<compile_context>
chip_gen: v7x
topology: tpu7x:2x2x1
jax: 0.10.0
libtpu: 0.0.40
codegen_flags: <defaults>
</compile_context>

<pallas_src>
import math
import functools

import jax
import jax.numpy as jnp
from jax.experimental import pallas as pl
from jax.experimental.pallas import tpu as pltpu


_VMEM_LIMIT = 64 * 1024 * 1024  # explicit scoped-VMEM budget (fits v7x too)


# ----------------------------------------------------------------------------
# Tiling helpers
# ----------------------------------------------------------------------------

def _round_up(x, m):
    return ((x + m - 1) // m) * m


def _row_tiling(M, max_tile=512):
    """Pick an M tile (multiple of 8, capped at max_tile) + padded row count."""
    mp8 = _round_up(M, 8)
    tm = min(max_tile, mp8)
    mp = _round_up(M, tm)
    return tm, mp


def _col_tiling(N):
    """Tile wide N (MLP / padded vocab) to bound the resident weight block
    (matters on v7x's 64 MiB VMEM); small N stays untiled."""
    if N >= 2048:
        for t in (2048, 1536, 1024, 768, 512, 384, 256, 128):
            if N % t == 0:
                return t
    return N


def _k_tiling(K):
    """Tile the contraction dim when it is too large to keep fully resident
    (adds a K grid axis + fp32 accumulator inside the kernel)."""
    if K <= 2048:
        return K
    for t in (2048, 1024, 512, 256, 128):
        if K % t == 0:
            return t
    return K


def _seq_tiling(S, max_tile):
    if S <= max_tile:
        return S
    for t in (512, 384, 256, 128, 64, 32, 16, 8):
        if t <= max_tile and S % t == 0:
            return t
    # TODO(synk): pad + length-mask ragged sequence lengths (e.g. Sk=1500)
    # instead of falling back to a single full-length block.
    return S


def _pad_rows(x, mp):
    m = x.shape[0]
    if mp == m:
        return x
    return jnp.pad(x, ((0, mp - m), (0, 0)))


def _pick_head_block(BH, dh):
    """Heads per attention grid step: aim for hb*dh ~ 128-256 lanes of work."""
    cap = max(1, 256 // max(dh, 1))
    best = 1
    for d in range(1, BH + 1):
        if BH % d == 0 and d <= cap:
            best = d
    return best


# ----------------------------------------------------------------------------
# Linear (matmul + fused epilogue) kernel
# ----------------------------------------------------------------------------

def _linear_kernel(activation, has_scale, has_residual, nk):
    """(tm,tk)@(tk,tn) [K-accumulated] + bias, optional fused GELU /
    1/(|T|+eps) temperature scale / residual add epilogue."""
    def kernel(*refs):
        a_ref, w_ref, b_ref = refs[0], refs[1], refs[2]
        idx = 3
        s_ref = None
        r_ref = None
        if has_scale:
            s_ref = refs[idx]
            idx += 1
        if has_residual:
            r_ref = refs[idx]
            idx += 1
        o_ref = refs[idx]
        acc_ref = refs[idx + 1] if nk > 1 else None

        def epilogue(acc):
            y = acc + b_ref[...]
            if activation == "gelu":
                # TODO(synk): PyTorch F.gelu is exact (erf); tanh-approx GELU
                # used here for Mosaic-lowering safety (small numeric drift).
                y = jax.nn.gelu(y)
            if has_scale:
                # logits / (|T| + 1e-6), T read from the SMEM scalar path.
                y = y * (1.0 / (jnp.abs(s_ref[0]) + 1e-6))
            if has_residual:
                y = y + r_ref[...]
            o_ref[...] = y.astype(o_ref.dtype)

        # Activation cast to bf16 inside the kernel (no separate XLA cast pass);
        # weights are already bf16.  fp32 accumulation on the MXU.
        part = jnp.dot(a_ref[...].astype(jnp.bfloat16),
                       w_ref[...].astype(jnp.bfloat16),
                       preferred_element_type=jnp.float32)

        if nk == 1:
            epilogue(part)
        else:
            k = pl.program_id(2)

            @pl.when(k == 0)
            def _():
                acc_ref[...] = jnp.zeros(acc_ref.shape, acc_ref.dtype)

            acc_ref[...] += part

            @pl.when(k == nk - 1)
            def _():
                epilogue(acc_ref[...])
    return kernel


def linear(x2d, w, b, activation=None, residual=None, scale=None,
           out_dtype=jnp.float32):
    """x2d: (M, K) @ w: (K, N) + b with fused epilogue (GELU / residual /
    temperature scale).  Grid is (N-tiles, M-tiles, K-tiles), K innermost;
    when K is fully resident the weight column block is constant across the M
    axis so it is fetched once and reused (no per-row-tile weight restream)."""
    M, K = x2d.shape
    K2, N = w.shape
    assert K == K2
    tk = _k_tiling(K)
    nk = K // tk
    max_tm = 256 if K >= 4096 else 512
    tm, Mp = _row_tiling(M, max_tile=max_tm)
    tn = _col_tiling(N)

    x_p = _pad_rows(x2d, Mp)                      # dtype preserved; cast in-kernel
    b2 = b.reshape(1, N).astype(jnp.float32)

    in_specs = [pl.BlockSpec((tm, tk), lambda j, i, k: (i, k)),
                pl.BlockSpec((tk, tn), lambda j, i, k: (k, j)),
                pl.BlockSpec((1, tn), lambda j, i, k: (0, j))]
    args = [x_p, w, b2]
    if scale is not None:
        in_specs.append(pl.BlockSpec(memory_space=pltpu.MemorySpace.SMEM))
        args.append(jnp.reshape(scale, (1,)).astype(jnp.float32))
    if residual is not None:
        in_specs.append(pl.BlockSpec((tm, tn), lambda j, i, k: (i, j)))
        args.append(_pad_rows(residual, Mp))

    scratch = [pltpu.VMEM((tm, tn), jnp.float32)] if nk > 1 else []

    out = pl.pallas_call(
        _linear_kernel(activation, scale is not None, residual is not None, nk),
        out_shape=jax.ShapeDtypeStruct((Mp, N), out_dtype),
        grid=(N // tn, Mp // tm, nk),
        in_specs=in_specs,
        out_specs=pl.BlockSpec((tm, tn), lambda j, i, k: (i, j)),
        scratch_shapes=scratch,
        compiler_params=pltpu.CompilerParams(
            dimension_semantics=("parallel", "parallel", "arbitrary"),
            vmem_limit_bytes=_VMEM_LIMIT),
    )(*args)
    return out if Mp == M else out[:M]


# ----------------------------------------------------------------------------
# LayerNorm kernel (f32 math, bf16 output for the matmul consumers)
# ----------------------------------------------------------------------------

def _layernorm_kernel(eps):
    def kernel(x_ref, g_ref, b_ref, o_ref):
        x = x_ref[...].astype(jnp.float32)
        mu = jnp.mean(x, axis=-1, keepdims=True)
        var = jnp.mean((x - mu) ** 2, axis=-1, keepdims=True)
        y = (x - mu) * jax.lax.rsqrt(var + eps)
        o_ref[...] = (y * g_ref[...] + b_ref[...]).astype(o_ref.dtype)
    return kernel


def layernorm(x2d, gamma, beta, eps=1e-5, out_dtype=jnp.bfloat16):
    # TODO(synk): fuse LN into the following linear's prologue to remove one
    # activation-sized HBM round trip per LN.
    M, D = x2d.shape
    tm, Mp = _row_tiling(M, max_tile=1024)
    g = gamma.reshape(1, D).astype(jnp.float32)
    b = beta.reshape(1, D).astype(jnp.float32)
    out = pl.pallas_call(
        _layernorm_kernel(eps),
        out_shape=jax.ShapeDtypeStruct((Mp, D), out_dtype),
        grid=(Mp // tm,),
        in_specs=[pl.BlockSpec((tm, D), lambda i: (i, 0)),
                  pl.BlockSpec((1, D), lambda i: (0, 0)),
                  pl.BlockSpec((1, D), lambda i: (0, 0))],
        out_specs=pl.BlockSpec((tm, D), lambda i: (i, 0)),
        compiler_params=pltpu.CompilerParams(
            dimension_semantics=("parallel",),
            vmem_limit_bytes=_VMEM_LIMIT),
    )(_pad_rows(x2d, Mp), g, b)
    return out if Mp == M else out[:M]


# ----------------------------------------------------------------------------
# Flash attention kernel (online softmax over Sk tiles)
# ----------------------------------------------------------------------------

def _flash_attention_kernel(scale, causal, tq, tk, nk):
    def kernel(q_ref, k_ref, v_ref, bw_ref, o_ref, m_sc, l_sc, acc_sc):
        ki = pl.program_id(2)

        @pl.when(ki == 0)
        def _():
            m_sc[...] = jnp.full(m_sc.shape, -1e30, dtype=m_sc.dtype)
            l_sc[...] = jnp.zeros(l_sc.shape, l_sc.dtype)
            acc_sc[...] = jnp.zeros(acc_sc.shape, acc_sc.dtype)

        # 1/sqrt(dh) and the per-layer bandwidth logit-temperature are folded
        # into Q (dh-wide) instead of scaling the (hb, tq, tk) score tensor.
        inv_t = scale / bw_ref[0]
        q = (q_ref[...].astype(jnp.float32) * inv_t).astype(jnp.bfloat16)

        s = jnp.einsum('bqd,bkd->bqk', q, k_ref[...],
                       preferred_element_type=jnp.float32)    # (hb, tq, tk)

        if causal:
            # Single 2-D additive mask shared by every head in the block.
            row = pl.program_id(1) * tq + \
                jax.lax.broadcasted_iota(jnp.int32, (tq, tk), 0)
            col = ki * tk + \
                jax.lax.broadcasted_iota(jnp.int32, (tq, tk), 1)
            bias = jnp.where(col <= row, 0.0, -1e30).astype(jnp.float32)
            s = s + bias[None, :, :]

        m_prev = m_sc[...]
        m_new = jnp.maximum(m_prev, jnp.max(s, axis=-1, keepdims=True))
        alpha = jnp.exp(m_prev - m_new)
        # TODO(synk): on v6e/v7x this exp could run in bf16 (bf16 EUP) for ~2x
        # transcendental throughput; kept f32 for v5e portability.
        p = jnp.exp(s - m_new)
        l_sc[...] = alpha * l_sc[...] + jnp.sum(p, axis=-1, keepdims=True)
        acc_sc[...] = alpha * acc_sc[...] + jnp.einsum(
            'bqk,bkd->bqd', p.astype(v_ref.dtype), v_ref[...],
            preferred_element_type=jnp.float32)
        m_sc[...] = m_new

        @pl.when(ki == nk - 1)
        def _():
            o_ref[...] = (acc_sc[...] *
                          pl.reciprocal(l_sc[...], approx=True)
                          ).astype(o_ref.dtype)
    return kernel


def attention(q, k, v, bandwidth, causal, out_dtype=jnp.bfloat16):
    """q: (BH, Sq, dh), k/v: (BH, Sk, dh) -> (BH, Sq, dh).
    Flash attention: heads batched per grid step, Sq/Sk are grid axes with
    running max/sum/acc scratch; bandwidth is a scalar logit temperature."""
    BH, Sq, dh = q.shape
    _, Sk, _ = k.shape
    scale = 1.0 / math.sqrt(dh)
    hb = _pick_head_block(BH, dh)
    tq = _seq_tiling(Sq, 256)
    tk = _seq_tiling(Sk, 512)
    nkv = Sk // tk
    bw = jnp.reshape(bandwidth, (1,)).astype(jnp.float32)

    return pl.pallas_call(
        _flash_attention_kernel(scale, causal, tq, tk, nkv),
        out_shape=jax.ShapeDtypeStruct((BH, Sq, dh), out_dtype),
        grid=(BH // hb, Sq // tq, nkv),
        in_specs=[pl.BlockSpec((hb, tq, dh), lambda b, qi, ki: (b, qi, 0)),
                  pl.BlockSpec((hb, tk, dh), lambda b, qi, ki: (b, ki, 0)),
                  pl.BlockSpec((hb, tk, dh), lambda b, qi, ki: (b, ki, 0)),
                  pl.BlockSpec(memory_space=pltpu.MemorySpace.SMEM)],
        out_specs=pl.BlockSpec((hb, tq, dh), lambda b, qi, ki: (b, qi, 0)),
        scratch_shapes=[pltpu.VMEM((hb, tq, 1), jnp.float32),
                        pltpu.VMEM((hb, tq, 1), jnp.float32),
                        pltpu.VMEM((hb, tq, dh), jnp.float32)],
        compiler_params=pltpu.CompilerParams(
            dimension_semantics=("parallel", "parallel", "arbitrary"),
            vmem_limit_bytes=_VMEM_LIMIT),
    )(q, k, v, bw)


# ----------------------------------------------------------------------------
# Glue: im2col, multi-head plumbing, model forward
# ----------------------------------------------------------------------------

def im2col_1d(x, kernel, stride, pad):
    """x: (B, T, C) -> patches (B, T_out, C*kernel), flatten order (C, k)
    to match torch Conv1d weight.reshape(out, in*k)."""
    B, T, C = x.shape
    xp = jnp.pad(x, ((0, 0), (pad, pad), (0, 0)))
    T_out = (T + 2 * pad - kernel) // stride + 1
    cols = [xp[:, kk: kk + stride * T_out: stride, :] for kk in range(kernel)]
    patches = jnp.stack(cols, axis=-1)            # (B, T_out, C, k)
    return patches.reshape(B, T_out, C * kernel), T_out


# TODO(synk): head split/merge are XLA-side transposes; eliminating them via
# BlockSpec head-column slicing needs hb*dh lane alignment (>=128) which the
# toy dh=8 config cannot satisfy, so they stay in XLA here.
def split_heads(x, B, S, H, dh):
    return x.reshape(B, S, H, dh).transpose(0, 2, 1, 3).reshape(B * H, S, dh)


def merge_heads(x, B, S, H, dh):
    return x.reshape(B, H, S, dh).transpose(0, 2, 1, 3).reshape(B * S, H * dh)


def self_mha(x2d, p, B, S, H, dh, bandwidth, causal, residual):
    """Self-attention with fused QKV projection and residual fused into the
    output projection epilogue."""
    D = H * dh
    qkv = linear(x2d, p["wqkv"], p["bqkv"], out_dtype=jnp.bfloat16)
    q, k, v = qkv[:, :D], qkv[:, D:2 * D], qkv[:, 2 * D:]
    o = attention(split_heads(q, B, S, H, dh),
                  split_heads(k, B, S, H, dh),
                  split_heads(v, B, S, H, dh), bandwidth, causal)
    o = merge_heads(o, B, S, H, dh)
    return linear(o, p["wo"], p["bo"], residual=residual)


def cross_mha(x2d, kv2d, p, B, Sq, Sk, H, dh, bandwidth, residual):
    """Cross-attention: Q from decoder stream, fused K/V from encoder output;
    residual fused into the output projection."""
    D = H * dh
    q = linear(x2d, p["wq"], p["bq"], out_dtype=jnp.bfloat16)
    kv = linear(kv2d, p["wkv"], p["bkv"], out_dtype=jnp.bfloat16)
    k, v = kv[:, :D], kv[:, D:]
    o = attention(split_heads(q, B, Sq, H, dh),
                  split_heads(k, B, Sk, H, dh),
                  split_heads(v, B, Sk, H, dh), bandwidth, causal=False)
    o = merge_heads(o, B, Sq, H, dh)
    return linear(o, p["wo"], p["bo"], residual=residual)


def mlp(x2d, p, residual):
    h = linear(x2d, p["w1"], p["b1"], activation="gelu",
               out_dtype=jnp.bfloat16)
    return linear(h, p["w2"], p["b2"], residual=residual)


def whisper_temperature_forward(params, mel_input, text_tokens, cfg):
    B, n_mels, T = mel_input.shape
    D, H, V = cfg["d_model"], cfg["n_heads"], cfg["vocab"]
    dh = D // H

    # ---------------- Encoder ----------------
    x = jnp.transpose(mel_input, (0, 2, 1)).astype(jnp.float32)   # (B, T, n_mels)

    patches, T1 = im2col_1d(x, kernel=3, stride=1, pad=1)
    x = linear(patches.reshape(B * T1, -1), params["conv1_w"],
               params["conv1_b"], activation="gelu",
               out_dtype=jnp.bfloat16).reshape(B, T1, D)
    patches, T2 = im2col_1d(x, kernel=3, stride=2, pad=1)
    x = linear(patches.reshape(B * T2, -1), params["conv2_w"],
               params["conv2_b"], activation="gelu").reshape(B, T2, D)

    x = x + params["enc_pos"][None, :T2, :]
    x2d = x.reshape(B * T2, D)                                    # f32 residual stream

    for l, blk in enumerate(params["enc_blocks"]):
        bw = params["bandwidth_enc"][l]
        h = layernorm(x2d, blk["ln1_g"], blk["ln1_b"])            # bf16 out
        x2d = self_mha(h, blk["attn"], B, T2, H, dh, bw, causal=False,
                       residual=x2d)
        h = layernorm(x2d, blk["ln2_g"], blk["ln2_b"])
        x2d = mlp(h, blk["mlp"], residual=x2d)
    audio2d = layernorm(x2d, params["enc_lnpost_g"], params["enc_lnpost_b"])

    # ---------------- Decoder ----------------
    S = text_tokens.shape[1]
    tok = jnp.take(params["tok_emb"], text_tokens, axis=0)        # (B, S, D)
    y2d = (tok + params["dec_pos"][None, :S, :]).reshape(B * S, D)

    for l, blk in enumerate(params["dec_blocks"]):
        bw = params["bandwidth_dec"][l]
        h = layernorm(y2d, blk["ln1_g"], blk["ln1_b"])
        y2d = self_mha(h, blk["self_attn"], B, S, H, dh, bw, causal=True,
                       residual=y2d)
        h = layernorm(y2d, blk["ln2_g"], blk["ln2_b"])
        y2d = cross_mha(h, audio2d, blk["cross_attn"], B, S, T2, H, dh, bw,
                        residual=y2d)
        h = layernorm(y2d, blk["ln3_g"], blk["ln3_b"])
        y2d = mlp(h, blk["mlp"], residual=y2d)

    y2d = layernorm(y2d, params["dec_ln_g"], params["dec_ln_b"])  # bf16

    # Tied vocab head: (D, Vp) bf16 weight pre-transposed + vocab-padded at
    # init; temperature divide logits/(|T|+1e-6) fused into the epilogue.
    logits2d = linear(y2d, params["head_w"], params["head_b"],
                      scale=params["temperature"])                # (B*S, Vp) f32
    return logits2d[:, :V].reshape(B, S, V)


# ----------------------------------------------------------------------------
# Deterministic parameter init
# ----------------------------------------------------------------------------

def _sinusoids(length, channels):
    half = channels // 2
    log_timescale = math.log(10000.0) / max(half - 1, 1)
    inv = jnp.exp(-log_timescale * jnp.arange(half, dtype=jnp.float32))
    scaled = jnp.arange(length, dtype=jnp.float32)[:, None] * inv[None, :]
    return jnp.concatenate([jnp.sin(scaled), jnp.cos(scaled)], axis=1)


def init_params(key, cfg):
    D, H, V = cfg["d_model"], cfg["n_heads"], cfg["vocab"]
    n_mels, mlp_dim = cfg["n_mels"], 4 * cfg["d_model"]
    keys = iter(jax.random.split(key, 256))

    def w(shape, scale=0.02, dtype=jnp.bfloat16):
        # Matmul weights are stored bf16 at init: no per-forward HBM cast pass.
        return (scale * jax.random.normal(next(keys), shape)).astype(dtype)

    def zeros(n):
        return jnp.zeros((n,), jnp.float32)

    def ones(n):
        return jnp.ones((n,), jnp.float32)

    def self_attn_params():
        # Q, K, V projections pre-fused into one (D, 3D) weight.
        return dict(wqkv=w((D, 3 * D)), bqkv=zeros(3 * D),
                    wo=w((D, D)), bo=zeros(D))

    def cross_attn_params():
        # K and V share the encoder input, so only K/V are fused.
        return dict(wq=w((D, D)), bq=zeros(D),
                    wkv=w((D, 2 * D)), bkv=zeros(2 * D),
                    wo=w((D, D)), bo=zeros(D))

    def mlp_params():
        return dict(w1=w((D, mlp_dim)), b1=zeros(mlp_dim),
                    w2=w((mlp_dim, D)), b2=zeros(D))

    enc_blocks = [dict(ln1_g=ones(D), ln1_b=zeros(D), attn=self_attn_params(),
                       ln2_g=ones(D), ln2_b=zeros(D), mlp=mlp_params())
                  for _ in range(cfg["n_enc_layers"])]
    dec_blocks = [dict(ln1_g=ones(D), ln1_b=zeros(D),
                       self_attn=self_attn_params(),
                       ln2_g=ones(D), ln2_b=zeros(D),
                       cross_attn=cross_attn_params(),
                       ln3_g=ones(D), ln3_b=zeros(D), mlp=mlp_params())
                  for _ in range(cfg["n_dec_layers"])]

    # Conv weights stored pre-flattened for im2col matmul:
    # torch weight (out, in, k) -> (in*k, out), bf16.
    conv1_w = w((D, n_mels, 3), dtype=jnp.float32).reshape(
        D, n_mels * 3).T.astype(jnp.bfloat16)
    conv2_w = w((D, D, 3), dtype=jnp.float32).reshape(
        D, D * 3).T.astype(jnp.bfloat16)

    # Token embedding: f32 (V, D) for the gather; tied vocab head stored once,
    # pre-transposed and vocab-padded to a lane/tile multiple, in bf16.
    tok_emb = w((V, D), dtype=jnp.float32)
    Vp = _round_up(V, 2048) if V >= 4096 else _round_up(V, 128)
    head_w = jnp.pad(tok_emb, ((0, Vp - V), (0, 0))).T.astype(jnp.bfloat16)

    return dict(
        conv1_w=conv1_w, conv1_b=zeros(D),
        conv2_w=conv2_w, conv2_b=zeros(D),
        enc_pos=_sinusoids(cfg["audio_ctx"], D),
        enc_blocks=enc_blocks,
        enc_lnpost_g=ones(D), enc_lnpost_b=zeros(D),
        tok_emb=tok_emb,
        head_w=head_w, head_b=zeros(Vp),
        dec_pos=w((cfg["text_ctx"], D), dtype=jnp.float32),
        dec_blocks=dec_blocks,
        dec_ln_g=ones(D), dec_ln_b=zeros(D),
        # WhisperTemperatureWrapper's own trainable parameters:
        bandwidth_enc=jnp.ones((cfg["n_enc_layers"],), jnp.float32),
        bandwidth_dec=jnp.ones((cfg["n_dec_layers"],), jnp.float32),
        temperature=jnp.array(1.0, jnp.float32),
    )


# ----------------------------------------------------------------------------
# Main
# ----------------------------------------------------------------------------

if __name__ == "__main__":
    cfg = dict(n_mels=16, d_model=32, n_heads=4, vocab=64,
               n_enc_layers=2, n_dec_layers=2,
               n_frames=32, audio_ctx=16, text_ctx=8)

    key = jax.random.PRNGKey(0)
    k_param, k_mel, k_tok = jax.random.split(key, 3)

    params = init_params(k_param, cfg)

    B = 2
    mel_input = jax.random.normal(
        k_mel, (B, cfg["n_mels"], cfg["n_frames"]), jnp.float32)   # NCL (torch)
    text_tokens = jax.random.randint(
        k_tok, (B, cfg["text_ctx"]), 0, cfg["vocab"], jnp.int32)

    fwd = jax.jit(functools.partial(whisper_temperature_forward, cfg=cfg))
    scaled_logits = fwd(params, mel_input, text_tokens)
    jax.block_until_ready(scaled_logits)

    assert scaled_logits.shape == (B, cfg["text_ctx"], cfg["vocab"])
    assert bool(jnp.all(jnp.isfinite(scaled_logits)))
    print("KERNEL_OK")
</pallas_src>

<mosaic_0001>
module attributes {stable_mosaic.version = 11 : i64} {
  func.func @kernel(%arg0: i32, %arg1: i32, %arg2: i32, %arg3: memref<64x48xf32, #tpu.memory_space<vmem>>, %arg4: memref<48x32xbf16, #tpu.memory_space<vmem>>, %arg5: memref<1x32xf32, #tpu.memory_space<vmem>>, %arg6: memref<64x32xbf16, #tpu.memory_space<vmem>>) attributes {dimension_semantics = [#tpu.dimension_semantics<parallel>, #tpu.dimension_semantics<parallel>, #tpu.dimension_semantics<arbitrary>], iteration_bounds = array<i64: 1, 1, 1>, scalar_prefetch = 0 : i64, scratch_operands = 0 : i64, tpu.core_type = #tpu.core_type<tc>, window_params = [{transform_indices = @transform_0, window_bounds = array<i64: 64, 48>}, {transform_indices = @transform_1, window_bounds = array<i64: 48, 32>}, {transform_indices = @transform_2, window_bounds = array<i64: 1, 32>}, {transform_indices = @transform_3, window_bounds = array<i64: 64, 32>}]} {
    %c0 = arith.constant 0 : index
    %c0_0 = arith.constant 0 : index
    %0 = vector.load %arg3[%c0, %c0_0] : memref<64x48xf32, #tpu.memory_space<vmem>>, vector<64x48xf32>
    %1 = arith.truncf %0 : vector<64x48xf32> to vector<64x48xbf16>
    %c0_1 = arith.constant 0 : index
    %c0_2 = arith.constant 0 : index
    %2 = vector.load %arg4[%c0_1, %c0_2] : memref<48x32xbf16, #tpu.memory_space<vmem>>, vector<48x32xbf16>
    %cst = arith.constant dense<0.000000e+00> : vector<64x32xf32>
    %3 = tpu.matmul %1, %2, %cst {dimension_numbers = #tpu.dot_dimension_numbers<[1], [0], [0], [1], [0, 0, 1, 1], [], []>} : vector<64x48xbf16>, vector<48x32xbf16>, vector<64x32xf32> -> vector<64x32xf32>
    %c0_3 = arith.constant 0 : index
    %c0_4 = arith.constant 0 : index
    %4 = vector.load %arg5[%c0_3, %c0_4] : memref<1x32xf32, #tpu.memory_space<vmem>>, vector<1x32xf32>
    %5 = vector.broadcast %4 : vector<1x32xf32> to vector<64x32xf32>
    %6 = arith.addf %3, %5 : vector<64x32xf32>
    %7 = arith.mulf %6, %6 : vector<64x32xf32>
    %8 = arith.mulf %6, %7 : vector<64x32xf32>
    %cst_5 = arith.constant 4.471500e-02 : f32
    %9 = vector.broadcast %cst_5 : f32 to vector<64x32xf32>
    %10 = arith.mulf %9, %8 : vector<64x32xf32>
    %11 = arith.addf %6, %10 : vector<64x32xf32>
    %cst_6 = arith.constant 0.797884583 : f32
    %12 = vector.broadcast %cst_6 : f32 to vector<64x32xf32>
    %13 = arith.mulf %12, %11 : vector<64x32xf32>
    %14 = math.tanh %13 : vector<64x32xf32>
    %cst_7 = arith.constant 1.000000e+00 : f32
    %15 = vector.broadcast %cst_7 : f32 to vector<64x32xf32>
    %16 = arith.addf %15, %14 : vector<64x32xf32>
    %cst_8 = arith.constant 5.000000e-01 : f32
    %17 = vector.broadcast %cst_8 : f32 to vector<64x32xf32>
    %18 = arith.mulf %17, %16 : vector<64x32xf32>
    %19 = arith.mulf %6, %18 : vector<64x32xf32>
    %20 = arith.truncf %19 : vector<64x32xf32> to vector<64x32xbf16>
    %c0_9 = arith.constant 0 : index
    %c0_10 = arith.constant 0 : index
    %21 = vector.load %arg6[%c0_9, %c0_10] : memref<64x32xbf16, #tpu.memory_space<vmem>>, vector<64x32xbf16>
    tpu.vector_store %arg6[%c0_9, %c0_10], %20 {strides = array<i32>} : memref<64x32xbf16, #tpu.memory_space<vmem>>, vector<64x32xbf16>,
    return
  }
  func.func @transform_0(%arg0: i32, %arg1: i32, %arg2: i32) -> (i32, i32) {
    %c0_i32 = arith.constant 0 : i32
    return %arg1, %arg2 : i32, i32
  }
  func.func @transform_1(%arg0: i32, %arg1: i32, %arg2: i32) -> (i32, i32) {
    %c0_i32 = arith.constant 0 : i32
    return %arg2, %arg0 : i32, i32
  }
  func.func @transform_2(%arg0: i32, %arg1: i32, %arg2: i32) -> (i32, i32) {
    %c0_i32 = arith.constant 0 : i32
    %c0_i32_0 = arith.constant 0 : i32
    return %c0_i32, %arg0 : i32, i32
  }
  func.func @transform_3(%arg0: i32, %arg1: i32, %arg2: i32) -> (i32, i32) {
    %c0_i32 = arith.constant 0 : i32
    return %arg1, %arg0 : i32, i32
  }
}

module attributes {stable_mosaic.version = 11 : i64} {
  func.func @kernel(%arg0: i32, %arg1: i32, %arg2: i32, %arg3: memref<32x96xbf16, #tpu.memory_space<vmem>>, %arg4: memref<96x32xbf16, #tpu.memory_space<vmem>>, %arg5: memref<1x32xf32, #tpu.memory_space<vmem>>, %arg6: memref<32x32xf32, #tpu.memory_space<vmem>>) attributes {dimension_semantics = [#tpu.dimension_semantics<parallel>, #tpu.dimension_semantics<parallel>, #tpu.dimension_semantics<arbitrary>], iteration_bounds = array<i64: 1, 1, 1>, scalar_prefetch = 0 : i64, scratch_operands = 0 : i64, tpu.core_type = #tpu.core_type<tc>, window_params = [{transform_indices = @transform_0, window_bounds = array<i64: 32, 96>}, {transform_indices = @transform_1, window_bounds = array<i64: 96, 32>}, {transform_indices = @transform_2, window_bounds = array<i64: 1, 32>}, {transform_indices = @transform_3, window_bounds = array<i64: 32, 32>}]} {
    %c0 = arith.constant 0 : index
    %c0_0 = arith.constant 0 : index
    %0 = vector.load %arg3[%c0, %c0_0] : memref<32x96xbf16, #tpu.memory_space<vmem>>, vector<32x96xbf16>
    %c0_1 = arith.constant 0 : index
    %c0_2 = arith.constant 0 : index
    %1 = vector.load %arg4[%c0_1, %c0_2] : memref<96x32xbf16, #tpu.memory_space<vmem>>, vector<96x32xbf16>
    %cst = arith.constant dense<0.000000e+00> : vector<32x32xf32>
    %2 = tpu.matmul %0, %1, %cst {dimension_numbers = #tpu.dot_dimension_numbers<[1], [0], [0], [1], [0, 0, 1, 1], [], []>} : vector<32x96xbf16>, vector<96x32xbf16>, vector<32x32xf32> -> vector<32x32xf32>
    %c0_3 = arith.constant 0 : index
    %c0_4 = arith.constant 0 : index
    %3 = vector.load %arg5[%c0_3, %c0_4] : memref<1x32xf32, #tpu.memory_space<vmem>>, vector<1x32xf32>
    %4 = vector.broadcast %3 : vector<1x32xf32> to vector<32x32xf32>
    %5 = arith.addf %2, %4 : vector<32x32xf32>
    %6 = arith.mulf %5, %5 : vector<32x32xf32>
    %7 = arith.mulf %5, %6 : vector<32x32xf32>
    %cst_5 = arith.constant 4.471500e-02 : f32
    %8 = vector.broadcast %cst_5 : f32 to vector<32x32xf32>
    %9 = arith.mulf %8, %7 : vector<32x32xf32>
    %10 = arith.addf %5, %9 : vector<32x32xf32>
    %cst_6 = arith.constant 0.797884583 : f32
    %11 = vector.broadcast %cst_6 : f32 to vector<32x32xf32>
    %12 = arith.mulf %11, %10 : vector<32x32xf32>
    %13 = math.tanh %12 : vector<32x32xf32>
    %cst_7 = arith.constant 1.000000e+00 : f32
    %14 = vector.broadcast %cst_7 : f32 to vector<32x32xf32>
    %15 = arith.addf %14, %13 : vector<32x32xf32>
    %cst_8 = arith.constant 5.000000e-01 : f32
    %16 = vector.broadcast %cst_8 : f32 to vector<32x32xf32>
    %17 = arith.mulf %16, %15 : vector<32x32xf32>
    %18 = arith.mulf %5, %17 : vector<32x32xf32>
    %c0_9 = arith.constant 0 : index
    %c0_10 = arith.constant 0 : index
    %19 = vector.load %arg6[%c0_9, %c0_10] : memref<32x32xf32, #tpu.memory_space<vmem>>, vector<32x32xf32>
    tpu.vector_store %arg6[%c0_9, %c0_10], %18 {strides = array<i32>} : memref<32x32xf32, #tpu.memory_space<vmem>>, vector<32x32xf32>,
    return
  }
  func.func @transform_0(%arg0: i32, %arg1: i32, %arg2: i32) -> (i32, i32) {
    %c0_i32 = arith.constant 0 : i32
    return %arg1, %arg2 : i32, i32
  }
  func.func @transform_1(%arg0: i32, %arg1: i32, %arg2: i32) -> (i32, i32) {
    %c0_i32 = arith.constant 0 : i32
    return %arg2, %arg0 : i32, i32
  }
  func.func @transform_2(%arg0: i32, %arg1: i32, %arg2: i32) -> (i32, i32) {
    %c0_i32 = arith.constant 0 : i32
    %c0_i32_0 = arith.constant 0 : i32
    return %c0_i32, %arg0 : i32, i32
  }
  func.func @transform_3(%arg0: i32, %arg1: i32, %arg2: i32) -> (i32, i32) {
    %c0_i32 = arith.constant 0 : i32
    return %arg1, %arg0 : i32, i32
  }
}

module attributes {stable_mosaic.version = 11 : i64} {
  func.func @kernel(%arg0: i32, %arg1: i32, %arg2: i32, %arg3: memref<32x32xbf16, #tpu.memory_space<vmem>>, %arg4: memref<32x96xbf16, #tpu.memory_space<vmem>>, %arg5: memref<1x96xf32, #tpu.memory_space<vmem>>, %arg6: memref<32x96xbf16, #tpu.memory_space<vmem>>) attributes {dimension_semantics = [#tpu.dimension_semantics<parallel>, #tpu.dimension_semantics<parallel>, #tpu.dimension_semantics<arbitrary>], iteration_bounds = array<i64: 1, 1, 1>, scalar_prefetch = 0 : i64, scratch_operands = 0 : i64, tpu.core_type = #tpu.core_type<tc>, window_params = [{transform_indices = @transform_0, window_bounds = array<i64: 32, 32>}, {transform_indices = @transform_1, window_bounds = array<i64: 32, 96>}, {transform_indices = @transform_2, window_bounds = array<i64: 1, 96>}, {transform_indices = @transform_3, window_bounds = array<i64: 32, 96>}]} {
    %c0 = arith.constant 0 : index
    %c0_0 = arith.constant 0 : index
    %0 = vector.load %arg3[%c0, %c0_0] : memref<32x32xbf16, #tpu.memory_space<vmem>>, vector<32x32xbf16>
    %c0_1 = arith.constant 0 : index
    %c0_2 = arith.constant 0 : index
    %1 = vector.load %arg4[%c0_1, %c0_2] : memref<32x96xbf16, #tpu.memory_space<vmem>>, vector<32x96xbf16>
    %cst = arith.constant dense<0.000000e+00> : vector<32x96xf32>
    %2 = tpu.matmul %0, %1, %cst {dimension_numbers = #tpu.dot_dimension_numbers<[1], [0], [0], [1], [0, 0, 1, 1], [], []>} : vector<32x32xbf16>, vector<32x96xbf16>, vector<32x96xf32> -> vector<32x96xf32>
    %c0_3 = arith.constant 0 : index
    %c0_4 = arith.constant 0 : index
    %3 = vector.load %arg5[%c0_3, %c0_4] : memref<1x96xf32, #tpu.memory_space<vmem>>, vector<1x96xf32>
    %4 = vector.broadcast %3 : vector<1x96xf32> to vector<32x96xf32>
    %5 = arith.addf %2, %4 : vector<32x96xf32>
    %6 = arith.truncf %5 : vector<32x96xf32> to vector<32x96xbf16>
    %c0_5 = arith.constant 0 : index
    %c0_6 = arith.constant 0 : index
    %7 = vector.load %arg6[%c0_5, %c0_6] : memref<32x96xbf16, #tpu.memory_space<vmem>>, vector<32x96xbf16>
    tpu.vector_store %arg6[%c0_5, %c0_6], %6 {strides = array<i32>} : memref<32x96xbf16, #tpu.memory_space<vmem>>, vector<32x96xbf16>,
    return
  }
  func.func @transform_0(%arg0: i32, %arg1: i32, %arg2: i32) -> (i32, i32) {
    %c0_i32 = arith.constant 0 : i32
    return %arg1, %arg2 : i32, i32
  }
  func.func @transform_1(%arg0: i32, %arg1: i32, %arg2: i32) -> (i32, i32) {
    %c0_i32 = arith.constant 0 : i32
    return %arg2, %arg0 : i32, i32
  }
  func.func @transform_2(%arg0: i32, %arg1: i32, %arg2: i32) -> (i32, i32) {
    %c0_i32 = arith.constant 0 : i32
    %c0_i32_0 = arith.constant 0 : i32
    return %c0_i32, %arg0 : i32, i32
  }
  func.func @transform_3(%arg0: i32, %arg1: i32, %arg2: i32) -> (i32, i32) {
    %c0_i32 = arith.constant 0 : i32
    return %arg1, %arg0 : i32, i32
  }
}

module attributes {stable_mosaic.version = 11 : i64} {
  func.func @kernel(%arg0: i32, %arg1: memref<32x32xf32, #tpu.memory_space<vmem>>, %arg2: memref<1x32xf32, #tpu.memory_space<vmem>>, %arg3: memref<1x32xf32, #tpu.memory_space<vmem>>, %arg4: memref<32x32xbf16, #tpu.memory_space<vmem>>) attributes {dimension_semantics = [#tpu.dimension_semantics<parallel>], iteration_bounds = array<i64: 1>, scalar_prefetch = 0 : i64, scratch_operands = 0 : i64, tpu.core_type = #tpu.core_type<tc>, window_params = [{transform_indices = @transform_0, window_bounds = array<i64: 32, 32>}, {pipeline_mode = #tpu.pipeline_mode<synchronous>, transform_indices = @transform_1, window_bounds = array<i64: 1, 32>}, {pipeline_mode = #tpu.pipeline_mode<synchronous>, transform_indices = @transform_2, window_bounds = array<i64: 1, 32>}, {transform_indices = @transform_3, window_bounds = array<i64: 32, 32>}]} {
    %c0 = arith.constant 0 : index
    %c0_0 = arith.constant 0 : index
    %0 = vector.load %arg1[%c0, %c0_0] : memref<32x32xf32, #tpu.memory_space<vmem>>, vector<32x32xf32>
    %cst = arith.constant dense<0.000000e+00> : vector<32xf32>
    %1 = vector.multi_reduction <add>, %0, %cst [1] : vector<32x32xf32> to vector<32xf32>
    %2 = vector.shape_cast %1 : vector<32xf32> to vector<32x1xf32>
    %cst_1 = arith.constant 3.200000e+01 : f32
    %3 = vector.broadcast %cst_1 : f32 to vector<32x1xf32>
    %4 = arith.divf %2, %3 : vector<32x1xf32>
    %5 = vector.broadcast %4 : vector<32x1xf32> to vector<32x32xf32>
    %6 = arith.subf %0, %5 : vector<32x32xf32>
    %7 = arith.mulf %6, %6 : vector<32x32xf32>
    %cst_2 = arith.constant dense<0.000000e+00> : vector<32xf32>
    %8 = vector.multi_reduction <add>, %7, %cst_2 [1] : vector<32x32xf32> to vector<32xf32>
    %9 = vector.shape_cast %8 : vector<32xf32> to vector<32x1xf32>
    %cst_3 = arith.constant 3.200000e+01 : f32
    %10 = vector.broadcast %cst_3 : f32 to vector<32x1xf32>
    %11 = arith.divf %9, %10 : vector<32x1xf32>
    %12 = vector.broadcast %4 : vector<32x1xf32> to vector<32x32xf32>
    %13 = arith.subf %0, %12 : vector<32x32xf32>
    %cst_4 = arith.constant 9.99999974E-6 : f32
    %14 = vector.broadcast %cst_4 : f32 to vector<32x1xf32>
    %15 = arith.addf %11, %14 : vector<32x1xf32>
    %16 = math.rsqrt %15 : vector<32x1xf32>
    %17 = vector.broadcast %16 : vector<32x1xf32> to vector<32x32xf32>
    %18 = arith.mulf %13, %17 : vector<32x32xf32>
    %c0_5 = arith.constant 0 : index
    %c0_6 = arith.constant 0 : index
    %19 = vector.load %arg2[%c0_5, %c0_6] : memref<1x32xf32, #tpu.memory_space<vmem>>, vector<1x32xf32>
    %20 = vector.broadcast %19 : vector<1x32xf32> to vector<32x32xf32>
    %21 = arith.mulf %18, %20 : vector<32x32xf32>
    %c0_7 = arith.constant 0 : index
    %c0_8 = arith.constant 0 : index
    %22 = vector.load %arg3[%c0_7, %c0_8] : memref<1x32xf32, #tpu.memory_space<vmem>>, vector<1x32xf32>
    %23 = vector.broadcast %22 : vector<1x32xf32> to vector<32x32xf32>
    %24 = arith.addf %21, %23 : vector<32x32xf32>
    %25 = arith.truncf %24 : vector<32x32xf32> to vector<32x32xbf16>
    %c0_9 = arith.constant 0 : index
    %c0_10 = arith.constant 0 : index
    %26 = vector.load %arg4[%c0_9, %c0_10] : memref<32x32xbf16, #tpu.memory_space<vmem>>, vector<32x32xbf16>
    tpu.vector_store %arg4[%c0_9, %c0_10], %25 {strides = array<i32>} : memref<32x32xbf16, #tpu.memory_space<vmem>>, vector<32x32xbf16>,
    return
  }
  func.func @transform_0(%arg0: i32) -> (i32, i32) {
    %c0_i32 = arith.constant 0 : i32
    %c0_i32_0 = arith.constant 0 : i32
    return %arg0, %c0_i32 : i32, i32
  }
  func.func @transform_1(%arg0: i32) -> (i32, i32) {
    %c0_i32 = arith.constant 0 : i32
    %c0_i32_0 = arith.constant 0 : i32
    %c0_i32_1 = arith.constant 0 : i32
    return %c0_i32, %c0_i32_0 : i32, i32
  }
  func.func @transform_2(%arg0: i32) -> (i32, i32) {
    %c0_i32 = arith.constant 0 : i32
    %c0_i32_0 = arith.constant 0 : i32
    %c0_i32_1 = arith.constant 0 : i32
    return %c0_i32, %c0_i32_0 : i32, i32
  }
  func.func @transform_3(%arg0: i32) -> (i32, i32) {
    %c0_i32 = arith.constant 0 : i32
    %c0_i32_0 = arith.constant 0 : i32
    return %arg0, %c0_i32 : i32, i32
  }
}

module attributes {stable_mosaic.version = 11 : i64} {
  func.func @kernel(%arg0: i32, %arg1: i32, %arg2: i32, %arg3: memref<8x16x8xbf16, #tpu.memory_space<vmem>>, %arg4: memref<8x16x8xbf16, #tpu.memory_space<vmem>>, %arg5: memref<8x16x8xbf16, #tpu.memory_space<vmem>>, %arg6: memref<1xf32, #tpu.memory_space<smem>>, %arg7: memref<8x16x8xbf16, #tpu.memory_space<vmem>>, %arg8: memref<8x16x1xf32, #tpu.memory_space<vmem>>, %arg9: memref<8x16x1xf32, #tpu.memory_space<vmem>>, %arg10: memref<8x16x8xf32, #tpu.memory_space<vmem>>) attributes {dimension_semantics = [#tpu.dimension_semantics<parallel>, #tpu.dimension_semantics<parallel>, #tpu.dimension_semantics<arbitrary>], iteration_bounds = array<i64: 1, 1, 1>, scalar_prefetch = 0 : i64, scratch_operands = 3 : i64, tpu.core_type = #tpu.core_type<tc>, window_params = [{transform_indices = @transform_0, window_bounds = array<i64: 8, 16, 8>}, {transform_indices = @transform_1, window_bounds = array<i64: 8, 16, 8>}, {transform_indices = @transform_2, window_bounds = array<i64: 8, 16, 8>}, {transform_indices = @transform_3, window_bounds = array<i64: 1>}, {transform_indices = @transform_4, window_bounds = array<i64: 8, 16, 8>}]} {
    %c0_i32 = arith.constant 0 : i32
    %0 = arith.cmpi eq, %arg2, %c0_i32 : i32
    %1 = arith.extui %0 : i1 to i32
    %c0_i32_0 = arith.constant 0 : i32
    %2 = arith.cmpi ne, %1, %c0_i32_0 : i32
    scf.if %2 {
      %cst_34 = arith.constant -1.000000e+30 : f32
      %39 = vector.broadcast %cst_34 : f32 to vector<8x16x1xf32>
      %c0_35 = arith.constant 0 : index
      %c0_36 = arith.constant 0 : index
      %c0_37 = arith.constant 0 : index
      %40 = vector.load %arg8[%c0_35, %c0_36, %c0_37] : memref<8x16x1xf32, #tpu.memory_space<vmem>>, vector<8x16x1xf32>
      tpu.vector_store %arg8[%c0_35, %c0_36, %c0_37], %39 {strides = array<i32>} : memref<8x16x1xf32, #tpu.memory_space<vmem>>, vector<8x16x1xf32>,
      %cst_38 = arith.constant 0.000000e+00 : f32
      %41 = vector.broadcast %cst_38 : f32 to vector<8x16x1xf32>
      %c0_39 = arith.constant 0 : index
      %c0_40 = arith.constant 0 : index
      %c0_41 = arith.constant 0 : index
      %42 = vector.load %arg9[%c0_39, %c0_40, %c0_41] : memref<8x16x1xf32, #tpu.memory_space<vmem>>, vector<8x16x1xf32>
      tpu.vector_store %arg9[%c0_39, %c0_40, %c0_41], %41 {strides = array<i32>} : memref<8x16x1xf32, #tpu.memory_space<vmem>>, vector<8x16x1xf32>,
      %cst_42 = arith.constant 0.000000e+00 : f32
      %43 = vector.broadcast %cst_42 : f32 to vector<8x16x8xf32>
      %c0_43 = arith.constant 0 : index
      %c0_44 = arith.constant 0 : index
      %c0_45 = arith.constant 0 : index
      %44 = vector.load %arg10[%c0_43, %c0_44, %c0_45] : memref<8x16x8xf32, #tpu.memory_space<vmem>>, vector<8x16x8xf32>
      tpu.vector_store %arg10[%c0_43, %c0_44, %c0_45], %43 {strides = array<i32>} : memref<8x16x8xf32, #tpu.memory_space<vmem>>, vector<8x16x8xf32>,
    } else {
    }
    %c0 = arith.constant 0 : index
    %3 = memref.load %arg6[%c0] : memref<1xf32, #tpu.memory_space<smem>>
    %cst = arith.constant 0.353553385 : f32
    %4 = arith.divf %cst, %3 : f32
    %c0_1 = arith.constant 0 : index
    %c0_2 = arith.constant 0 : index
    %c0_3 = arith.constant 0 : index
    %5 = vector.load %arg3[%c0_1, %c0_2, %c0_3] : memref<8x16x8xbf16, #tpu.memory_space<vmem>>, vector<8x16x8xbf16>
    %6 = arith.extf %5 : vector<8x16x8xbf16> to vector<8x16x8xf32>
    %7 = vector.broadcast %4 : f32 to vector<8x16x8xf32>
    %8 = arith.mulf %6, %7 : vector<8x16x8xf32>
    %9 = arith.truncf %8 : vector<8x16x8xf32> to vector<8x16x8xbf16>
    %c0_4 = arith.constant 0 : index
    %c0_5 = arith.constant 0 : index
    %c0_6 = arith.constant 0 : index
    %10 = vector.load %arg4[%c0_4, %c0_5, %c0_6] : memref<8x16x8xbf16, #tpu.memory_space<vmem>>, vector<8x16x8xbf16>
    "tpu.trace_start"() <{level = 10 : i32, message = "bqd,bkd->bqk"}> : () -> ()
    %cst_7 = arith.constant dense<0.000000e+00> : vector<8x16x16xf32>
    %11 = tpu.matmul %9, %10, %cst_7 {dimension_numbers = #tpu.dot_dimension_numbers<[2], [2], [1], [1], [0, 0, 0, 1, 1, 1], [0], [0]>} : vector<8x16x8xbf16>, vector<8x16x8xbf16>, vector<8x16x16xf32> -> vector<8x16x16xf32>
    "tpu.trace_stop"() : () -> ()
    %c0_8 = arith.constant 0 : index
    %c0_9 = arith.constant 0 : index
    %c0_10 = arith.constant 0 : index
    %12 = vector.load %arg8[%c0_8, %c0_9, %c0_10] : memref<8x16x1xf32, #tpu.memory_space<vmem>>, vector<8x16x1xf32>
    %cst_11 = arith.constant dense<0xFF800000> : vector<8x16xf32>
    %13 = vector.multi_reduction <maximumf>, %11, %cst_11 [2] : vector<8x16x16xf32> to vector<8x16xf32>
    %14 = vector.shape_cast %13 : vector<8x16xf32> to vector<8x16x1xf32>
    %15 = arith.maximumf %12, %14 : vector<8x16x1xf32>
    %16 = arith.subf %12, %15 : vector<8x16x1xf32>
    %17 = math.exp %16 : vector<8x16x1xf32>
    %18 = vector.broadcast %15 : vector<8x16x1xf32> to vector<8x16x16xf32>
    %19 = arith.subf %11, %18 : vector<8x16x16xf32>
    %20 = math.exp %19 : vector<8x16x16xf32>
    %c0_12 = arith.constant 0 : index
    %c0_13 = arith.constant 0 : index
    %c0_14 = arith.constant 0 : index
    %21 = vector.load %arg9[%c0_12, %c0_13, %c0_14] : memref<8x16x1xf32, #tpu.memory_space<vmem>>, vector<8x16x1xf32>
    %22 = arith.mulf %17, %21 : vector<8x16x1xf32>
    %cst_15 = arith.constant dense<0.000000e+00> : vector<8x16xf32>
    %23 = vector.multi_reduction <add>, %20, %cst_15 [2] : vector<8x16x16xf32> to vector<8x16xf32>
    %24 = vector.shape_cast %23 : vector<8x16xf32> to vector<8x16x1xf32>
    %25 = arith.addf %22, %24 : vector<8x16x1xf32>
    %c0_16 = arith.constant 0 : index
    %c0_17 = arith.constant 0 : index
    %c0_18 = arith.constant 0 : index
    %26 = vector.load %arg9[%c0_16, %c0_17, %c0_18] : memref<8x16x1xf32, #tpu.memory_space<vmem>>, vector<8x16x1xf32>
    tpu.vector_store %arg9[%c0_16, %c0_17, %c0_18], %25 {strides = array<i32>} : memref<8x16x1xf32, #tpu.memory_space<vmem>>, vector<8x16x1xf32>,
    %c0_19 = arith.constant 0 : index
    %c0_20 = arith.constant 0 : index
    %c0_21 = arith.constant 0 : index
    %27 = vector.load %arg10[%c0_19, %c0_20, %c0_21] : memref<8x16x8xf32, #tpu.memory_space<vmem>>, vector<8x16x8xf32>
    %28 = vector.broadcast %17 : vector<8x16x1xf32> to vector<8x16x8xf32>
    %29 = arith.mulf %28, %27 : vector<8x16x8xf32>
    %30 = arith.truncf %20 : vector<8x16x16xf32> to vector<8x16x16xbf16>
    %c0_22 = arith.constant 0 : index
    %c0_23 = arith.constant 0 : index
    %c0_24 = arith.constant 0 : index
    %31 = vector.load %arg5[%c0_22, %c0_23, %c0_24] : memref<8x16x8xbf16, #tpu.memory_space<vmem>>, vector<8x16x8xbf16>
    "tpu.trace_start"() <{level = 10 : i32, message = "bqk,bkd->bqd"}> : () -> ()
    %cst_25 = arith.constant dense<0.000000e+00> : vector<8x16x8xf32>
    %32 = tpu.matmul %30, %31, %cst_25 {dimension_numbers = #tpu.dot_dimension_numbers<[2], [1], [1], [2], [0, 0, 0, 1, 1, 2], [0], [0]>} : vector<8x16x16xbf16>, vector<8x16x8xbf16>, vector<8x16x8xf32> -> vector<8x16x8xf32>
    "tpu.trace_stop"() : () -> ()
    %33 = arith.addf %29, %32 : vector<8x16x8xf32>
    %c0_26 = arith.constant 0 : index
    %c0_27 = arith.constant 0 : index
    %c0_28 = arith.constant 0 : index
    %34 = vector.load %arg10[%c0_26, %c0_27, %c0_28] : memref<8x16x8xf32, #tpu.memory_space<vmem>>, vector<8x16x8xf32>
    tpu.vector_store %arg10[%c0_26, %c0_27, %c0_28], %33 {strides = array<i32>} : memref<8x16x8xf32, #tpu.memory_space<vmem>>, vector<8x16x8xf32>,
    %c0_29 = arith.constant 0 : index
    %c0_30 = arith.constant 0 : index
    %c0_31 = arith.constant 0 : index
    %35 = vector.load %arg8[%c0_29, %c0_30, %c0_31] : memref<8x16x1xf32, #tpu.memory_space<vmem>>, vector<8x16x1xf32>
    tpu.vector_store %arg8[%c0_29, %c0_30, %c0_31], %15 {strides = array<i32>} : memref<8x16x1xf32, #tpu.memory_space<vmem>>, vector<8x16x1xf32>,
    %c0_i32_32 = arith.constant 0 : i32
    %36 = arith.cmpi eq, %arg2, %c0_i32_32 : i32
    %37 = arith.extui %36 : i1 to i32
    %c0_i32_33 = arith.constant 0 : i32
    %38 = arith.cmpi ne, %37, %c0_i32_33 : i32
    scf.if %38 {
      %c0_34 = arith.constant 0 : index
      %c0_35 = arith.constant 0 : index
      %c0_36 = arith.constant 0 : index
      %39 = vector.load %arg10[%c0_34, %c0_35, %c0_36] : memref<8x16x8xf32, #tpu.memory_space<vmem>>, vector<8x16x8xf32>
      %c0_37 = arith.constant 0 : index
      %c0_38 = arith.constant 0 : index
      %c0_39 = arith.constant 0 : index
      %40 = vector.load %arg9[%c0_37, %c0_38, %c0_39] : memref<8x16x1xf32, #tpu.memory_space<vmem>>, vector<8x16x1xf32>
      %41 = tpu.reciprocal %40 {approx = true} : vector<8x16x1xf32> -> vector<8x16x1xf32>
      %42 = vector.broadcast %41 : vector<8x16x1xf32> to vector<8x16x8xf32>
      %43 = arith.mulf %39, %42 : vector<8x16x8xf32>
      %44 = arith.truncf %43 : vector<8x16x8xf32> to vector<8x16x8xbf16>
      %c0_40 = arith.constant 0 : index
      %c0_41 = arith.constant 0 : index
      %c0_42 = arith.constant 0 : index
      %45 = vector.load %arg7[%c0_40, %c0_41, %c0_42] : memref<8x16x8xbf16, #tpu.memory_space<vmem>>, vector<8x16x8xbf16>
      tpu.vector_store %arg7[%c0_40, %c0_41, %c0_42], %44 {strides = array<i32>} : memref<8x16x8xbf16, #tpu.memory_space<vmem>>, vector<8x16x8xbf16>,
    } else {
    }
    return
  }
  func.func @transform_0(%arg0: i32, %arg1: i32, %arg2: i32) -> (i32, i32, i32) {
    %c0_i32 = arith.constant 0 : i32
    %c0_i32_0 = arith.constant 0 : i32
    return %arg0, %arg1, %c0_i32 : i32, i32, i32
  }
  func.func @transform_1(%arg0: i32, %arg1: i32, %arg2: i32) -> (i32, i32, i32) {
    %c0_i32 = arith.constant 0 : i32
    %c0_i32_0 = arith.constant 0 : i32
    return %arg0, %arg2, %c0_i32 : i32, i32, i32
  }
  func.func @transform_2(%arg0: i32, %arg1: i32, %arg2: i32) -> (i32, i32, i32) {
    %c0_i32 = arith.constant 0 : i32
    %c0_i32_0 = arith.constant 0 : i32
    return %arg0, %arg2, %c0_i32 : i32, i32, i32
  }
  func.func @transform_3(%arg0: i32, %arg1: i32, %arg2: i32) -> i32 {
    %c0_i32 = arith.constant 0 : i32
    %c0_i32_0 = arith.constant 0 : i32
    return %c0_i32 : i32
  }
  func.func @transform_4(%arg0: i32, %arg1: i32, %arg2: i32) -> (i32, i32, i32) {
    %c0_i32 = arith.constant 0 : i32
    %c0_i32_0 = arith.constant 0 : i32
    return %arg0, %arg1, %c0_i32 : i32, i32, i32
  }
}

module attributes {stable_mosaic.version = 11 : i64} {
  func.func @kernel(%arg0: i32, %arg1: i32, %arg2: i32, %arg3: memref<32x32xbf16, #tpu.memory_space<vmem>>, %arg4: memref<32x32xbf16, #tpu.memory_space<vmem>>, %arg5: memref<1x32xf32, #tpu.memory_space<vmem>>, %arg6: memref<32x32xf32, #tpu.memory_space<vmem>>, %arg7: memref<32x32xf32, #tpu.memory_space<vmem>>) attributes {dimension_semantics = [#tpu.dimension_semantics<parallel>, #tpu.dimension_semantics<parallel>, #tpu.dimension_semantics<arbitrary>], iteration_bounds = array<i64: 1, 1, 1>, scalar_prefetch = 0 : i64, scratch_operands = 0 : i64, tpu.core_type = #tpu.core_type<tc>, window_params = [{transform_indices = @transform_0, window_bounds = array<i64: 32, 32>}, {transform_indices = @transform_1, window_bounds = array<i64: 32, 32>}, {transform_indices = @transform_2, window_bounds = array<i64: 1, 32>}, {transform_indices = @transform_3, window_bounds = array<i64: 32, 32>}, {transform_indices = @transform_4, window_bounds = array<i64: 32, 32>}]} {
    %c0 = arith.constant 0 : index
    %c0_0 = arith.constant 0 : index
    %0 = vector.load %arg3[%c0, %c0_0] : memref<32x32xbf16, #tpu.memory_space<vmem>>, vector<32x32xbf16>
    %c0_1 = arith.constant 0 : index
    %c0_2 = arith.constant 0 : index
    %1 = vector.load %arg4[%c0_1, %c0_2] : memref<32x32xbf16, #tpu.memory_space<vmem>>, vector<32x32xbf16>
    %cst = arith.constant dense<0.000000e+00> : vector<32x32xf32>
    %2 = tpu.matmul %0, %1, %cst {dimension_numbers = #tpu.dot_dimension_numbers<[1], [0], [0], [1], [0, 0, 1, 1], [], []>} : vector<32x32xbf16>, vector<32x32xbf16>, vector<32x32xf32> -> vector<32x32xf32>
    %c0_3 = arith.constant 0 : index
    %c0_4 = arith.constant 0 : index
    %3 = vector.load %arg5[%c0_3, %c0_4] : memref<1x32xf32, #tpu.memory_space<vmem>>, vector<1x32xf32>
    %4 = vector.broadcast %3 : vector<1x32xf32> to vector<32x32xf32>
    %5 = arith.addf %2, %4 : vector<32x32xf32>
    %c0_5 = arith.constant 0 : index
    %c0_6 = arith.constant 0 : index
    %6 = vector.load %arg6[%c0_5, %c0_6] : memref<32x32xf32, #tpu.memory_space<vmem>>, vector<32x32xf32>
    %7 = arith.addf %5, %6 : vector<32x32xf32>
    %c0_7 = arith.constant 0 : index
    %c0_8 = arith.constant 0 : index
    %8 = vector.load %arg7[%c0_7, %c0_8] : memref<32x32xf32, #tpu.memory_space<vmem>>, vector<32x32xf32>
    tpu.vector_store %arg7[%c0_7, %c0_8], %7 {strides = array<i32>} : memref<32x32xf32, #tpu.memory_space<vmem>>, vector<32x32xf32>,
    return
  }
  func.func @transform_0(%arg0: i32, %arg1: i32, %arg2: i32) -> (i32, i32) {
    %c0_i32 = arith.constant 0 : i32
    return %arg1, %arg2 : i32, i32
  }
  func.func @transform_1(%arg0: i32, %arg1: i32, %arg2: i32) -> (i32, i32) {
    %c0_i32 = arith.constant 0 : i32
    return %arg2, %arg0 : i32, i32
  }
  func.func @transform_2(%arg0: i32, %arg1: i32, %arg2: i32) -> (i32, i32) {
    %c0_i32 = arith.constant 0 : i32
    %c0_i32_0 = arith.constant 0 : i32
    return %c0_i32, %arg0 : i32, i32
  }
  func.func @transform_3(%arg0: i32, %arg1: i32, %arg2: i32) -> (i32, i32) {
    %c0_i32 = arith.constant 0 : i32
    return %arg1, %arg0 : i32, i32
  }
  func.func @transform_4(%arg0: i32, %arg1: i32, %arg2: i32) -> (i32, i32) {
    %c0_i32 = arith.constant 0 : i32
    return %arg1, %arg0 : i32, i32
  }
}

module attributes {stable_mosaic.version = 11 : i64} {
  func.func @kernel(%arg0: i32, %arg1: i32, %arg2: i32, %arg3: memref<32x32xbf16, #tpu.memory_space<vmem>>, %arg4: memref<32x128xbf16, #tpu.memory_space<vmem>>, %arg5: memref<1x128xf32, #tpu.memory_space<vmem>>, %arg6: memref<32x128xbf16, #tpu.memory_space<vmem>>) attributes {dimension_semantics = [#tpu.dimension_semantics<parallel>, #tpu.dimension_semantics<parallel>, #tpu.dimension_semantics<arbitrary>], iteration_bounds = array<i64: 1, 1, 1>, scalar_prefetch = 0 : i64, scratch_operands = 0 : i64, tpu.core_type = #tpu.core_type<tc>, window_params = [{transform_indices = @transform_0, window_bounds = array<i64: 32, 32>}, {transform_indices = @transform_1, window_bounds = array<i64: 32, 128>}, {transform_indices = @transform_2, window_bounds = array<i64: 1, 128>}, {transform_indices = @transform_3, window_bounds = array<i64: 32, 128>}]} {
    %c0 = arith.constant 0 : index
    %c0_0 = arith.constant 0 : index
    %0 = vector.load %arg3[%c0, %c0_0] : memref<32x32xbf16, #tpu.memory_space<vmem>>, vector<32x32xbf16>
    %c0_1 = arith.constant 0 : index
    %c0_2 = arith.constant 0 : index
    %1 = vector.load %arg4[%c0_1, %c0_2] : memref<32x128xbf16, #tpu.memory_space<vmem>>, vector<32x128xbf16>
    %cst = arith.constant dense<0.000000e+00> : vector<32x128xf32>
    %2 = tpu.matmul %0, %1, %cst {dimension_numbers = #tpu.dot_dimension_numbers<[1], [0], [0], [1], [0, 0, 1, 1], [], []>} : vector<32x32xbf16>, vector<32x128xbf16>, vector<32x128xf32> -> vector<32x128xf32>
    %c0_3 = arith.constant 0 : index
    %c0_4 = arith.constant 0 : index
    %3 = vector.load %arg5[%c0_3, %c0_4] : memref<1x128xf32, #tpu.memory_space<vmem>>, vector<1x128xf32>
    %4 = vector.broadcast %3 : vector<1x128xf32> to vector<32x128xf32>
    %5 = arith.addf %2, %4 : vector<32x128xf32>
    %6 = arith.mulf %5, %5 : vector<32x128xf32>
    %7 = arith.mulf %5, %6 : vector<32x128xf32>
    %cst_5 = arith.constant 4.471500e-02 : f32
    %8 = vector.broadcast %cst_5 : f32 to vector<32x128xf32>
    %9 = arith.mulf %8, %7 : vector<32x128xf32>
    %10 = arith.addf %5, %9 : vector<32x128xf32>
    %cst_6 = arith.constant 0.797884583 : f32
    %11 = vector.broadcast %cst_6 : f32 to vector<32x128xf32>
    %12 = arith.mulf %11, %10 : vector<32x128xf32>
    %13 = math.tanh %12 : vector<32x128xf32>
    %cst_7 = arith.constant 1.000000e+00 : f32
    %14 = vector.broadcast %cst_7 : f32 to vector<32x128xf32>
    %15 = arith.addf %14, %13 : vector<32x128xf32>
    %cst_8 = arith.constant 5.000000e-01 : f32
    %16 = vector.broadcast %cst_8 : f32 to vector<32x128xf32>
    %17 = arith.mulf %16, %15 : vector<32x128xf32>
    %18 = arith.mulf %5, %17 : vector<32x128xf32>
    %19 = arith.truncf %18 : vector<32x128xf32> to vector<32x128xbf16>
    %c0_9 = arith.constant 0 : index
    %c0_10 = arith.constant 0 : index
    %20 = vector.load %arg6[%c0_9, %c0_10] : memref<32x128xbf16, #tpu.memory_space<vmem>>, vector<32x128xbf16>
    tpu.vector_store %arg6[%c0_9, %c0_10], %19 {strides = array<i32>} : memref<32x128xbf16, #tpu.memory_space<vmem>>, vector<32x128xbf16>,
    return
  }
  func.func @transform_0(%arg0: i32, %arg1: i32, %arg2: i32) -> (i32, i32) {
    %c0_i32 = arith.constant 0 : i32
    return %arg1, %arg2 : i32, i32
  }
  func.func @transform_1(%arg0: i32, %arg1: i32, %arg2: i32) -> (i32, i32) {
    %c0_i32 = arith.constant 0 : i32
    return %arg2, %arg0 : i32, i32
  }
  func.func @transform_2(%arg0: i32, %arg1: i32, %arg2: i32) -> (i32, i32) {
    %c0_i32 = arith.constant 0 : i32
    %c0_i32_0 = arith.constant 0 : i32
    return %c0_i32, %arg0 : i32, i32
  }
  func.func @transform_3(%arg0: i32, %arg1: i32, %arg2: i32) -> (i32, i32) {
    %c0_i32 = arith.constant 0 : i32
    return %arg1, %arg0 : i32, i32
  }
}

module attributes {stable_mosaic.version = 11 : i64} {
  func.func @kernel(%arg0: i32, %arg1: i32, %arg2: i32, %arg3: memref<32x128xbf16, #tpu.memory_space<vmem>>, %arg4: memref<128x32xbf16, #tpu.memory_space<vmem>>, %arg5: memref<1x32xf32, #tpu.memory_space<vmem>>, %arg6: memref<32x32xf32, #tpu.memory_space<vmem>>, %arg7: memref<32x32xf32, #tpu.memory_space<vmem>>) attributes {dimension_semantics = [#tpu.dimension_semantics<parallel>, #tpu.dimension_semantics<parallel>, #tpu.dimension_semantics<arbitrary>], iteration_bounds = array<i64: 1, 1, 1>, scalar_prefetch = 0 : i64, scratch_operands = 0 : i64, tpu.core_type = #tpu.core_type<tc>, window_params = [{transform_indices = @transform_0, window_bounds = array<i64: 32, 128>}, {transform_indices = @transform_1, window_bounds = array<i64: 128, 32>}, {transform_indices = @transform_2, window_bounds = array<i64: 1, 32>}, {transform_indices = @transform_3, window_bounds = array<i64: 32, 32>}, {transform_indices = @transform_4, window_bounds = array<i64: 32, 32>}]} {
    %c0 = arith.constant 0 : index
    %c0_0 = arith.constant 0 : index
    %0 = vector.load %arg3[%c0, %c0_0] : memref<32x128xbf16, #tpu.memory_space<vmem>>, vector<32x128xbf16>
    %c0_1 = arith.constant 0 : index
    %c0_2 = arith.constant 0 : index
    %1 = vector.load %arg4[%c0_1, %c0_2] : memref<128x32xbf16, #tpu.memory_space<vmem>>, vector<128x32xbf16>
    %cst = arith.constant dense<0.000000e+00> : vector<32x32xf32>
    %2 = tpu.matmul %0, %1, %cst {dimension_numbers = #tpu.dot_dimension_numbers<[1], [0], [0], [1], [0, 0, 1, 1], [], []>} : vector<32x128xbf16>, vector<128x32xbf16>, vector<32x32xf32> -> vector<32x32xf32>
    %c0_3 = arith.constant 0 : index
    %c0_4 = arith.constant 0 : index
    %3 = vector.load %arg5[%c0_3, %c0_4] : memref<1x32xf32, #tpu.memory_space<vmem>>, vector<1x32xf32>
    %4 = vector.broadcast %3 : vector<1x32xf32> to vector<32x32xf32>
    %5 = arith.addf %2, %4 : vector<32x32xf32>
    %c0_5 = arith.constant 0 : index
    %c0_6 = arith.constant 0 : index
    %6 = vector.load %arg6[%c0_5, %c0_6] : memref<32x32xf32, #tpu.memory_space<vmem>>, vector<32x32xf32>
    %7 = arith.addf %5, %6 : vector<32x32xf32>
    %c0_7 = arith.constant 0 : index
    %c0_8 = arith.constant 0 : index
    %8 = vector.load %arg7[%c0_7, %c0_8] : memref<32x32xf32, #tpu.memory_space<vmem>>, vector<32x32xf32>
    tpu.vector_store %arg7[%c0_7, %c0_8], %7 {strides = array<i32>} : memref<32x32xf32, #tpu.memory_space<vmem>>, vector<32x32xf32>,
    return
  }
  func.func @transform_0(%arg0: i32, %arg1: i32, %arg2: i32) -> (i32, i32) {
    %c0_i32 = arith.constant 0 : i32
    return %arg1, %arg2 : i32, i32
  }
  func.func @transform_1(%arg0: i32, %arg1: i32, %arg2: i32) -> (i32, i32) {
    %c0_i32 = arith.constant 0 : i32
    return %arg2, %arg0 : i32, i32
  }
  func.func @transform_2(%arg0: i32, %arg1: i32, %arg2: i32) -> (i32, i32) {
    %c0_i32 = arith.constant 0 : i32
    %c0_i32_0 = arith.constant 0 : i32
    return %c0_i32, %arg0 : i32, i32
  }
  func.func @transform_3(%arg0: i32, %arg1: i32, %arg2: i32) -> (i32, i32) {
    %c0_i32 = arith.constant 0 : i32
    return %arg1, %arg0 : i32, i32
  }
  func.func @transform_4(%arg0: i32, %arg1: i32, %arg2: i32) -> (i32, i32) {
    %c0_i32 = arith.constant 0 : i32
    return %arg1, %arg0 : i32, i32
  }
}

module attributes {stable_mosaic.version = 11 : i64} {
  func.func @kernel(%arg0: i32, %arg1: i32, %arg2: i32, %arg3: memref<32x32xbf16, #tpu.memory_space<vmem>>, %arg4: memref<32x64xbf16, #tpu.memory_space<vmem>>, %arg5: memref<1x64xf32, #tpu.memory_space<vmem>>, %arg6: memref<32x64xbf16, #tpu.memory_space<vmem>>) attributes {dimension_semantics = [#tpu.dimension_semantics<parallel>, #tpu.dimension_semantics<parallel>, #tpu.dimension_semantics<arbitrary>], iteration_bounds = array<i64: 1, 1, 1>, scalar_prefetch = 0 : i64, scratch_operands = 0 : i64, tpu.core_type = #tpu.core_type<tc>, window_params = [{transform_indices = @transform_0, window_bounds = array<i64: 32, 32>}, {transform_indices = @transform_1, window_bounds = array<i64: 32, 64>}, {transform_indices = @transform_2, window_bounds = array<i64: 1, 64>}, {transform_indices = @transform_3, window_bounds = array<i64: 32, 64>}]} {
    %c0 = arith.constant 0 : index
    %c0_0 = arith.constant 0 : index
    %0 = vector.load %arg3[%c0, %c0_0] : memref<32x32xbf16, #tpu.memory_space<vmem>>, vector<32x32xbf16>
    %c0_1 = arith.constant 0 : index
    %c0_2 = arith.constant 0 : index
    %1 = vector.load %arg4[%c0_1, %c0_2] : memref<32x64xbf16, #tpu.memory_space<vmem>>, vector<32x64xbf16>
    %cst = arith.constant dense<0.000000e+00> : vector<32x64xf32>
    %2 = tpu.matmul %0, %1, %cst {dimension_numbers = #tpu.dot_dimension_numbers<[1], [0], [0], [1], [0, 0, 1, 1], [], []>} : vector<32x32xbf16>, vector<32x64xbf16>, vector<32x64xf32> -> vector<32x64xf32>
    %c0_3 = arith.constant 0 : index
    %c0_4 = arith.constant 0 : index
    %3 = vector.load %arg5[%c0_3, %c0_4] : memref<1x64xf32, #tpu.memory_space<vmem>>, vector<1x64xf32>
    %4 = vector.broadcast %3 : vector<1x64xf32> to vector<32x64xf32>
    %5 = arith.addf %2, %4 : vector<32x64xf32>
    %6 = arith.truncf %5 : vector<32x64xf32> to vector<32x64xbf16>
    %c0_5 = arith.constant 0 : index
    %c0_6 = arith.constant 0 : index
    %7 = vector.load %arg6[%c0_5, %c0_6] : memref<32x64xbf16, #tpu.memory_space<vmem>>, vector<32x64xbf16>
    tpu.vector_store %arg6[%c0_5, %c0_6], %6 {strides = array<i32>} : memref<32x64xbf16, #tpu.memory_space<vmem>>, vector<32x64xbf16>,
    return
  }
  func.func @transform_0(%arg0: i32, %arg1: i32, %arg2: i32) -> (i32, i32) {
    %c0_i32 = arith.constant 0 : i32
    return %arg1, %arg2 : i32, i32
  }
  func.func @transform_1(%arg0: i32, %arg1: i32, %arg2: i32) -> (i32, i32) {
    %c0_i32 = arith.constant 0 : i32
    return %arg2, %arg0 : i32, i32
  }
  func.func @transform_2(%arg0: i32, %arg1: i32, %arg2: i32) -> (i32, i32) {
    %c0_i32 = arith.constant 0 : i32
    %c0_i32_0 = arith.constant 0 : i32
    return %c0_i32, %arg0 : i32, i32
  }
  func.func @transform_3(%arg0: i32, %arg1: i32, %arg2: i32) -> (i32, i32) {
    %c0_i32 = arith.constant 0 : i32
    return %arg1, %arg0 : i32, i32
  }
}

module attributes {stable_mosaic.version = 11 : i64} {
  func.func @kernel(%arg0: i32, %arg1: i32, %arg2: i32, %arg3: memref<16x32xbf16, #tpu.memory_space<vmem>>, %arg4: memref<32x96xbf16, #tpu.memory_space<vmem>>, %arg5: memref<1x96xf32, #tpu.memory_space<vmem>>, %arg6: memref<16x96xbf16, #tpu.memory_space<vmem>>) attributes {dimension_semantics = [#tpu.dimension_semantics<parallel>, #tpu.dimension_semantics<parallel>, #tpu.dimension_semantics<arbitrary>], iteration_bounds = array<i64: 1, 1, 1>, scalar_prefetch = 0 : i64, scratch_operands = 0 : i64, tpu.core_type = #tpu.core_type<tc>, window_params = [{transform_indices = @transform_0, window_bounds = array<i64: 16, 32>}, {transform_indices = @transform_1, window_bounds = array<i64: 32, 96>}, {transform_indices = @transform_2, window_bounds = array<i64: 1, 96>}, {transform_indices = @transform_3, window_bounds = array<i64: 16, 96>}]} {
    %c0 = arith.constant 0 : index
    %c0_0 = arith.constant 0 : index
    %0 = vector.load %arg3[%c0, %c0_0] : memref<16x32xbf16, #tpu.memory_space<vmem>>, vector<16x32xbf16>
    %c0_1 = arith.constant 0 : index
    %c0_2 = arith.constant 0 : index
    %1 = vector.load %arg4[%c0_1, %c0_2] : memref<32x96xbf16, #tpu.memory_space<vmem>>, vector<32x96xbf16>
    %cst = arith.constant dense<0.000000e+00> : vector<16x96xf32>
    %2 = tpu.matmul %0, %1, %cst {dimension_numbers = #tpu.dot_dimension_numbers<[1], [0], [0], [1], [0, 0, 1, 1], [], []>} : vector<16x32xbf16>, vector<32x96xbf16>, vector<16x96xf32> -> vector<16x96xf32>
    %c0_3 = arith.constant 0 : index
    %c0_4 = arith.constant 0 : index
    %3 = vector.load %arg5[%c0_3, %c0_4] : memref<1x96xf32, #tpu.memory_space<vmem>>, vector<1x96xf32>
    %4 = vector.broadcast %3 : vector<1x96xf32> to vector<16x96xf32>
    %5 = arith.addf %2, %4 : vector<16x96xf32>
    %6 = arith.truncf %5 : vector<16x96xf32> to vector<16x96xbf16>
    %c0_5 = arith.constant 0 : index
    %c0_6 = arith.constant 0 : index
    %7 = vector.load %arg6[%c0_5, %c0_6] : memref<16x96xbf16, #tpu.memory_space<vmem>>, vector<16x96xbf16>
    tpu.vector_store %arg6[%c0_5, %c0_6], %6 {strides = array<i32>} : memref<16x96xbf16, #tpu.memory_space<vmem>>, vector<16x96xbf16>,
    return
  }
  func.func @transform_0(%arg0: i32, %arg1: i32, %arg2: i32) -> (i32, i32) {
    %c0_i32 = arith.constant 0 : i32
    return %arg1, %arg2 : i32, i32
  }
  func.func @transform_1(%arg0: i32, %arg1: i32, %arg2: i32) -> (i32, i32) {
    %c0_i32 = arith.constant 0 : i32
    return %arg2, %arg0 : i32, i32
  }
  func.func @transform_2(%arg0: i32, %arg1: i32, %arg2: i32) -> (i32, i32) {
    %c0_i32 = arith.constant 0 : i32
    %c0_i32_0 = arith.constant 0 : i32
    return %c0_i32, %arg0 : i32, i32
  }
  func.func @transform_3(%arg0: i32, %arg1: i32, %arg2: i32) -> (i32, i32) {
    %c0_i32 = arith.constant 0 : i32
    return %arg1, %arg0 : i32, i32
  }
}

module attributes {stable_mosaic.version = 11 : i64} {
  func.func @kernel(%arg0: i32, %arg1: memref<16x32xf32, #tpu.memory_space<vmem>>, %arg2: memref<1x32xf32, #tpu.memory_space<vmem>>, %arg3: memref<1x32xf32, #tpu.memory_space<vmem>>, %arg4: memref<16x32xbf16, #tpu.memory_space<vmem>>) attributes {dimension_semantics = [#tpu.dimension_semantics<parallel>], iteration_bounds = array<i64: 1>, scalar_prefetch = 0 : i64, scratch_operands = 0 : i64, tpu.core_type = #tpu.core_type<tc>, window_params = [{transform_indices = @transform_0, window_bounds = array<i64: 16, 32>}, {pipeline_mode = #tpu.pipeline_mode<synchronous>, transform_indices = @transform_1, window_bounds = array<i64: 1, 32>}, {pipeline_mode = #tpu.pipeline_mode<synchronous>, transform_indices = @transform_2, window_bounds = array<i64: 1, 32>}, {transform_indices = @transform_3, window_bounds = array<i64: 16, 32>}]} {
    %c0 = arith.constant 0 : index
    %c0_0 = arith.constant 0 : index
    %0 = vector.load %arg1[%c0, %c0_0] : memref<16x32xf32, #tpu.memory_space<vmem>>, vector<16x32xf32>
    %cst = arith.constant dense<0.000000e+00> : vector<16xf32>
    %1 = vector.multi_reduction <add>, %0, %cst [1] : vector<16x32xf32> to vector<16xf32>
    %2 = vector.shape_cast %1 : vector<16xf32> to vector<16x1xf32>
    %cst_1 = arith.constant 3.200000e+01 : f32
    %3 = vector.broadcast %cst_1 : f32 to vector<16x1xf32>
    %4 = arith.divf %2, %3 : vector<16x1xf32>
    %5 = vector.broadcast %4 : vector<16x1xf32> to vector<16x32xf32>
    %6 = arith.subf %0, %5 : vector<16x32xf32>
    %7 = arith.mulf %6, %6 : vector<16x32xf32>
    %cst_2 = arith.constant dense<0.000000e+00> : vector<16xf32>
    %8 = vector.multi_reduction <add>, %7, %cst_2 [1] : vector<16x32xf32> to vector<16xf32>
    %9 = vector.shape_cast %8 : vector<16xf32> to vector<16x1xf32>
    %cst_3 = arith.constant 3.200000e+01 : f32
    %10 = vector.broadcast %cst_3 : f32 to vector<16x1xf32>
    %11 = arith.divf %9, %10 : vector<16x1xf32>
    %12 = vector.broadcast %4 : vector<16x1xf32> to vector<16x32xf32>
    %13 = arith.subf %0, %12 : vector<16x32xf32>
    %cst_4 = arith.constant 9.99999974E-6 : f32
    %14 = vector.broadcast %cst_4 : f32 to vector<16x1xf32>
    %15 = arith.addf %11, %14 : vector<16x1xf32>
    %16 = math.rsqrt %15 : vector<16x1xf32>
    %17 = vector.broadcast %16 : vector<16x1xf32> to vector<16x32xf32>
    %18 = arith.mulf %13, %17 : vector<16x32xf32>
    %c0_5 = arith.constant 0 : index
    %c0_6 = arith.constant 0 : index
    %19 = vector.load %arg2[%c0_5, %c0_6] : memref<1x32xf32, #tpu.memory_space<vmem>>, vector<1x32xf32>
    %20 = vector.broadcast %19 : vector<1x32xf32> to vector<16x32xf32>
    %21 = arith.mulf %18, %20 : vector<16x32xf32>
    %c0_7 = arith.constant 0 : index
    %c0_8 = arith.constant 0 : index
    %22 = vector.load %arg3[%c0_7, %c0_8] : memref<1x32xf32, #tpu.memory_space<vmem>>, vector<1x32xf32>
    %23 = vector.broadcast %22 : vector<1x32xf32> to vector<16x32xf32>
    %24 = arith.addf %21, %23 : vector<16x32xf32>
    %25 = arith.truncf %24 : vector<16x32xf32> to vector<16x32xbf16>
    %c0_9 = arith.constant 0 : index
    %c0_10 = arith.constant 0 : index
    %26 = vector.load %arg4[%c0_9, %c0_10] : memref<16x32xbf16, #tpu.memory_space<vmem>>, vector<16x32xbf16>
    tpu.vector_store %arg4[%c0_9, %c0_10], %25 {strides = array<i32>} : memref<16x32xbf16, #tpu.memory_space<vmem>>, vector<16x32xbf16>,
    return
  }
  func.func @transform_0(%arg0: i32) -> (i32, i32) {
    %c0_i32 = arith.constant 0 : i32
    %c0_i32_0 = arith.constant 0 : i32
    return %arg0, %c0_i32 : i32, i32
  }
  func.func @transform_1(%arg0: i32) -> (i32, i32) {
    %c0_i32 = arith.constant 0 : i32
    %c0_i32_0 = arith.constant 0 : i32
    %c0_i32_1 = arith.constant 0 : i32
    return %c0_i32, %c0_i32_0 : i32, i32
  }
  func.func @transform_2(%arg0: i32) -> (i32, i32) {
    %c0_i32 = arith.constant 0 : i32
    %c0_i32_0 = arith.constant 0 : i32
    %c0_i32_1 = arith.constant 0 : i32
    return %c0_i32, %c0_i32_0 : i32, i32
  }
  func.func @transform_3(%arg0: i32) -> (i32, i32) {
    %c0_i32 = arith.constant 0 : i32
    %c0_i32_0 = arith.constant 0 : i32
    return %arg0, %c0_i32 : i32, i32
  }
}

module attributes {stable_mosaic.version = 11 : i64} {
  func.func @kernel(%arg0: i32, %arg1: i32, %arg2: i32, %arg3: memref<8x8x8xbf16, #tpu.memory_space<vmem>>, %arg4: memref<8x8x8xbf16, #tpu.memory_space<vmem>>, %arg5: memref<8x8x8xbf16, #tpu.memory_space<vmem>>, %arg6: memref<1xf32, #tpu.memory_space<smem>>, %arg7: memref<8x8x8xbf16, #tpu.memory_space<vmem>>, %arg8: memref<8x8x1xf32, #tpu.memory_space<vmem>>, %arg9: memref<8x8x1xf32, #tpu.memory_space<vmem>>, %arg10: memref<8x8x8xf32, #tpu.memory_space<vmem>>) attributes {dimension_semantics = [#tpu.dimension_semantics<parallel>, #tpu.dimension_semantics<parallel>, #tpu.dimension_semantics<arbitrary>], iteration_bounds = array<i64: 1, 1, 1>, scalar_prefetch = 0 : i64, scratch_operands = 3 : i64, tpu.core_type = #tpu.core_type<tc>, window_params = [{transform_indices = @transform_0, window_bounds = array<i64: 8, 8, 8>}, {transform_indices = @transform_1, window_bounds = array<i64: 8, 8, 8>}, {transform_indices = @transform_2, window_bounds = array<i64: 8, 8, 8>}, {transform_indices = @transform_3, window_bounds = array<i64: 1>}, {transform_indices = @transform_4, window_bounds = array<i64: 8, 8, 8>}]} {
    %c0_i32 = arith.constant 0 : i32
    %0 = arith.cmpi eq, %arg2, %c0_i32 : i32
    %1 = arith.extui %0 : i1 to i32
    %c0_i32_0 = arith.constant 0 : i32
    %2 = arith.cmpi ne, %1, %c0_i32_0 : i32
    scf.if %2 {
      %cst_37 = arith.constant -1.000000e+30 : f32
      %54 = vector.broadcast %cst_37 : f32 to vector<8x8x1xf32>
      %c0_38 = arith.constant 0 : index
      %c0_39 = arith.constant 0 : index
      %c0_40 = arith.constant 0 : index
      %55 = vector.load %arg8[%c0_38, %c0_39, %c0_40] : memref<8x8x1xf32, #tpu.memory_space<vmem>>, vector<8x8x1xf32>
      tpu.vector_store %arg8[%c0_38, %c0_39, %c0_40], %54 {strides = array<i32>} : memref<8x8x1xf32, #tpu.memory_space<vmem>>, vector<8x8x1xf32>,
      %cst_41 = arith.constant 0.000000e+00 : f32
      %56 = vector.broadcast %cst_41 : f32 to vector<8x8x1xf32>
      %c0_42 = arith.constant 0 : index
      %c0_43 = arith.constant 0 : index
      %c0_44 = arith.constant 0 : index
      %57 = vector.load %arg9[%c0_42, %c0_43, %c0_44] : memref<8x8x1xf32, #tpu.memory_space<vmem>>, vector<8x8x1xf32>
      tpu.vector_store %arg9[%c0_42, %c0_43, %c0_44], %56 {strides = array<i32>} : memref<8x8x1xf32, #tpu.memory_space<vmem>>, vector<8x8x1xf32>,
      %cst_45 = arith.constant 0.000000e+00 : f32
      %58 = vector.broadcast %cst_45 : f32 to vector<8x8x8xf32>
      %c0_46 = arith.constant 0 : index
      %c0_47 = arith.constant 0 : index
      %c0_48 = arith.constant 0 : index
      %59 = vector.load %arg10[%c0_46, %c0_47, %c0_48] : memref<8x8x8xf32, #tpu.memory_space<vmem>>, vector<8x8x8xf32>
      tpu.vector_store %arg10[%c0_46, %c0_47, %c0_48], %58 {strides = array<i32>} : memref<8x8x8xf32, #tpu.memory_space<vmem>>, vector<8x8x8xf32>,
    } else {
    }
    %c0 = arith.constant 0 : index
    %3 = memref.load %arg6[%c0] : memref<1xf32, #tpu.memory_space<smem>>
    %cst = arith.constant 0.353553385 : f32
    %4 = arith.divf %cst, %3 : f32
    %c0_1 = arith.constant 0 : index
    %c0_2 = arith.constant 0 : index
    %c0_3 = arith.constant 0 : index
    %5 = vector.load %arg3[%c0_1, %c0_2, %c0_3] : memref<8x8x8xbf16, #tpu.memory_space<vmem>>, vector<8x8x8xbf16>
    %6 = arith.extf %5 : vector<8x8x8xbf16> to vector<8x8x8xf32>
    %7 = vector.broadcast %4 : f32 to vector<8x8x8xf32>
    %8 = arith.mulf %6, %7 : vector<8x8x8xf32>
    %9 = arith.truncf %8 : vector<8x8x8xf32> to vector<8x8x8xbf16>
    %c0_4 = arith.constant 0 : index
    %c0_5 = arith.constant 0 : index
    %c0_6 = arith.constant 0 : index
    %10 = vector.load %arg4[%c0_4, %c0_5, %c0_6] : memref<8x8x8xbf16, #tpu.memory_space<vmem>>, vector<8x8x8xbf16>
    "tpu.trace_start"() <{level = 10 : i32, message = "bqd,bkd->bqk"}> : () -> ()
    %cst_7 = arith.constant dense<0.000000e+00> : vector<8x8x8xf32>
    %11 = tpu.matmul %9, %10, %cst_7 {dimension_numbers = #tpu.dot_dimension_numbers<[2], [2], [1], [1], [0, 0, 0, 1, 1, 1], [0], [0]>} : vector<8x8x8xbf16>, vector<8x8x8xbf16>, vector<8x8x8xf32> -> vector<8x8x8xf32>
    "tpu.trace_stop"() : () -> ()
    %c8_i32 = arith.constant 8 : i32
    %12 = arith.muli %arg1, %c8_i32 : i32
    %13 = tpu.iota {dimensions = array<i32: 0>} : vector<8x8xi32>
    %14 = vector.broadcast %12 : i32 to vector<8x8xi32>
    %15 = arith.addi %14, %13 : vector<8x8xi32>
    %c8_i32_8 = arith.constant 8 : i32
    %16 = arith.muli %arg2, %c8_i32_8 : i32
    %17 = tpu.iota {dimensions = array<i32: 1>} : vector<8x8xi32>
    %18 = vector.broadcast %16 : i32 to vector<8x8xi32>
    %19 = arith.addi %18, %17 : vector<8x8xi32>
    %20 = arith.cmpi sle, %19, %15 : vector<8x8xi32>
    %cst_9 = arith.constant 0.000000e+00 : f32
    %cst_10 = arith.constant -1.000000e+30 : f32
    %21 = vector.broadcast %cst_9 : f32 to vector<8x8xf32>
    %22 = vector.broadcast %cst_10 : f32 to vector<8x8xf32>
    %23 = arith.select %20, %21, %22 : vector<8x8xi1>, vector<8x8xf32>
    %24 = vector.shape_cast %23 : vector<8x8xf32> to vector<1x8x8xf32>
    %25 = vector.broadcast %24 : vector<1x8x8xf32> to vector<8x8x8xf32>
    %26 = arith.addf %11, %25 : vector<8x8x8xf32>
    %c0_11 = arith.constant 0 : index
    %c0_12 = arith.constant 0 : index
    %c0_13 = arith.constant 0 : index
    %27 = vector.load %arg8[%c0_11, %c0_12, %c0_13] : memref<8x8x1xf32, #tpu.memory_space<vmem>>, vector<8x8x1xf32>
    %cst_14 = arith.constant dense<0xFF800000> : vector<8x8xf32>
    %28 = vector.multi_reduction <maximumf>, %26, %cst_14 [2] : vector<8x8x8xf32> to vector<8x8xf32>
    %29 = vector.shape_cast %28 : vector<8x8xf32> to vector<8x8x1xf32>
    %30 = arith.maximumf %27, %29 : vector<8x8x1xf32>
    %31 = arith.subf %27, %30 : vector<8x8x1xf32>
    %32 = math.exp %31 : vector<8x8x1xf32>
    %33 = vector.broadcast %30 : vector<8x8x1xf32> to vector<8x8x8xf32>
    %34 = arith.subf %26, %33 : vector<8x8x8xf32>
    %35 = math.exp %34 : vector<8x8x8xf32>
    %c0_15 = arith.constant 0 : index
    %c0_16 = arith.constant 0 : index
    %c0_17 = arith.constant 0 : index
    %36 = vector.load %arg9[%c0_15, %c0_16, %c0_17] : memref<8x8x1xf32, #tpu.memory_space<vmem>>, vector<8x8x1xf32>
    %37 = arith.mulf %32, %36 : vector<8x8x1xf32>
    %cst_18 = arith.constant dense<0.000000e+00> : vector<8x8xf32>
    %38 = vector.multi_reduction <add>, %35, %cst_18 [2] : vector<8x8x8xf32> to vector<8x8xf32>
    %39 = vector.shape_cast %38 : vector<8x8xf32> to vector<8x8x1xf32>
    %40 = arith.addf %37, %39 : vector<8x8x1xf32>
    %c0_19 = arith.constant 0 : index
    %c0_20 = arith.constant 0 : index
    %c0_21 = arith.constant 0 : index
    %41 = vector.load %arg9[%c0_19, %c0_20, %c0_21] : memref<8x8x1xf32, #tpu.memory_space<vmem>>, vector<8x8x1xf32>
    tpu.vector_store %arg9[%c0_19, %c0_20, %c0_21], %40 {strides = array<i32>} : memref<8x8x1xf32, #tpu.memory_space<vmem>>, vector<8x8x1xf32>,
    %c0_22 = arith.constant 0 : index
    %c0_23 = arith.constant 0 : index
    %c0_24 = arith.constant 0 : index
    %42 = vector.load %arg10[%c0_22, %c0_23, %c0_24] : memref<8x8x8xf32, #tpu.memory_space<vmem>>, vector<8x8x8xf32>
    %43 = vector.broadcast %32 : vector<8x8x1xf32> to vector<8x8x8xf32>
    %44 = arith.mulf %43, %42 : vector<8x8x8xf32>
    %45 = arith.truncf %35 : vector<8x8x8xf32> to vector<8x8x8xbf16>
    %c0_25 = arith.constant 0 : index
    %c0_26 = arith.constant 0 : index
    %c0_27 = arith.constant 0 : index
    %46 = vector.load %arg5[%c0_25, %c0_26, %c0_27] : memref<8x8x8xbf16, #tpu.memory_space<vmem>>, vector<8x8x8xbf16>
    "tpu.trace_start"() <{level = 10 : i32, message = "bqk,bkd->bqd"}> : () -> ()
    %cst_28 = arith.constant dense<0.000000e+00> : vector<8x8x8xf32>
    %47 = tpu.matmul %45, %46, %cst_28 {dimension_numbers = #tpu.dot_dimension_numbers<[2], [1], [1], [2], [0, 0, 0, 1, 1, 2], [0], [0]>} : vector<8x8x8xbf16>, vector<8x8x8xbf16>, vector<8x8x8xf32> -> vector<8x8x8xf32>
    "tpu.trace_stop"() : () -> ()
    %48 = arith.addf %44, %47 : vector<8x8x8xf32>
    %c0_29 = arith.constant 0 : index
    %c0_30 = arith.constant 0 : index
    %c0_31 = arith.constant 0 : index
    %49 = vector.load %arg10[%c0_29, %c0_30, %c0_31] : memref<8x8x8xf32, #tpu.memory_space<vmem>>, vector<8x8x8xf32>
    tpu.vector_store %arg10[%c0_29, %c0_30, %c0_31], %48 {strides = array<i32>} : memref<8x8x8xf32, #tpu.memory_space<vmem>>, vector<8x8x8xf32>,
    %c0_32 = arith.constant 0 : index
    %c0_33 = arith.constant 0 : index
    %c0_34 = arith.constant 0 : index
    %50 = vector.load %arg8[%c0_32, %c0_33, %c0_34] : memref<8x8x1xf32, #tpu.memory_space<vmem>>, vector<8x8x1xf32>
    tpu.vector_store %arg8[%c0_32, %c0_33, %c0_34], %30 {strides = array<i32>} : memref<8x8x1xf32, #tpu.memory_space<vmem>>, vector<8x8x1xf32>,
    %c0_i32_35 = arith.constant 0 : i32
    %51 = arith.cmpi eq, %arg2, %c0_i32_35 : i32
    %52 = arith.extui %51 : i1 to i32
    %c0_i32_36 = arith.constant 0 : i32
    %53 = arith.cmpi ne, %52, %c0_i32_36 : i32
    scf.if %53 {
      %c0_37 = arith.constant 0 : index
      %c0_38 = arith.constant 0 : index
      %c0_39 = arith.constant 0 : index
      %54 = vector.load %arg10[%c0_37, %c0_38, %c0_39] : memref<8x8x8xf32, #tpu.memory_space<vmem>>, vector<8x8x8xf32>
      %c0_40 = arith.constant 0 : index
      %c0_41 = arith.constant 0 : index
      %c0_42 = arith.constant 0 : index
      %55 = vector.load %arg9[%c0_40, %c0_41, %c0_42] : memref<8x8x1xf32, #tpu.memory_space<vmem>>, vector<8x8x1xf32>
      %56 = tpu.reciprocal %55 {approx = true} : vector<8x8x1xf32> -> vector<8x8x1xf32>
      %57 = vector.broadcast %56 : vector<8x8x1xf32> to vector<8x8x8xf32>
      %58 = arith.mulf %54, %57 : vector<8x8x8xf32>
      %59 = arith.truncf %58 : vector<8x8x8xf32> to vector<8x8x8xbf16>
      %c0_43 = arith.constant 0 : index
      %c0_44 = arith.constant 0 : index
      %c0_45 = arith.constant 0 : index
      %60 = vector.load %arg7[%c0_43, %c0_44, %c0_45] : memref<8x8x8xbf16, #tpu.memory_space<vmem>>, vector<8x8x8xbf16>
      tpu.vector_store %arg7[%c0_43, %c0_44, %c0_45], %59 {strides = array<i32>} : memref<8x8x8xbf16, #tpu.memory_space<vmem>>, vector<8x8x8xbf16>,
    } else {
    }
    return
  }
  func.func @transform_0(%arg0: i32, %arg1: i32, %arg2: i32) -> (i32, i32, i32) {
    %c0_i32 = arith.constant 0 : i32
    %c0_i32_0 = arith.constant 0 : i32
    return %arg0, %arg1, %c0_i32 : i32, i32, i32
  }
  func.func @transform_1(%arg0: i32, %arg1: i32, %arg2: i32) -> (i32, i32, i32) {
    %c0_i32 = arith.constant 0 : i32
    %c0_i32_0 = arith.constant 0 : i32
    return %arg0, %arg2, %c0_i32 : i32, i32, i32
  }
  func.func @transform_2(%arg0: i32, %arg1: i32, %arg2: i32) -> (i32, i32, i32) {
    %c0_i32 = arith.constant 0 : i32
    %c0_i32_0 = arith.constant 0 : i32
    return %arg0, %arg2, %c0_i32 : i32, i32, i32
  }
  func.func @transform_3(%arg0: i32, %arg1: i32, %arg2: i32) -> i32 {
    %c0_i32 = arith.constant 0 : i32
    %c0_i32_0 = arith.constant 0 : i32
    return %c0_i32 : i32
  }
  func.func @transform_4(%arg0: i32, %arg1: i32, %arg2: i32) -> (i32, i32, i32) {
    %c0_i32 = arith.constant 0 : i32
    %c0_i32_0 = arith.constant 0 : i32
    return %arg0, %arg1, %c0_i32 : i32, i32, i32
  }
}

module attributes {stable_mosaic.version = 11 : i64} {
  func.func @kernel(%arg0: i32, %arg1: i32, %arg2: i32, %arg3: memref<16x32xbf16, #tpu.memory_space<vmem>>, %arg4: memref<32x32xbf16, #tpu.memory_space<vmem>>, %arg5: memref<1x32xf32, #tpu.memory_space<vmem>>, %arg6: memref<16x32xbf16, #tpu.memory_space<vmem>>) attributes {dimension_semantics = [#tpu.dimension_semantics<parallel>, #tpu.dimension_semantics<parallel>, #tpu.dimension_semantics<arbitrary>], iteration_bounds = array<i64: 1, 1, 1>, scalar_prefetch = 0 : i64, scratch_operands = 0 : i64, tpu.core_type = #tpu.core_type<tc>, window_params = [{transform_indices = @transform_0, window_bounds = array<i64: 16, 32>}, {transform_indices = @transform_1, window_bounds = array<i64: 32, 32>}, {transform_indices = @transform_2, window_bounds = array<i64: 1, 32>}, {transform_indices = @transform_3, window_bounds = array<i64: 16, 32>}]} {
    %c0 = arith.constant 0 : index
    %c0_0 = arith.constant 0 : index
    %0 = vector.load %arg3[%c0, %c0_0] : memref<16x32xbf16, #tpu.memory_space<vmem>>, vector<16x32xbf16>
    %c0_1 = arith.constant 0 : index
    %c0_2 = arith.constant 0 : index
    %1 = vector.load %arg4[%c0_1, %c0_2] : memref<32x32xbf16, #tpu.memory_space<vmem>>, vector<32x32xbf16>
    %cst = arith.constant dense<0.000000e+00> : vector<16x32xf32>
    %2 = tpu.matmul %0, %1, %cst {dimension_numbers = #tpu.dot_dimension_numbers<[1], [0], [0], [1], [0, 0, 1, 1], [], []>} : vector<16x32xbf16>, vector<32x32xbf16>, vector<16x32xf32> -> vector<16x32xf32>
    %c0_3 = arith.constant 0 : index
    %c0_4 = arith.constant 0 : index
    %3 = vector.load %arg5[%c0_3, %c0_4] : memref<1x32xf32, #tpu.memory_space<vmem>>, vector<1x32xf32>
    %4 = vector.broadcast %3 : vector<1x32xf32> to vector<16x32xf32>
    %5 = arith.addf %2, %4 : vector<16x32xf32>
    %6 = arith.truncf %5 : vector<16x32xf32> to vector<16x32xbf16>
    %c0_5 = arith.constant 0 : index
    %c0_6 = arith.constant 0 : index
    %7 = vector.load %arg6[%c0_5, %c0_6] : memref<16x32xbf16, #tpu.memory_space<vmem>>, vector<16x32xbf16>
    tpu.vector_store %arg6[%c0_5, %c0_6], %6 {strides = array<i32>} : memref<16x32xbf16, #tpu.memory_space<vmem>>, vector<16x32xbf16>,
    return
  }
  func.func @transform_0(%arg0: i32, %arg1: i32, %arg2: i32) -> (i32, i32) {
    %c0_i32 = arith.constant 0 : i32
    return %arg1, %arg2 : i32, i32
  }
  func.func @transform_1(%arg0: i32, %arg1: i32, %arg2: i32) -> (i32, i32) {
    %c0_i32 = arith.constant 0 : i32
    return %arg2, %arg0 : i32, i32
  }
  func.func @transform_2(%arg0: i32, %arg1: i32, %arg2: i32) -> (i32, i32) {
    %c0_i32 = arith.constant 0 : i32
    %c0_i32_0 = arith.constant 0 : i32
    return %c0_i32, %arg0 : i32, i32
  }
  func.func @transform_3(%arg0: i32, %arg1: i32, %arg2: i32) -> (i32, i32) {
    %c0_i32 = arith.constant 0 : i32
    return %arg1, %arg0 : i32, i32
  }
}

module attributes {stable_mosaic.version = 11 : i64} {
  func.func @kernel(%arg0: i32, %arg1: i32, %arg2: i32, %arg3: memref<16x32xbf16, #tpu.memory_space<vmem>>, %arg4: memref<32x32xbf16, #tpu.memory_space<vmem>>, %arg5: memref<1x32xf32, #tpu.memory_space<vmem>>, %arg6: memref<16x32xf32, #tpu.memory_space<vmem>>, %arg7: memref<16x32xf32, #tpu.memory_space<vmem>>) attributes {dimension_semantics = [#tpu.dimension_semantics<parallel>, #tpu.dimension_semantics<parallel>, #tpu.dimension_semantics<arbitrary>], iteration_bounds = array<i64: 1, 1, 1>, scalar_prefetch = 0 : i64, scratch_operands = 0 : i64, tpu.core_type = #tpu.core_type<tc>, window_params = [{transform_indices = @transform_0, window_bounds = array<i64: 16, 32>}, {transform_indices = @transform_1, window_bounds = array<i64: 32, 32>}, {transform_indices = @transform_2, window_bounds = array<i64: 1, 32>}, {transform_indices = @transform_3, window_bounds = array<i64: 16, 32>}, {transform_indices = @transform_4, window_bounds = array<i64: 16, 32>}]} {
    %c0 = arith.constant 0 : index
    %c0_0 = arith.constant 0 : index
    %0 = vector.load %arg3[%c0, %c0_0] : memref<16x32xbf16, #tpu.memory_space<vmem>>, vector<16x32xbf16>
    %c0_1 = arith.constant 0 : index
    %c0_2 = arith.constant 0 : index
    %1 = vector.load %arg4[%c0_1, %c0_2] : memref<32x32xbf16, #tpu.memory_space<vmem>>, vector<32x32xbf16>
    %cst = arith.constant dense<0.000000e+00> : vector<16x32xf32>
    %2 = tpu.matmul %0, %1, %cst {dimension_numbers = #tpu.dot_dimension_numbers<[1], [0], [0], [1], [0, 0, 1, 1], [], []>} : vector<16x32xbf16>, vector<32x32xbf16>, vector<16x32xf32> -> vector<16x32xf32>
    %c0_3 = arith.constant 0 : index
    %c0_4 = arith.constant 0 : index
    %3 = vector.load %arg5[%c0_3, %c0_4] : memref<1x32xf32, #tpu.memory_space<vmem>>, vector<1x32xf32>
    %4 = vector.broadcast %3 : vector<1x32xf32> to vector<16x32xf32>
    %5 = arith.addf %2, %4 : vector<16x32xf32>
    %c0_5 = arith.constant 0 : index
    %c0_6 = arith.constant 0 : index
    %6 = vector.load %arg6[%c0_5, %c0_6] : memref<16x32xf32, #tpu.memory_space<vmem>>, vector<16x32xf32>
    %7 = arith.addf %5, %6 : vector<16x32xf32>
    %c0_7 = arith.constant 0 : index
    %c0_8 = arith.constant 0 : index
    %8 = vector.load %arg7[%c0_7, %c0_8] : memref<16x32xf32, #tpu.memory_space<vmem>>, vector<16x32xf32>
    tpu.vector_store %arg7[%c0_7, %c0_8], %7 {strides = array<i32>} : memref<16x32xf32, #tpu.memory_space<vmem>>, vector<16x32xf32>,
    return
  }
  func.func @transform_0(%arg0: i32, %arg1: i32, %arg2: i32) -> (i32, i32) {
    %c0_i32 = arith.constant 0 : i32
    return %arg1, %arg2 : i32, i32
  }
  func.func @transform_1(%arg0: i32, %arg1: i32, %arg2: i32) -> (i32, i32) {
    %c0_i32 = arith.constant 0 : i32
    return %arg2, %arg0 : i32, i32
  }
  func.func @transform_2(%arg0: i32, %arg1: i32, %arg2: i32) -> (i32, i32) {
    %c0_i32 = arith.constant 0 : i32
    %c0_i32_0 = arith.constant 0 : i32
    return %c0_i32, %arg0 : i32, i32
  }
  func.func @transform_3(%arg0: i32, %arg1: i32, %arg2: i32) -> (i32, i32) {
    %c0_i32 = arith.constant 0 : i32
    return %arg1, %arg0 : i32, i32
  }
  func.func @transform_4(%arg0: i32, %arg1: i32, %arg2: i32) -> (i32, i32) {
    %c0_i32 = arith.constant 0 : i32
    return %arg1, %arg0 : i32, i32
  }
}

module attributes {stable_mosaic.version = 11 : i64} {
  func.func @kernel(%arg0: i32, %arg1: i32, %arg2: i32, %arg3: memref<8x8x8xbf16, #tpu.memory_space<vmem>>, %arg4: memref<8x16x8xbf16, #tpu.memory_space<vmem>>, %arg5: memref<8x16x8xbf16, #tpu.memory_space<vmem>>, %arg6: memref<1xf32, #tpu.memory_space<smem>>, %arg7: memref<8x8x8xbf16, #tpu.memory_space<vmem>>, %arg8: memref<8x8x1xf32, #tpu.memory_space<vmem>>, %arg9: memref<8x8x1xf32, #tpu.memory_space<vmem>>, %arg10: memref<8x8x8xf32, #tpu.memory_space<vmem>>) attributes {dimension_semantics = [#tpu.dimension_semantics<parallel>, #tpu.dimension_semantics<parallel>, #tpu.dimension_semantics<arbitrary>], iteration_bounds = array<i64: 1, 1, 1>, scalar_prefetch = 0 : i64, scratch_operands = 3 : i64, tpu.core_type = #tpu.core_type<tc>, window_params = [{transform_indices = @transform_0, window_bounds = array<i64: 8, 8, 8>}, {transform_indices = @transform_1, window_bounds = array<i64: 8, 16, 8>}, {transform_indices = @transform_2, window_bounds = array<i64: 8, 16, 8>}, {transform_indices = @transform_3, window_bounds = array<i64: 1>}, {transform_indices = @transform_4, window_bounds = array<i64: 8, 8, 8>}]} {
    %c0_i32 = arith.constant 0 : i32
    %0 = arith.cmpi eq, %arg2, %c0_i32 : i32
    %1 = arith.extui %0 : i1 to i32
    %c0_i32_0 = arith.constant 0 : i32
    %2 = arith.cmpi ne, %1, %c0_i32_0 : i32
    scf.if %2 {
      %cst_34 = arith.constant -1.000000e+30 : f32
      %39 = vector.broadcast %cst_34 : f32 to vector<8x8x1xf32>
      %c0_35 = arith.constant 0 : index
      %c0_36 = arith.constant 0 : index
      %c0_37 = arith.constant 0 : index
      %40 = vector.load %arg8[%c0_35, %c0_36, %c0_37] : memref<8x8x1xf32, #tpu.memory_space<vmem>>, vector<8x8x1xf32>
      tpu.vector_store %arg8[%c0_35, %c0_36, %c0_37], %39 {strides = array<i32>} : memref<8x8x1xf32, #tpu.memory_space<vmem>>, vector<8x8x1xf32>,
      %cst_38 = arith.constant 0.000000e+00 : f32
      %41 = vector.broadcast %cst_38 : f32 to vector<8x8x1xf32>
      %c0_39 = arith.constant 0 : index
      %c0_40 = arith.constant 0 : index
      %c0_41 = arith.constant 0 : index
      %42 = vector.load %arg9[%c0_39, %c0_40, %c0_41] : memref<8x8x1xf32, #tpu.memory_space<vmem>>, vector<8x8x1xf32>
      tpu.vector_store %arg9[%c0_39, %c0_40, %c0_41], %41 {strides = array<i32>} : memref<8x8x1xf32, #tpu.memory_space<vmem>>, vector<8x8x1xf32>,
      %cst_42 = arith.constant 0.000000e+00 : f32
      %43 = vector.broadcast %cst_42 : f32 to vector<8x8x8xf32>
      %c0_43 = arith.constant 0 : index
      %c0_44 = arith.constant 0 : index
      %c0_45 = arith.constant 0 : index
      %44 = vector.load %arg10[%c0_43, %c0_44, %c0_45] : memref<8x8x8xf32, #tpu.memory_space<vmem>>, vector<8x8x8xf32>
      tpu.vector_store %arg10[%c0_43, %c0_44, %c0_45], %43 {strides = array<i32>} : memref<8x8x8xf32, #tpu.memory_space<vmem>>, vector<8x8x8xf32>,
    } else {
    }
    %c0 = arith.constant 0 : index
    %3 = memref.load %arg6[%c0] : memref<1xf32, #tpu.memory_space<smem>>
    %cst = arith.constant 0.353553385 : f32
    %4 = arith.divf %cst, %3 : f32
    %c0_1 = arith.constant 0 : index
    %c0_2 = arith.constant 0 : index
    %c0_3 = arith.constant 0 : index
    %5 = vector.load %arg3[%c0_1, %c0_2, %c0_3] : memref<8x8x8xbf16, #tpu.memory_space<vmem>>, vector<8x8x8xbf16>
    %6 = arith.extf %5 : vector<8x8x8xbf16> to vector<8x8x8xf32>
    %7 = vector.broadcast %4 : f32 to vector<8x8x8xf32>
    %8 = arith.mulf %6, %7 : vector<8x8x8xf32>
    %9 = arith.truncf %8 : vector<8x8x8xf32> to vector<8x8x8xbf16>
    %c0_4 = arith.constant 0 : index
    %c0_5 = arith.constant 0 : index
    %c0_6 = arith.constant 0 : index
    %10 = vector.load %arg4[%c0_4, %c0_5, %c0_6] : memref<8x16x8xbf16, #tpu.memory_space<vmem>>, vector<8x16x8xbf16>
    "tpu.trace_start"() <{level = 10 : i32, message = "bqd,bkd->bqk"}> : () -> ()
    %cst_7 = arith.constant dense<0.000000e+00> : vector<8x8x16xf32>
    %11 = tpu.matmul %9, %10, %cst_7 {dimension_numbers = #tpu.dot_dimension_numbers<[2], [2], [1], [1], [0, 0, 0, 1, 1, 1], [0], [0]>} : vector<8x8x8xbf16>, vector<8x16x8xbf16>, vector<8x8x16xf32> -> vector<8x8x16xf32>
    "tpu.trace_stop"() : () -> ()
    %c0_8 = arith.constant 0 : index
    %c0_9 = arith.constant 0 : index
    %c0_10 = arith.constant 0 : index
    %12 = vector.load %arg8[%c0_8, %c0_9, %c0_10] : memref<8x8x1xf32, #tpu.memory_space<vmem>>, vector<8x8x1xf32>
    %cst_11 = arith.constant dense<0xFF800000> : vector<8x8xf32>
    %13 = vector.multi_reduction <maximumf>, %11, %cst_11 [2] : vector<8x8x16xf32> to vector<8x8xf32>
    %14 = vector.shape_cast %13 : vector<8x8xf32> to vector<8x8x1xf32>
    %15 = arith.maximumf %12, %14 : vector<8x8x1xf32>
    %16 = arith.subf %12, %15 : vector<8x8x1xf32>
    %17 = math.exp %16 : vector<8x8x1xf32>
    %18 = vector.broadcast %15 : vector<8x8x1xf32> to vector<8x8x16xf32>
    %19 = arith.subf %11, %18 : vector<8x8x16xf32>
    %20 = math.exp %19 : vector<8x8x16xf32>
    %c0_12 = arith.constant 0 : index
    %c0_13 = arith.constant 0 : index
    %c0_14 = arith.constant 0 : index
    %21 = vector.load %arg9[%c0_12, %c0_13, %c0_14] : memref<8x8x1xf32, #tpu.memory_space<vmem>>, vector<8x8x1xf32>
    %22 = arith.mulf %17, %21 : vector<8x8x1xf32>
    %cst_15 = arith.constant dense<0.000000e+00> : vector<8x8xf32>
    %23 = vector.multi_reduction <add>, %20, %cst_15 [2] : vector<8x8x16xf32> to vector<8x8xf32>
    %24 = vector.shape_cast %23 : vector<8x8xf32> to vector<8x8x1xf32>
    %25 = arith.addf %22, %24 : vector<8x8x1xf32>
    %c0_16 = arith.constant 0 : index
    %c0_17 = arith.constant 0 : index
    %c0_18 = arith.constant 0 : index
    %26 = vector.load %arg9[%c0_16, %c0_17, %c0_18] : memref<8x8x1xf32, #tpu.memory_space<vmem>>, vector<8x8x1xf32>
    tpu.vector_store %arg9[%c0_16, %c0_17, %c0_18], %25 {strides = array<i32>} : memref<8x8x1xf32, #tpu.memory_space<vmem>>, vector<8x8x1xf32>,
    %c0_19 = arith.constant 0 : index
    %c0_20 = arith.constant 0 : index
    %c0_21 = arith.constant 0 : index
    %27 = vector.load %arg10[%c0_19, %c0_20, %c0_21] : memref<8x8x8xf32, #tpu.memory_space<vmem>>, vector<8x8x8xf32>
    %28 = vector.broadcast %17 : vector<8x8x1xf32> to vector<8x8x8xf32>
    %29 = arith.mulf %28, %27 : vector<8x8x8xf32>
    %30 = arith.truncf %20 : vector<8x8x16xf32> to vector<8x8x16xbf16>
    %c0_22 = arith.constant 0 : index
    %c0_23 = arith.constant 0 : index
    %c0_24 = arith.constant 0 : index
    %31 = vector.load %arg5[%c0_22, %c0_23, %c0_24] : memref<8x16x8xbf16, #tpu.memory_space<vmem>>, vector<8x16x8xbf16>
    "tpu.trace_start"() <{level = 10 : i32, message = "bqk,bkd->bqd"}> : () -> ()
    %cst_25 = arith.constant dense<0.000000e+00> : vector<8x8x8xf32>
    %32 = tpu.matmul %30, %31, %cst_25 {dimension_numbers = #tpu.dot_dimension_numbers<[2], [1], [1], [2], [0, 0, 0, 1, 1, 2], [0], [0]>} : vector<8x8x16xbf16>, vector<8x16x8xbf16>, vector<8x8x8xf32> -> vector<8x8x8xf32>
    "tpu.trace_stop"() : () -> ()
    %33 = arith.addf %29, %32 : vector<8x8x8xf32>
    %c0_26 = arith.constant 0 : index
    %c0_27 = arith.constant 0 : index
    %c0_28 = arith.constant 0 : index
    %34 = vector.load %arg10[%c0_26, %c0_27, %c0_28] : memref<8x8x8xf32, #tpu.memory_space<vmem>>, vector<8x8x8xf32>
    tpu.vector_store %arg10[%c0_26, %c0_27, %c0_28], %33 {strides = array<i32>} : memref<8x8x8xf32, #tpu.memory_space<vmem>>, vector<8x8x8xf32>,
    %c0_29 = arith.constant 0 : index
    %c0_30 = arith.constant 0 : index
    %c0_31 = arith.constant 0 : index
    %35 = vector.load %arg8[%c0_29, %c0_30, %c0_31] : memref<8x8x1xf32, #tpu.memory_space<vmem>>, vector<8x8x1xf32>
    tpu.vector_store %arg8[%c0_29, %c0_30, %c0_31], %15 {strides = array<i32>} : memref<8x8x1xf32, #tpu.memory_space<vmem>>, vector<8x8x1xf32>,
    %c0_i32_32 = arith.constant 0 : i32
    %36 = arith.cmpi eq, %arg2, %c0_i32_32 : i32
    %37 = arith.extui %36 : i1 to i32
    %c0_i32_33 = arith.constant 0 : i32
    %38 = arith.cmpi ne, %37, %c0_i32_33 : i32
    scf.if %38 {
      %c0_34 = arith.constant 0 : index
      %c0_35 = arith.constant 0 : index
      %c0_36 = arith.constant 0 : index
      %39 = vector.load %arg10[%c0_34, %c0_35, %c0_36] : memref<8x8x8xf32, #tpu.memory_space<vmem>>, vector<8x8x8xf32>
      %c0_37 = arith.constant 0 : index
      %c0_38 = arith.constant 0 : index
      %c0_39 = arith.constant 0 : index
      %40 = vector.load %arg9[%c0_37, %c0_38, %c0_39] : memref<8x8x1xf32, #tpu.memory_space<vmem>>, vector<8x8x1xf32>
      %41 = tpu.reciprocal %40 {approx = true} : vector<8x8x1xf32> -> vector<8x8x1xf32>
      %42 = vector.broadcast %41 : vector<8x8x1xf32> to vector<8x8x8xf32>
      %43 = arith.mulf %39, %42 : vector<8x8x8xf32>
      %44 = arith.truncf %43 : vector<8x8x8xf32> to vector<8x8x8xbf16>
      %c0_40 = arith.constant 0 : index
      %c0_41 = arith.constant 0 : index
      %c0_42 = arith.constant 0 : index
      %45 = vector.load %arg7[%c0_40, %c0_41, %c0_42] : memref<8x8x8xbf16, #tpu.memory_space<vmem>>, vector<8x8x8xbf16>
      tpu.vector_store %arg7[%c0_40, %c0_41, %c0_42], %44 {strides = array<i32>} : memref<8x8x8xbf16, #tpu.memory_space<vmem>>, vector<8x8x8xbf16>,
    } else {
    }
    return
  }
  func.func @transform_0(%arg0: i32, %arg1: i32, %arg2: i32) -> (i32, i32, i32) {
    %c0_i32 = arith.constant 0 : i32
    %c0_i32_0 = arith.constant 0 : i32
    return %arg0, %arg1, %c0_i32 : i32, i32, i32
  }
  func.func @transform_1(%arg0: i32, %arg1: i32, %arg2: i32) -> (i32, i32, i32) {
    %c0_i32 = arith.constant 0 : i32
    %c0_i32_0 = arith.constant 0 : i32
    return %arg0, %arg2, %c0_i32 : i32, i32, i32
  }
  func.func @transform_2(%arg0: i32, %arg1: i32, %arg2: i32) -> (i32, i32, i32) {
    %c0_i32 = arith.constant 0 : i32
    %c0_i32_0 = arith.constant 0 : i32
    return %arg0, %arg2, %c0_i32 : i32, i32, i32
  }
  func.func @transform_3(%arg0: i32, %arg1: i32, %arg2: i32) -> i32 {
    %c0_i32 = arith.constant 0 : i32
    %c0_i32_0 = arith.constant 0 : i32
    return %c0_i32 : i32
  }
  func.func @transform_4(%arg0: i32, %arg1: i32, %arg2: i32) -> (i32, i32, i32) {
    %c0_i32 = arith.constant 0 : i32
    %c0_i32_0 = arith.constant 0 : i32
    return %arg0, %arg1, %c0_i32 : i32, i32, i32
  }
}

module attributes {stable_mosaic.version = 11 : i64} {
  func.func @kernel(%arg0: i32, %arg1: i32, %arg2: i32, %arg3: memref<16x32xbf16, #tpu.memory_space<vmem>>, %arg4: memref<32x128xbf16, #tpu.memory_space<vmem>>, %arg5: memref<1x128xf32, #tpu.memory_space<vmem>>, %arg6: memref<16x128xbf16, #tpu.memory_space<vmem>>) attributes {dimension_semantics = [#tpu.dimension_semantics<parallel>, #tpu.dimension_semantics<parallel>, #tpu.dimension_semantics<arbitrary>], iteration_bounds = array<i64: 1, 1, 1>, scalar_prefetch = 0 : i64, scratch_operands = 0 : i64, tpu.core_type = #tpu.core_type<tc>, window_params = [{transform_indices = @transform_0, window_bounds = array<i64: 16, 32>}, {transform_indices = @transform_1, window_bounds = array<i64: 32, 128>}, {transform_indices = @transform_2, window_bounds = array<i64: 1, 128>}, {transform_indices = @transform_3, window_bounds = array<i64: 16, 128>}]} {
    %c0 = arith.constant 0 : index
    %c0_0 = arith.constant 0 : index
    %0 = vector.load %arg3[%c0, %c0_0] : memref<16x32xbf16, #tpu.memory_space<vmem>>, vector<16x32xbf16>
    %c0_1 = arith.constant 0 : index
    %c0_2 = arith.constant 0 : index
    %1 = vector.load %arg4[%c0_1, %c0_2] : memref<32x128xbf16, #tpu.memory_space<vmem>>, vector<32x128xbf16>
    %cst = arith.constant dense<0.000000e+00> : vector<16x128xf32>
    %2 = tpu.matmul %0, %1, %cst {dimension_numbers = #tpu.dot_dimension_numbers<[1], [0], [0], [1], [0, 0, 1, 1], [], []>} : vector<16x32xbf16>, vector<32x128xbf16>, vector<16x128xf32> -> vector<16x128xf32>
    %c0_3 = arith.constant 0 : index
    %c0_4 = arith.constant 0 : index
    %3 = vector.load %arg5[%c0_3, %c0_4] : memref<1x128xf32, #tpu.memory_space<vmem>>, vector<1x128xf32>
    %4 = vector.broadcast %3 : vector<1x128xf32> to vector<16x128xf32>
    %5 = arith.addf %2, %4 : vector<16x128xf32>
    %6 = arith.mulf %5, %5 : vector<16x128xf32>
    %7 = arith.mulf %5, %6 : vector<16x128xf32>
    %cst_5 = arith.constant 4.471500e-02 : f32
    %8 = vector.broadcast %cst_5 : f32 to vector<16x128xf32>
    %9 = arith.mulf %8, %7 : vector<16x128xf32>
    %10 = arith.addf %5, %9 : vector<16x128xf32>
    %cst_6 = arith.constant 0.797884583 : f32
    %11 = vector.broadcast %cst_6 : f32 to vector<16x128xf32>
    %12 = arith.mulf %11, %10 : vector<16x128xf32>
    %13 = math.tanh %12 : vector<16x128xf32>
    %cst_7 = arith.constant 1.000000e+00 : f32
    %14 = vector.broadcast %cst_7 : f32 to vector<16x128xf32>
    %15 = arith.addf %14, %13 : vector<16x128xf32>
    %cst_8 = arith.constant 5.000000e-01 : f32
    %16 = vector.broadcast %cst_8 : f32 to vector<16x128xf32>
    %17 = arith.mulf %16, %15 : vector<16x128xf32>
    %18 = arith.mulf %5, %17 : vector<16x128xf32>
    %19 = arith.truncf %18 : vector<16x128xf32> to vector<16x128xbf16>
    %c0_9 = arith.constant 0 : index
    %c0_10 = arith.constant 0 : index
    %20 = vector.load %arg6[%c0_9, %c0_10] : memref<16x128xbf16, #tpu.memory_space<vmem>>, vector<16x128xbf16>
    tpu.vector_store %arg6[%c0_9, %c0_10], %19 {strides = array<i32>} : memref<16x128xbf16, #tpu.memory_space<vmem>>, vector<16x128xbf16>,
    return
  }
  func.func @transform_0(%arg0: i32, %arg1: i32, %arg2: i32) -> (i32, i32) {
    %c0_i32 = arith.constant 0 : i32
    return %arg1, %arg2 : i32, i32
  }
  func.func @transform_1(%arg0: i32, %arg1: i32, %arg2: i32) -> (i32, i32) {
    %c0_i32 = arith.constant 0 : i32
    return %arg2, %arg0 : i32, i32
  }
  func.func @transform_2(%arg0: i32, %arg1: i32, %arg2: i32) -> (i32, i32) {
    %c0_i32 = arith.constant 0 : i32
    %c0_i32_0 = arith.constant 0 : i32
    return %c0_i32, %arg0 : i32, i32
  }
  func.func @transform_3(%arg0: i32, %arg1: i32, %arg2: i32) -> (i32, i32) {
    %c0_i32 = arith.constant 0 : i32
    return %arg1, %arg0 : i32, i32
  }
}

module attributes {stable_mosaic.version = 11 : i64} {
  func.func @kernel(%arg0: i32, %arg1: i32, %arg2: i32, %arg3: memref<16x128xbf16, #tpu.memory_space<vmem>>, %arg4: memref<128x32xbf16, #tpu.memory_space<vmem>>, %arg5: memref<1x32xf32, #tpu.memory_space<vmem>>, %arg6: memref<16x32xf32, #tpu.memory_space<vmem>>, %arg7: memref<16x32xf32, #tpu.memory_space<vmem>>) attributes {dimension_semantics = [#tpu.dimension_semantics<parallel>, #tpu.dimension_semantics<parallel>, #tpu.dimension_semantics<arbitrary>], iteration_bounds = array<i64: 1, 1, 1>, scalar_prefetch = 0 : i64, scratch_operands = 0 : i64, tpu.core_type = #tpu.core_type<tc>, window_params = [{transform_indices = @transform_0, window_bounds = array<i64: 16, 128>}, {transform_indices = @transform_1, window_bounds = array<i64: 128, 32>}, {transform_indices = @transform_2, window_bounds = array<i64: 1, 32>}, {transform_indices = @transform_3, window_bounds = array<i64: 16, 32>}, {transform_indices = @transform_4, window_bounds = array<i64: 16, 32>}]} {
    %c0 = arith.constant 0 : index
    %c0_0 = arith.constant 0 : index
    %0 = vector.load %arg3[%c0, %c0_0] : memref<16x128xbf16, #tpu.memory_space<vmem>>, vector<16x128xbf16>
    %c0_1 = arith.constant 0 : index
    %c0_2 = arith.constant 0 : index
    %1 = vector.load %arg4[%c0_1, %c0_2] : memref<128x32xbf16, #tpu.memory_space<vmem>>, vector<128x32xbf16>
    %cst = arith.constant dense<0.000000e+00> : vector<16x32xf32>
    %2 = tpu.matmul %0, %1, %cst {dimension_numbers = #tpu.dot_dimension_numbers<[1], [0], [0], [1], [0, 0, 1, 1], [], []>} : vector<16x128xbf16>, vector<128x32xbf16>, vector<16x32xf32> -> vector<16x32xf32>
    %c0_3 = arith.constant 0 : index
    %c0_4 = arith.constant 0 : index
    %3 = vector.load %arg5[%c0_3, %c0_4] : memref<1x32xf32, #tpu.memory_space<vmem>>, vector<1x32xf32>
    %4 = vector.broadcast %3 : vector<1x32xf32> to vector<16x32xf32>
    %5 = arith.addf %2, %4 : vector<16x32xf32>
    %c0_5 = arith.constant 0 : index
    %c0_6 = arith.constant 0 : index
    %6 = vector.load %arg6[%c0_5, %c0_6] : memref<16x32xf32, #tpu.memory_space<vmem>>, vector<16x32xf32>
    %7 = arith.addf %5, %6 : vector<16x32xf32>
    %c0_7 = arith.constant 0 : index
    %c0_8 = arith.constant 0 : index
    %8 = vector.load %arg7[%c0_7, %c0_8] : memref<16x32xf32, #tpu.memory_space<vmem>>, vector<16x32xf32>
    tpu.vector_store %arg7[%c0_7, %c0_8], %7 {strides = array<i32>} : memref<16x32xf32, #tpu.memory_space<vmem>>, vector<16x32xf32>,
    return
  }
  func.func @transform_0(%arg0: i32, %arg1: i32, %arg2: i32) -> (i32, i32) {
    %c0_i32 = arith.constant 0 : i32
    return %arg1, %arg2 : i32, i32
  }
  func.func @transform_1(%arg0: i32, %arg1: i32, %arg2: i32) -> (i32, i32) {
    %c0_i32 = arith.constant 0 : i32
    return %arg2, %arg0 : i32, i32
  }
  func.func @transform_2(%arg0: i32, %arg1: i32, %arg2: i32) -> (i32, i32) {
    %c0_i32 = arith.constant 0 : i32
    %c0_i32_0 = arith.constant 0 : i32
    return %c0_i32, %arg0 : i32, i32
  }
  func.func @transform_3(%arg0: i32, %arg1: i32, %arg2: i32) -> (i32, i32) {
    %c0_i32 = arith.constant 0 : i32
    return %arg1, %arg0 : i32, i32
  }
  func.func @transform_4(%arg0: i32, %arg1: i32, %arg2: i32) -> (i32, i32) {
    %c0_i32 = arith.constant 0 : i32
    return %arg1, %arg0 : i32, i32
  }
}

module attributes {stable_mosaic.version = 11 : i64} {
  func.func @kernel(%arg0: i32, %arg1: i32, %arg2: i32, %arg3: memref<16x32xbf16, #tpu.memory_space<vmem>>, %arg4: memref<32x128xbf16, #tpu.memory_space<vmem>>, %arg5: memref<1x128xf32, #tpu.memory_space<vmem>>, %arg6: memref<1xf32, #tpu.memory_space<smem>>, %arg7: memref<16x128xf32, #tpu.memory_space<vmem>>) attributes {dimension_semantics = [#tpu.dimension_semantics<parallel>, #tpu.dimension_semantics<parallel>, #tpu.dimension_semantics<arbitrary>], iteration_bounds = array<i64: 1, 1, 1>, scalar_prefetch = 0 : i64, scratch_operands = 0 : i64, tpu.core_type = #tpu.core_type<tc>, window_params = [{transform_indices = @transform_0, window_bounds = array<i64: 16, 32>}, {transform_indices = @transform_1, window_bounds = array<i64: 32, 128>}, {transform_indices = @transform_2, window_bounds = array<i64: 1, 128>}, {transform_indices = @transform_3, window_bounds = array<i64: 1>}, {transform_indices = @transform_4, window_bounds = array<i64: 16, 128>}]} {
    %c0 = arith.constant 0 : index
    %c0_0 = arith.constant 0 : index
    %0 = vector.load %arg3[%c0, %c0_0] : memref<16x32xbf16, #tpu.memory_space<vmem>>, vector<16x32xbf16>
    %c0_1 = arith.constant 0 : index
    %c0_2 = arith.constant 0 : index
    %1 = vector.load %arg4[%c0_1, %c0_2] : memref<32x128xbf16, #tpu.memory_space<vmem>>, vector<32x128xbf16>
    %cst = arith.constant dense<0.000000e+00> : vector<16x128xf32>
    %2 = tpu.matmul %0, %1, %cst {dimension_numbers = #tpu.dot_dimension_numbers<[1], [0], [0], [1], [0, 0, 1, 1], [], []>} : vector<16x32xbf16>, vector<32x128xbf16>, vector<16x128xf32> -> vector<16x128xf32>
    %c0_3 = arith.constant 0 : index
    %c0_4 = arith.constant 0 : index
    %3 = vector.load %arg5[%c0_3, %c0_4] : memref<1x128xf32, #tpu.memory_space<vmem>>, vector<1x128xf32>
    %4 = vector.broadcast %3 : vector<1x128xf32> to vector<16x128xf32>
    %5 = arith.addf %2, %4 : vector<16x128xf32>
    %c0_5 = arith.constant 0 : index
    %6 = memref.load %arg6[%c0_5] : memref<1xf32, #tpu.memory_space<smem>>
    %7 = math.absf %6 : f32
    %cst_6 = arith.constant 9.99999997E-7 : f32
    %8 = arith.addf %7, %cst_6 : f32
    %cst_7 = arith.constant 1.000000e+00 : f32
    %9 = arith.divf %cst_7, %8 : f32
    %10 = vector.broadcast %9 : f32 to vector<16x128xf32>
    %11 = arith.mulf %5, %10 : vector<16x128xf32>
    %c0_8 = arith.constant 0 : index
    %c0_9 = arith.constant 0 : index
    %12 = vector.load %arg7[%c0_8, %c0_9] : memref<16x128xf32, #tpu.memory_space<vmem>>, vector<16x128xf32>
    tpu.vector_store %arg7[%c0_8, %c0_9], %11 {strides = array<i32>} : memref<16x128xf32, #tpu.memory_space<vmem>>, vector<16x128xf32>,
    return
  }
  func.func @transform_0(%arg0: i32, %arg1: i32, %arg2: i32) -> (i32, i32) {
    %c0_i32 = arith.constant 0 : i32
    return %arg1, %arg2 : i32, i32
  }
  func.func @transform_1(%arg0: i32, %arg1: i32, %arg2: i32) -> (i32, i32) {
    %c0_i32 = arith.constant 0 : i32
    return %arg2, %arg0 : i32, i32
  }
  func.func @transform_2(%arg0: i32, %arg1: i32, %arg2: i32) -> (i32, i32) {
    %c0_i32 = arith.constant 0 : i32
    %c0_i32_0 = arith.constant 0 : i32
    return %c0_i32, %arg0 : i32, i32
  }
  func.func @transform_3(%arg0: i32, %arg1: i32, %arg2: i32) -> i32 {
    %c0_i32 = arith.constant 0 : i32
    %c0_i32_0 = arith.constant 0 : i32
    return %c0_i32 : i32
  }
  func.func @transform_4(%arg0: i32, %arg1: i32, %arg2: i32) -> (i32, i32) {
    %c0_i32 = arith.constant 0 : i32
    return %arg1, %arg0 : i32, i32
  }
}

</mosaic_0001>

<llo_original>
// kernel: whisper_temperature_forward.43
$region0: #{whisper_temperature_forward.43}
  #allocation0 [shape = 'u32[]', space=smem, size = 0x4, offset = 0x4, fixed_abs, tag = 'smem constant byte address 0x4 - core index']
  #allocation1 [shape = 'u32[144,128]{1,0:T(1,128)}', space=vmem, size = 0x12000, scoped, tag = 'internal scratch']
  %s0 = inlined_call_operand.hbm [shape: f32[64,48], index: 0, kind: input, shape index: {}]
  %s1 = inlined_call_operand.hbm [shape: bf16[48,32], index: 1, kind: input, shape index: {}]
  %s2 = inlined_call_operand.hbm [shape: f32[1,32], index: 2, kind: input, shape index: {}]
  %s3 = inlined_call_operand.hbm [shape: bf16[64,32], index: 3, kind: output, shape index: {}]
  %s4 = sld [smem:[#allocation0]]
  $region34: #{whisper_temperature_forward.43} parent=0
    _
  %s6 = ssub.s32 1, %s4
  %s7 = scalar_select 0, %s6, %s4
  $region1: #{whisper_temperature_forward.43} parent=0
    #allocation2 [shape = 'u8[32768]{0}', space=vmem, size = 0x8000, scoped, tag = 'input window, operand 0, single buffered']
    #allocation3 [shape = 's32[1]{0}', space=sflag, size = 0x4, scoped, tag = 'scoped memory for whisper_temperature_forward.43']
    #allocation4 [shape = 's32[1]{0}', space=sflag, size = 0x4, scoped, tag = 'scoped memory for whisper_temperature_forward.43']
    #allocation5 [shape = 'u8[12288]{0}', space=vmem, size = 0x3000, scoped, tag = 'input window, operand 1, single buffered']
    #allocation6 [shape = 's32[1]{0}', space=sflag, size = 0x4, scoped, tag = 'scoped memory for whisper_temperature_forward.43']
    #allocation7 [shape = 'u8[512]{0}', space=vmem, size = 0x400, scoped, tag = 'input window, operand 2, single buffered']
    #allocation8 [shape = 'u8[16384]{0}', space=vmem, size = 0x4000, scoped, tag = 'output window, operand 0, single buffered']
    %8 = vsyncpa [#allocation3], 0
    %9 = vsyncpa [#allocation6], 0
    %10 = vsyncpa [#allocation4], 0
    // Predicated region
    $region2: #{whisper_temperature_forward.43} parent=1 // pred_check
      _
    $region3: #{whisper_temperature_forward.43} parent=1 // pred_check_branch
      %12 = sbr.rel (0) target = $region5
    $region4: #{whisper_temperature_forward.43} parent=1 // pred_region
      %s14 = ssub.s32 1024, 1024
      %15 = vsyncadd [#allocation3], %s14
      %s16 = sshll.u32 [#allocation2], 4
      %s17 = int_to_ptr.vmem [resolvable:$true] %s16
      %22 = dma.hbm_to_vmem [thread:$0]  %s0, 1024, %s17, [#allocation3], 128, 128, 8
    $region5: #{whisper_temperature_forward.43} parent=1 // pred_fallthru
      _
    // Predicated region
    $region6: #{whisper_temperature_forward.43} parent=1 // pred_check
      _
    $region7: #{whisper_temperature_forward.43} parent=1 // pred_check_branch
      %24 = sbr.rel (0) target = $region9
    $region8: #{whisper_temperature_forward.43} parent=1 // pred_region
      %s26 = ssub.s32 384, 384
      %27 = vsyncadd [#allocation6], %s26
      %s28 = sshll.u32 [#allocation5], 4
      %s29 = int_to_ptr.vmem [resolvable:$true] %s28
      %34 = dma.hbm_to_vmem [thread:$0]  %s1, 384, %s29, [#allocation6], 64, 64, 4
    $region9: #{whisper_temperature_forward.43} parent=1 // pred_fallthru
      _
    // Predicated region
    $region10: #{whisper_temperature_forward.43} parent=1 // pred_check
      _
    $region11: #{whisper_temperature_forward.43} parent=1 // pred_check_branch
      %36 = sbr.rel (0) target = $region13
    $region12: #{whisper_temperature_forward.43} parent=1 // pred_region
      %s38 = ssub.s32 16, 16
      %39 = vsyncadd [#allocation6], %s38
      %s41 = sshll.u32 [#allocation7], 4
      %s42 = int_to_ptr.vmem [resolvable:$true] %s41
      %44 = dma.hbm_to_vmem [thread:$0]  %s2, 16, %s42, [#allocation6]
    $region13: #{whisper_temperature_forward.43} parent=1 // pred_fallthru
      _
    // Predicated region
    $region14: #{whisper_temperature_forward.43} parent=1 // pred_check
      _
    $region15: #{whisper_temperature_forward.43} parent=1 // pred_check_branch
      %46 = sbr.rel (0) target = $region17
    $region16: #{whisper_temperature_forward.43} parent=1 // pred_region
      %47 = dma.done [#allocation3], 1024
    $region17: #{whisper_temperature_forward.43} parent=1 // pred_fallthru
      _
    // Predicated region
    $region18: #{whisper_temperature_forward.43} parent=1 // pred_check
      _
    $region19: #{whisper_temperature_forward.43} parent=1 // pred_check_branch
      %49 = sbr.rel (0) target = $region21
    $region20: #{whisper_temperature_forward.43} parent=1 // pred_region
      %50 = dma.done [#allocation6], 384
    $region21: #{whisper_temperature_forward.43} parent=1 // pred_fallthru
      _
    // Predicated region
    $region22: #{whisper_temperature_forward.43} parent=1 // pred_check
      _
    $region23: #{whisper_temperature_forward.43} parent=1 // pred_check_branch
      %52 = sbr.rel (0) target = $region25
    $region24: #{whisper_temperature_forward.43} parent=1 // pred_region
      %53 = dma.done [#allocation6], 16
    $region25: #{whisper_temperature_forward.43} parent=1 // pred_fallthru
      _
    %v55 = vld [vmem:[#allocation2] sm:$0xff]
    %v56 = vld [vmem:[#allocation2 + $0x8] sm:$0xff]
    %v57 = vld [vmem:[#allocation2 + $0x10] sm:$0xff]
    %v58 = vld [vmem:[#allocation2 + $0x18] sm:$0xff]
    %v59 = vld [vmem:[#allocation2 + $0x20] sm:$0xff]
    %v60 = vld [vmem:[#allocation2 + $0x28] sm:$0xff]
    %v61 = vld [vmem:[#allocation2 + $0x30] sm:$0xff]
    %v62 = vld [vmem:[#allocation2 + $0x38] sm:$0xff]
    %v63 = vpack.c.bf16 %v56, %v55
    %v64 = vpack.c.bf16 %v58, %v57
    %v65 = vpack.c.bf16 %v60, %v59
    %v66 = vpack.c.bf16 %v62, %v61
    %v67 = vld [vmem:[#allocation5] sm:$0xf]
    %v68 = vld [vmem:[#allocation5 + $0x4] sm:$0xf]
    %v69 = vld [vmem:[#allocation5 + $0x8] sm:$0xf]
    %v70 = vld [vmem:[#allocation5 + $0xc] sm:$0xf]
    %v71 = vld [vmem:[#allocation5 + $0x10] sm:$0xf]
    %v72 = vld [vmem:[#allocation5 + $0x14] sm:$0xf]
    %v73 = vld [vmem:[#allocation7] sm:$0x1]
    %v75 = vlaneseq
    %v76 = vshrl.u32 %v75, 7
    %v77 = vsub.s32 0, %v76
    %v78 = vrot.slane %v73, %v77
    %v86 = vunpack.c.l.b16 %v67
    %v87 = vunpack.c.l.b16 %v68
    %v88 = vunpack.c.l.b16 %v69
    %v89 = vunpack.c.l.b16 %v70
    %v90 = vunpack.c.l.b16 %v71
    %v91 = vunpack.c.l.b16 %v72
    %v92 = vpack.c.b16 %v87, %v86
    %v93 = vpack.c.b16 %v89, %v88
    %v94 = vpack.c.b16 %v91, %v90
    %vm98 = vcmask 392192
    %v100 = vsel %vm98, %v63, 0
    %v103 = vsel %vm98, %v64, 0
    %v106 = vsel %vm98, %v65, 0
    %v109 = vsel %vm98, %v66, 0
    %111 = vmatprep.subr.bf16.mxu0 0
    %112 = vmatpush1.bf16.msra.mxu0 %v92
    %113 = vmatprep.subr.bf16.mxu0 0
    %114 = vmatpush1.bf16.msra.mxu0 %v93
    %115 = vmatprep.subr.bf16.mxu0 0
    %116 = vmatpush1.bf16.msra.mxu0 %v94
    %117 = vmatprep.subr.bf16.mxu0 0
    %118 = vmatpush1.bf16.msra.mxu0 0
    %119 = vmatprep.subr.bf16.mxu0 0
    %120 = vmatpush1.bf16.msra.mxu0 0
    %121 = vmatprep.subr.bf16.mxu0 0
    %122 = vmatpush1.bf16.msra.mxu0 0
    %123 = vmatprep.subr.bf16.mxu0 0
    %124 = vmatpush1.bf16.msra.mxu0 0
    %125 = vmatprep.subr.bf16.mxu0 0
    %126 = vmatpush1.bf16.msra.mxu0 0
    %127 = vmatprep.subr.bf16.mxu0 0
    %128 = vmatpush1.bf16.msra.mxu0 0
    %129 = vmatprep.subr.bf16.mxu0 0
    %130 = vmatpush1.bf16.msra.mxu0 0
    %131 = vmatprep.subr.bf16.mxu0 0
    %132 = vmatpush1.bf16.msra.mxu0 0
    %133 = vmatprep.subr.bf16.mxu0 0
    %134 = vmatpush1.bf16.msra.mxu0 0
    %135 = vmatprep.subr.bf16.mxu0 0
    %136 = vmatpush1.bf16.msra.mxu0 0
    %137 = vmatprep.subr.bf16.mxu0 0
    %138 = vmatpush1.bf16.msra.mxu0 0
    %139 = vmatprep.subr.bf16.mxu0 0
    %140 = vmatpush1.bf16.msra.mxu0 0
    %141 = vmatprep.subr.bf16.mxu0 0
    %142 = vmatpush1.bf16.msra.mxu0 0
    %143 = vmatprep.mubr.bf16.mxu0 0
    %144 = vmatmul.mubr.bf16.gmra.mrb[0].mxu0 %v100
    %v145 = vpop.f32.mrb[0].mxu0
    %v146 = vadd.f32 %v78, %v145
    %v147 = vpop.f32.mrb[0].mxu0
    %v148 = vpop.f32.mrb[0].mxu0
    %v149 = vadd.f32 %v78, %v148
    %v150 = vpop.f32.mrb[0].mxu0
    %151 = vmatprep.mubr.bf16.mxu0 0
    %152 = vmatmul.mubr.bf16.gmra.mrb[0].mxu0 %v103
    %v153 = vpop.f32.mrb[0].mxu0
    %v154 = vadd.f32 %v78, %v153
    %v155 = vpop.f32.mrb[0].mxu0
    %v156 = vpop.f32.mrb[0].mxu0
    %v157 = vadd.f32 %v78, %v156
    %v158 = vpop.f32.mrb[0].mxu0
    %159 = vmatprep.mubr.bf16.mxu0 0
    %160 = vmatmul.mubr.bf16.gmra.mrb[0].mxu0 %v106
    %v161 = vpop.f32.mrb[0].mxu0
    %v162 = vadd.f32 %v78, %v161
    %v163 = vpop.f32.mrb[0].mxu0
    %v164 = vpop.f32.mrb[0].mxu0
    %v165 = vadd.f32 %v78, %v164
    %v166 = vpop.f32.mrb[0].mxu0
    %167 = vmatprep.mubr.bf16.mxu0 0
    %168 = vmatmul.mubr.bf16.gmra.mrb[0].mxu0 %v109
    %v169 = vpop.f32.mrb[0].mxu0
    %v170 = vadd.f32 %v78, %v169
    %v171 = vpop.f32.mrb[0].mxu0
    %v172 = vpop.f32.mrb[0].mxu0
    %v173 = vadd.f32 %v78, %v172
    %v174 = vpop.f32.mrb[0].mxu0
    %175 = vdwg.mxu0
    %v176 = vmul.f32 %v146, %v146
    %v177 = vmul.f32 %v149, %v149
    %v178 = vmul.f32 %v154, %v154
    %v179 = vmul.f32 %v157, %v157
    %v180 = vmul.f32 %v162, %v162
    %v181 = vmul.f32 %v165, %v165
    %v182 = vmul.f32 %v170, %v170
    %v183 = vmul.f32 %v173, %v173
    %v184 = vmul.f32 %v146, %v176
    %v185 = vmul.f32 %v149, %v177
    %v186 = vmul.f32 %v154, %v178
    %v187 = vmul.f32 %v157, %v179
    %v188 = vmul.f32 %v162, %v180
    %v189 = vmul.f32 %v165, %v181
    %v190 = vmul.f32 %v170, %v182
    %v191 = vmul.f32 %v173, %v183
    %v192 = vmul.f32 %v184, 0.044715
    %v193 = vmul.f32 %v185, 0.044715
    %v194 = vmul.f32 %v186, 0.044715
    %v195 = vmul.f32 %v187, 0.044715
    %v196 = vmul.f32 %v188, 0.044715
    %v197 = vmul.f32 %v189, 0.044715
    %v198 = vmul.f32 %v190, 0.044715
    %v199 = vmul.f32 %v191, 0.044715
    %v200 = vadd.f32 %v146, %v192
    %v201 = vadd.f32 %v149, %v193
    %v202 = vadd.f32 %v154, %v194
    %v203 = vadd.f32 %v157, %v195
    %v204 = vadd.f32 %v162, %v196
    %v205 = vadd.f32 %v165, %v197
    %v206 = vadd.f32 %v170, %v198
    %v207 = vadd.f32 %v173, %v199
    %v208 = vmul.f32 %v200, 0.7978846
    %v209 = vmul.f32 %v201, 0.7978846
    %v210 = vmul.f32 %v202, 0.7978846
    %v211 = vmul.f32 %v203, 0.7978846
    %v212 = vmul.f32 %v204, 0.7978846
    %v213 = vmul.f32 %v205, 0.7978846
    %v214 = vmul.f32 %v206, 0.7978846
    %v215 = vmul.f32 %v207, 0.7978846
    %v216 = vtanh.pop %v208
    %v217 = vtanh.pop %v209
    %v218 = vtanh.pop %v210
    %v219 = vtanh.pop %v211
    %v220 = vtanh.pop %v212
    %v221 = vtanh.pop %v213
    %v222 = vtanh.pop %v214
    %v223 = vtanh.pop %v215
    %v224 = vadd.f32 %v216, 1.0
    %v225 = vadd.f32 %v217, 1.0
    %v226 = vadd.f32 %v218, 1.0
    %v227 = vadd.f32 %v219, 1.0
    %v228 = vadd.f32 %v220, 1.0
    %v229 = vadd.f32 %v221, 1.0
    %v230 = vadd.f32 %v222, 1.0
    %v231 = vadd.f32 %v223, 1.0
    %v232 = vmul.f32 %v224, 0.5
    %v233 = vmul.f32 %v225, 0.5
    %v234 = vmul.f32 %v226, 0.5
    %v235 = vmul.f32 %v227, 0.5
    %v236 = vmul.f32 %v228, 0.5
    %v237 = vmul.f32 %v229, 0.5
    %v238 = vmul.f32 %v230, 0.5
    %v239 = vmul.f32 %v231, 0.5
    %v240 = vmul.f32 %v146, %v232
    %v241 = vmul.f32 %v149, %v233
    %v242 = vmul.f32 %v154, %v234
    %v243 = vmul.f32 %v157, %v235
    %v244 = vmul.f32 %v162, %v236
    %v245 = vmul.f32 %v165, %v237
    %v246 = vmul.f32 %v170, %v238
    %v247 = vmul.f32 %v173, %v239
    %v248 = vpack.c.bf16 %v241, %v240
    %v249 = vpack.c.bf16 %v243, %v242
    %v250 = vpack.c.bf16 %v245, %v244
    %v251 = vpack.c.bf16 %v247, %v246
    %v256 = vunpack.c.l.b16 %v248
    %v257 = vunpack.c.h.b16 %v248
    %v258 = vunpack.c.l.b16 %v249
    %v259 = vunpack.c.h.b16 %v249
    %v260 = vunpack.c.l.b16 %v250
    %v261 = vunpack.c.h.b16 %v250
    %v262 = vunpack.c.l.b16 %v251
    %v263 = vunpack.c.h.b16 %v251
    %v264 = vpack.c.b16 %v256, %v256
    %v265 = vpack.c.b16 %v257, %v257
    %v266 = vpack.c.b16 %v258, %v258
    %v267 = vpack.c.b16 %v259, %v259
    %v268 = vpack.c.b16 %v260, %v260
    %v269 = vpack.c.b16 %v261, %v261
    %v270 = vpack.c.b16 %v262, %v262
    %v271 = vpack.c.b16 %v263, %v263
    %vm280 = vcmask 257024
    %281 = vst.msk [vmem:[#allocation8] sm:$0xf] %vm280, %v264
    %282 = vst.msk [vmem:[#allocation8 + $0x4] sm:$0xf] %vm280, %v265
    %283 = vst.msk [vmem:[#allocation8 + $0x8] sm:$0xf] %vm280, %v266
    %284 = vst.msk [vmem:[#allocation8 + $0xc] sm:$0xf] %vm280, %v267
    %285 = vst.msk [vmem:[#allocation8 + $0x10] sm:$0xf] %vm280, %v268
    %286 = vst.msk [vmem:[#allocation8 + $0x14] sm:$0xf] %vm280, %v269
    %287 = vst.msk [vmem:[#allocation8 + $0x18] sm:$0xf] %vm280, %v270
    %288 = vst.msk [vmem:[#allocation8 + $0x1c] sm:$0xf] %vm280, %v271
    // Predicated region
    $region26: #{whisper_temperature_forward.43} parent=1 // pred_check
      _
    $region27: #{whisper_temperature_forward.43} parent=1 // pred_check_branch
      %290 = sbr.rel (0) target = $region29
    $region28: #{whisper_temperature_forward.43} parent=1 // pred_region
      %s292 = ssub.s32 512, 512
      %293 = vsyncadd [#allocation4], %s292
      %s294 = sshll.u32 [#allocation8], 4
      %s295 = int_to_ptr.vmem [resolvable:$true] %s294
      %300 = dma.vmem_to_hbm [thread:$0]  %s295, 512, %s3, [#allocation4], 64, 64, 4
    $region29: #{whisper_temperature_forward.43} parent=1 // pred_fallthru
      _
    // Predicated region
    $region30: #{whisper_temperature_forward.43} parent=1 // pred_check
      _
    $region31: #{whisper_temperature_forward.43} parent=1 // pred_check_branch
      %302 = sbr.rel (0) target = $region33
    $region32: #{whisper_temperature_forward.43} parent=1 // pred_region
      %303 = dma.done [#allocation4], 512
    $region33: #{whisper_temperature_forward.43} parent=1 // pred_fallthru
      _
    %304 = vsyncpa [#allocation3], 1
    %305 = vsyncpa [#allocation6], 1
    %306 = vsyncpa [#allocation4], 1

// kernel: whisper_temperature_forward.44
$region0: #{whisper_temperature_forward.44}
  #allocation0 [shape = 'u32[]', space=smem, size = 0x4, offset = 0x4, fixed_abs, tag = 'smem constant byte address 0x4 - core index']
  #allocation1 [shape = 'u32[144,128]{1,0:T(1,128)}', space=vmem, size = 0x12000, scoped, tag = 'internal scratch']
  %s0 = inlined_call_operand.hbm [shape: bf16[32,96], index: 0, kind: input, shape index: {}]
  %s1 = inlined_call_operand.hbm [shape: bf16[96,32], index: 1, kind: input, shape index: {}]
  %s2 = inlined_call_operand.hbm [shape: f32[1,32], index: 2, kind: input, shape index: {}]
  %s3 = inlined_call_operand.hbm [shape: f32[32,32], index: 3, kind: output, shape index: {}]
  %s4 = sld [smem:[#allocation0]]
  $region34: #{whisper_temperature_forward.44} parent=0
    _
  %s6 = ssub.s32 1, %s4
  %s7 = scalar_select 0, %s6, %s4
  $region1: #{whisper_temperature_forward.44} parent=0
    #allocation2 [shape = 'u8[8192]{0}', space=vmem, size = 0x2000, scoped, tag = 'input window, operand 0, single buffered']
    #allocation3 [shape = 's32[1]{0}', space=sflag, size = 0x4, scoped, tag = 'scoped memory for whisper_temperature_forward.44']
    #allocation4 [shape = 's32[1]{0}', space=sflag, size = 0x4, scoped, tag = 'scoped memory for whisper_temperature_forward.44']
    #allocation5 [shape = 'u8[24576]{0}', space=vmem, size = 0x6000, scoped, tag = 'input window, operand 1, single buffered']
    #allocation6 [shape = 's32[1]{0}', space=sflag, size = 0x4, scoped, tag = 'scoped memory for whisper_temperature_forward.44']
    #allocation7 [shape = 'u8[512]{0}', space=vmem, size = 0x400, scoped, tag = 'input window, operand 2, single buffered']
    #allocation8 [shape = 'u8[16384]{0}', space=vmem, size = 0x4000, scoped, tag = 'output window, operand 0, single buffered']
    %8 = vsyncpa [#allocation3], 0
    %9 = vsyncpa [#allocation6], 0
    %10 = vsyncpa [#allocation4], 0
    // Predicated region
    $region2: #{whisper_temperature_forward.44} parent=1 // pred_check
      _
    $region3: #{whisper_temperature_forward.44} parent=1 // pred_check_branch
      %12 = sbr.rel (0) target = $region5
    $region4: #{whisper_temperature_forward.44} parent=1 // pred_region
      %s14 = ssub.s32 256, 256
      %15 = vsyncadd [#allocation3], %s14
      %s16 = sshll.u32 [#allocation2], 4
      %s17 = int_to_ptr.vmem [resolvable:$true] %s16
      %22 = dma.hbm_to_vmem [thread:$0]  %s0, 256, %s17, [#allocation3], 64, 64, 4
    $region5: #{whisper_temperature_forward.44} parent=1 // pred_fallthru
      _
    // Predicated region
    $region6: #{whisper_temperature_forward.44} parent=1 // pred_check
      _
    $region7: #{whisper_temperature_forward.44} parent=1 // pred_check_branch
      %24 = sbr.rel (0) target = $region9
    $region8: #{whisper_temperature_forward.44} parent=1 // pred_region
      %s26 = ssub.s32 768, 768
      %27 = vsyncadd [#allocation6], %s26
      %s28 = sshll.u32 [#allocation5], 4
      %s29 = int_to_ptr.vmem [resolvable:$true] %s28
      %34 = dma.hbm_to_vmem [thread:$0]  %s1, 768, %s29, [#allocation6], 64, 64, 4
    $region9: #{whisper_temperature_forward.44} parent=1 // pred_fallthru
      _
    // Predicated region
    $region10: #{whisper_temperature_forward.44} parent=1 // pred_check
      _
    $region11: #{whisper_temperature_forward.44} parent=1 // pred_check_branch
      %36 = sbr.rel (0) target = $region13
    $region12: #{whisper_temperature_forward.44} parent=1 // pred_region
      %s38 = ssub.s32 16, 16
      %39 = vsyncadd [#allocation6], %s38
      %s41 = sshll.u32 [#allocation7], 4
      %s42 = int_to_ptr.vmem [resolvable:$true] %s41
      %44 = dma.hbm_to_vmem [thread:$0]  %s2, 16, %s42, [#allocation6]
    $region13: #{whisper_temperature_forward.44} parent=1 // pred_fallthru
      _
    // Predicated region
    $region14: #{whisper_temperature_forward.44} parent=1 // pred_check
      _
    $region15: #{whisper_temperature_forward.44} parent=1 // pred_check_branch
      %46 = sbr.rel (0) target = $region17
    $region16: #{whisper_temperature_forward.44} parent=1 // pred_region
      %47 = dma.done [#allocation3], 256
    $region17: #{whisper_temperature_forward.44} parent=1 // pred_fallthru
      _
    // Predicated region
    $region18: #{whisper_temperature_forward.44} parent=1 // pred_check
      _
    $region19: #{whisper_temperature_forward.44} parent=1 // pred_check_branch
      %49 = sbr.rel (0) target = $region21
    $region20: #{whisper_temperature_forward.44} parent=1 // pred_region
      %50 = dma.done [#allocation6], 768
    $region21: #{whisper_temperature_forward.44} parent=1 // pred_fallthru
      _
    // Predicated region
    $region22: #{whisper_temperature_forward.44} parent=1 // pred_check
      _
    $region23: #{whisper_temperature_forward.44} parent=1 // pred_check_branch
      %52 = sbr.rel (0) target = $region25
    $region24: #{whisper_temperature_forward.44} parent=1 // pred_region
      %53 = dma.done [#allocation6], 16
    $region25: #{whisper_temperature_forward.44} parent=1 // pred_fallthru
      _
    %v55 = vld [vmem:[#allocation2] sm:$0xf]
    %v56 = vld [vmem:[#allocation2 + $0x4] sm:$0xf]
    %v57 = vld [vmem:[#allocation2 + $0x8] sm:$0xf]
    %v58 = vld [vmem:[#allocation2 + $0xc] sm:$0xf]
    %v59 = vld [vmem:[#allocation5] sm:$0xf]
    %v60 = vld [vmem:[#allocation5 + $0x4] sm:$0xf]
    %v61 = vld [vmem:[#allocation5 + $0x8] sm:$0xf]
    %v62 = vld [vmem:[#allocation5 + $0xc] sm:$0xf]
    %v63 = vld [vmem:[#allocation5 + $0x10] sm:$0xf]
    %v64 = vld [vmem:[#allocation5 + $0x14] sm:$0xf]
    %v65 = vld [vmem:[#allocation5 + $0x18] sm:$0xf]
    %v66 = vld [vmem:[#allocation5 + $0x1c] sm:$0xf]
    %v67 = vld [vmem:[#allocation5 + $0x20] sm:$0xf]
    %v68 = vld [vmem:[#allocation5 + $0x24] sm:$0xf]
    %v69 = vld [vmem:[#allocation5 + $0x28] sm:$0xf]
    %v70 = vld [vmem:[#allocation5 + $0x2c] sm:$0xf]
    %v71 = vld [vmem:[#allocation7] sm:$0x1]
    %v73 = vlaneseq
    %v74 = vshrl.u32 %v73, 7
    %v75 = vsub.s32 0, %v74
    %v76 = vrot.slane %v71, %v75
    %v82 = vunpack.c.l.b16 %v55
    %v83 = vunpack.c.l.b16 %v56
    %v84 = vunpack.c.l.b16 %v57
    %v85 = vunpack.c.l.b16 %v58
    %v86 = vpack.c.b16 %v83, %v82
    %v87 = vpack.c.b16 %v85, %v84
    %v100 = vunpack.c.l.b16 %v59
    %v101 = vunpack.c.l.b16 %v60
    %v102 = vunpack.c.l.b16 %v61
    %v103 = vunpack.c.l.b16 %v62
    %v104 = vunpack.c.l.b16 %v63
    %v105 = vunpack.c.l.b16 %v64
    %v106 = vunpack.c.l.b16 %v65
    %v107 = vunpack.c.l.b16 %v66
    %v108 = vunpack.c.l.b16 %v67
    %v109 = vunpack.c.l.b16 %v68
    %v110 = vunpack.c.l.b16 %v69
    %v111 = vunpack.c.l.b16 %v70
    %v112 = vpack.c.b16 %v101, %v100
    %v113 = vpack.c.b16 %v103, %v102
    %v114 = vpack.c.b16 %v105, %v104
    %v115 = vpack.c.b16 %v107, %v106
    %v116 = vpack.c.b16 %v109, %v108
    %v117 = vpack.c.b16 %v111, %v110
    %vm124 = vcmask 785408
    %v126 = vsel %vm124, %v86, 0
    %v129 = vsel %vm124, %v87, 0
    %131 = vmatprep.subr.bf16.mxu0 0
    %132 = vmatpush1.bf16.msra.mxu0 %v112
    %133 = vmatprep.subr.bf16.mxu0 0
    %134 = vmatpush1.bf16.msra.mxu0 %v113
    %135 = vmatprep.subr.bf16.mxu0 0
    %136 = vmatpush1.bf16.msra.mxu0 %v114
    %137 = vmatprep.subr.bf16.mxu0 0
    %138 = vmatpush1.bf16.msra.mxu0 %v115
    %139 = vmatprep.subr.bf16.mxu0 0
    %140 = vmatpush1.bf16.msra.mxu0 %v116
    %141 = vmatprep.subr.bf16.mxu0 0
    %142 = vmatpush1.bf16.msra.mxu0 %v117
    %143 = vmatprep.subr.bf16.mxu0 0
    %144 = vmatpush1.bf16.msra.mxu0 0
    %145 = vmatprep.subr.bf16.mxu0 0
    %146 = vmatpush1.bf16.msra.mxu0 0
    %147 = vmatprep.subr.bf16.mxu0 0
    %148 = vmatpush1.bf16.msra.mxu0 0
    %149 = vmatprep.subr.bf16.mxu0 0
    %150 = vmatpush1.bf16.msra.mxu0 0
    %151 = vmatprep.subr.bf16.mxu0 0
    %152 = vmatpush1.bf16.msra.mxu0 0
    %153 = vmatprep.subr.bf16.mxu0 0
    %154 = vmatpush1.bf16.msra.mxu0 0
    %155 = vmatprep.subr.bf16.mxu0 0
    %156 = vmatpush1.bf16.msra.mxu0 0
    %157 = vmatprep.subr.bf16.mxu0 0
    %158 = vmatpush1.bf16.msra.mxu0 0
    %159 = vmatprep.subr.bf16.mxu0 0
    %160 = vmatpush1.bf16.msra.mxu0 0
    %161 = vmatprep.subr.bf16.mxu0 0
    %162 = vmatpush1.bf16.msra.mxu0 0
    %163 = vmatprep.mubr.bf16.mxu0 0
    %164 = vmatmul.mubr.bf16.gmra.mrb[0].mxu0 %v126
    %v165 = vpop.f32.mrb[0].mxu0
    %v166 = vadd.f32 %v76, %v165
    %v167 = vpop.f32.mrb[0].mxu0
    %v168 = vpop.f32.mrb[0].mxu0
    %v169 = vadd.f32 %v76, %v168
    %v170 = vpop.f32.mrb[0].mxu0
    %171 = vmatprep.mubr.bf16.mxu0 0
    %172 = vmatmul.mubr.bf16.gmra.mrb[0].mxu0 %v129
    %v173 = vpop.f32.mrb[0].mxu0
    %v174 = vadd.f32 %v76, %v173
    %v175 = vpop.f32.mrb[0].mxu0
    %v176 = vpop.f32.mrb[0].mxu0
    %v177 = vadd.f32 %v76, %v176
    %v178 = vpop.f32.mrb[0].mxu0
    %179 = vdwg.mxu0
    %v180 = vmul.f32 %v166, %v166
    %v181 = vmul.f32 %v169, %v169
    %v182 = vmul.f32 %v174, %v174
    %v183 = vmul.f32 %v177, %v177
    %v184 = vmul.f32 %v166, %v180
    %v185 = vmul.f32 %v169, %v181
    %v186 = vmul.f32 %v174, %v182
    %v187 = vmul.f32 %v177, %v183
    %v188 = vmul.f32 %v184, 0.044715
    %v189 = vmul.f32 %v185, 0.044715
    %v190 = vmul.f32 %v186, 0.044715
    %v191 = vmul.f32 %v187, 0.044715
    %v192 = vadd.f32 %v166, %v188
    %v193 = vadd.f32 %v169, %v189
    %v194 = vadd.f32 %v174, %v190
    %v195 = vadd.f32 %v177, %v191
    %v196 = vmul.f32 %v192, 0.7978846
    %v197 = vmul.f32 %v193, 0.7978846
    %v198 = vmul.f32 %v194, 0.7978846
    %v199 = vmul.f32 %v195, 0.7978846
    %v200 = vtanh.pop %v196
    %v201 = vtanh.pop %v197
    %v202 = vtanh.pop %v198
    %v203 = vtanh.pop %v199
    %v204 = vadd.f32 %v200, 1.0
    %v205 = vadd.f32 %v201, 1.0
    %v206 = vadd.f32 %v202, 1.0
    %v207 = vadd.f32 %v203, 1.0
    %v208 = vmul.f32 %v204, 0.5
    %v209 = vmul.f32 %v205, 0.5
    %v210 = vmul.f32 %v206, 0.5
    %v211 = vmul.f32 %v207, 0.5
    %v212 = vmul.f32 %v166, %v208
    %v213 = vmul.f32 %v169, %v209
    %v214 = vmul.f32 %v174, %v210
    %v215 = vmul.f32 %v177, %v211
    %vm216 = vcmask 261120
    %217 = vst.msk [vmem:[#allocation8] sm:$0xff] %vm216, %v212
    %218 = vst.msk [vmem:[#allocation8 + $0x8] sm:$0xff] %vm216, %v213
    %219 = vst.msk [vmem:[#allocation8 + $0x10] sm:$0xff] %vm216, %v214
    %220 = vst.msk [vmem:[#allocation8 + $0x18] sm:$0xff] %vm216, %v215
    // Predicated region
    $region26: #{whisper_temperature_forward.44} parent=1 // pred_check
      _
    $region27: #{whisper_temperature_forward.44} parent=1 // pred_check_branch
      %222 = sbr.rel (0) target = $region29
    $region28: #{whisper_temperature_forward.44} parent=1 // pred_region
      %s224 = ssub.s32 512, 512
      %225 = vsyncadd [#allocation4], %s224
      %s226 = sshll.u32 [#allocation8], 4
      %s227 = int_to_ptr.vmem [resolvable:$true] %s226
      %232 = dma.vmem_to_hbm [thread:$0]  %s227, 512, %s3, [#allocation4], 128, 128, 8
    $region29: #{whisper_temperature_forward.44} parent=1 // pred_fallthru
      _
    // Predicated region
    $region30: #{whisper_temperature_forward.44} parent=1 // pred_check
      _
    $region31: #{whisper_temperature_forward.44} parent=1 // pred_check_branch
      %234 = sbr.rel (0) target = $region33
    $region32: #{whisper_temperature_forward.44} parent=1 // pred_region
      %235 = dma.done [#allocation4], 512
    $region33: #{whisper_temperature_forward.44} parent=1 // pred_fallthru
      _
    %236 = vsyncpa [#allocation3], 1
    %237 = vsyncpa [#allocation6], 1
    %238 = vsyncpa [#allocation4], 1

// kernel: whisper_temperature_forward.46
$region0: #{whisper_temperature_forward.46}
  #allocation0 [shape = 'u32[]', space=smem, size = 0x4, offset = 0x4, fixed_abs, tag = 'smem constant byte address 0x4 - core index']
  #allocation1 [shape = 'u32[144,128]{1,0:T(1,128)}', space=vmem, size = 0x12000, scoped, tag = 'internal scratch']
  %s0 = inlined_call_operand.hbm [shape: bf16[32,32], index: 0, kind: input, shape index: {}]
  %s1 = inlined_call_operand.hbm [shape: bf16[32,96], index: 1, kind: input, shape index: {}]
  %s2 = inlined_call_operand.hbm [shape: f32[1,96], index: 2, kind: input, shape index: {}]
  %s3 = inlined_call_operand.hbm [shape: bf16[32,96], index: 3, kind: output, shape index: {}]
  %s4 = sld [smem:[#allocation0]]
  $region34: #{whisper_temperature_forward.46} parent=0
    _
  %s6 = ssub.s32 1, %s4
  %s7 = scalar_select 0, %s6, %s4
  $region1: #{whisper_temperature_forward.46} parent=0
    #allocation2 [shape = 'u8[8192]{0}', space=vmem, size = 0x2000, scoped, tag = 'input window, operand 0, single buffered']
    #allocation3 [shape = 's32[1]{0}', space=sflag, size = 0x4, scoped, tag = 'scoped memory for whisper_temperature_forward.46']
    #allocation4 [shape = 's32[1]{0}', space=sflag, size = 0x4, scoped, tag = 'scoped memory for whisper_temperature_forward.46']
    #allocation5 [shape = 'u8[8192]{0}', space=vmem, size = 0x2000, scoped, tag = 'input window, operand 1, single buffered']
    #allocation6 [shape = 's32[1]{0}', space=sflag, size = 0x4, scoped, tag = 'scoped memory for whisper_temperature_forward.46']
    #allocation7 [shape = 'u8[512]{0}', space=vmem, size = 0x400, scoped, tag = 'input window, operand 2, single buffered']
    #allocation8 [shape = 'u8[8192]{0}', space=vmem, size = 0x2000, scoped, tag = 'output window, operand 0, single buffered']
    %8 = vsyncpa [#allocation3], 0
    %9 = vsyncpa [#allocation6], 0
    %10 = vsyncpa [#allocation4], 0
    // Predicated region
    $region2: #{whisper_temperature_forward.46} parent=1 // pred_check
      _
    $region3: #{whisper_temperature_forward.46} parent=1 // pred_check_branch
      %12 = sbr.rel (0) target = $region5
    $region4: #{whisper_temperature_forward.46} parent=1 // pred_region
      %s14 = ssub.s32 256, 256
      %15 = vsyncadd [#allocation3], %s14
      %s16 = sshll.u32 [#allocation2], 4
      %s17 = int_to_ptr.vmem [resolvable:$true] %s16
      %22 = dma.hbm_to_vmem [thread:$0]  %s0, 256, %s17, [#allocation3], 64, 64, 4
    $region5: #{whisper_temperature_forward.46} parent=1 // pred_fallthru
      _
    // Predicated region
    $region6: #{whisper_temperature_forward.46} parent=1 // pred_check
      _
    $region7: #{whisper_temperature_forward.46} parent=1 // pred_check_branch
      %24 = sbr.rel (0) target = $region9
    $region8: #{whisper_temperature_forward.46} parent=1 // pred_region
      %s26 = ssub.s32 256, 256
      %27 = vsyncadd [#allocation6], %s26
      %s28 = sshll.u32 [#allocation5], 4
      %s29 = int_to_ptr.vmem [resolvable:$true] %s28
      %34 = dma.hbm_to_vmem [thread:$0]  %s1, 256, %s29, [#allocation6], 64, 64, 4
    $region9: #{whisper_temperature_forward.46} parent=1 // pred_fallthru
      _
    // Predicated region
    $region10: #{whisper_temperature_forward.46} parent=1 // pred_check
      _
    $region11: #{whisper_temperature_forward.46} parent=1 // pred_check_branch
      %36 = sbr.rel (0) target = $region13
    $region12: #{whisper_temperature_forward.46} parent=1 // pred_region
      %s38 = ssub.s32 16, 16
      %39 = vsyncadd [#allocation6], %s38
      %s41 = sshll.u32 [#allocation7], 4
      %s42 = int_to_ptr.vmem [resolvable:$true] %s41
      %44 = dma.hbm_to_vmem [thread:$0]  %s2, 16, %s42, [#allocation6]
    $region13: #{whisper_temperature_forward.46} parent=1 // pred_fallthru
      _
    // Predicated region
    $region14: #{whisper_temperature_forward.46} parent=1 // pred_check
      _
    $region15: #{whisper_temperature_forward.46} parent=1 // pred_check_branch
      %46 = sbr.rel (0) target = $region17
    $region16: #{whisper_temperature_forward.46} parent=1 // pred_region
      %47 = dma.done [#allocation3], 256
    $region17: #{whisper_temperature_forward.46} parent=1 // pred_fallthru
      _
    // Predicated region
    $region18: #{whisper_temperature_forward.46} parent=1 // pred_check
      _
    $region19: #{whisper_temperature_forward.46} parent=1 // pred_check_branch
      %49 = sbr.rel (0) target = $region21
    $region20: #{whisper_temperature_forward.46} parent=1 // pred_region
      %50 = dma.done [#allocation6], 256
    $region21: #{whisper_temperature_forward.46} parent=1 // pred_fallthru
      _
    // Predicated region
    $region22: #{whisper_temperature_forward.46} parent=1 // pred_check
      _
    $region23: #{whisper_temperature_forward.46} parent=1 // pred_check_branch
      %52 = sbr.rel (0) target = $region25
    $region24: #{whisper_temperature_forward.46} parent=1 // pred_region
      %53 = dma.done [#allocation6], 16
    $region25: #{whisper_temperature_forward.46} parent=1 // pred_fallthru
      _
    %v55 = vld [vmem:[#allocation2] sm:$0xf]
    %v56 = vld [vmem:[#allocation2 + $0x4] sm:$0xf]
    %v57 = vld [vmem:[#allocation2 + $0x8] sm:$0xf]
    %v58 = vld [vmem:[#allocation2 + $0xc] sm:$0xf]
    %v59 = vld [vmem:[#allocation5] sm:$0xf]
    %v60 = vld [vmem:[#allocation5 + $0x4] sm:$0xf]
    %v61 = vld [vmem:[#allocation5 + $0x8] sm:$0xf]
    %v62 = vld [vmem:[#allocation5 + $0xc] sm:$0xf]
    %v63 = vld [vmem:[#allocation7] sm:$0x1]
    %v65 = vlaneseq
    %v66 = vshrl.u32 %v65, 7
    %v67 = vsub.s32 0, %v66
    %v68 = vrot.slane %v63, %v67
    %v74 = vunpack.c.l.b16 %v55
    %v75 = vunpack.c.l.b16 %v56
    %v76 = vunpack.c.l.b16 %v57
    %v77 = vunpack.c.l.b16 %v58
    %v78 = vpack.c.b16 %v75, %v74
    %v79 = vpack.c.b16 %v77, %v76
    %v84 = vunpack.c.l.b16 %v59
    %v85 = vunpack.c.l.b16 %v60
    %v86 = vunpack.c.l.b16 %v61
    %v87 = vunpack.c.l.b16 %v62
    %v88 = vpack.c.b16 %v85, %v84
    %v89 = vpack.c.b16 %v87, %v86
    %vm92 = vcmask 261120
    %v94 = vsel %vm92, %v78, 0
    %v97 = vsel %vm92, %v79, 0
    %99 = vmatprep.subr.bf16.mxu0 0
    %100 = vmatpush1.bf16.msra.mxu0 %v88
    %101 = vmatprep.subr.bf16.mxu0 0
    %102 = vmatpush1.bf16.msra.mxu0 %v89
    %103 = vmatprep.subr.bf16.mxu0 0
    %104 = vmatpush1.bf16.msra.mxu0 0
    %105 = vmatprep.subr.bf16.mxu0 0
    %106 = vmatpush1.bf16.msra.mxu0 0
    %107 = vmatprep.subr.bf16.mxu0 0
    %108 = vmatpush1.bf16.msra.mxu0 0
    %109 = vmatprep.subr.bf16.mxu0 0
    %110 = vmatpush1.bf16.msra.mxu0 0
    %111 = vmatprep.subr.bf16.mxu0 0
    %112 = vmatpush1.bf16.msra.mxu0 0
    %113 = vmatprep.subr.bf16.mxu0 0
    %114 = vmatpush1.bf16.msra.mxu0 0
    %115 = vmatprep.subr.bf16.mxu0 0
    %116 = vmatpush1.bf16.msra.mxu0 0
    %117 = vmatprep.subr.bf16.mxu0 0
    %118 = vmatpush1.bf16.msra.mxu0 0
    %119 = vmatprep.subr.bf16.mxu0 0
    %120 = vmatpush1.bf16.msra.mxu0 0
    %121 = vmatprep.subr.bf16.mxu0 0
    %122 = vmatpush1.bf16.msra.mxu0 0
    %123 = vmatprep.subr.bf16.mxu0 0
    %124 = vmatpush1.bf16.msra.mxu0 0
    %125 = vmatprep.subr.bf16.mxu0 0
    %126 = vmatpush1.bf16.msra.mxu0 0
    %127 = vmatprep.subr.bf16.mxu0 0
    %128 = vmatpush1.bf16.msra.mxu0 0
    %129 = vmatprep.subr.bf16.mxu0 0
    %130 = vmatpush1.bf16.msra.mxu0 0
    %131 = vmatprep.mubr.bf16.mxu0 0
    %132 = vmatmul.mubr.bf16.gmra.mrb[0].mxu0 %v94
    %v133 = vpop.f32.mrb[0].mxu0
    %v134 = vadd.f32 %v68, %v133
    %v135 = vpop.f32.mrb[0].mxu0
    %v136 = vpop.f32.mrb[0].mxu0
    %v137 = vadd.f32 %v68, %v136
    %v138 = vpop.f32.mrb[0].mxu0
    %139 = vmatprep.mubr.bf16.mxu0 0
    %140 = vmatmul.mubr.bf16.gmra.mrb[0].mxu0 %v97
    %v141 = vpop.f32.mrb[0].mxu0
    %v142 = vadd.f32 %v68, %v141
    %v143 = vpop.f32.mrb[0].mxu0
    %v144 = vpop.f32.mrb[0].mxu0
    %v145 = vadd.f32 %v68, %v144
    %v146 = vpop.f32.mrb[0].mxu0
    %147 = vdwg.mxu0
    %v148 = vpack.c.bf16 %v137, %v134
    %v149 = vpack.c.bf16 %v145, %v142
    %v152 = vunpack.c.l.b16 %v148
    %v153 = vunpack.c.h.b16 %v148
    %v154 = vunpack.c.l.b16 %v149
    %v155 = vunpack.c.h.b16 %v149
    %v156 = vpack.c.b16 %v152, %v152
    %v157 = vpack.c.b16 %v153, %v153
    %v158 = vpack.c.b16 %v154, %v154
    %v159 = vpack.c.b16 %v155, %v155
    %vm164 = vcmask 781312
    %165 = vst.msk [vmem:[#allocation8] sm:$0xf] %vm164, %v156
    %166 = vst.msk [vmem:[#allocation8 + $0x4] sm:$0xf] %vm164, %v157
    %167 = vst.msk [vmem:[#allocation8 + $0x8] sm:$0xf] %vm164, %v158
    %168 = vst.msk [vmem:[#allocation8 + $0xc] sm:$0xf] %vm164, %v159
    // Predicated region
    $region26: #{whisper_temperature_forward.46} parent=1 // pred_check
      _
    $region27: #{whisper_temperature_forward.46} parent=1 // pred_check_branch
      %170 = sbr.rel (0) target = $region29
    $region28: #{whisper_temperature_forward.46} parent=1 // pred_region
      %s172 = ssub.s32 256, 256
      %173 = vsyncadd [#allocation4], %s172
      %s174 = sshll.u32 [#allocation8], 4
      %s175 = int_to_ptr.vmem [resolvable:$true] %s174
      %180 = dma.vmem_to_hbm [thread:$0]  %s175, 256, %s3, [#allocation4], 64, 64, 4
    $region29: #{whisper_temperature_forward.46} parent=1 // pred_fallthru
      _
    // Predicated region
    $region30: #{whisper_temperature_forward.46} parent=1 // pred_check
      _
    $region31: #{whisper_temperature_forward.46} parent=1 // pred_check_branch
      %182 = sbr.rel (0) target = $region33
    $region32: #{whisper_temperature_forward.46} parent=1 // pred_region
      %183 = dma.done [#allocation4], 256
    $region33: #{whisper_temperature_forward.46} parent=1 // pred_fallthru
      _
    %184 = vsyncpa [#allocation3], 1
    %185 = vsyncpa [#allocation6], 1
    %186 = vsyncpa [#allocation4], 1

// kernel: whisper_temperature_forward.45
$region0: #{whisper_temperature_forward.45}
  #allocation0 [shape = 'u32[]', space=smem, size = 0x4, offset = 0x4, fixed_abs, tag = 'smem constant byte address 0x4 - core index']
  #allocation1 [shape = 'u32[144,128]{1,0:T(1,128)}', space=vmem, size = 0x12000, scoped, tag = 'internal scratch']
  %s0 = inlined_call_operand.hbm [shape: f32[32,32], index: 0, kind: input, shape index: {}]
  %s1 = inlined_call_operand.hbm [shape: f32[1,32], index: 1, kind: input, shape index: {}]
  %s2 = inlined_call_operand.hbm [shape: f32[1,32], index: 2, kind: input, shape index: {}]
  %s3 = inlined_call_operand.hbm [shape: bf16[32,32], index: 3, kind: output, shape index: {}]
  %s4 = sld [smem:[#allocation0]]
  $region34: #{whisper_temperature_forward.45} parent=0
    _
  %s6 = ssub.s32 1, %s4
  %s7 = scalar_select 0, %s6, %s4
  $region1: #{whisper_temperature_forward.45} parent=0
    #allocation2 [shape = 'u8[16384]{0}', space=vmem, size = 0x4000, scoped, tag = 'input window, operand 0, single buffered']
    #allocation3 [shape = 's32[1]{0}', space=sflag, size = 0x4, scoped, tag = 'scoped memory for whisper_temperature_forward.45']
    #allocation4 [shape = 's32[1]{0}', space=sflag, size = 0x4, scoped, tag = 'scoped memory for whisper_temperature_forward.45']
    #allocation5 [shape = 'u8[512]{0}', space=vmem, size = 0x400, scoped, tag = 'input window, operand 1, single buffered']
    #allocation6 [shape = 's32[1]{0}', space=sflag, size = 0x4, scoped, tag = 'scoped memory for whisper_temperature_forward.45']
    #allocation7 [shape = 'u8[512]{0}', space=vmem, size = 0x400, scoped, tag = 'input window, operand 2, single buffered']
    #allocation8 [shape = 'u8[8192]{0}', space=vmem, size = 0x2000, scoped, tag = 'output window, operand 0, single buffered']
    %8 = vsyncpa [#allocation3], 0
    %9 = vsyncpa [#allocation6], 0
    %10 = vsyncpa [#allocation4], 0
    // Predicated region
    $region2: #{whisper_temperature_forward.45} parent=1 // pred_check
      _
    $region3: #{whisper_temperature_forward.45} parent=1 // pred_check_branch
      %12 = sbr.rel (0) target = $region5
    $region4: #{whisper_temperature_forward.45} parent=1 // pred_region
      %s14 = ssub.s32 512, 512
      %15 = vsyncadd [#allocation3], %s14
      %s16 = sshll.u32 [#allocation2], 4
      %s17 = int_to_ptr.vmem [resolvable:$true] %s16
      %22 = dma.hbm_to_vmem [thread:$0]  %s0, 512, %s17, [#allocation3], 128, 128, 8
    $region5: #{whisper_temperature_forward.45} parent=1 // pred_fallthru
      _
    // Predicated region
    $region6: #{whisper_temperature_forward.45} parent=1 // pred_check
      _
    $region7: #{whisper_temperature_forward.45} parent=1 // pred_check_branch
      %24 = sbr.rel (0) target = $region9
    $region8: #{whisper_temperature_forward.45} parent=1 // pred_region
      %s26 = ssub.s32 16, 16
      %27 = vsyncadd [#allocation6], %s26
      %s29 = sshll.u32 [#allocation5], 4
      %s30 = int_to_ptr.vmem [resolvable:$true] %s29
      %32 = dma.hbm_to_vmem [thread:$0]  %s1, 16, %s30, [#allocation6]
    $region9: #{whisper_temperature_forward.45} parent=1 // pred_fallthru
      _
    // Predicated region
    $region10: #{whisper_temperature_forward.45} parent=1 // pred_check
      _
    $region11: #{whisper_temperature_forward.45} parent=1 // pred_check_branch
      %34 = sbr.rel (0) target = $region13
    $region12: #{whisper_temperature_forward.45} parent=1 // pred_region
      %s36 = ssub.s32 16, 16
      %37 = vsyncadd [#allocation6], %s36
      %s39 = sshll.u32 [#allocation7], 4
      %s40 = int_to_ptr.vmem [resolvable:$true] %s39
      %42 = dma.hbm_to_vmem [thread:$0]  %s2, 16, %s40, [#allocation6]
    $region13: #{whisper_temperature_forward.45} parent=1 // pred_fallthru
      _
    // Predicated region
    $region14: #{whisper_temperature_forward.45} parent=1 // pred_check
      _
    $region15: #{whisper_temperature_forward.45} parent=1 // pred_check_branch
      %44 = sbr.rel (0) target = $region17
    $region16: #{whisper_temperature_forward.45} parent=1 // pred_region
      %45 = dma.done [#allocation3], 512
    $region17: #{whisper_temperature_forward.45} parent=1 // pred_fallthru
      _
    // Predicated region
    $region18: #{whisper_temperature_forward.45} parent=1 // pred_check
      _
    $region19: #{whisper_temperature_forward.45} parent=1 // pred_check_branch
      %47 = sbr.rel (0) target = $region21
    $region20: #{whisper_temperature_forward.45} parent=1 // pred_region
      %48 = dma.done [#allocation6], 16
    $region21: #{whisper_temperature_forward.45} parent=1 // pred_fallthru
      _
    // Predicated region
    $region22: #{whisper_temperature_forward.45} parent=1 // pred_check
      _
    $region23: #{whisper_temperature_forward.45} parent=1 // pred_check_branch
      %50 = sbr.rel (0) target = $region25
    $region24: #{whisper_temperature_forward.45} parent=1 // pred_region
      %51 = dma.done [#allocation6], 16
    $region25: #{whisper_temperature_forward.45} parent=1 // pred_fallthru
      _
    %v52 = vld [vmem:[#allocation2] sm:$0xff]
    %v53 = vld [vmem:[#allocation2 + $0x8] sm:$0xff]
    %v54 = vld [vmem:[#allocation2 + $0x10] sm:$0xff]
    %v55 = vld [vmem:[#allocation2 + $0x18] sm:$0xff]
    %vm56 = vcmask 261120
    %v57 = vsel %vm56, %v52, 0.0
    %58 = vadd.xlane.f32.xlu0 %v57
    %v59 = vpop.xlane.xlu0 %58
    %v60 = vsel %vm56, %v53, 0.0
    %61 = vadd.xlane.f32.xlu0 %v60
    %v62 = vpop.xlane.xlu0 %61
    %v63 = vsel %vm56, %v54, 0.0
    %64 = vadd.xlane.f32.xlu0 %v63
    %v65 = vpop.xlane.xlu0 %64
    %v66 = vsel %vm56, %v55, 0.0
    %67 = vadd.xlane.f32.xlu0 %v66
    %v68 = vpop.xlane.xlu0 %67
    %v69 = vrcp.pop 32.0
    %v70 = vmul.f32 %v59, %v69
    %v71 = vmul.f32 %v62, %v69
    %v72 = vmul.f32 %v65, %v69
    %v73 = vmul.f32 %v68, %v69
    %v74 = vsub.f32 %v52, %v70
    %v75 = vsub.f32 %v53, %v71
    %v76 = vsub.f32 %v54, %v72
    %v77 = vsub.f32 %v55, %v73
    %v78 = vmul.f32 %v74, %v74
    %v79 = vmul.f32 %v75, %v75
    %v80 = vmul.f32 %v76, %v76
    %v81 = vmul.f32 %v77, %v77
    %v82 = vsel %vm56, %v78, 0.0
    %83 = vadd.xlane.f32.xlu0 %v82
    %v84 = vpop.xlane.xlu0 %83
    %v85 = vsel %vm56, %v79, 0.0
    %86 = vadd.xlane.f32.xlu0 %v85
    %v87 = vpop.xlane.xlu0 %86
    %v88 = vsel %vm56, %v80, 0.0
    %89 = vadd.xlane.f32.xlu0 %v88
    %v90 = vpop.xlane.xlu0 %89
    %v91 = vsel %vm56, %v81, 0.0
    %92 = vadd.xlane.f32.xlu0 %v91
    %v93 = vpop.xlane.xlu0 %92
    %v94 = vmul.f32 %v84, %v69
    %v95 = vmul.f32 %v87, %v69
    %v96 = vmul.f32 %v90, %v69
    %v97 = vmul.f32 %v93, %v69
    %v98 = vadd.f32 %v94, 1e-05
    %v99 = vadd.f32 %v95, 1e-05
    %v100 = vadd.f32 %v96, 1e-05
    %v101 = vadd.f32 %v97, 1e-05
    %v102 = vrsqrt.pop %v98
    %v103 = vrsqrt.pop %v99
    %v104 = vrsqrt.pop %v100
    %v105 = vrsqrt.pop %v101
    %v106 = vmul.f32 %v74, %v102
    %v107 = vmul.f32 %v75, %v103
    %v108 = vmul.f32 %v76, %v104
    %v109 = vmul.f32 %v77, %v105
    %v110 = vld [vmem:[#allocation5] sm:$0x1]
    %v112 = vlaneseq
    %v113 = vshrl.u32 %v112, 7
    %v114 = vsub.s32 0, %v113
    %v115 = vrot.slane %v110, %v114
    %v117 = vmul.f32 %v106, %v115
    %v118 = vmul.f32 %v107, %v115
    %v119 = vmul.f32 %v108, %v115
    %v120 = vmul.f32 %v109, %v115
    %v121 = vld [vmem:[#allocation7] sm:$0x1]
    %v123 = vlaneseq
    %v124 = vshrl.u32 %v123, 7
    %v125 = vsub.s32 0, %v124
    %v126 = vrot.slane %v121, %v125
    %v128 = vadd.f32 %v117, %v126
    %v129 = vadd.f32 %v118, %v126
    %v130 = vadd.f32 %v119, %v126
    %v131 = vadd.f32 %v120, %v126
    %v132 = vpack.c.bf16 %v129, %v128
    %v133 = vpack.c.bf16 %v131, %v130
    %v136 = vunpack.c.l.b16 %v132
    %v137 = vunpack.c.h.b16 %v132
    %v138 = vunpack.c.l.b16 %v133
    %v139 = vunpack.c.h.b16 %v133
    %v140 = vpack.c.b16 %v136, %v136
    %v141 = vpack.c.b16 %v137, %v137
    %v142 = vpack.c.b16 %v138, %v138
    %v143 = vpack.c.b16 %v139, %v139
    %vm148 = vcmask 257024
    %149 = vst.msk [vmem:[#allocation8] sm:$0xf] %vm148, %v140
    %150 = vst.msk [vmem:[#allocation8 + $0x4] sm:$0xf] %vm148, %v141
    %151 = vst.msk [vmem:[#allocation8 + $0x8] sm:$0xf] %vm148, %v142
    %152 = vst.msk [vmem:[#allocation8 + $0xc] sm:$0xf] %vm148, %v143
    // Predicated region
    $region26: #{whisper_temperature_forward.45} parent=1 // pred_check
      _
    $region27: #{whisper_temperature_forward.45} parent=1 // pred_check_branch
      %154 = sbr.rel (0) target = $region29
    $region28: #{whisper_temperature_forward.45} parent=1 // pred_region
      %s156 = ssub.s32 256, 256
      %157 = vsyncadd [#allocation4], %s156
      %s158 = sshll.u32 [#allocation8], 4
      %s159 = int_to_ptr.vmem [resolvable:$true] %s158
      %164 = dma.vmem_to_hbm [thread:$0]  %s159, 256, %s3, [#allocation4], 64, 64, 4
    $region29: #{whisper_temperature_forward.45} parent=1 // pred_fallthru
      _
    // Predicated region
    $region30: #{whisper_temperature_forward.45} parent=1 // pred_check
      _
    $region31: #{whisper_temperature_forward.45} parent=1 // pred_check_branch
      %166 = sbr.rel (0) target = $region33
    $region32: #{whisper_temperature_forward.45} parent=1 // pred_region
      %167 = dma.done [#allocation4], 256
    $region33: #{whisper_temperature_forward.45} parent=1 // pred_fallthru
      _
    %168 = vsyncpa [#allocation3], 1
    %169 = vsyncpa [#allocation6], 1
    %170 = vsyncpa [#allocation4], 1

// kernel: whisper_temperature_forward.48
$region0: #{whisper_temperature_forward.48}
  #allocation0 [shape = 'u32[]', space=smem, size = 0x4, offset = 0x4, fixed_abs, tag = 'smem constant byte address 0x4 - core index']
  #allocation1 [shape = 'u32[144,128]{1,0:T(1,128)}', space=vmem, size = 0x12000, scoped, tag = 'internal scratch']
  %s0 = inlined_call_operand.hbm [shape: bf16[32,32], index: 0, kind: input, shape index: {}]
  %s1 = inlined_call_operand.hbm [shape: bf16[32,32], index: 1, kind: input, shape index: {}]
  %s2 = inlined_call_operand.hbm [shape: f32[1,32], index: 2, kind: input, shape index: {}]
  %s3 = inlined_call_operand.hbm [shape: f32[32,32], index: 3, kind: input, shape index: {}]
  %s4 = inlined_call_operand.hbm [shape: f32[32,32], index: 4, kind: output, shape index: {}]
  %s5 = sld [smem:[#allocation0]]
  $region42: #{whisper_temperature_forward.48} parent=0
    _
  %s7 = ssub.s32 1, %s5
  %s8 = scalar_select 0, %s7, %s5
  $region1: #{whisper_temperature_forward.48} parent=0
    #allocation2 [shape = 'u8[8192]{0}', space=vmem, size = 0x2000, scoped, tag = 'input window, operand 0, single buffered']
    #allocation3 [shape = 's32[1]{0}', space=sflag, size = 0x4, scoped, tag = 'scoped memory for whisper_temperature_forward.48']
    #allocation4 [shape = 's32[1]{0}', space=sflag, size = 0x4, scoped, tag = 'scoped memory for whisper_temperature_forward.48']
    #allocation5 [shape = 'u8[8192]{0}', space=vmem, size = 0x2000, scoped, tag = 'input window, operand 1, single buffered']
    #allocation6 [shape = 's32[1]{0}', space=sflag, size = 0x4, scoped, tag = 'scoped memory for whisper_temperature_forward.48']
    #allocation7 [shape = 'u8[512]{0}', space=vmem, size = 0x400, scoped, tag = 'input window, operand 2, single buffered']
    #allocation8 [shape = 'u8[16384]{0}', space=vmem, size = 0x4000, scoped, tag = 'input window, operand 3, single buffered']
    #allocation9 [shape = 's32[1]{0}', space=sflag, size = 0x4, scoped, tag = 'scoped memory for whisper_temperature_forward.48']
    #allocation10 [shape = 'u8[16384]{0}', space=vmem, size = 0x4000, scoped, tag = 'output window, operand 0, single buffered']
    %9 = vsyncpa [#allocation3], 0
    %10 = vsyncpa [#allocation6], 0
    %11 = vsyncpa [#allocation9], 0
    %12 = vsyncpa [#allocation4], 0
    // Predicated region
    $region2: #{whisper_temperature_forward.48} parent=1 // pred_check
      _
    $region3: #{whisper_temperature_forward.48} parent=1 // pred_check_branch
      %14 = sbr.rel (0) target = $region5
    $region4: #{whisper_temperature_forward.48} parent=1 // pred_region
      %s16 = ssub.s32 256, 256
      %17 = vsyncadd [#allocation3], %s16
      %s18 = sshll.u32 [#allocation2], 4
      %s19 = int_to_ptr.vmem [resolvable:$true] %s18
      %24 = dma.hbm_to_vmem [thread:$0]  %s0, 256, %s19, [#allocation3], 64, 64, 4
    $region5: #{whisper_temperature_forward.48} parent=1 // pred_fallthru
      _
    // Predicated region
    $region6: #{whisper_temperature_forward.48} parent=1 // pred_check
      _
    $region7: #{whisper_temperature_forward.48} parent=1 // pred_check_branch
      %26 = sbr.rel (0) target = $region9
    $region8: #{whisper_temperature_forward.48} parent=1 // pred_region
      %s28 = ssub.s32 256, 256
      %29 = vsyncadd [#allocation6], %s28
      %s30 = sshll.u32 [#allocation5], 4
      %s31 = int_to_ptr.vmem [resolvable:$true] %s30
      %36 = dma.hbm_to_vmem [thread:$0]  %s1, 256, %s31, [#allocation6], 64, 64, 4
    $region9: #{whisper_temperature_forward.48} parent=1 // pred_fallthru
      _
    // Predicated region
    $region10: #{whisper_temperature_forward.48} parent=1 // pred_check
      _
    $region11: #{whisper_temperature_forward.48} parent=1 // pred_check_branch
      %38 = sbr.rel (0) target = $region13
    $region12: #{whisper_temperature_forward.48} parent=1 // pred_region
      %s40 = ssub.s32 16, 16
      %41 = vsyncadd [#allocation6], %s40
      %s43 = sshll.u32 [#allocation7], 4
      %s44 = int_to_ptr.vmem [resolvable:$true] %s43
      %46 = dma.hbm_to_vmem [thread:$0]  %s2, 16, %s44, [#allocation6]
    $region13: #{whisper_temperature_forward.48} parent=1 // pred_fallthru
      _
    // Predicated region
    $region14: #{whisper_temperature_forward.48} parent=1 // pred_check
      _
    $region15: #{whisper_temperature_forward.48} parent=1 // pred_check_branch
      %48 = sbr.rel (0) target = $region17
    $region16: #{whisper_temperature_forward.48} parent=1 // pred_region
      %s50 = ssub.s32 512, 512
      %51 = vsyncadd [#allocation9], %s50
      %s52 = sshll.u32 [#allocation8], 4
      %s53 = int_to_ptr.vmem [resolvable:$true] %s52
      %58 = dma.hbm_to_vmem [thread:$0]  %s3, 512, %s53, [#allocation9], 128, 128, 8
    $region17: #{whisper_temperature_forward.48} parent=1 // pred_fallthru
      _
    // Predicated region
    $region18: #{whisper_temperature_forward.48} parent=1 // pred_check
      _
    $region19: #{whisper_temperature_forward.48} parent=1 // pred_check_branch
      %60 = sbr.rel (0) target = $region21
    $region20: #{whisper_temperature_forward.48} parent=1 // pred_region
      %61 = dma.done [#allocation3], 256
    $region21: #{whisper_temperature_forward.48} parent=1 // pred_fallthru
      _
    // Predicated region
    $region22: #{whisper_temperature_forward.48} parent=1 // pred_check
      _
    $region23: #{whisper_temperature_forward.48} parent=1 // pred_check_branch
      %63 = sbr.rel (0) target = $region25
    $region24: #{whisper_temperature_forward.48} parent=1 // pred_region
      %64 = dma.done [#allocation6], 256
    $region25: #{whisper_temperature_forward.48} parent=1 // pred_fallthru
      _
    // Predicated region
    $region26: #{whisper_temperature_forward.48} parent=1 // pred_check
      _
    $region27: #{whisper_temperature_forward.48} parent=1 // pred_check_branch
      %66 = sbr.rel (0) target = $region29
    $region28: #{whisper_temperature_forward.48} parent=1 // pred_region
      %67 = dma.done [#allocation6], 16
    $region29: #{whisper_temperature_forward.48} parent=1 // pred_fallthru
      _
    // Predicated region
    $region30: #{whisper_temperature_forward.48} parent=1 // pred_check
      _
    $region31: #{whisper_temperature_forward.48} parent=1 // pred_check_branch
      %69 = sbr.rel (0) target = $region33
    $region32: #{whisper_temperature_forward.48} parent=1 // pred_region
      %70 = dma.done [#allocation9], 512
    $region33: #{whisper_temperature_forward.48} parent=1 // pred_fallthru
      _
    %v72 = vld [vmem:[#allocation2] sm:$0xf]
    %v73 = vld [vmem:[#allocation2 + $0x4] sm:$0xf]
    %v74 = vld [vmem:[#allocation2 + $0x8] sm:$0xf]
    %v75 = vld [vmem:[#allocation2 + $0xc] sm:$0xf]
    %v76 = vld [vmem:[#allocation5] sm:$0xf]
    %v77 = vld [vmem:[#allocation5 + $0x4] sm:$0xf]
    %v78 = vld [vmem:[#allocation5 + $0x8] sm:$0xf]
    %v79 = vld [vmem:[#allocation5 + $0xc] sm:$0xf]
    %v80 = vld [vmem:[#allocation7] sm:$0x1]
    %v82 = vlaneseq
    %v83 = vshrl.u32 %v82, 7
    %v84 = vsub.s32 0, %v83
    %v85 = vrot.slane %v80, %v84
    %v91 = vunpack.c.l.b16 %v72
    %v92 = vunpack.c.l.b16 %v73
    %v93 = vunpack.c.l.b16 %v74
    %v94 = vunpack.c.l.b16 %v75
    %v95 = vpack.c.b16 %v92, %v91
    %v96 = vpack.c.b16 %v94, %v93
    %v101 = vunpack.c.l.b16 %v76
    %v102 = vunpack.c.l.b16 %v77
    %v103 = vunpack.c.l.b16 %v78
    %v104 = vunpack.c.l.b16 %v79
    %v105 = vpack.c.b16 %v102, %v101
    %v106 = vpack.c.b16 %v104, %v103
    %vm109 = vcmask 261120
    %v111 = vsel %vm109, %v95, 0
    %v114 = vsel %vm109, %v96, 0
    %116 = vmatprep.subr.bf16.mxu0 0
    %117 = vmatpush1.bf16.msra.mxu0 %v105
    %118 = vmatprep.subr.bf16.mxu0 0
    %119 = vmatpush1.bf16.msra.mxu0 %v106
    %120 = vmatprep.subr.bf16.mxu0 0
    %121 = vmatpush1.bf16.msra.mxu0 0
    %122 = vmatprep.subr.bf16.mxu0 0
    %123 = vmatpush1.bf16.msra.mxu0 0
    %124 = vmatprep.subr.bf16.mxu0 0
    %125 = vmatpush1.bf16.msra.mxu0 0
    %126 = vmatprep.subr.bf16.mxu0 0
    %127 = vmatpush1.bf16.msra.mxu0 0
    %128 = vmatprep.subr.bf16.mxu0 0
    %129 = vmatpush1.bf16.msra.mxu0 0
    %130 = vmatprep.subr.bf16.mxu0 0
    %131 = vmatpush1.bf16.msra.mxu0 0
    %132 = vmatprep.subr.bf16.mxu0 0
    %133 = vmatpush1.bf16.msra.mxu0 0
    %134 = vmatprep.subr.bf16.mxu0 0
    %135 = vmatpush1.bf16.msra.mxu0 0
    %136 = vmatprep.subr.bf16.mxu0 0
    %137 = vmatpush1.bf16.msra.mxu0 0
    %138 = vmatprep.subr.bf16.mxu0 0
    %139 = vmatpush1.bf16.msra.mxu0 0
    %140 = vmatprep.subr.bf16.mxu0 0
    %141 = vmatpush1.bf16.msra.mxu0 0
    %142 = vmatprep.subr.bf16.mxu0 0
    %143 = vmatpush1.bf16.msra.mxu0 0
    %144 = vmatprep.subr.bf16.mxu0 0
    %145 = vmatpush1.bf16.msra.mxu0 0
    %146 = vmatprep.subr.bf16.mxu0 0
    %147 = vmatpush1.bf16.msra.mxu0 0
    %148 = vmatprep.mubr.bf16.mxu0 0
    %149 = vmatmul.mubr.bf16.gmra.mrb[0].mxu0 %v111
    %v150 = vpop.f32.mrb[0].mxu0
    %v151 = vadd.f32 %v85, %v150
    %v152 = vpop.f32.mrb[0].mxu0
    %v153 = vpop.f32.mrb[0].mxu0
    %v154 = vadd.f32 %v85, %v153
    %v155 = vpop.f32.mrb[0].mxu0
    %156 = vmatprep.mubr.bf16.mxu0 0
    %157 = vmatmul.mubr.bf16.gmra.mrb[0].mxu0 %v114
    %v158 = vpop.f32.mrb[0].mxu0
    %v159 = vadd.f32 %v85, %v158
    %v160 = vpop.f32.mrb[0].mxu0
    %v161 = vpop.f32.mrb[0].mxu0
    %v162 = vadd.f32 %v85, %v161
    %v163 = vpop.f32.mrb[0].mxu0
    %164 = vdwg.mxu0
    %v165 = vld [vmem:[#allocation8] sm:$0xff]
    %v166 = vld [vmem:[#allocation8 + $0x8] sm:$0xff]
    %v167 = vld [vmem:[#allocation8 + $0x10] sm:$0xff]
    %v168 = vld [vmem:[#allocation8 + $0x18] sm:$0xff]
    %v169 = vadd.f32 %v151, %v165
    %v170 = vadd.f32 %v154, %v166
    %v171 = vadd.f32 %v159, %v167
    %v172 = vadd.f32 %v162, %v168
    %173 = vst.msk [vmem:[#allocation10] sm:$0xff] %vm109, %v169
    %174 = vst.msk [vmem:[#allocation10 + $0x8] sm:$0xff] %vm109, %v170
    %175 = vst.msk [vmem:[#allocation10 + $0x10] sm:$0xff] %vm109, %v171
    %176 = vst.msk [vmem:[#allocation10 + $0x18] sm:$0xff] %vm109, %v172
    // Predicated region
    $region34: #{whisper_temperature_forward.48} parent=1 // pred_check
      _
    $region35: #{whisper_temperature_forward.48} parent=1 // pred_check_branch
      %178 = sbr.rel (0) target = $region37
    $region36: #{whisper_temperature_forward.48} parent=1 // pred_region
      %s180 = ssub.s32 512, 512
      %181 = vsyncadd [#allocation4], %s180
      %s182 = sshll.u32 [#allocation10], 4
      %s183 = int_to_ptr.vmem [resolvable:$true] %s182
      %188 = dma.vmem_to_hbm [thread:$0]  %s183, 512, %s4, [#allocation4], 128, 128, 8
    $region37: #{whisper_temperature_forward.48} parent=1 // pred_fallthru
      _
    // Predicated region
    $region38: #{whisper_temperature_forward.48} parent=1 // pred_check
      _
    $region39: #{whisper_temperature_forward.48} parent=1 // pred_check_branch
      %190 = sbr.rel (0) target = $region41
    $region40: #{whisper_temperature_forward.48} parent=1 // pred_region
      %191 = dma.done [#allocation4], 512
    $region41: #{whisper_temperature_forward.48} parent=1 // pred_fallthru
      _
    %192 = vsyncpa [#allocation3], 1
    %193 = vsyncpa [#allocation6], 1
    %194 = vsyncpa [#allocation9], 1
    %195 = vsyncpa [#allocation4], 1

// kernel: whisper_temperature_forward.50
$region0: #{whisper_temperature_forward.50}
  #allocation0 [shape = 'u32[]', space=smem, size = 0x4, offset = 0x4, fixed_abs, tag = 'smem constant byte address 0x4 - core index']
  #allocation1 [shape = 'u32[144,128]{1,0:T(1,128)}', space=vmem, size = 0x12000, scoped, tag = 'internal scratch']
  %s0 = inlined_call_operand.hbm [shape: bf16[32,32], index: 0, kind: input, shape index: {}]
  %s1 = inlined_call_operand.hbm [shape: bf16[32,128], index: 1, kind: input, shape index: {}]
  %s2 = inlined_call_operand.hbm [shape: f32[1,128], index: 2, kind: input, shape index: {}]
  %s3 = inlined_call_operand.hbm [shape: bf16[32,128], index: 3, kind: output, shape index: {}]
  %s4 = sld [smem:[#allocation0]]
  $region34: #{whisper_temperature_forward.50} parent=0
    _
  %s6 = ssub.s32 1, %s4
  %s7 = scalar_select 0, %s6, %s4
  $region1: #{whisper_temperature_forward.50} parent=0
    #allocation2 [shape = 'u8[8192]{0}', space=vmem, size = 0x2000, scoped, tag = 'input window, operand 0, single buffered']
    #allocation3 [shape = 's32[1]{0}', space=sflag, size = 0x4, scoped, tag = 'scoped memory for whisper_temperature_forward.50']
    #allocation4 [shape = 's32[1]{0}', space=sflag, size = 0x4, scoped, tag = 'scoped memory for whisper_temperature_forward.50']
    #allocation5 [shape = 'u8[8192]{0}', space=vmem, size = 0x2000, scoped, tag = 'input window, operand 1, single buffered']
    #allocation6 [shape = 's32[1]{0}', space=sflag, size = 0x4, scoped, tag = 'scoped memory for whisper_temperature_forward.50']
    #allocation7 [shape = 'u8[512]{0}', space=vmem, size = 0x400, scoped, tag = 'input window, operand 2, single buffered']
    #allocation8 [shape = 'u8[8192]{0}', space=vmem, size = 0x2000, scoped, tag = 'output window, operand 0, single buffered']
    %8 = vsyncpa [#allocation3], 0
    %9 = vsyncpa [#allocation6], 0
    %10 = vsyncpa [#allocation4], 0
    // Predicated region
    $region2: #{whisper_temperature_forward.50} parent=1 // pred_check
      _
    $region3: #{whisper_temperature_forward.50} parent=1 // pred_check_branch
      %12 = sbr.rel (0) target = $region5
    $region4: #{whisper_temperature_forward.50} parent=1 // pred_region
      %s14 = ssub.s32 256, 256
      %15 = vsyncadd [#allocation3], %s14
      %s16 = sshll.u32 [#allocation2], 4
      %s17 = int_to_ptr.vmem [resolvable:$true] %s16
      %22 = dma.hbm_to_vmem [thread:$0]  %s0, 256, %s17, [#allocation3], 64, 64, 4
    $region5: #{whisper_temperature_forward.50} parent=1 // pred_fallthru
      _
    // Predicated region
    $region6: #{whisper_temperature_forward.50} parent=1 // pred_check
      _
    $region7: #{whisper_temperature_forward.50} parent=1 // pred_check_branch
      %24 = sbr.rel (0) target = $region9
    $region8: #{whisper_temperature_forward.50} parent=1 // pred_region
      %s26 = ssub.s32 256, 256
      %27 = vsyncadd [#allocation6], %s26
      %s28 = sshll.u32 [#allocation5], 4
      %s29 = int_to_ptr.vmem [resolvable:$true] %s28
      %34 = dma.hbm_to_vmem [thread:$0]  %s1, 256, %s29, [#allocation6], 64, 64, 4
    $region9: #{whisper_temperature_forward.50} parent=1 // pred_fallthru
      _
    // Predicated region
    $region10: #{whisper_temperature_forward.50} parent=1 // pred_check
      _
    $region11: #{whisper_temperature_forward.50} parent=1 // pred_check_branch
      %36 = sbr.rel (0) target = $region13
    $region12: #{whisper_temperature_forward.50} parent=1 // pred_region
      %s38 = ssub.s32 16, 16
      %39 = vsyncadd [#allocation6], %s38
      %s41 = sshll.u32 [#allocation7], 4
      %s42 = int_to_ptr.vmem [resolvable:$true] %s41
      %44 = dma.hbm_to_vmem [thread:$0]  %s2, 16, %s42, [#allocation6]
    $region13: #{whisper_temperature_forward.50} parent=1 // pred_fallthru
      _
    // Predicated region
    $region14: #{whisper_temperature_forward.50} parent=1 // pred_check
      _
    $region15: #{whisper_temperature_forward.50} parent=1 // pred_check_branch
      %46 = sbr.rel (0) target = $region17
    $region16: #{whisper_temperature_forward.50} parent=1 // pred_region
      %47 = dma.done [#allocation3], 256
    $region17: #{whisper_temperature_forward.50} parent=1 // pred_fallthru
      _
    // Predicated region
    $region18: #{whisper_temperature_forward.50} parent=1 // pred_check
      _
    $region19: #{whisper_temperature_forward.50} parent=1 // pred_check_branch
      %49 = sbr.rel (0) target = $region21
    $region20: #{whisper_temperature_forward.50} parent=1 // pred_region
      %50 = dma.done [#allocation6], 256
    $region21: #{whisper_temperature_forward.50} parent=1 // pred_fallthru
      _
    // Predicated region
    $region22: #{whisper_temperature_forward.50} parent=1 // pred_check
      _
    $region23: #{whisper_temperature_forward.50} parent=1 // pred_check_branch
      %52 = sbr.rel (0) target = $region25
    $region24: #{whisper_temperature_forward.50} parent=1 // pred_region
      %53 = dma.done [#allocation6], 16
    $region25: #{whisper_temperature_forward.50} parent=1 // pred_fallthru
      _
    %v55 = vld [vmem:[#allocation2] sm:$0xf]
    %v56 = vld [vmem:[#allocation2 + $0x4] sm:$0xf]
    %v57 = vld [vmem:[#allocation2 + $0x8] sm:$0xf]
    %v58 = vld [vmem:[#allocation2 + $0xc] sm:$0xf]
    %v59 = vld [vmem:[#allocation5] sm:$0xf]
    %v60 = vld [vmem:[#allocation5 + $0x4] sm:$0xf]
    %v61 = vld [vmem:[#allocation5 + $0x8] sm:$0xf]
    %v62 = vld [vmem:[#allocation5 + $0xc] sm:$0xf]
    %v63 = vld [vmem:[#allocation7] sm:$0x1]
    %v65 = vlaneseq
    %v66 = vshrl.u32 %v65, 7
    %v67 = vsub.s32 0, %v66
    %v68 = vrot.slane %v63, %v67
    %v74 = vunpack.c.l.b16 %v55
    %v75 = vunpack.c.l.b16 %v56
    %v76 = vunpack.c.l.b16 %v57
    %v77 = vunpack.c.l.b16 %v58
    %v78 = vpack.c.b16 %v75, %v74
    %v79 = vpack.c.b16 %v77, %v76
    %v84 = vunpack.c.l.b16 %v59
    %v85 = vunpack.c.l.b16 %v60
    %v86 = vunpack.c.l.b16 %v61
    %v87 = vunpack.c.l.b16 %v62
    %v88 = vpack.c.b16 %v85, %v84
    %v89 = vpack.c.b16 %v87, %v86
    %vm92 = vcmask 261120
    %v94 = vsel %vm92, %v78, 0
    %v97 = vsel %vm92, %v79, 0
    %99 = vmatprep.subr.bf16.mxu0 0
    %100 = vmatpush1.bf16.msra.mxu0 %v88
    %101 = vmatprep.subr.bf16.mxu0 0
    %102 = vmatpush1.bf16.msra.mxu0 %v89
    %103 = vmatprep.subr.bf16.mxu0 0
    %104 = vmatpush1.bf16.msra.mxu0 0
    %105 = vmatprep.subr.bf16.mxu0 0
    %106 = vmatpush1.bf16.msra.mxu0 0
    %107 = vmatprep.subr.bf16.mxu0 0
    %108 = vmatpush1.bf16.msra.mxu0 0
    %109 = vmatprep.subr.bf16.mxu0 0
    %110 = vmatpush1.bf16.msra.mxu0 0
    %111 = vmatprep.subr.bf16.mxu0 0
    %112 = vmatpush1.bf16.msra.mxu0 0
    %113 = vmatprep.subr.bf16.mxu0 0
    %114 = vmatpush1.bf16.msra.mxu0 0
    %115 = vmatprep.subr.bf16.mxu0 0
    %116 = vmatpush1.bf16.msra.mxu0 0
    %117 = vmatprep.subr.bf16.mxu0 0
    %118 = vmatpush1.bf16.msra.mxu0 0
    %119 = vmatprep.subr.bf16.mxu0 0
    %120 = vmatpush1.bf16.msra.mxu0 0
    %121 = vmatprep.subr.bf16.mxu0 0
    %122 = vmatpush1.bf16.msra.mxu0 0
    %123 = vmatprep.subr.bf16.mxu0 0
    %124 = vmatpush1.bf16.msra.mxu0 0
    %125 = vmatprep.subr.bf16.mxu0 0
    %126 = vmatpush1.bf16.msra.mxu0 0
    %127 = vmatprep.subr.bf16.mxu0 0
    %128 = vmatpush1.bf16.msra.mxu0 0
    %129 = vmatprep.subr.bf16.mxu0 0
    %130 = vmatpush1.bf16.msra.mxu0 0
    %131 = vmatprep.mubr.bf16.mxu0 0
    %132 = vmatmul.mubr.bf16.gmra.mrb[0].mxu0 %v94
    %v133 = vpop.f32.mrb[0].mxu0
    %v134 = vadd.f32 %v68, %v133
    %v135 = vpop.f32.mrb[0].mxu0
    %v136 = vpop.f32.mrb[0].mxu0
    %v137 = vadd.f32 %v68, %v136
    %v138 = vpop.f32.mrb[0].mxu0
    %139 = vmatprep.mubr.bf16.mxu0 0
    %140 = vmatmul.mubr.bf16.gmra.mrb[0].mxu0 %v97
    %v141 = vpop.f32.mrb[0].mxu0
    %v142 = vadd.f32 %v68, %v141
    %v143 = vpop.f32.mrb[0].mxu0
    %v144 = vpop.f32.mrb[0].mxu0
    %v145 = vadd.f32 %v68, %v144
    %v146 = vpop.f32.mrb[0].mxu0
    %147 = vdwg.mxu0
    %v148 = vmul.f32 %v134, %v134
    %v149 = vmul.f32 %v137, %v137
    %v150 = vmul.f32 %v142, %v142
    %v151 = vmul.f32 %v145, %v145
    %v152 = vmul.f32 %v134, %v148
    %v153 = vmul.f32 %v137, %v149
    %v154 = vmul.f32 %v142, %v150
    %v155 = vmul.f32 %v145, %v151
    %v156 = vmul.f32 %v152, 0.044715
    %v157 = vmul.f32 %v153, 0.044715
    %v158 = vmul.f32 %v154, 0.044715
    %v159 = vmul.f32 %v155, 0.044715
    %v160 = vadd.f32 %v134, %v156
    %v161 = vadd.f32 %v137, %v157
    %v162 = vadd.f32 %v142, %v158
    %v163 = vadd.f32 %v145, %v159
    %v164 = vmul.f32 %v160, 0.7978846
    %v165 = vmul.f32 %v161, 0.7978846
    %v166 = vmul.f32 %v162, 0.7978846
    %v167 = vmul.f32 %v163, 0.7978846
    %v168 = vtanh.pop %v164
    %v169 = vtanh.pop %v165
    %v170 = vtanh.pop %v166
    %v171 = vtanh.pop %v167
    %v172 = vadd.f32 %v168, 1.0
    %v173 = vadd.f32 %v169, 1.0
    %v174 = vadd.f32 %v170, 1.0
    %v175 = vadd.f32 %v171, 1.0
    %v176 = vmul.f32 %v172, 0.5
    %v177 = vmul.f32 %v173, 0.5
    %v178 = vmul.f32 %v174, 0.5
    %v179 = vmul.f32 %v175, 0.5
    %v180 = vmul.f32 %v134, %v176
    %v181 = vmul.f32 %v137, %v177
    %v182 = vmul.f32 %v142, %v178
    %v183 = vmul.f32 %v145, %v179
    %v184 = vpack.c.bf16 %v181, %v180
    %v185 = vpack.c.bf16 %v183, %v182
    %v188 = vunpack.c.l.b16 %v184
    %v189 = vunpack.c.h.b16 %v184
    %v190 = vunpack.c.l.b16 %v185
    %v191 = vunpack.c.h.b16 %v185
    %v192 = vpack.c.b16 %v188, %v188
    %v193 = vpack.c.b16 %v189, %v189
    %v194 = vpack.c.b16 %v190, %v190
    %v195 = vpack.c.b16 %v191, %v191
    %200 = vst [vmem:[#allocation8] sm:$0xf] %v192
    %201 = vst [vmem:[#allocation8 + $0x4] sm:$0xf] %v193
    %202 = vst [vmem:[#allocation8 + $0x8] sm:$0xf] %v194
    %203 = vst [vmem:[#allocation8 + $0xc] sm:$0xf] %v195
    // Predicated region
    $region26: #{whisper_temperature_forward.50} parent=1 // pred_check
      _
    $region27: #{whisper_temperature_forward.50} parent=1 // pred_check_branch
      %205 = sbr.rel (0) target = $region29
    $region28: #{whisper_temperature_forward.50} parent=1 // pred_region
      %s207 = ssub.s32 256, 256
      %208 = vsyncadd [#allocation4], %s207
      %s209 = sshll.u32 [#allocation8], 4
      %s210 = int_to_ptr.vmem [resolvable:$true] %s209
      %215 = dma.vmem_to_hbm [thread:$0]  %s210, 256, %s3, [#allocation4], 64, 64, 4
    $region29: #{whisper_temperature_forward.50} parent=1 // pred_fallthru
      _
    // Predicated region
    $region30: #{whisper_temperature_forward.50} parent=1 // pred_check
      _
    $region31: #{whisper_temperature_forward.50} parent=1 // pred_check_branch
      %217 = sbr.rel (0) target = $region33
    $region32: #{whisper_temperature_forward.50} parent=1 // pred_region
      %218 = dma.done [#allocation4], 256
    $region33: #{whisper_temperature_forward.50} parent=1 // pred_fallthru
      _
    %219 = vsyncpa [#allocation3], 1
    %220 = vsyncpa [#allocation6], 1
    %221 = vsyncpa [#allocation4], 1

// kernel: whisper_temperature_forward.51
$region0: #{whisper_temperature_forward.51}
  #allocation0 [shape = 'u32[]', space=smem, size = 0x4, offset = 0x4, fixed_abs, tag = 'smem constant byte address 0x4 - core index']
  #allocation1 [shape = 'u32[144,128]{1,0:T(1,128)}', space=vmem, size = 0x12000, scoped, tag = 'internal scratch']
  %s0 = inlined_call_operand.hbm [shape: bf16[32,128], index: 0, kind: input, shape index: {}]
  %s1 = inlined_call_operand.hbm [shape: bf16[128,32], index: 1, kind: input, shape index: {}]
  %s2 = inlined_call_operand.hbm [shape: f32[1,32], index: 2, kind: input, shape index: {}]
  %s3 = inlined_call_operand.hbm [shape: f32[32,32], index: 3, kind: input, shape index: {}]
  %s4 = inlined_call_operand.hbm [shape: f32[32,32], index: 4, kind: output, shape index: {}]
  %s5 = sld [smem:[#allocation0]]
  $region42: #{whisper_temperature_forward.51} parent=0
    _
  %s7 = ssub.s32 1, %s5
  %s8 = scalar_select 0, %s7, %s5
  $region1: #{whisper_temperature_forward.51} parent=0
    #allocation2 [shape = 'u8[8192]{0}', space=vmem, size = 0x2000, scoped, tag = 'input window, operand 0, single buffered']
    #allocation3 [shape = 's32[1]{0}', space=sflag, size = 0x4, scoped, tag = 'scoped memory for whisper_temperature_forward.51']
    #allocation4 [shape = 's32[1]{0}', space=sflag, size = 0x4, scoped, tag = 'scoped memory for whisper_temperature_forward.51']
    #allocation5 [shape = 'u8[32768]{0}', space=vmem, size = 0x8000, scoped, tag = 'input window, operand 1, single buffered']
    #allocation6 [shape = 's32[1]{0}', space=sflag, size = 0x4, scoped, tag = 'scoped memory for whisper_temperature_forward.51']
    #allocation7 [shape = 'u8[512]{0}', space=vmem, size = 0x400, scoped, tag = 'input window, operand 2, single buffered']
    #allocation8 [shape = 'u8[16384]{0}', space=vmem, size = 0x4000, scoped, tag = 'input window, operand 3, single buffered']
    #allocation9 [shape = 's32[1]{0}', space=sflag, size = 0x4, scoped, tag = 'scoped memory for whisper_temperature_forward.51']
    #allocation10 [shape = 'u8[16384]{0}', space=vmem, size = 0x4000, scoped, tag = 'output window, operand 0, single buffered']
    %9 = vsyncpa [#allocation3], 0
    %10 = vsyncpa [#allocation6], 0
    %11 = vsyncpa [#allocation9], 0
    %12 = vsyncpa [#allocation4], 0
    // Predicated region
    $region2: #{whisper_temperature_forward.51} parent=1 // pred_check
      _
    $region3: #{whisper_temperature_forward.51} parent=1 // pred_check_branch
      %14 = sbr.rel (0) target = $region5
    $region4: #{whisper_temperature_forward.51} parent=1 // pred_region
      %s16 = ssub.s32 256, 256
      %17 = vsyncadd [#allocation3], %s16
      %s18 = sshll.u32 [#allocation2], 4
      %s19 = int_to_ptr.vmem [resolvable:$true] %s18
      %24 = dma.hbm_to_vmem [thread:$0]  %s0, 256, %s19, [#allocation3], 64, 64, 4
    $region5: #{whisper_temperature_forward.51} parent=1 // pred_fallthru
      _
    // Predicated region
    $region6: #{whisper_temperature_forward.51} parent=1 // pred_check
      _
    $region7: #{whisper_temperature_forward.51} parent=1 // pred_check_branch
      %26 = sbr.rel (0) target = $region9
    $region8: #{whisper_temperature_forward.51} parent=1 // pred_region
      %s28 = ssub.s32 1024, 1024
      %29 = vsyncadd [#allocation6], %s28
      %s30 = sshll.u32 [#allocation5], 4
      %s31 = int_to_ptr.vmem [resolvable:$true] %s30
      %36 = dma.hbm_to_vmem [thread:$0]  %s1, 1024, %s31, [#allocation6], 64, 64, 4
    $region9: #{whisper_temperature_forward.51} parent=1 // pred_fallthru
      _
    // Predicated region
    $region10: #{whisper_temperature_forward.51} parent=1 // pred_check
      _
    $region11: #{whisper_temperature_forward.51} parent=1 // pred_check_branch
      %38 = sbr.rel (0) target = $region13
    $region12: #{whisper_temperature_forward.51} parent=1 // pred_region
      %s40 = ssub.s32 16, 16
      %41 = vsyncadd [#allocation6], %s40
      %s43 = sshll.u32 [#allocation7], 4
      %s44 = int_to_ptr.vmem [resolvable:$true] %s43
      %46 = dma.hbm_to_vmem [thread:$0]  %s2, 16, %s44, [#allocation6]
    $region13: #{whisper_temperature_forward.51} parent=1 // pred_fallthru
      _
    // Predicated region
    $region14: #{whisper_temperature_forward.51} parent=1 // pred_check
      _
    $region15: #{whisper_temperature_forward.51} parent=1 // pred_check_branch
      %48 = sbr.rel (0) target = $region17
    $region16: #{whisper_temperature_forward.51} parent=1 // pred_region
      %s50 = ssub.s32 512, 512
      %51 = vsyncadd [#allocation9], %s50
      %s52 = sshll.u32 [#allocation8], 4
      %s53 = int_to_ptr.vmem [resolvable:$true] %s52
      %58 = dma.hbm_to_vmem [thread:$0]  %s3, 512, %s53, [#allocation9], 128, 128, 8
    $region17: #{whisper_temperature_forward.51} parent=1 // pred_fallthru
      _
    // Predicated region
    $region18: #{whisper_temperature_forward.51} parent=1 // pred_check
      _
    $region19: #{whisper_temperature_forward.51} parent=1 // pred_check_branch
      %60 = sbr.rel (0) target = $region21
    $region20: #{whisper_temperature_forward.51} parent=1 // pred_region
      %61 = dma.done [#allocation3], 256
    $region21: #{whisper_temperature_forward.51} parent=1 // pred_fallthru
      _
    // Predicated region
    $region22: #{whisper_temperature_forward.51} parent=1 // pred_check
      _
    $region23: #{whisper_temperature_forward.51} parent=1 // pred_check_branch
      %63 = sbr.rel (0) target = $region25
    $region24: #{whisper_temperature_forward.51} parent=1 // pred_region
      %64 = dma.done [#allocation6], 1024
    $region25: #{whisper_temperature_forward.51} parent=1 // pred_fallthru
      _
    // Predicated region
    $region26: #{whisper_temperature_forward.51} parent=1 // pred_check
      _
    $region27: #{whisper_temperature_forward.51} parent=1 // pred_check_branch
      %66 = sbr.rel (0) target = $region29
    $region28: #{whisper_temperature_forward.51} parent=1 // pred_region
      %67 = dma.done [#allocation6], 16
    $region29: #{whisper_temperature_forward.51} parent=1 // pred_fallthru
      _
    // Predicated region
    $region30: #{whisper_temperature_forward.51} parent=1 // pred_check
      _
    $region31: #{whisper_temperature_forward.51} parent=1 // pred_check_branch
      %69 = sbr.rel (0) target = $region33
    $region32: #{whisper_temperature_forward.51} parent=1 // pred_region
      %70 = dma.done [#allocation9], 512
    $region33: #{whisper_temperature_forward.51} parent=1 // pred_fallthru
      _
    %v72 = vld [vmem:[#allocation2] sm:$0xf]
    %v73 = vld [vmem:[#allocation2 + $0x4] sm:$0xf]
    %v74 = vld [vmem:[#allocation2 + $0x8] sm:$0xf]
    %v75 = vld [vmem:[#allocation2 + $0xc] sm:$0xf]
    %v76 = vld [vmem:[#allocation5] sm:$0xf]
    %v77 = vld [vmem:[#allocation5 + $0x4] sm:$0xf]
    %v78 = vld [vmem:[#allocation5 + $0x8] sm:$0xf]
    %v79 = vld [vmem:[#allocation5 + $0xc] sm:$0xf]
    %v80 = vld [vmem:[#allocation5 + $0x10] sm:$0xf]
    %v81 = vld [vmem:[#allocation5 + $0x14] sm:$0xf]
    %v82 = vld [vmem:[#allocation5 + $0x18] sm:$0xf]
    %v83 = vld [vmem:[#allocation5 + $0x1c] sm:$0xf]
    %v84 = vld [vmem:[#allocation5 + $0x20] sm:$0xf]
    %v85 = vld [vmem:[#allocation5 + $0x24] sm:$0xf]
    %v86 = vld [vmem:[#allocation5 + $0x28] sm:$0xf]
    %v87 = vld [vmem:[#allocation5 + $0x2c] sm:$0xf]
    %v88 = vld [vmem:[#allocation5 + $0x30] sm:$0xf]
    %v89 = vld [vmem:[#allocation5 + $0x34] sm:$0xf]
    %v90 = vld [vmem:[#allocation5 + $0x38] sm:$0xf]
    %v91 = vld [vmem:[#allocation5 + $0x3c] sm:$0xf]
    %v92 = vld [vmem:[#allocation7] sm:$0x1]
    %v94 = vlaneseq
    %v95 = vshrl.u32 %v94, 7
    %v96 = vsub.s32 0, %v95
    %v97 = vrot.slane %v92, %v96
    %v103 = vunpack.c.l.b16 %v72
    %v104 = vunpack.c.l.b16 %v73
    %v105 = vunpack.c.l.b16 %v74
    %v106 = vunpack.c.l.b16 %v75
    %v107 = vpack.c.b16 %v104, %v103
    %v108 = vpack.c.b16 %v106, %v105
    %v127 = vunpack.c.l.b16 %v76
    %v128 = vunpack.c.l.b16 %v77
    %v129 = vunpack.c.l.b16 %v78
    %v130 = vunpack.c.l.b16 %v79
    %v131 = vunpack.c.l.b16 %v80
    %v132 = vunpack.c.l.b16 %v81
    %v133 = vunpack.c.l.b16 %v82
    %v134 = vunpack.c.l.b16 %v83
    %v135 = vunpack.c.l.b16 %v84
    %v136 = vunpack.c.l.b16 %v85
    %v137 = vunpack.c.l.b16 %v86
    %v138 = vunpack.c.l.b16 %v87
    %v139 = vunpack.c.l.b16 %v88
    %v140 = vunpack.c.l.b16 %v89
    %v141 = vunpack.c.l.b16 %v90
    %v142 = vunpack.c.l.b16 %v91
    %v143 = vpack.c.b16 %v128, %v127
    %v144 = vpack.c.b16 %v130, %v129
    %v145 = vpack.c.b16 %v132, %v131
    %v146 = vpack.c.b16 %v134, %v133
    %v147 = vpack.c.b16 %v136, %v135
    %v148 = vpack.c.b16 %v138, %v137
    %v149 = vpack.c.b16 %v140, %v139
    %v150 = vpack.c.b16 %v142, %v141
    %159 = vmatprep.subr.bf16.mxu0 0
    %160 = vmatpush1.bf16.msra.mxu0 %v143
    %161 = vmatprep.subr.bf16.mxu0 0
    %162 = vmatpush1.bf16.msra.mxu0 %v144
    %163 = vmatprep.subr.bf16.mxu0 0
    %164 = vmatpush1.bf16.msra.mxu0 %v145
    %165 = vmatprep.subr.bf16.mxu0 0
    %166 = vmatpush1.bf16.msra.mxu0 %v146
    %167 = vmatprep.subr.bf16.mxu0 0
    %168 = vmatpush1.bf16.msra.mxu0 %v147
    %169 = vmatprep.subr.bf16.mxu0 0
    %170 = vmatpush1.bf16.msra.mxu0 %v148
    %171 = vmatprep.subr.bf16.mxu0 0
    %172 = vmatpush1.bf16.msra.mxu0 %v149
    %173 = vmatprep.subr.bf16.mxu0 0
    %174 = vmatpush1.bf16.msra.mxu0 %v150
    %175 = vmatprep.subr.bf16.mxu0 0
    %176 = vmatpush1.bf16.msra.mxu0 0
    %177 = vmatprep.subr.bf16.mxu0 0
    %178 = vmatpush1.bf16.msra.mxu0 0
    %179 = vmatprep.subr.bf16.mxu0 0
    %180 = vmatpush1.bf16.msra.mxu0 0
    %181 = vmatprep.subr.bf16.mxu0 0
    %182 = vmatpush1.bf16.msra.mxu0 0
    %183 = vmatprep.subr.bf16.mxu0 0
    %184 = vmatpush1.bf16.msra.mxu0 0
    %185 = vmatprep.subr.bf16.mxu0 0
    %186 = vmatpush1.bf16.msra.mxu0 0
    %187 = vmatprep.subr.bf16.mxu0 0
    %188 = vmatpush1.bf16.msra.mxu0 0
    %189 = vmatprep.subr.bf16.mxu0 0
    %190 = vmatpush1.bf16.msra.mxu0 0
    %191 = vmatprep.mubr.bf16.mxu0 0
    %192 = vmatmul.mubr.bf16.gmra.mrb[0].mxu0 %v107
    %v193 = vpop.f32.mrb[0].mxu0
    %v194 = vadd.f32 %v97, %v193
    %v195 = vpop.f32.mrb[0].mxu0
    %v196 = vpop.f32.mrb[0].mxu0
    %v197 = vadd.f32 %v97, %v196
    %v198 = vpop.f32.mrb[0].mxu0
    %199 = vmatprep.mubr.bf16.mxu0 0
    %200 = vmatmul.mubr.bf16.gmra.mrb[0].mxu0 %v108
    %v201 = vpop.f32.mrb[0].mxu0
    %v202 = vadd.f32 %v97, %v201
    %v203 = vpop.f32.mrb[0].mxu0
    %v204 = vpop.f32.mrb[0].mxu0
    %v205 = vadd.f32 %v97, %v204
    %v206 = vpop.f32.mrb[0].mxu0
    %207 = vdwg.mxu0
    %v208 = vld [vmem:[#allocation8] sm:$0xff]
    %v209 = vld [vmem:[#allocation8 + $0x8] sm:$0xff]
    %v210 = vld [vmem:[#allocation8 + $0x10] sm:$0xff]
    %v211 = vld [vmem:[#allocation8 + $0x18] sm:$0xff]
    %v212 = vadd.f32 %v194, %v208
    %v213 = vadd.f32 %v197, %v209
    %v214 = vadd.f32 %v202, %v210
    %v215 = vadd.f32 %v205, %v211
    %vm216 = vcmask 261120
    %217 = vst.msk [vmem:[#allocation10] sm:$0xff] %vm216, %v212
    %218 = vst.msk [vmem:[#allocation10 + $0x8] sm:$0xff] %vm216, %v213
    %219 = vst.msk [vmem:[#allocation10 + $0x10] sm:$0xff] %vm216, %v214
    %220 = vst.msk [vmem:[#allocation10 + $0x18] sm:$0xff] %vm216, %v215
    // Predicated region
    $region34: #{whisper_temperature_forward.51} parent=1 // pred_check
      _
    $region35: #{whisper_temperature_forward.51} parent=1 // pred_check_branch
      %222 = sbr.rel (0) target = $region37
    $region36: #{whisper_temperature_forward.51} parent=1 // pred_region
      %s224 = ssub.s32 512, 512
      %225 = vsyncadd [#allocation4], %s224
      %s226 = sshll.u32 [#allocation10], 4
      %s227 = int_to_ptr.vmem [resolvable:$true] %s226
      %232 = dma.vmem_to_hbm [thread:$0]  %s227, 512, %s4, [#allocation4], 128, 128, 8
    $region37: #{whisper_temperature_forward.51} parent=1 // pred_fallthru
      _
    // Predicated region
    $region38: #{whisper_temperature_forward.51} parent=1 // pred_check
      _
    $region39: #{whisper_temperature_forward.51} parent=1 // pred_check_branch
      %234 = sbr.rel (0) target = $region41
    $region40: #{whisper_temperature_forward.51} parent=1 // pred_region
      %235 = dma.done [#allocation4], 512
    $region41: #{whisper_temperature_forward.51} parent=1 // pred_fallthru
      _
    %236 = vsyncpa [#allocation3], 1
    %237 = vsyncpa [#allocation6], 1
    %238 = vsyncpa [#allocation9], 1
    %239 = vsyncpa [#allocation4], 1

// kernel: whisper_temperature_forward.66
$region0: #{whisper_temperature_forward.66}
  #allocation0 [shape = 'u32[]', space=smem, size = 0x4, offset = 0x4, fixed_abs, tag = 'smem constant byte address 0x4 - core index']
  #allocation1 [shape = 'u32[144,128]{1,0:T(1,128)}', space=vmem, size = 0x12000, scoped, tag = 'internal scratch']
  %s0 = inlined_call_operand.hbm [shape: bf16[32,32], index: 0, kind: input, shape index: {}]
  %s1 = inlined_call_operand.hbm [shape: bf16[32,64], index: 1, kind: input, shape index: {}]
  %s2 = inlined_call_operand.hbm [shape: f32[1,64], index: 2, kind: input, shape index: {}]
  %s3 = inlined_call_operand.hbm [shape: bf16[32,64], index: 3, kind: output, shape index: {}]
  %s4 = sld [smem:[#allocation0]]
  $region34: #{whisper_temperature_forward.66} parent=0
    _
  %s6 = ssub.s32 1, %s4
  %s7 = scalar_select 0, %s6, %s4
  $region1: #{whisper_temperature_forward.66} parent=0
    #allocation2 [shape = 'u8[8192]{0}', space=vmem, size = 0x2000, scoped, tag = 'input window, operand 0, single buffered']
    #allocation3 [shape = 's32[1]{0}', space=sflag, size = 0x4, scoped, tag = 'scoped memory for whisper_temperature_forward.66']
    #allocation4 [shape = 's32[1]{0}', space=sflag, size = 0x4, scoped, tag = 'scoped memory for whisper_temperature_forward.66']
    #allocation5 [shape = 'u8[8192]{0}', space=vmem, size = 0x2000, scoped, tag = 'input window, operand 1, single buffered']
    #allocation6 [shape = 's32[1]{0}', space=sflag, size = 0x4, scoped, tag = 'scoped memory for whisper_temperature_forward.66']
    #allocation7 [shape = 'u8[512]{0}', space=vmem, size = 0x400, scoped, tag = 'input window, operand 2, single buffered']
    #allocation8 [shape = 'u8[8192]{0}', space=vmem, size = 0x2000, scoped, tag = 'output window, operand 0, single buffered']
    %8 = vsyncpa [#allocation3], 0
    %9 = vsyncpa [#allocation6], 0
    %10 = vsyncpa [#allocation4], 0
    // Predicated region
    $region2: #{whisper_temperature_forward.66} parent=1 // pred_check
      _
    $region3: #{whisper_temperature_forward.66} parent=1 // pred_check_branch
      %12 = sbr.rel (0) target = $region5
    $region4: #{whisper_temperature_forward.66} parent=1 // pred_region
      %s14 = ssub.s32 256, 256
      %15 = vsyncadd [#allocation3], %s14
      %s16 = sshll.u32 [#allocation2], 4
      %s17 = int_to_ptr.vmem [resolvable:$true] %s16
      %22 = dma.hbm_to_vmem [thread:$0]  %s0, 256, %s17, [#allocation3], 64, 64, 4
    $region5: #{whisper_temperature_forward.66} parent=1 // pred_fallthru
      _
    // Predicated region
    $region6: #{whisper_temperature_forward.66} parent=1 // pred_check
      _
    $region7: #{whisper_temperature_forward.66} parent=1 // pred_check_branch
      %24 = sbr.rel (0) target = $region9
    $region8: #{whisper_temperature_forward.66} parent=1 // pred_region
      %s26 = ssub.s32 256, 256
      %27 = vsyncadd [#allocation6], %s26
      %s28 = sshll.u32 [#allocation5], 4
      %s29 = int_to_ptr.vmem [resolvable:$true] %s28
      %34 = dma.hbm_to_vmem [thread:$0]  %s1, 256, %s29, [#allocation6], 64, 64, 4
    $region9: #{whisper_temperature_forward.66} parent=1 // pred_fallthru
      _
    // Predicated region
    $region10: #{whisper_temperature_forward.66} parent=1 // pred_check
      _
    $region11: #{whisper_temperature_forward.66} parent=1 // pred_check_branch
      %36 = sbr.rel (0) target = $region13
    $region12: #{whisper_temperature_forward.66} parent=1 // pred_region
      %s38 = ssub.s32 16, 16
      %39 = vsyncadd [#allocation6], %s38
      %s41 = sshll.u32 [#allocation7], 4
      %s42 = int_to_ptr.vmem [resolvable:$true] %s41
      %44 = dma.hbm_to_vmem [thread:$0]  %s2, 16, %s42, [#allocation6]
    $region13: #{whisper_temperature_forward.66} parent=1 // pred_fallthru
      _
    // Predicated region
    $region14: #{whisper_temperature_forward.66} parent=1 // pred_check
      _
    $region15: #{whisper_temperature_forward.66} parent=1 // pred_check_branch
      %46 = sbr.rel (0) target = $region17
    $region16: #{whisper_temperature_forward.66} parent=1 // pred_region
      %47 = dma.done [#allocation3], 256
    $region17: #{whisper_temperature_forward.66} parent=1 // pred_fallthru
      _
    // Predicated region
    $region18: #{whisper_temperature_forward.66} parent=1 // pred_check
      _
    $region19: #{whisper_temperature_forward.66} parent=1 // pred_check_branch
      %49 = sbr.rel (0) target = $region21
    $region20: #{whisper_temperature_forward.66} parent=1 // pred_region
      %50 = dma.done [#allocation6], 256
    $region21: #{whisper_temperature_forward.66} parent=1 // pred_fallthru
      _
    // Predicated region
    $region22: #{whisper_temperature_forward.66} parent=1 // pred_check
      _
    $region23: #{whisper_temperature_forward.66} parent=1 // pred_check_branch
      %52 = sbr.rel (0) target = $region25
    $region24: #{whisper_temperature_forward.66} parent=1 // pred_region
      %53 = dma.done [#allocation6], 16
    $region25: #{whisper_temperature_forward.66} parent=1 // pred_fallthru
      _
    %v55 = vld [vmem:[#allocation2] sm:$0xf]
    %v56 = vld [vmem:[#allocation2 + $0x4] sm:$0xf]
    %v57 = vld [vmem:[#allocation2 + $0x8] sm:$0xf]
    %v58 = vld [vmem:[#allocation2 + $0xc] sm:$0xf]
    %v59 = vld [vmem:[#allocation5] sm:$0xf]
    %v60 = vld [vmem:[#allocation5 + $0x4] sm:$0xf]
    %v61 = vld [vmem:[#allocation5 + $0x8] sm:$0xf]
    %v62 = vld [vmem:[#allocation5 + $0xc] sm:$0xf]
    %v63 = vld [vmem:[#allocation7] sm:$0x1]
    %v65 = vlaneseq
    %v66 = vshrl.u32 %v65, 7
    %v67 = vsub.s32 0, %v66
    %v68 = vrot.slane %v63, %v67
    %v74 = vunpack.c.l.b16 %v55
    %v75 = vunpack.c.l.b16 %v56
    %v76 = vunpack.c.l.b16 %v57
    %v77 = vunpack.c.l.b16 %v58
    %v78 = vpack.c.b16 %v75, %v74
    %v79 = vpack.c.b16 %v77, %v76
    %v84 = vunpack.c.l.b16 %v59
    %v85 = vunpack.c.l.b16 %v60
    %v86 = vunpack.c.l.b16 %v61
    %v87 = vunpack.c.l.b16 %v62
    %v88 = vpack.c.b16 %v85, %v84
    %v89 = vpack.c.b16 %v87, %v86
    %vm92 = vcmask 261120
    %v94 = vsel %vm92, %v78, 0
    %v97 = vsel %vm92, %v79, 0
    %99 = vmatprep.subr.bf16.mxu0 0
    %100 = vmatpush1.bf16.msra.mxu0 %v88
    %101 = vmatprep.subr.bf16.mxu0 0
    %102 = vmatpush1.bf16.msra.mxu0 %v89
    %103 = vmatprep.subr.bf16.mxu0 0
    %104 = vmatpush1.bf16.msra.mxu0 0
    %105 = vmatprep.subr.bf16.mxu0 0
    %106 = vmatpush1.bf16.msra.mxu0 0
    %107 = vmatprep.subr.bf16.mxu0 0
    %108 = vmatpush1.bf16.msra.mxu0 0
    %109 = vmatprep.subr.bf16.mxu0 0
    %110 = vmatpush1.bf16.msra.mxu0 0
    %111 = vmatprep.subr.bf16.mxu0 0
    %112 = vmatpush1.bf16.msra.mxu0 0
    %113 = vmatprep.subr.bf16.mxu0 0
    %114 = vmatpush1.bf16.msra.mxu0 0
    %115 = vmatprep.subr.bf16.mxu0 0
    %116 = vmatpush1.bf16.msra.mxu0 0
    %117 = vmatprep.subr.bf16.mxu0 0
    %118 = vmatpush1.bf16.msra.mxu0 0
    %119 = vmatprep.subr.bf16.mxu0 0
    %120 = vmatpush1.bf16.msra.mxu0 0
    %121 = vmatprep.subr.bf16.mxu0 0
    %122 = vmatpush1.bf16.msra.mxu0 0
    %123 = vmatprep.subr.bf16.mxu0 0
    %124 = vmatpush1.bf16.msra.mxu0 0
    %125 = vmatprep.subr.bf16.mxu0 0
    %126 = vmatpush1.bf16.msra.mxu0 0
    %127 = vmatprep.subr.bf16.mxu0 0
    %128 = vmatpush1.bf16.msra.mxu0 0
    %129 = vmatprep.subr.bf16.mxu0 0
    %130 = vmatpush1.bf16.msra.mxu0 0
    %131 = vmatprep.mubr.bf16.mxu0 0
    %132 = vmatmul.mubr.bf16.gmra.mrb[0].mxu0 %v94
    %v133 = vpop.f32.mrb[0].mxu0
    %v134 = vadd.f32 %v68, %v133
    %v135 = vpop.f32.mrb[0].mxu0
    %v136 = vpop.f32.mrb[0].mxu0
    %v137 = vadd.f32 %v68, %v136
    %v138 = vpop.f32.mrb[0].mxu0
    %139 = vmatprep.mubr.bf16.mxu0 0
    %140 = vmatmul.mubr.bf16.gmra.mrb[0].mxu0 %v97
    %v141 = vpop.f32.mrb[0].mxu0
    %v142 = vadd.f32 %v68, %v141
    %v143 = vpop.f32.mrb[0].mxu0
    %v144 = vpop.f32.mrb[0].mxu0
    %v145 = vadd.f32 %v68, %v144
    %v146 = vpop.f32.mrb[0].mxu0
    %147 = vdwg.mxu0
    %v148 = vpack.c.bf16 %v137, %v134
    %v149 = vpack.c.bf16 %v145, %v142
    %v152 = vunpack.c.l.b16 %v148
    %v153 = vunpack.c.h.b16 %v148
    %v154 = vunpack.c.l.b16 %v149
    %v155 = vunpack.c.h.b16 %v149
    %v156 = vpack.c.b16 %v152, %v152
    %v157 = vpack.c.b16 %v153, %v153
    %v158 = vpack.c.b16 %v154, %v154
    %v159 = vpack.c.b16 %v155, %v155
    %vm164 = vcmask 519168
    %165 = vst.msk [vmem:[#allocation8] sm:$0xf] %vm164, %v156
    %166 = vst.msk [vmem:[#allocation8 + $0x4] sm:$0xf] %vm164, %v157
    %167 = vst.msk [vmem:[#allocation8 + $0x8] sm:$0xf] %vm164, %v158
    %168 = vst.msk [vmem:[#allocation8 + $0xc] sm:$0xf] %vm164, %v159
    // Predicated region
    $region26: #{whisper_temperature_forward.66} parent=1 // pred_check
      _
    $region27: #{whisper_temperature_forward.66} parent=1 // pred_check_branch
      %170 = sbr.rel (0) target = $region29
    $region28: #{whisper_temperature_forward.66} parent=1 // pred_region
      %s172 = ssub.s32 256, 256
      %173 = vsyncadd [#allocation4], %s172
      %s174 = sshll.u32 [#allocation8], 4
      %s175 = int_to_ptr.vmem [resolvable:$true] %s174
      %180 = dma.vmem_to_hbm [thread:$0]  %s175, 256, %s3, [#allocation4], 64, 64, 4
    $region29: #{whisper_temperature_forward.66} parent=1 // pred_fallthru
      _
    // Predicated region
    $region30: #{whisper_temperature_forward.66} parent=1 // pred_check
      _
    $region31: #{whisper_temperature_forward.66} parent=1 // pred_check_branch
      %182 = sbr.rel (0) target = $region33
    $region32: #{whisper_temperature_forward.66} parent=1 // pred_region
      %183 = dma.done [#allocation4], 256
    $region33: #{whisper_temperature_forward.66} parent=1 // pred_fallthru
      _
    %184 = vsyncpa [#allocation3], 1
    %185 = vsyncpa [#allocation6], 1
    %186 = vsyncpa [#allocation4], 1

// kernel: whisper_temperature_forward.47
$region0: #{whisper_temperature_forward.47}
  #allocation0 [shape = 'u32[]', space=smem, size = 0x4, offset = 0x4, fixed_abs, tag = 'smem constant byte address 0x4 - core index']
  #allocation1 [shape = 'u32[144,128]{1,0:T(1,128)}', space=vmem, size = 0x12000, scoped, tag = 'internal scratch']
  #allocation2 [shape = 'f32[8,16,1]{2,1,0:T(8,128)}', space=vmem, size = 0x10000, scoped, tag = 'scratch operand']
  #allocation3 [shape = 'f32[8,16,1]{2,1,0:T(8,128)}', space=vmem, size = 0x10000, scoped, tag = 'scratch operand']
  #allocation4 [shape = 'f32[8,16,8]{2,1,0:T(8,128)}', space=vmem, size = 0x10000, scoped, tag = 'scratch operand']
  #allocation5 [shape = 'f32[1]{0:T(128)S(6)}', space=smem, size = 0x200, scoped, tag = 'scoped memory for whisper_temperature_forward.47']
  %s0 = inlined_call_operand.hbm [shape: bf16[8,16,8], index: 0, kind: input, shape index: {}]
  %s1 = inlined_call_operand.hbm [shape: bf16[8,16,8], index: 1, kind: input, shape index: {}]
  %s2 = inlined_call_operand.hbm [shape: bf16[8,16,8], index: 2, kind: input, shape index: {}]
  %s3 = inlined_call_operand.<no memory space> [shape: f32[1], index: 3, kind: input, shape index: {}]
  %s4 = inlined_call_operand.hbm [shape: bf16[8,16,8], index: 4, kind: output, shape index: {}]
  %s5 = sld [smem:[#allocation0]]
  $region46: #{whisper_temperature_forward.47} parent=0
    _
  %s7 = ssub.s32 1, %s5
  %s8 = scalar_select 0, %s7, %s5
  %9 = sst [smem:[#allocation5]] %s3
  $region1: #{whisper_temperature_forward.47} parent=0
    #allocation6 [shape = 'u8[32768]{0}', space=vmem, size = 0x8000, scoped, tag = 'input window, operand 0, single buffered']
    #allocation7 [shape = 's32[1]{0}', space=sflag, size = 0x4, scoped, tag = 'scoped memory for whisper_temperature_forward.47']
    #allocation8 [shape = 's32[1]{0}', space=sflag, size = 0x4, scoped, tag = 'scoped memory for whisper_temperature_forward.47']
    #allocation9 [shape = 'u8[32768]{0}', space=vmem, size = 0x8000, scoped, tag = 'input window, operand 1, single buffered']
    #allocation10 [shape = 's32[1]{0}', space=sflag, size = 0x4, scoped, tag = 'scoped memory for whisper_temperature_forward.47']
    #allocation11 [shape = 'u8[32768]{0}', space=vmem, size = 0x8000, scoped, tag = 'input window, operand 2, single buffered']
    #allocation12 [shape = 'u8[32768]{0}', space=vmem, size = 0x8000, scoped, tag = 'output window, operand 0, single buffered']
    %10 = vsyncpa [#allocation7], 0
    %11 = vsyncpa [#allocation10], 0
    %12 = vsyncpa [#allocation8], 0
    // Predicated region
    $region2: #{whisper_temperature_forward.47} parent=1 // pred_check
      _
    $region3: #{whisper_temperature_forward.47} parent=1 // pred_check_branch
      %14 = sbr.rel (0) target = $region5
    $region4: #{whisper_temperature_forward.47} parent=1 // pred_region
      %s16 = ssub.s32 1024, 1024
      %17 = vsyncadd [#allocation7], %s16
      %s18 = sshll.u32 [#allocation6], 4
      %s19 = int_to_ptr.vmem [resolvable:$true] %s18
      %24 = dma.hbm_to_vmem [thread:$0]  %s0, 1024, %s19, [#allocation7], 64, 64, 4
    $region5: #{whisper_temperature_forward.47} parent=1 // pred_fallthru
      _
    // Predicated region
    $region6: #{whisper_temperature_forward.47} parent=1 // pred_check
      _
    $region7: #{whisper_temperature_forward.47} parent=1 // pred_check_branch
      %26 = sbr.rel (0) target = $region9
    $region8: #{whisper_temperature_forward.47} parent=1 // pred_region
      %s28 = ssub.s32 1024, 1024
      %29 = vsyncadd [#allocation10], %s28
      %s30 = sshll.u32 [#allocation9], 4
      %s31 = int_to_ptr.vmem [resolvable:$true] %s30
      %36 = dma.hbm_to_vmem [thread:$0]  %s1, 1024, %s31, [#allocation10], 64, 64, 4
    $region9: #{whisper_temperature_forward.47} parent=1 // pred_fallthru
      _
    // Predicated region
    $region10: #{whisper_temperature_forward.47} parent=1 // pred_check
      _
    $region11: #{whisper_temperature_forward.47} parent=1 // pred_check_branch
      %38 = sbr.rel (0) target = $region13
    $region12: #{whisper_temperature_forward.47} parent=1 // pred_region
      %s40 = ssub.s32 1024, 1024
      %41 = vsyncadd [#allocation10], %s40
      %s42 = sshll.u32 [#allocation11], 4
      %s43 = int_to_ptr.vmem [resolvable:$true] %s42
      %48 = dma.hbm_to_vmem [thread:$0]  %s2, 1024, %s43, [#allocation10], 64, 64, 4
    $region13: #{whisper_temperature_forward.47} parent=1 // pred_fallthru
      _
    // Predicated region
    $region14: #{whisper_temperature_forward.47} parent=1 // pred_check
      _
    $region15: #{whisper_temperature_forward.47} parent=1 // pred_check_branch
      %50 = sbr.rel (0) target = $region17
    $region16: #{whisper_temperature_forward.47} parent=1 // pred_region
      _
    $region17: #{whisper_temperature_forward.47} parent=1 // pred_fallthru
      _
    // Predicated region
    $region18: #{whisper_temperature_forward.47} parent=1 // pred_check
      _
    $region19: #{whisper_temperature_forward.47} parent=1 // pred_check_branch
      %52 = sbr.rel (0) target = $region21
    $region20: #{whisper_temperature_forward.47} parent=1 // pred_region
      %53 = dma.done [#allocation7], 1024
    $region21: #{whisper_temperature_forward.47} parent=1 // pred_fallthru
      _
    // Predicated region
    $region22: #{whisper_temperature_forward.47} parent=1 // pred_check
      _
    $region23: #{whisper_temperature_forward.47} parent=1 // pred_check_branch
      %55 = sbr.rel (0) target = $region25
    $region24: #{whisper_temperature_forward.47} parent=1 // pred_region
      %56 = dma.done [#allocation10], 1024
    $region25: #{whisper_temperature_forward.47} parent=1 // pred_fallthru
      _
    // Predicated region
    $region26: #{whisper_temperature_forward.47} parent=1 // pred_check
      _
    $region27: #{whisper_temperature_forward.47} parent=1 // pred_check_branch
      %58 = sbr.rel (0) target = $region29
    $region28: #{whisper_temperature_forward.47} parent=1 // pred_region
      %59 = dma.done [#allocation10], 1024
    $region29: #{whisper_temperature_forward.47} parent=1 // pred_fallthru
      _
    %p61 = scmp.eq.s32.totalorder 0, 0
    // Predicated region
    $region30: #{whisper_temperature_forward.47} parent=1 // pred_check
      %p62 = pneg %p61
    $region31: #{whisper_temperature_forward.47} parent=1 // pred_check_branch
      %64 = sbr.rel (%p62) target = $region33
    $region32: #{whisper_temperature_forward.47} parent=1 // pred_region
      %vm65 = vcmask 7168
      %66 = vst.msk [vmem:[#allocation2] sm:$0xff] %vm65, -1e+30
      %67 = vst.msk [vmem:[#allocation2 + $0x8] sm:$0xff] %vm65, -1e+30
      %68 = vst.msk [vmem:[#allocation2 + $0x10] sm:$0xff] %vm65, -1e+30
      %69 = vst.msk [vmem:[#allocation2 + $0x18] sm:$0xff] %vm65, -1e+30
      %70 = vst.msk [vmem:[#allocation2 + $0x20] sm:$0xff] %vm65, -1e+30
      %71 = vst.msk [vmem:[#allocation2 + $0x28] sm:$0xff] %vm65, -1e+30
      %72 = vst.msk [vmem:[#allocation2 + $0x30] sm:$0xff] %vm65, -1e+30
      %73 = vst.msk [vmem:[#allocation2 + $0x38] sm:$0xff] %vm65, -1e+30
      %74 = vst.msk [vmem:[#allocation2 + $0x40] sm:$0xff] %vm65, -1e+30
      %75 = vst.msk [vmem:[#allocation2 + $0x48] sm:$0xff] %vm65, -1e+30
      %76 = vst.msk [vmem:[#allocation2 + $0x50] sm:$0xff] %vm65, -1e+30
      %77 = vst.msk [vmem:[#allocation2 + $0x58] sm:$0xff] %vm65, -1e+30
      %78 = vst.msk [vmem:[#allocation2 + $0x60] sm:$0xff] %vm65, -1e+30
      %79 = vst.msk [vmem:[#allocation2 + $0x68] sm:$0xff] %vm65, -1e+30
      %80 = vst.msk [vmem:[#allocation2 + $0x70] sm:$0xff] %vm65, -1e+30
      %81 = vst.msk [vmem:[#allocation2 + $0x78] sm:$0xff] %vm65, -1e+30
      %82 = vst.msk [vmem:[#allocation3] sm:$0xff] %vm65, 0.0
      %83 = vst.msk [vmem:[#allocation3 + $0x8] sm:$0xff] %vm65, 0.0
      %84 = vst.msk [vmem:[#allocation3 + $0x10] sm:$0xff] %vm65, 0.0
      %85 = vst.msk [vmem:[#allocation3 + $0x18] sm:$0xff] %vm65, 0.0
      %86 = vst.msk [vmem:[#allocation3 + $0x20] sm:$0xff] %vm65, 0.0
      %87 = vst.msk [vmem:[#allocation3 + $0x28] sm:$0xff] %vm65, 0.0
      %88 = vst.msk [vmem:[#allocation3 + $0x30] sm:$0xff] %vm65, 0.0
      %89 = vst.msk [vmem:[#allocation3 + $0x38] sm:$0xff] %vm65, 0.0
      %90 = vst.msk [vmem:[#allocation3 + $0x40] sm:$0xff] %vm65, 0.0
      %91 = vst.msk [vmem:[#allocation3 + $0x48] sm:$0xff] %vm65, 0.0
      %92 = vst.msk [vmem:[#allocation3 + $0x50] sm:$0xff] %vm65, 0.0
      %93 = vst.msk [vmem:[#allocation3 + $0x58] sm:$0xff] %vm65, 0.0
      %94 = vst.msk [vmem:[#allocation3 + $0x60] sm:$0xff] %vm65, 0.0
      %95 = vst.msk [vmem:[#allocation3 + $0x68] sm:$0xff] %vm65, 0.0
      %96 = vst.msk [vmem:[#allocation3 + $0x70] sm:$0xff] %vm65, 0.0
      %97 = vst.msk [vmem:[#allocation3 + $0x78] sm:$0xff] %vm65, 0.0
      %vm98 = vcmask 64512
      %99 = vst.msk [vmem:[#allocation4] sm:$0xff] %vm98, 0.0
      %100 = vst.msk [vmem:[#allocation4 + $0x8] sm:$0xff] %vm98, 0.0
      %101 = vst.msk [vmem:[#allocation4 + $0x10] sm:$0xff] %vm98, 0.0
      %102 = vst.msk [vmem:[#allocation4 + $0x18] sm:$0xff] %vm98, 0.0
      %103 = vst.msk [vmem:[#allocation4 + $0x20] sm:$0xff] %vm98, 0.0
      %104 = vst.msk [vmem:[#allocation4 + $0x28] sm:$0xff] %vm98, 0.0
      %105 = vst.msk [vmem:[#allocation4 + $0x30] sm:$0xff] %vm98, 0.0
      %106 = vst.msk [vmem:[#allocation4 + $0x38] sm:$0xff] %vm98, 0.0
      %107 = vst.msk [vmem:[#allocation4 + $0x40] sm:$0xff] %vm98, 0.0
      %108 = vst.msk [vmem:[#allocation4 + $0x48] sm:$0xff] %vm98, 0.0
      %109 = vst.msk [vmem:[#allocation4 + $0x50] sm:$0xff] %vm98, 0.0
      %110 = vst.msk [vmem:[#allocation4 + $0x58] sm:$0xff] %vm98, 0.0
      %111 = vst.msk [vmem:[#allocation4 + $0x60] sm:$0xff] %vm98, 0.0
      %112 = vst.msk [vmem:[#allocation4 + $0x68] sm:$0xff] %vm98, 0.0
      %113 = vst.msk [vmem:[#allocation4 + $0x70] sm:$0xff] %vm98, 0.0
      %114 = vst.msk [vmem:[#allocation4 + $0x78] sm:$0xff] %vm98, 0.0
    $region33: #{whisper_temperature_forward.47} parent=1 // pred_fallthru
      _
    %s115 = sld [smem:[#allocation5]]
    %v116 = vstv %s115
    %v117 = vrcp.pop %v116
    %s118 = vtos %v117
    %s119 = smul.f32 0.35355338, %s118
    %v120 = vld [vmem:[#allocation6] sm:$0xf]
    %v121 = vld [vmem:[#allocation6 + $0x4] sm:$0xf]
    %v122 = vld [vmem:[#allocation6 + $0x8] sm:$0xf]
    %v123 = vld [vmem:[#allocation6 + $0xc] sm:$0xf]
    %v124 = vld [vmem:[#allocation6 + $0x10] sm:$0xf]
    %v125 = vld [vmem:[#allocation6 + $0x14] sm:$0xf]
    %v126 = vld [vmem:[#allocation6 + $0x18] sm:$0xf]
    %v127 = vld [vmem:[#allocation6 + $0x1c] sm:$0xf]
    %v128 = vld [vmem:[#allocation6 + $0x20] sm:$0xf]
    %v129 = vld [vmem:[#allocation6 + $0x24] sm:$0xf]
    %v130 = vld [vmem:[#allocation6 + $0x28] sm:$0xf]
    %v131 = vld [vmem:[#allocation6 + $0x2c] sm:$0xf]
    %v132 = vld [vmem:[#allocation6 + $0x30] sm:$0xf]
    %v133 = vld [vmem:[#allocation6 + $0x34] sm:$0xf]
    %v134 = vld [vmem:[#allocation6 + $0x38] sm:$0xf]
    %v135 = vld [vmem:[#allocation6 + $0x3c] sm:$0xf]
    %v136 = vunpack.c.l.bf16 %v120
    %v137 = vunpack.c.l.bf16 %v121
    %v138 = vunpack.c.l.bf16 %v122
    %v139 = vunpack.c.l.bf16 %v123
    %v140 = vunpack.c.l.bf16 %v124
    %v141 = vunpack.c.l.bf16 %v125
    %v142 = vunpack.c.l.bf16 %v126
    %v143 = vunpack.c.l.bf16 %v127
    %v144 = vunpack.c.l.bf16 %v128
    %v145 = vunpack.c.l.bf16 %v129
    %v146 = vunpack.c.l.bf16 %v130
    %v147 = vunpack.c.l.bf16 %v131
    %v148 = vunpack.c.l.bf16 %v132
    %v149 = vunpack.c.l.bf16 %v133
    %v150 = vunpack.c.l.bf16 %v134
    %v151 = vunpack.c.l.bf16 %v135
    %v152 = vstv %s119
    %v153 = vmul.f32 %v136, %v152
    %v154 = vmul.f32 %v137, %v152
    %v155 = vmul.f32 %v138, %v152
    %v156 = vmul.f32 %v139, %v152
    %v157 = vmul.f32 %v140, %v152
    %v158 = vmul.f32 %v141, %v152
    %v159 = vmul.f32 %v142, %v152
    %v160 = vmul.f32 %v143, %v152
    %v161 = vmul.f32 %v144, %v152
    %v162 = vmul.f32 %v145, %v152
    %v163 = vmul.f32 %v146, %v152
    %v164 = vmul.f32 %v147, %v152
    %v165 = vmul.f32 %v148, %v152
    %v166 = vmul.f32 %v149, %v152
    %v167 = vmul.f32 %v150, %v152
    %v168 = vmul.f32 %v151, %v152
    %v169 = vpack.c.bf16 %v154, %v153
    %v170 = vpack.c.bf16 %v156, %v155
    %v171 = vpack.c.bf16 %v158, %v157
    %v172 = vpack.c.bf16 %v160, %v159
    %v173 = vpack.c.bf16 %v162, %v161
    %v174 = vpack.c.bf16 %v164, %v163
    %v175 = vpack.c.bf16 %v166, %v165
    %v176 = vpack.c.bf16 %v168, %v167
    %v177 = vld [vmem:[#allocation9] sm:$0xf]
    %v178 = vld [vmem:[#allocation9 + $0x4] sm:$0xf]
    %v179 = vld [vmem:[#allocation9 + $0x8] sm:$0xf]
    %v180 = vld [vmem:[#allocation9 + $0xc] sm:$0xf]
    %v181 = vld [vmem:[#allocation9 + $0x10] sm:$0xf]
    %v182 = vld [vmem:[#allocation9 + $0x14] sm:$0xf]
    %v183 = vld [vmem:[#allocation9 + $0x18] sm:$0xf]
    %v184 = vld [vmem:[#allocation9 + $0x1c] sm:$0xf]
    %v185 = vld [vmem:[#allocation9 + $0x20] sm:$0xf]
    %v186 = vld [vmem:[#allocation9 + $0x24] sm:$0xf]
    %v187 = vld [vmem:[#allocation9 + $0x28] sm:$0xf]
    %v188 = vld [vmem:[#allocation9 + $0x2c] sm:$0xf]
    %v189 = vld [vmem:[#allocation9 + $0x30] sm:$0xf]
    %v190 = vld [vmem:[#allocation9 + $0x34] sm:$0xf]
    %v191 = vld [vmem:[#allocation9 + $0x38] sm:$0xf]
    %v192 = vld [vmem:[#allocation9 + $0x3c] sm:$0xf]
    %v195 = vunpack.c.l.b16 %v177
    %v196 = vunpack.c.l.b16 %v178
    %v197 = vpack.c.b16 %v196, %v195
    %vm198 = vcmask 64512
    %v200 = vsel %vm198, %v169, 0
    %v203 = vsel %vm198, %v197, 0
    %205 = vmatprep.subr.bf16.mxu0 0
    %206 = vmatpush1.bf16.xpose.msra.mxu0 %v203
    %207 = vmatprep.subr.bf16.mxu0 0
    %208 = vmatpush1.bf16.xpose.msra.mxu0 0
    %209 = vmatprep.subr.bf16.mxu0 0
    %210 = vmatpush1.bf16.xpose.msra.mxu0 0
    %211 = vmatprep.subr.bf16.mxu0 0
    %212 = vmatpush1.bf16.xpose.msra.mxu0 0
    %213 = vmatprep.subr.bf16.mxu0 0
    %214 = vmatpush1.bf16.xpose.msra.mxu0 0
    %215 = vmatprep.subr.bf16.mxu0 0
    %216 = vmatpush1.bf16.xpose.msra.mxu0 0
    %217 = vmatprep.subr.bf16.mxu0 0
    %218 = vmatpush1.bf16.xpose.msra.mxu0 0
    %219 = vmatprep.subr.bf16.mxu0 0
    %220 = vmatpush1.bf16.xpose.msra.mxu0 0
    %221 = vmatprep.subr.bf16.mxu0 0
    %222 = vmatpush1.bf16.xpose.msra.mxu0 0
    %223 = vmatprep.subr.bf16.mxu0 0
    %224 = vmatpush1.bf16.xpose.msra.mxu0 0
    %225 = vmatprep.subr.bf16.mxu0 0
    %226 = vmatpush1.bf16.xpose.msra.mxu0 0
    %227 = vmatprep.subr.bf16.mxu0 0
    %228 = vmatpush1.bf16.xpose.msra.mxu0 0
    %229 = vmatprep.subr.bf16.mxu0 0
    %230 = vmatpush1.bf16.xpose.msra.mxu0 0
    %231 = vmatprep.subr.bf16.mxu0 0
    %232 = vmatpush1.bf16.xpose.msra.mxu0 0
    %233 = vmatprep.subr.bf16.mxu0 0
    %234 = vmatpush1.bf16.xpose.msra.mxu0 0
    %235 = vmatprep.subr.bf16.mxu0 0
    %236 = vmatpush1.bf16.xpose.msra.mxu0 0
    %237 = vmatprep.mubr.bf16.mxu0 0
    %238 = vmatmul.mubr.bf16.gmra.mrb[0].mxu0 %v200
    %v239 = vpop.f32.mrb[0].mxu0
    %v240 = vadd.f32 0.0, %v239
    %v241 = vpop.f32.mrb[0].mxu0
    %v242 = vpop.f32.mrb[0].mxu0
    %v243 = vadd.f32 0.0, %v242
    %v244 = vpop.f32.mrb[0].mxu0
    %245 = vdwg.mxu0
    %v248 = vunpack.c.l.b16 %v179
    %v249 = vunpack.c.l.b16 %v180
    %v250 = vpack.c.b16 %v249, %v248
    %v252 = vsel %vm198, %v170, 0
    %v255 = vsel %vm198, %v250, 0
    %257 = vmatprep.subr.bf16.mxu0 0
    %258 = vmatpush1.bf16.xpose.msra.mxu0 %v255
    %259 = vmatprep.subr.bf16.mxu0 0
    %260 = vmatpush1.bf16.xpose.msra.mxu0 0
    %261 = vmatprep.subr.bf16.mxu0 0
    %262 = vmatpush1.bf16.xpose.msra.mxu0 0
    %263 = vmatprep.subr.bf16.mxu0 0
    %264 = vmatpush1.bf16.xpose.msra.mxu0 0
    %265 = vmatprep.subr.bf16.mxu0 0
    %266 = vmatpush1.bf16.xpose.msra.mxu0 0
    %267 = vmatprep.subr.bf16.mxu0 0
    %268 = vmatpush1.bf16.xpose.msra.mxu0 0
    %269 = vmatprep.subr.bf16.mxu0 0
    %270 = vmatpush1.bf16.xpose.msra.mxu0 0
    %271 = vmatprep.subr.bf16.mxu0 0
    %272 = vmatpush1.bf16.xpose.msra.mxu0 0
    %273 = vmatprep.subr.bf16.mxu0 0
    %274 = vmatpush1.bf16.xpose.msra.mxu0 0
    %275 = vmatprep.subr.bf16.mxu0 0
    %276 = vmatpush1.bf16.xpose.msra.mxu0 0
    %277 = vmatprep.subr.bf16.mxu0 0
    %278 = vmatpush1.bf16.xpose.msra.mxu0 0
    %279 = vmatprep.subr.bf16.mxu0 0
    %280 = vmatpush1.bf16.xpose.msra.mxu0 0
    %281 = vmatprep.subr.bf16.mxu0 0
    %282 = vmatpush1.bf16.xpose.msra.mxu0 0
    %283 = vmatprep.subr.bf16.mxu0 0
    %284 = vmatpush1.bf16.xpose.msra.mxu0 0
    %285 = vmatprep.subr.bf16.mxu0 0
    %286 = vmatpush1.bf16.xpose.msra.mxu0 0
    %287 = vmatprep.subr.bf16.mxu0 0
    %288 = vmatpush1.bf16.xpose.msra.mxu0 0
    %289 = vmatprep.mubr.bf16.mxu0 0
    %290 = vmatmul.mubr.bf16.gmra.mrb[0].mxu0 %v252
    %v291 = vpop.f32.mrb[0].mxu0
    %v292 = vadd.f32 0.0, %v291
    %v293 = vpop.f32.mrb[0].mxu0
    %v294 = vpop.f32.mrb[0].mxu0
    %v295 = vadd.f32 0.0, %v294
    %v296 = vpop.f32.mrb[0].mxu0
    %297 = vdwg.mxu0
    %v300 = vunpack.c.l.b16 %v181
    %v301 = vunpack.c.l.b16 %v182
    %v302 = vpack.c.b16 %v301, %v300
    %v304 = vsel %vm198, %v171, 0
    %v307 = vsel %vm198, %v302, 0
    %309 = vmatprep.subr.bf16.mxu0 0
    %310 = vmatpush1.bf16.xpose.msra.mxu0 %v307
    %311 = vmatprep.subr.bf16.mxu0 0
    %312 = vmatpush1.bf16.xpose.msra.mxu0 0
    %313 = vmatprep.subr.bf16.mxu0 0
    %314 = vmatpush1.bf16.xpose.msra.mxu0 0
    %315 = vmatprep.subr.bf16.mxu0 0
    %316 = vmatpush1.bf16.xpose.msra.mxu0 0
    %317 = vmatprep.subr.bf16.mxu0 0
    %318 = vmatpush1.bf16.xpose.msra.mxu0 0
    %319 = vmatprep.subr.bf16.mxu0 0
    %320 = vmatpush1.bf16.xpose.msra.mxu0 0
    %321 = vmatprep.subr.bf16.mxu0 0
    %322 = vmatpush1.bf16.xpose.msra.mxu0 0
    %323 = vmatprep.subr.bf16.mxu0 0
    %324 = vmatpush1.bf16.xpose.msra.mxu0 0
    %325 = vmatprep.subr.bf16.mxu0 0
    %326 = vmatpush1.bf16.xpose.msra.mxu0 0
    %327 = vmatprep.subr.bf16.mxu0 0
    %328 = vmatpush1.bf16.xpose.msra.mxu0 0
    %329 = vmatprep.subr.bf16.mxu0 0
    %330 = vmatpush1.bf16.xpose.msra.mxu0 0
    %331 = vmatprep.subr.bf16.mxu0 0
    %332 = vmatpush1.bf16.xpose.msra.mxu0 0
    %333 = vmatprep.subr.bf16.mxu0 0
    %334 = vmatpush1.bf16.xpose.msra.mxu0 0
    %335 = vmatprep.subr.bf16.mxu0 0
    %336 = vmatpush1.bf16.xpose.msra.mxu0 0
    %337 = vmatprep.subr.bf16.mxu0 0
    %338 = vmatpush1.bf16.xpose.msra.mxu0 0
    %339 = vmatprep.subr.bf16.mxu0 0
    %340 = vmatpush1.bf16.xpose.msra.mxu0 0
    %341 = vmatprep.mubr.bf16.mxu0 0
    %342 = vmatmul.mubr.bf16.gmra.mrb[0].mxu0 %v304
    %v343 = vpop.f32.mrb[0].mxu0
    %v344 = vadd.f32 0.0, %v343
    %v345 = vpop.f32.mrb[0].mxu0
    %v346 = vpop.f32.mrb[0].mxu0
    %v347 = vadd.f32 0.0, %v346
    %v348 = vpop.f32.mrb[0].mxu0
    %349 = vdwg.mxu0
    %v352 = vunpack.c.l.b16 %v183
    %v353 = vunpack.c.l.b16 %v184
    %v354 = vpack.c.b16 %v353, %v352
    %v356 = vsel %vm198, %v172, 0
    %v359 = vsel %vm198, %v354, 0
    %361 = vmatprep.subr.bf16.mxu0 0
    %362 = vmatpush1.bf16.xpose.msra.mxu0 %v359
    %363 = vmatprep.subr.bf16.mxu0 0
    %364 = vmatpush1.bf16.xpose.msra.mxu0 0
    %365 = vmatprep.subr.bf16.mxu0 0
    %366 = vmatpush1.bf16.xpose.msra.mxu0 0
    %367 = vmatprep.subr.bf16.mxu0 0
    %368 = vmatpush1.bf16.xpose.msra.mxu0 0
    %369 = vmatprep.subr.bf16.mxu0 0
    %370 = vmatpush1.bf16.xpose.msra.mxu0 0
    %371 = vmatprep.subr.bf16.mxu0 0
    %372 = vmatpush1.bf16.xpose.msra.mxu0 0
    %373 = vmatprep.subr.bf16.mxu0 0
    %374 = vmatpush1.bf16.xpose.msra.mxu0 0
    %375 = vmatprep.subr.bf16.mxu0 0
    %376 = vmatpush1.bf16.xpose.msra.mxu0 0
    %377 = vmatprep.subr.bf16.mxu0 0
    %378 = vmatpush1.bf16.xpose.msra.mxu0 0
    %379 = vmatprep.subr.bf16.mxu0 0
    %380 = vmatpush1.bf16.xpose.msra.mxu0 0
    %381 = vmatprep.subr.bf16.mxu0 0
    %382 = vmatpush1.bf16.xpose.msra.mxu0 0
    %383 = vmatprep.subr.bf16.mxu0 0
    %384 = vmatpush1.bf16.xpose.msra.mxu0 0
    %385 = vmatprep.subr.bf16.mxu0 0
    %386 = vmatpush1.bf16.xpose.msra.mxu0 0
    %387 = vmatprep.subr.bf16.mxu0 0
    %388 = vmatpush1.bf16.xpose.msra.mxu0 0
    %389 = vmatprep.subr.bf16.mxu0 0
    %390 = vmatpush1.bf16.xpose.msra.mxu0 0
    %391 = vmatprep.subr.bf16.mxu0 0
    %392 = vmatpush1.bf16.xpose.msra.mxu0 0
    %393 = vmatprep.mubr.bf16.mxu0 0
    %394 = vmatmul.mubr.bf16.gmra.mrb[0].mxu0 %v356
    %v395 = vpop.f32.mrb[0].mxu0
    %v396 = vadd.f32 0.0, %v395
    %v397 = vpop.f32.mrb[0].mxu0
    %v398 = vpop.f32.mrb[0].mxu0
    %v399 = vadd.f32 0.0, %v398
    %v400 = vpop.f32.mrb[0].mxu0
    %401 = vdwg.mxu0
    %v404 = vunpack.c.l.b16 %v185
    %v405 = vunpack.c.l.b16 %v186
    %v406 = vpack.c.b16 %v405, %v404
    %v408 = vsel %vm198, %v173, 0
    %v411 = vsel %vm198, %v406, 0
    %413 = vmatprep.subr.bf16.mxu0 0
    %414 = vmatpush1.bf16.xpose.msra.mxu0 %v411
    %415 = vmatprep.subr.bf16.mxu0 0
    %416 = vmatpush1.bf16.xpose.msra.mxu0 0
    %417 = vmatprep.subr.bf16.mxu0 0
    %418 = vmatpush1.bf16.xpose.msra.mxu0 0
    %419 = vmatprep.subr.bf16.mxu0 0
    %420 = vmatpush1.bf16.xpose.msra.mxu0 0
    %421 = vmatprep.subr.bf16.mxu0 0
    %422 = vmatpush1.bf16.xpose.msra.mxu0 0
    %423 = vmatprep.subr.bf16.mxu0 0
    %424 = vmatpush1.bf16.xpose.msra.mxu0 0
    %425 = vmatprep.subr.bf16.mxu0 0
    %426 = vmatpush1.bf16.xpose.msra.mxu0 0
    %427 = vmatprep.subr.bf16.mxu0 0
    %428 = vmatpush1.bf16.xpose.msra.mxu0 0
    %429 = vmatprep.subr.bf16.mxu0 0
    %430 = vmatpush1.bf16.xpose.msra.mxu0 0
    %431 = vmatprep.subr.bf16.mxu0 0
    %432 = vmatpush1.bf16.xpose.msra.mxu0 0
    %433 = vmatprep.subr.bf16.mxu0 0
    %434 = vmatpush1.bf16.xpose.msra.mxu0 0
    %435 = vmatprep.subr.bf16.mxu0 0
    %436 = vmatpush1.bf16.xpose.msra.mxu0 0
    %437 = vmatprep.subr.bf16.mxu0 0
    %438 = vmatpush1.bf16.xpose.msra.mxu0 0
    %439 = vmatprep.subr.bf16.mxu0 0
    %440 = vmatpush1.bf16.xpose.msra.mxu0 0
    %441 = vmatprep.subr.bf16.mxu0 0
    %442 = vmatpush1.bf16.xpose.msra.mxu0 0
    %443 = vmatprep.subr.bf16.mxu0 0
    %444 = vmatpush1.bf16.xpose.msra.mxu0 0
    %445 = vmatprep.mubr.bf16.mxu0 0
    %446 = vmatmul.mubr.bf16.gmra.mrb[0].mxu0 %v408
    %v447 = vpop.f32.mrb[0].mxu0
    %v448 = vadd.f32 0.0, %v447
    %v449 = vpop.f32.mrb[0].mxu0
    %v450 = vpop.f32.mrb[0].mxu0
    %v451 = vadd.f32 0.0, %v450
    %v452 = vpop.f32.mrb[0].mxu0
    %453 = vdwg.mxu0
    %v456 = vunpack.c.l.b16 %v187
    %v457 = vunpack.c.l.b16 %v188
    %v458 = vpack.c.b16 %v457, %v456
    %v460 = vsel %vm198, %v174, 0
    %v463 = vsel %vm198, %v458, 0
    %465 = vmatprep.subr.bf16.mxu0 0
    %466 = vmatpush1.bf16.xpose.msra.mxu0 %v463
    %467 = vmatprep.subr.bf16.mxu0 0
    %468 = vmatpush1.bf16.xpose.msra.mxu0 0
    %469 = vmatprep.subr.bf16.mxu0 0
    %470 = vmatpush1.bf16.xpose.msra.mxu0 0
    %471 = vmatprep.subr.bf16.mxu0 0
    %472 = vmatpush1.bf16.xpose.msra.mxu0 0
    %473 = vmatprep.subr.bf16.mxu0 0
    %474 = vmatpush1.bf16.xpose.msra.mxu0 0
    %475 = vmatprep.subr.bf16.mxu0 0
    %476 = vmatpush1.bf16.xpose.msra.mxu0 0
    %477 = vmatprep.subr.bf16.mxu0 0
    %478 = vmatpush1.bf16.xpose.msra.mxu0 0
    %479 = vmatprep.subr.bf16.mxu0 0
    %480 = vmatpush1.bf16.xpose.msra.mxu0 0
    %481 = vmatprep.subr.bf16.mxu0 0
    %482 = vmatpush1.bf16.xpose.msra.mxu0 0
    %483 = vmatprep.subr.bf16.mxu0 0
    %484 = vmatpush1.bf16.xpose.msra.mxu0 0
    %485 = vmatprep.subr.bf16.mxu0 0
    %486 = vmatpush1.bf16.xpose.msra.mxu0 0
    %487 = vmatprep.subr.bf16.mxu0 0
    %488 = vmatpush1.bf16.xpose.msra.mxu0 0
    %489 = vmatprep.subr.bf16.mxu0 0
    %490 = vmatpush1.bf16.xpose.msra.mxu0 0
    %491 = vmatprep.subr.bf16.mxu0 0
    %492 = vmatpush1.bf16.xpose.msra.mxu0 0
    %493 = vmatprep.subr.bf16.mxu0 0
    %494 = vmatpush1.bf16.xpose.msra.mxu0 0
    %495 = vmatprep.subr.bf16.mxu0 0
    %496 = vmatpush1.bf16.xpose.msra.mxu0 0
    %497 = vmatprep.mubr.bf16.mxu0 0
    %498 = vmatmul.mubr.bf16.gmra.mrb[0].mxu0 %v460
    %v499 = vpop.f32.mrb[0].mxu0
    %v500 = vadd.f32 0.0, %v499
    %v501 = vpop.f32.mrb[0].mxu0
    %v502 = vpop.f32.mrb[0].mxu0
    %v503 = vadd.f32 0.0, %v502
    %v504 = vpop.f32.mrb[0].mxu0
    %505 = vdwg.mxu0
    %v508 = vunpack.c.l.b16 %v189
    %v509 = vunpack.c.l.b16 %v190
    %v510 = vpack.c.b16 %v509, %v508
    %v512 = vsel %vm198, %v175, 0
    %v515 = vsel %vm198, %v510, 0
    %517 = vmatprep.subr.bf16.mxu0 0
    %518 = vmatpush1.bf16.xpose.msra.mxu0 %v515
    %519 = vmatprep.subr.bf16.mxu0 0
    %520 = vmatpush1.bf16.xpose.msra.mxu0 0
    %521 = vmatprep.subr.bf16.mxu0 0
    %522 = vmatpush1.bf16.xpose.msra.mxu0 0
    %523 = vmatprep.subr.bf16.mxu0 0
    %524 = vmatpush1.bf16.xpose.msra.mxu0 0
    %525 = vmatprep.subr.bf16.mxu0 0
    %526 = vmatpush1.bf16.xpose.msra.mxu0 0
    %527 = vmatprep.subr.bf16.mxu0 0
    %528 = vmatpush1.bf16.xpose.msra.mxu0 0
    %529 = vmatprep.subr.bf16.mxu0 0
    %530 = vmatpush1.bf16.xpose.msra.mxu0 0
    %531 = vmatprep.subr.bf16.mxu0 0
    %532 = vmatpush1.bf16.xpose.msra.mxu0 0
    %533 = vmatprep.subr.bf16.mxu0 0
    %534 = vmatpush1.bf16.xpose.msra.mxu0 0
    %535 = vmatprep.subr.bf16.mxu0 0
    %536 = vmatpush1.bf16.xpose.msra.mxu0 0
    %537 = vmatprep.subr.bf16.mxu0 0
    %538 = vmatpush1.bf16.xpose.msra.mxu0 0
    %539 = vmatprep.subr.bf16.mxu0 0
    %540 = vmatpush1.bf16.xpose.msra.mxu0 0
    %541 = vmatprep.subr.bf16.mxu0 0
    %542 = vmatpush1.bf16.xpose.msra.mxu0 0
    %543 = vmatprep.subr.bf16.mxu0 0
    %544 = vmatpush1.bf16.xpose.msra.mxu0 0
    %545 = vmatprep.subr.bf16.mxu0 0
    %546 = vmatpush1.bf16.xpose.msra.mxu0 0
    %547 = vmatprep.subr.bf16.mxu0 0
    %548 = vmatpush1.bf16.xpose.msra.mxu0 0
    %549 = vmatprep.mubr.bf16.mxu0 0
    %550 = vmatmul.mubr.bf16.gmra.mrb[0].mxu0 %v512
    %v551 = vpop.f32.mrb[0].mxu0
    %v552 = vadd.f32 0.0, %v551
    %v553 = vpop.f32.mrb[0].mxu0
    %v554 = vpop.f32.mrb[0].mxu0
    %v555 = vadd.f32 0.0, %v554
    %v556 = vpop.f32.mrb[0].mxu0
    %557 = vdwg.mxu0
    %v560 = vunpack.c.l.b16 %v191
    %v561 = vunpack.c.l.b16 %v192
    %v562 = vpack.c.b16 %v561, %v560
    %v564 = vsel %vm198, %v176, 0
    %v567 = vsel %vm198, %v562, 0
    %569 = vmatprep.subr.bf16.mxu0 0
    %570 = vmatpush1.bf16.xpose.msra.mxu0 %v567
    %571 = vmatprep.subr.bf16.mxu0 0
    %572 = vmatpush1.bf16.xpose.msra.mxu0 0
    %573 = vmatprep.subr.bf16.mxu0 0
    %574 = vmatpush1.bf16.xpose.msra.mxu0 0
    %575 = vmatprep.subr.bf16.mxu0 0
    %576 = vmatpush1.bf16.xpose.msra.mxu0 0
    %577 = vmatprep.subr.bf16.mxu0 0
    %578 = vmatpush1.bf16.xpose.msra.mxu0 0
    %579 = vmatprep.subr.bf16.mxu0 0
    %580 = vmatpush1.bf16.xpose.msra.mxu0 0
    %581 = vmatprep.subr.bf16.mxu0 0
    %582 = vmatpush1.bf16.xpose.msra.mxu0 0
    %583 = vmatprep.subr.bf16.mxu0 0
    %584 = vmatpush1.bf16.xpose.msra.mxu0 0
    %585 = vmatprep.subr.bf16.mxu0 0
    %586 = vmatpush1.bf16.xpose.msra.mxu0 0
    %587 = vmatprep.subr.bf16.mxu0 0
    %588 = vmatpush1.bf16.xpose.msra.mxu0 0
    %589 = vmatprep.subr.bf16.mxu0 0
    %590 = vmatpush1.bf16.xpose.msra.mxu0 0
    %591 = vmatprep.subr.bf16.mxu0 0
    %592 = vmatpush1.bf16.xpose.msra.mxu0 0
    %593 = vmatprep.subr.bf16.mxu0 0
    %594 = vmatpush1.bf16.xpose.msra.mxu0 0
    %595 = vmatprep.subr.bf16.mxu0 0
    %596 = vmatpush1.bf16.xpose.msra.mxu0 0
    %597 = vmatprep.subr.bf16.mxu0 0
    %598 = vmatpush1.bf16.xpose.msra.mxu0 0
    %599 = vmatprep.subr.bf16.mxu0 0
    %600 = vmatpush1.bf16.xpose.msra.mxu0 0
    %601 = vmatprep.mubr.bf16.mxu0 0
    %602 = vmatmul.mubr.bf16.gmra.mrb[0].mxu0 %v564
    %v603 = vpop.f32.mrb[0].mxu0
    %v604 = vadd.f32 0.0, %v603
    %v605 = vpop.f32.mrb[0].mxu0
    %v606 = vpop.f32.mrb[0].mxu0
    %v607 = vadd.f32 0.0, %v606
    %v608 = vpop.f32.mrb[0].mxu0
    %609 = vdwg.mxu0
    %v610 = vld [vmem:[#allocation2] sm:$0xff]
    %v611 = vld [vmem:[#allocation2 + $0x8] sm:$0xff]
    %v612 = vld [vmem:[#allocation2 + $0x10] sm:$0xff]
    %v613 = vld [vmem:[#allocation2 + $0x18] sm:$0xff]
    %v614 = vld [vmem:[#allocation2 + $0x20] sm:$0xff]
    %v615 = vld [vmem:[#allocation2 + $0x28] sm:$0xff]
    %v616 = vld [vmem:[#allocation2 + $0x30] sm:$0xff]
    %v617 = vld [vmem:[#allocation2 + $0x38] sm:$0xff]
    %v618 = vld [vmem:[#allocation2 + $0x40] sm:$0xff]
    %v619 = vld [vmem:[#allocation2 + $0x48] sm:$0xff]
    %v620 = vld [vmem:[#allocation2 + $0x50] sm:$0xff]
    %v621 = vld [vmem:[#allocation2 + $0x58] sm:$0xff]
    %v622 = vld [vmem:[#allocation2 + $0x60] sm:$0xff]
    %v623 = vld [vmem:[#allocation2 + $0x68] sm:$0xff]
    %v624 = vld [vmem:[#allocation2 + $0x70] sm:$0xff]
    %v625 = vld [vmem:[#allocation2 + $0x78] sm:$0xff]
    %vm626 = vcmask 130048
    %v627 = vsel %vm626, %v240, -inf
    %628 = vmax.xlane.f32.xlu0 %v627
    %v629 = vpop.xlane.xlu0 %628
    %v630 = vsel %vm626, %v243, -inf
    %631 = vmax.xlane.f32.xlu0 %v630
    %v632 = vpop.xlane.xlu0 %631
    %v633 = vsel %vm626, %v292, -inf
    %634 = vmax.xlane.f32.xlu0 %v633
    %v635 = vpop.xlane.xlu0 %634
    %v636 = vsel %vm626, %v295, -inf
    %637 = vmax.xlane.f32.xlu0 %v636
    %v638 = vpop.xlane.xlu0 %637
    %v639 = vsel %vm626, %v344, -inf
    %640 = vmax.xlane.f32.xlu0 %v639
    %v641 = vpop.xlane.xlu0 %640
    %v642 = vsel %vm626, %v347, -inf
    %643 = vmax.xlane.f32.xlu0 %v642
    %v644 = vpop.xlane.xlu0 %643
    %v645 = vsel %vm626, %v396, -inf
    %646 = vmax.xlane.f32.xlu0 %v645
    %v647 = vpop.xlane.xlu0 %646
    %v648 = vsel %vm626, %v399, -inf
    %649 = vmax.xlane.f32.xlu0 %v648
    %v650 = vpop.xlane.xlu0 %649
    %v651 = vsel %vm626, %v448, -inf
    %652 = vmax.xlane.f32.xlu0 %v651
    %v653 = vpop.xlane.xlu0 %652
    %v654 = vsel %vm626, %v451, -inf
    %655 = vmax.xlane.f32.xlu0 %v654
    %v656 = vpop.xlane.xlu0 %655
    %v657 = vsel %vm626, %v500, -inf
    %658 = vmax.xlane.f32.xlu0 %v657
    %v659 = vpop.xlane.xlu0 %658
    %v660 = vsel %vm626, %v503, -inf
    %661 = vmax.xlane.f32.xlu0 %v660
    %v662 = vpop.xlane.xlu0 %661
    %v663 = vsel %vm626, %v552, -inf
    %664 = vmax.xlane.f32.xlu0 %v663
    %v665 = vpop.xlane.xlu0 %664
    %v666 = vsel %vm626, %v555, -inf
    %667 = vmax.xlane.f32.xlu0 %v666
    %v668 = vpop.xlane.xlu0 %667
    %v669 = vsel %vm626, %v604, -inf
    %670 = vmax.xlane.f32.xlu0 %v669
    %v671 = vpop.xlane.xlu0 %670
    %v672 = vsel %vm626, %v607, -inf
    %673 = vmax.xlane.f32.xlu0 %v672
    %v674 = vpop.xlane.xlu0 %673
    %v675 = vmax.f32 %v610, %v629
    %v676 = vmax.f32 %v611, %v632
    %v677 = vmax.f32 %v612, %v635
    %v678 = vmax.f32 %v613, %v638
    %v679 = vmax.f32 %v614, %v641
    %v680 = vmax.f32 %v615, %v644
    %v681 = vmax.f32 %v616, %v647
    %v682 = vmax.f32 %v617, %v650
    %v683 = vmax.f32 %v618, %v653
    %v684 = vmax.f32 %v619, %v656
    %v685 = vmax.f32 %v620, %v659
    %v686 = vmax.f32 %v621, %v662
    %v687 = vmax.f32 %v622, %v665
    %v688 = vmax.f32 %v623, %v668
    %v689 = vmax.f32 %v624, %v671
    %v690 = vmax.f32 %v625, %v674
    %v691 = vsub.f32 %v610, %v675
    %v692 = vsub.f32 %v611, %v676
    %v693 = vsub.f32 %v612, %v677
    %v694 = vsub.f32 %v613, %v678
    %v695 = vsub.f32 %v614, %v679
    %v696 = vsub.f32 %v615, %v680
    %v697 = vsub.f32 %v616, %v681
    %v698 = vsub.f32 %v617, %v682
    %v699 = vsub.f32 %v618, %v683
    %v700 = vsub.f32 %v619, %v684
    %v701 = vsub.f32 %v620, %v685
    %v702 = vsub.f32 %v621, %v686
    %v703 = vsub.f32 %v622, %v687
    %v704 = vsub.f32 %v623, %v688
    %v705 = vsub.f32 %v624, %v689
    %v706 = vsub.f32 %v625, %v690
    %v707 = vmul.f32 %v691, 1.442695
    %v708 = vpow.pop %v707
    %v709 = vmul.f32 %v692, 1.442695
    %v710 = vpow.pop %v709
    %v711 = vmul.f32 %v693, 1.442695
    %v712 = vpow.pop %v711
    %v713 = vmul.f32 %v694, 1.442695
    %v714 = vpow.pop %v713
    %v715 = vmul.f32 %v695, 1.442695
    %v716 = vpow.pop %v715
    %v717 = vmul.f32 %v696, 1.442695
    %v718 = vpow.pop %v717
    %v719 = vmul.f32 %v697, 1.442695
    %v720 = vpow.pop %v719
    %v721 = vmul.f32 %v698, 1.442695
    %v722 = vpow.pop %v721
    %v723 = vmul.f32 %v699, 1.442695
    %v724 = vpow.pop %v723
    %v725 = vmul.f32 %v700, 1.442695
    %v726 = vpow.pop %v725
    %v727 = vmul.f32 %v701, 1.442695
    %v728 = vpow.pop %v727
    %v729 = vmul.f32 %v702, 1.442695
    %v730 = vpow.pop %v729
    %v731 = vmul.f32 %v703, 1.442695
    %v732 = vpow.pop %v731
    %v733 = vmul.f32 %v704, 1.442695
    %v734 = vpow.pop %v733
    %v735 = vmul.f32 %v705, 1.442695
    %v736 = vpow.pop %v735
    %v737 = vmul.f32 %v706, 1.442695
    %v738 = vpow.pop %v737
    %740 = vset.pattern.permute.xlu0 0
    %741 = vperm.xlu0 %740, %v675
    %v742 = vpop.permute.xlu0 %741
    %745 = vset.pattern.permute.xlu0 0
    %746 = vperm.xlu0 %745, %v676
    %v747 = vpop.permute.xlu0 %746
    %750 = vset.pattern.permute.xlu0 0
    %751 = vperm.xlu0 %750, %v677
    %v752 = vpop.permute.xlu0 %751
    %755 = vset.pattern.permute.xlu0 0
    %756 = vperm.xlu0 %755, %v678
    %v757 = vpop.permute.xlu0 %756
    %760 = vset.pattern.permute.xlu0 0
    %761 = vperm.xlu0 %760, %v679
    %v762 = vpop.permute.xlu0 %761
    %765 = vset.pattern.permute.xlu0 0
    %766 = vperm.xlu0 %765, %v680
    %v767 = vpop.permute.xlu0 %766
    %770 = vset.pattern.permute.xlu0 0
    %771 = vperm.xlu0 %770, %v681
    %v772 = vpop.permute.xlu0 %771
    %775 = vset.pattern.permute.xlu0 0
    %776 = vperm.xlu0 %775, %v682
    %v777 = vpop.permute.xlu0 %776
    %780 = vset.pattern.permute.xlu0 0
    %781 = vperm.xlu0 %780, %v683
    %v782 = vpop.permute.xlu0 %781
    %785 = vset.pattern.permute.xlu0 0
    %786 = vperm.xlu0 %785, %v684
    %v787 = vpop.permute.xlu0 %786
    %790 = vset.pattern.permute.xlu0 0
    %791 = vperm.xlu0 %790, %v685
    %v792 = vpop.permute.xlu0 %791
    %795 = vset.pattern.permute.xlu0 0
    %796 = vperm.xlu0 %795, %v686
    %v797 = vpop.permute.xlu0 %796
    %800 = vset.pattern.permute.xlu0 0
    %801 = vperm.xlu0 %800, %v687
    %v802 = vpop.permute.xlu0 %801
    %805 = vset.pattern.permute.xlu0 0
    %806 = vperm.xlu0 %805, %v688
    %v807 = vpop.permute.xlu0 %806
    %810 = vset.pattern.permute.xlu0 0
    %811 = vperm.xlu0 %810, %v689
    %v812 = vpop.permute.xlu0 %811
    %815 = vset.pattern.permute.xlu0 0
    %816 = vperm.xlu0 %815, %v690
    %v817 = vpop.permute.xlu0 %816
    %v819 = vsub.f32 %v240, %v742
    %v820 = vsub.f32 %v243, %v747
    %v821 = vsub.f32 %v292, %v752
    %v822 = vsub.f32 %v295, %v757
    %v823 = vsub.f32 %v344, %v762
    %v824 = vsub.f32 %v347, %v767
    %v825 = vsub.f32 %v396, %v772
    %v826 = vsub.f32 %v399, %v777
    %v827 = vsub.f32 %v448, %v782
    %v828 = vsub.f32 %v451, %v787
    %v829 = vsub.f32 %v500, %v792
    %v830 = vsub.f32 %v503, %v797
    %v831 = vsub.f32 %v552, %v802
    %v832 = vsub.f32 %v555, %v807
    %v833 = vsub.f32 %v604, %v812
    %v834 = vsub.f32 %v607, %v817
    %v835 = vmul.f32 %v819, 1.442695
    %v836 = vpow.pop %v835
    %v837 = vmul.f32 %v820, 1.442695
    %v838 = vpow.pop %v837
    %v839 = vmul.f32 %v821, 1.442695
    %v840 = vpow.pop %v839
    %v841 = vmul.f32 %v822, 1.442695
    %v842 = vpow.pop %v841
    %v843 = vmul.f32 %v823, 1.442695
    %v844 = vpow.pop %v843
    %v845 = vmul.f32 %v824, 1.442695
    %v846 = vpow.pop %v845
    %v847 = vmul.f32 %v825, 1.442695
    %v848 = vpow.pop %v847
    %v849 = vmul.f32 %v826, 1.442695
    %v850 = vpow.pop %v849
    %v851 = vmul.f32 %v827, 1.442695
    %v852 = vpow.pop %v851
    %v853 = vmul.f32 %v828, 1.442695
    %v854 = vpow.pop %v853
    %v855 = vmul.f32 %v829, 1.442695
    %v856 = vpow.pop %v855
    %v857 = vmul.f32 %v830, 1.442695
    %v858 = vpow.pop %v857
    %v859 = vmul.f32 %v831, 1.442695
    %v860 = vpow.pop %v859
    %v861 = vmul.f32 %v832, 1.442695
    %v862 = vpow.pop %v861
    %v863 = vmul.f32 %v833, 1.442695
    %v864 = vpow.pop %v863
    %v865 = vmul.f32 %v834, 1.442695
    %v866 = vpow.pop %v865
    %v867 = vld [vmem:[#allocation3] sm:$0xff]
    %v868 = vld [vmem:[#allocation3 + $0x8] sm:$0xff]
    %v869 = vld [vmem:[#allocation3 + $0x10] sm:$0xff]
    %v870 = vld [vmem:[#allocation3 + $0x18] sm:$0xff]
    %v871 = vld [vmem:[#allocation3 + $0x20] sm:$0xff]
    %v872 = vld [vmem:[#allocation3 + $0x28] sm:$0xff]
    %v873 = vld [vmem:[#allocation3 + $0x30] sm:$0xff]
    %v874 = vld [vmem:[#allocation3 + $0x38] sm:$0xff]
    %v875 = vld [vmem:[#allocation3 + $0x40] sm:$0xff]
    %v876 = vld [vmem:[#allocation3 + $0x48] sm:$0xff]
    %v877 = vld [vmem:[#allocation3 + $0x50] sm:$0xff]
    %v878 = vld [vmem:[#allocation3 + $0x58] sm:$0xff]
    %v879 = vld [vmem:[#allocation3 + $0x60] sm:$0xff]
    %v880 = vld [vmem:[#allocation3 + $0x68] sm:$0xff]
    %v881 = vld [vmem:[#allocation3 + $0x70] sm:$0xff]
    %v882 = vld [vmem:[#allocation3 + $0x78] sm:$0xff]
    %v883 = vmul.f32 %v708, %v867
    %v884 = vmul.f32 %v710, %v868
    %v885 = vmul.f32 %v712, %v869
    %v886 = vmul.f32 %v714, %v870
    %v887 = vmul.f32 %v716, %v871
    %v888 = vmul.f32 %v718, %v872
    %v889 = vmul.f32 %v720, %v873
    %v890 = vmul.f32 %v722, %v874
    %v891 = vmul.f32 %v724, %v875
    %v892 = vmul.f32 %v726, %v876
    %v893 = vmul.f32 %v728, %v877
    %v894 = vmul.f32 %v730, %v878
    %v895 = vmul.f32 %v732, %v879
    %v896 = vmul.f32 %v734, %v880
    %v897 = vmul.f32 %v736, %v881
    %v898 = vmul.f32 %v738, %v882
    %v899 = vsel %vm626, %v836, 0.0
    %900 = vadd.xlane.f32.xlu0 %v899
    %v901 = vpop.xlane.xlu0 %900
    %v902 = vsel %vm626, %v838, 0.0
    %903 = vadd.xlane.f32.xlu0 %v902
    %v904 = vpop.xlane.xlu0 %903
    %v905 = vsel %vm626, %v840, 0.0
    %906 = vadd.xlane.f32.xlu0 %v905
    %v907 = vpop.xlane.xlu0 %906
    %v908 = vsel %vm626, %v842, 0.0
    %909 = vadd.xlane.f32.xlu0 %v908
    %v910 = vpop.xlane.xlu0 %909
    %v911 = vsel %vm626, %v844, 0.0
    %912 = vadd.xlane.f32.xlu0 %v911
    %v913 = vpop.xlane.xlu0 %912
    %v914 = vsel %vm626, %v846, 0.0
    %915 = vadd.xlane.f32.xlu0 %v914
    %v916 = vpop.xlane.xlu0 %915
    %v917 = vsel %vm626, %v848, 0.0
    %918 = vadd.xlane.f32.xlu0 %v917
    %v919 = vpop.xlane.xlu0 %918
    %v920 = vsel %vm626, %v850, 0.0
    %921 = vadd.xlane.f32.xlu0 %v920
    %v922 = vpop.xlane.xlu0 %921
    %v923 = vsel %vm626, %v852, 0.0
    %924 = vadd.xlane.f32.xlu0 %v923
    %v925 = vpop.xlane.xlu0 %924
    %v926 = vsel %vm626, %v854, 0.0
    %927 = vadd.xlane.f32.xlu0 %v926
    %v928 = vpop.xlane.xlu0 %927
    %v929 = vsel %vm626, %v856, 0.0
    %930 = vadd.xlane.f32.xlu0 %v929
    %v931 = vpop.xlane.xlu0 %930
    %v932 = vsel %vm626, %v858, 0.0
    %933 = vadd.xlane.f32.xlu0 %v932
    %v934 = vpop.xlane.xlu0 %933
    %v935 = vsel %vm626, %v860, 0.0
    %936 = vadd.xlane.f32.xlu0 %v935
    %v937 = vpop.xlane.xlu0 %936
    %v938 = vsel %vm626, %v862, 0.0
    %939 = vadd.xlane.f32.xlu0 %v938
    %v940 = vpop.xlane.xlu0 %939
    %v941 = vsel %vm626, %v864, 0.0
    %942 = vadd.xlane.f32.xlu0 %v941
    %v943 = vpop.xlane.xlu0 %942
    %v944 = vsel %vm626, %v866, 0.0
    %945 = vadd.xlane.f32.xlu0 %v944
    %v946 = vpop.xlane.xlu0 %945
    %v947 = vadd.f32 %v883, %v901
    %v948 = vadd.f32 %v884, %v904
    %v949 = vadd.f32 %v885, %v907
    %v950 = vadd.f32 %v886, %v910
    %v951 = vadd.f32 %v887, %v913
    %v952 = vadd.f32 %v888, %v916
    %v953 = vadd.f32 %v889, %v919
    %v954 = vadd.f32 %v890, %v922
    %v955 = vadd.f32 %v891, %v925
    %v956 = vadd.f32 %v892, %v928
    %v957 = vadd.f32 %v893, %v931
    %v958 = vadd.f32 %v894, %v934
    %v959 = vadd.f32 %v895, %v937
    %v960 = vadd.f32 %v896, %v940
    %v961 = vadd.f32 %v897, %v943
    %v962 = vadd.f32 %v898, %v946
    %vm963 = vcmask 7168
    %964 = vst.msk [vmem:[#allocation3] sm:$0xff] %vm963, %v947
    %965 = vst.msk [vmem:[#allocation3 + $0x8] sm:$0xff] %vm963, %v948
    %966 = vst.msk [vmem:[#allocation3 + $0x10] sm:$0xff] %vm963, %v949
    %967 = vst.msk [vmem:[#allocation3 + $0x18] sm:$0xff] %vm963, %v950
    %968 = vst.msk [vmem:[#allocation3 + $0x20] sm:$0xff] %vm963, %v951
    %969 = vst.msk [vmem:[#allocation3 + $0x28] sm:$0xff] %vm963, %v952
    %970 = vst.msk [vmem:[#allocation3 + $0x30] sm:$0xff] %vm963, %v953
    %971 = vst.msk [vmem:[#allocation3 + $0x38] sm:$0xff] %vm963, %v954
    %972 = vst.msk [vmem:[#allocation3 + $0x40] sm:$0xff] %vm963, %v955
    %973 = vst.msk [vmem:[#allocation3 + $0x48] sm:$0xff] %vm963, %v956
    %974 = vst.msk [vmem:[#allocation3 + $0x50] sm:$0xff] %vm963, %v957
    %975 = vst.msk [vmem:[#allocation3 + $0x58] sm:$0xff] %vm963, %v958
    %976 = vst.msk [vmem:[#allocation3 + $0x60] sm:$0xff] %vm963, %v959
    %977 = vst.msk [vmem:[#allocation3 + $0x68] sm:$0xff] %vm963, %v960
    %978 = vst.msk [vmem:[#allocation3 + $0x70] sm:$0xff] %vm963, %v961
    %979 = vst.msk [vmem:[#allocation3 + $0x78] sm:$0xff] %vm963, %v962
    %v980 = vld [vmem:[#allocation4] sm:$0xff]
    %v981 = vld [vmem:[#allocation4 + $0x8] sm:$0xff]
    %v982 = vld [vmem:[#allocation4 + $0x10] sm:$0xff]
    %v983 = vld [vmem:[#allocation4 + $0x18] sm:$0xff]
    %v984 = vld [vmem:[#allocation4 + $0x20] sm:$0xff]
    %v985 = vld [vmem:[#allocation4 + $0x28] sm:$0xff]
    %v986 = vld [vmem:[#allocation4 + $0x30] sm:$0xff]
    %v987 = vld [vmem:[#allocation4 + $0x38] sm:$0xff]
    %v988 = vld [vmem:[#allocation4 + $0x40] sm:$0xff]
    %v989 = vld [vmem:[#allocation4 + $0x48] sm:$0xff]
    %v990 = vld [vmem:[#allocation4 + $0x50] sm:$0xff]
    %v991 = vld [vmem:[#allocation4 + $0x58] sm:$0xff]
    %v992 = vld [vmem:[#allocation4 + $0x60] sm:$0xff]
    %v993 = vld [vmem:[#allocation4 + $0x68] sm:$0xff]
    %v994 = vld [vmem:[#allocation4 + $0x70] sm:$0xff]
    %v995 = vld [vmem:[#allocation4 + $0x78] sm:$0xff]
    %997 = vset.pattern.permute.xlu0 0
    %998 = vperm.xlu0 %997, %v708
    %v999 = vpop.permute.xlu0 %998
    %1002 = vset.pattern.permute.xlu0 0
    %1003 = vperm.xlu0 %1002, %v710
    %v1004 = vpop.permute.xlu0 %1003
    %1007 = vset.pattern.permute.xlu0 0
    %1008 = vperm.xlu0 %1007, %v712
    %v1009 = vpop.permute.xlu0 %1008
    %1012 = vset.pattern.permute.xlu0 0
    %1013 = vperm.xlu0 %1012, %v714
    %v1014 = vpop.permute.xlu0 %1013
    %1017 = vset.pattern.permute.xlu0 0
    %1018 = vperm.xlu0 %1017, %v716
    %v1019 = vpop.permute.xlu0 %1018
    %1022 = vset.pattern.permute.xlu0 0
    %1023 = vperm.xlu0 %1022, %v718
    %v1024 = vpop.permute.xlu0 %1023
    %1027 = vset.pattern.permute.xlu0 0
    %1028 = vperm.xlu0 %1027, %v720
    %v1029 = vpop.permute.xlu0 %1028
    %1032 = vset.pattern.permute.xlu0 0
    %1033 = vperm.xlu0 %1032, %v722
    %v1034 = vpop.permute.xlu0 %1033
    %1037 = vset.pattern.permute.xlu0 0
    %1038 = vperm.xlu0 %1037, %v724
    %v1039 = vpop.permute.xlu0 %1038
    %1042 = vset.pattern.permute.xlu0 0
    %1043 = vperm.xlu0 %1042, %v726
    %v1044 = vpop.permute.xlu0 %1043
    %1047 = vset.pattern.permute.xlu0 0
    %1048 = vperm.xlu0 %1047, %v728
    %v1049 = vpop.permute.xlu0 %1048
    %1052 = vset.pattern.permute.xlu0 0
    %1053 = vperm.xlu0 %1052, %v730
    %v1054 = vpop.permute.xlu0 %1053
    %1057 = vset.pattern.permute.xlu0 0
    %1058 = vperm.xlu0 %1057, %v732
    %v1059 = vpop.permute.xlu0 %1058
    %1062 = vset.pattern.permute.xlu0 0
    %1063 = vperm.xlu0 %1062, %v734
    %v1064 = vpop.permute.xlu0 %1063
    %1067 = vset.pattern.permute.xlu0 0
    %1068 = vperm.xlu0 %1067, %v736
    %v1069 = vpop.permute.xlu0 %1068
    %1072 = vset.pattern.permute.xlu0 0
    %1073 = vperm.xlu0 %1072, %v738
    %v1074 = vpop.permute.xlu0 %1073
    %v1076 = vmul.f32 %v999, %v980
    %v1077 = vmul.f32 %v1004, %v981
    %v1078 = vmul.f32 %v1009, %v982
    %v1079 = vmul.f32 %v1014, %v983
    %v1080 = vmul.f32 %v1019, %v984
    %v1081 = vmul.f32 %v1024, %v985
    %v1082 = vmul.f32 %v1029, %v986
    %v1083 = vmul.f32 %v1034, %v987
    %v1084 = vmul.f32 %v1039, %v988
    %v1085 = vmul.f32 %v1044, %v989
    %v1086 = vmul.f32 %v1049, %v990
    %v1087 = vmul.f32 %v1054, %v991
    %v1088 = vmul.f32 %v1059, %v992
    %v1089 = vmul.f32 %v1064, %v993
    %v1090 = vmul.f32 %v1069, %v994
    %v1091 = vmul.f32 %v1074, %v995
    %v1092 = vpack.c.bf16 %v838, %v836
    %v1093 = vpack.c.bf16 %v842, %v840
    %v1094 = vpack.c.bf16 %v846, %v844
    %v1095 = vpack.c.bf16 %v850, %v848
    %v1096 = vpack.c.bf16 %v854, %v852
    %v1097 = vpack.c.bf16 %v858, %v856
    %v1098 = vpack.c.bf16 %v862, %v860
    %v1099 = vpack.c.bf16 %v866, %v864
    %v1100 = vld [vmem:[#allocation11] sm:$0xf]
    %v1101 = vld [vmem:[#allocation11 + $0x4] sm:$0xf]
    %v1102 = vld [vmem:[#allocation11 + $0x8] sm:$0xf]
    %v1103 = vld [vmem:[#allocation11 + $0xc] sm:$0xf]
    %v1104 = vld [vmem:[#allocation11 + $0x10] sm:$0xf]
    %v1105 = vld [vmem:[#allocation11 + $0x14] sm:$0xf]
    %v1106 = vld [vmem:[#allocation11 + $0x18] sm:$0xf]
    %v1107 = vld [vmem:[#allocation11 + $0x1c] sm:$0xf]
    %v1108 = vld [vmem:[#allocation11 + $0x20] sm:$0xf]
    %v1109 = vld [vmem:[#allocation11 + $0x24] sm:$0xf]
    %v1110 = vld [vmem:[#allocation11 + $0x28] sm:$0xf]
    %v1111 = vld [vmem:[#allocation11 + $0x2c] sm:$0xf]
    %v1112 = vld [vmem:[#allocation11 + $0x30] sm:$0xf]
    %v1113 = vld [vmem:[#allocation11 + $0x34] sm:$0xf]
    %v1114 = vld [vmem:[#allocation11 + $0x38] sm:$0xf]
    %v1115 = vld [vmem:[#allocation11 + $0x3c] sm:$0xf]
    %v1118 = vunpack.c.l.b16 %v1100
    %v1119 = vunpack.c.l.b16 %v1101
    %v1120 = vpack.c.b16 %v1119, %v1118
    %v1123 = vsel %vm626, %v1092, 0
    %1125 = vmatprep.subr.bf16.mxu0 0
    %1126 = vmatpush1.bf16.msra.mxu0 %v1120
    %1127 = vmatprep.subr.bf16.mxu0 0
    %1128 = vmatpush1.bf16.msra.mxu0 0
    %1129 = vmatprep.subr.bf16.mxu0 0
    %1130 = vmatpush1.bf16.msra.mxu0 0
    %1131 = vmatprep.subr.bf16.mxu0 0
    %1132 = vmatpush1.bf16.msra.mxu0 0
    %1133 = vmatprep.subr.bf16.mxu0 0
    %1134 = vmatpush1.bf16.msra.mxu0 0
    %1135 = vmatprep.subr.bf16.mxu0 0
    %1136 = vmatpush1.bf16.msra.mxu0 0
    %1137 = vmatprep.subr.bf16.mxu0 0
    %1138 = vmatpush1.bf16.msra.mxu0 0
    %1139 = vmatprep.subr.bf16.mxu0 0
    %1140 = vmatpush1.bf16.msra.mxu0 0
    %1141 = vmatprep.subr.bf16.mxu0 0
    %1142 = vmatpush1.bf16.msra.mxu0 0
    %1143 = vmatprep.subr.bf16.mxu0 0
    %1144 = vmatpush1.bf16.msra.mxu0 0
    %1145 = vmatprep.subr.bf16.mxu0 0
    %1146 = vmatpush1.bf16.msra.mxu0 0
    %1147 = vmatprep.subr.bf16.mxu0 0
    %1148 = vmatpush1.bf16.msra.mxu0 0
    %1149 = vmatprep.subr.bf16.mxu0 0
    %1150 = vmatpush1.bf16.msra.mxu0 0
    %1151 = vmatprep.subr.bf16.mxu0 0
    %1152 = vmatpush1.bf16.msra.mxu0 0
    %1153 = vmatprep.subr.bf16.mxu0 0
    %1154 = vmatpush1.bf16.msra.mxu0 0
    %1155 = vmatprep.subr.bf16.mxu0 0
    %1156 = vmatpush1.bf16.msra.mxu0 0
    %1157 = vmatprep.mubr.bf16.mxu0 0
    %1158 = vmatmul.mubr.bf16.gmra.mrb[0].mxu0 %v1123
    %v1159 = vpop.f32.mrb[0].mxu0
    %v1160 = vadd.f32 0.0, %v1159
    %v1161 = vpop.f32.mrb[0].mxu0
    %v1162 = vpop.f32.mrb[0].mxu0
    %v1163 = vadd.f32 0.0, %v1162
    %v1164 = vpop.f32.mrb[0].mxu0
    %1165 = vdwg.mxu0
    %v1168 = vunpack.c.l.b16 %v1102
    %v1169 = vunpack.c.l.b16 %v1103
    %v1170 = vpack.c.b16 %v1169, %v1168
    %v1173 = vsel %vm626, %v1093, 0
    %1175 = vmatprep.subr.bf16.mxu0 0
    %1176 = vmatpush1.bf16.msra.mxu0 %v1170
    %1177 = vmatprep.subr.bf16.mxu0 0
    %1178 = vmatpush1.bf16.msra.mxu0 0
    %1179 = vmatprep.subr.bf16.mxu0 0
    %1180 = vmatpush1.bf16.msra.mxu0 0
    %1181 = vmatprep.subr.bf16.mxu0 0
    %1182 = vmatpush1.bf16.msra.mxu0 0
    %1183 = vmatprep.subr.bf16.mxu0 0
    %1184 = vmatpush1.bf16.msra.mxu0 0
    %1185 = vmatprep.subr.bf16.mxu0 0
    %1186 = vmatpush1.bf16.msra.mxu0 0
    %1187 = vmatprep.subr.bf16.mxu0 0
    %1188 = vmatpush1.bf16.msra.mxu0 0
    %1189 = vmatprep.subr.bf16.mxu0 0
    %1190 = vmatpush1.bf16.msra.mxu0 0
    %1191 = vmatprep.subr.bf16.mxu0 0
    %1192 = vmatpush1.bf16.msra.mxu0 0
    %1193 = vmatprep.subr.bf16.mxu0 0
    %1194 = vmatpush1.bf16.msra.mxu0 0
    %1195 = vmatprep.subr.bf16.mxu0 0
    %1196 = vmatpush1.bf16.msra.mxu0 0
    %1197 = vmatprep.subr.bf16.mxu0 0
    %1198 = vmatpush1.bf16.msra.mxu0 0
    %1199 = vmatprep.subr.bf16.mxu0 0
    %1200 = vmatpush1.bf16.msra.mxu0 0
    %1201 = vmatprep.subr.bf16.mxu0 0
    %1202 = vmatpush1.bf16.msra.mxu0 0
    %1203 = vmatprep.subr.bf16.mxu0 0
    %1204 = vmatpush1.bf16.msra.mxu0 0
    %1205 = vmatprep.subr.bf16.mxu0 0
    %1206 = vmatpush1.bf16.msra.mxu0 0
    %1207 = vmatprep.mubr.bf16.mxu0 0
    %1208 = vmatmul.mubr.bf16.gmra.mrb[0].mxu0 %v1173
    %v1209 = vpop.f32.mrb[0].mxu0
    %v1210 = vadd.f32 0.0, %v1209
    %v1211 = vpop.f32.mrb[0].mxu0
    %v1212 = vpop.f32.mrb[0].mxu0
    %v1213 = vadd.f32 0.0, %v1212
    %v1214 = vpop.f32.mrb[0].mxu0
    %1215 = vdwg.mxu0
    %v1218 = vunpack.c.l.b16 %v1104
    %v1219 = vunpack.c.l.b16 %v1105
    %v1220 = vpack.c.b16 %v1219, %v1218
    %v1223 = vsel %vm626, %v1094, 0
    %1225 = vmatprep.subr.bf16.mxu0 0
    %1226 = vmatpush1.bf16.msra.mxu0 %v1220
    %1227 = vmatprep.subr.bf16.mxu0 0
    %1228 = vmatpush1.bf16.msra.mxu0 0
    %1229 = vmatprep.subr.bf16.mxu0 0
    %1230 = vmatpush1.bf16.msra.mxu0 0
    %1231 = vmatprep.subr.bf16.mxu0 0
    %1232 = vmatpush1.bf16.msra.mxu0 0
    %1233 = vmatprep.subr.bf16.mxu0 0
    %1234 = vmatpush1.bf16.msra.mxu0 0
    %1235 = vmatprep.subr.bf16.mxu0 0
    %1236 = vmatpush1.bf16.msra.mxu0 0
    %1237 = vmatprep.subr.bf16.mxu0 0
    %1238 = vmatpush1.bf16.msra.mxu0 0
    %1239 = vmatprep.subr.bf16.mxu0 0
    %1240 = vmatpush1.bf16.msra.mxu0 0
    %1241 = vmatprep.subr.bf16.mxu0 0
    %1242 = vmatpush1.bf16.msra.mxu0 0
    %1243 = vmatprep.subr.bf16.mxu0 0
    %1244 = vmatpush1.bf16.msra.mxu0 0
    %1245 = vmatprep.subr.bf16.mxu0 0
    %1246 = vmatpush1.bf16.msra.mxu0 0
    %1247 = vmatprep.subr.bf16.mxu0 0
    %1248 = vmatpush1.bf16.msra.mxu0 0
    %1249 = vmatprep.subr.bf16.mxu0 0
    %1250 = vmatpush1.bf16.msra.mxu0 0
    %1251 = vmatprep.subr.bf16.mxu0 0
    %1252 = vmatpush1.bf16.msra.mxu0 0
    %1253 = vmatprep.subr.bf16.mxu0 0
    %1254 = vmatpush1.bf16.msra.mxu0 0
    %1255 = vmatprep.subr.bf16.mxu0 0
    %1256 = vmatpush1.bf16.msra.mxu0 0
    %1257 = vmatprep.mubr.bf16.mxu0 0
    %1258 = vmatmul.mubr.bf16.gmra.mrb[0].mxu0 %v1223
    %v1259 = vpop.f32.mrb[0].mxu0
    %v1260 = vadd.f32 0.0, %v1259
    %v1261 = vpop.f32.mrb[0].mxu0
    %v1262 = vpop.f32.mrb[0].mxu0
    %v1263 = vadd.f32 0.0, %v1262
    %v1264 = vpop.f32.mrb[0].mxu0
    %1265 = vdwg.mxu0
    %v1268 = vunpack.c.l.b16 %v1106
    %v1269 = vunpack.c.l.b16 %v1107
    %v1270 = vpack.c.b16 %v1269, %v1268
    %v1273 = vsel %vm626, %v1095, 0
    %1275 = vmatprep.subr.bf16.mxu0 0
    %1276 = vmatpush1.bf16.msra.mxu0 %v1270
    %1277 = vmatprep.subr.bf16.mxu0 0
    %1278 = vmatpush1.bf16.msra.mxu0 0
    %1279 = vmatprep.subr.bf16.mxu0 0
    %1280 = vmatpush1.bf16.msra.mxu0 0
    %1281 = vmatprep.subr.bf16.mxu0 0
    %1282 = vmatpush1.bf16.msra.mxu0 0
    %1283 = vmatprep.subr.bf16.mxu0 0
    %1284 = vmatpush1.bf16.msra.mxu0 0
    %1285 = vmatprep.subr.bf16.mxu0 0
    %1286 = vmatpush1.bf16.msra.mxu0 0
    %1287 = vmatprep.subr.bf16.mxu0 0
    %1288 = vmatpush1.bf16.msra.mxu0 0
    %1289 = vmatprep.subr.bf16.mxu0 0
    %1290 = vmatpush1.bf16.msra.mxu0 0
    %1291 = vmatprep.subr.bf16.mxu0 0
    %1292 = vmatpush1.bf16.msra.mxu0 0
    %1293 = vmatprep.subr.bf16.mxu0 0
    %1294 = vmatpush1.bf16.msra.mxu0 0
    %1295 = vmatprep.subr.bf16.mxu0 0
    %1296 = vmatpush1.bf16.msra.mxu0 0
    %1297 = vmatprep.subr.bf16.mxu0 0
    %1298 = vmatpush1.bf16.msra.mxu0 0
    %1299 = vmatprep.subr.bf16.mxu0 0
    %1300 = vmatpush1.bf16.msra.mxu0 0
    %1301 = vmatprep.subr.bf16.mxu0 0
    %1302 = vmatpush1.bf16.msra.mxu0 0
    %1303 = vmatprep.subr.bf16.mxu0 0
    %1304 = vmatpush1.bf16.msra.mxu0 0
    %1305 = vmatprep.subr.bf16.mxu0 0
    %1306 = vmatpush1.bf16.msra.mxu0 0
    %1307 = vmatprep.mubr.bf16.mxu0 0
    %1308 = vmatmul.mubr.bf16.gmra.mrb[0].mxu0 %v1273
    %v1309 = vpop.f32.mrb[0].mxu0
    %v1310 = vadd.f32 0.0, %v1309
    %v1311 = vpop.f32.mrb[0].mxu0
    %v1312 = vpop.f32.mrb[0].mxu0
    %v1313 = vadd.f32 0.0, %v1312
    %v1314 = vpop.f32.mrb[0].mxu0
    %1315 = vdwg.mxu0
    %v1318 = vunpack.c.l.b16 %v1108
    %v1319 = vunpack.c.l.b16 %v1109
    %v1320 = vpack.c.b16 %v1319, %v1318
    %v1323 = vsel %vm626, %v1096, 0
    %1325 = vmatprep.subr.bf16.mxu0 0
    %1326 = vmatpush1.bf16.msra.mxu0 %v1320
    %1327 = vmatprep.subr.bf16.mxu0 0
    %1328 = vmatpush1.bf16.msra.mxu0 0
    %1329 = vmatprep.subr.bf16.mxu0 0
    %1330 = vmatpush1.bf16.msra.mxu0 0
    %1331 = vmatprep.subr.bf16.mxu0 0
    %1332 = vmatpush1.bf16.msra.mxu0 0
    %1333 = vmatprep.subr.bf16.mxu0 0
    %1334 = vmatpush1.bf16.msra.mxu0 0
    %1335 = vmatprep.subr.bf16.mxu0 0
    %1336 = vmatpush1.bf16.msra.mxu0 0
    %1337 = vmatprep.subr.bf16.mxu0 0
    %1338 = vmatpush1.bf16.msra.mxu0 0
    %1339 = vmatprep.subr.bf16.mxu0 0
    %1340 = vmatpush1.bf16.msra.mxu0 0
    %1341 = vmatprep.subr.bf16.mxu0 0
    %1342 = vmatpush1.bf16.msra.mxu0 0
    %1343 = vmatprep.subr.bf16.mxu0 0
    %1344 = vmatpush1.bf16.msra.mxu0 0
    %1345 = vmatprep.subr.bf16.mxu0 0
    %1346 = vmatpush1.bf16.msra.mxu0 0
    %1347 = vmatprep.subr.bf16.mxu0 0
    %1348 = vmatpush1.bf16.msra.mxu0 0
    %1349 = vmatprep.subr.bf16.mxu0 0
    %1350 = vmatpush1.bf16.msra.mxu0 0
    %1351 = vmatprep.subr.bf16.mxu0 0
    %1352 = vmatpush1.bf16.msra.mxu0 0
    %1353 = vmatprep.subr.bf16.mxu0 0
    %1354 = vmatpush1.bf16.msra.mxu0 0
    %1355 = vmatprep.subr.bf16.mxu0 0
    %1356 = vmatpush1.bf16.msra.mxu0 0
    %1357 = vmatprep.mubr.bf16.mxu0 0
    %1358 = vmatmul.mubr.bf16.gmra.mrb[0].mxu0 %v1323
    %v1359 = vpop.f32.mrb[0].mxu0
    %v1360 = vadd.f32 0.0, %v1359
    %v1361 = vpop.f32.mrb[0].mxu0
    %v1362 = vpop.f32.mrb[0].mxu0
    %v1363 = vadd.f32 0.0, %v1362
    %v1364 = vpop.f32.mrb[0].mxu0
    %1365 = vdwg.mxu0
    %v1368 = vunpack.c.l.b16 %v1110
    %v1369 = vunpack.c.l.b16 %v1111
    %v1370 = vpack.c.b16 %v1369, %v1368
    %v1373 = vsel %vm626, %v1097, 0
    %1375 = vmatprep.subr.bf16.mxu0 0
    %1376 = vmatpush1.bf16.msra.mxu0 %v1370
    %1377 = vmatprep.subr.bf16.mxu0 0
    %1378 = vmatpush1.bf16.msra.mxu0 0
    %1379 = vmatprep.subr.bf16.mxu0 0
    %1380 = vmatpush1.bf16.msra.mxu0 0
    %1381 = vmatprep.subr.bf16.mxu0 0
    %1382 = vmatpush1.bf16.msra.mxu0 0
    %1383 = vmatprep.subr.bf16.mxu0 0
    %1384 = vmatpush1.bf16.msra.mxu0 0
    %1385 = vmatprep.subr.bf16.mxu0 0
    %1386 = vmatpush1.bf16.msra.mxu0 0
    %1387 = vmatprep.subr.bf16.mxu0 0
    %1388 = vmatpush1.bf16.msra.mxu0 0
    %1389 = vmatprep.subr.bf16.mxu0 0
    %1390 = vmatpush1.bf16.msra.mxu0 0
    %1391 = vmatprep.subr.bf16.mxu0 0
    %1392 = vmatpush1.bf16.msra.mxu0 0
    %1393 = vmatprep.subr.bf16.mxu0 0
    %1394 = vmatpush1.bf16.msra.mxu0 0
    %1395 = vmatprep.subr.bf16.mxu0 0
    %1396 = vmatpush1.bf16.msra.mxu0 0
    %1397 = vmatprep.subr.bf16.mxu0 0
    %1398 = vmatpush1.bf16.msra.mxu0 0
    %1399 = vmatprep.subr.bf16.mxu0 0
    %1400 = vmatpush1.bf16.msra.mxu0 0
    %1401 = vmatprep.subr.bf16.mxu0 0
    %1402 = vmatpush1.bf16.msra.mxu0 0
    %1403 = vmatprep.subr.bf16.mxu0 0
    %1404 = vmatpush1.bf16.msra.mxu0 0
    %1405 = vmatprep.subr.bf16.mxu0 0
    %1406 = vmatpush1.bf16.msra.mxu0 0
    %1407 = vmatprep.mubr.bf16.mxu0 0
    %1408 = vmatmul.mubr.bf16.gmra.mrb[0].mxu0 %v1373
    %v1409 = vpop.f32.mrb[0].mxu0
    %v1410 = vadd.f32 0.0, %v1409
    %v1411 = vpop.f32.mrb[0].mxu0
    %v1412 = vpop.f32.mrb[0].mxu0
    %v1413 = vadd.f32 0.0, %v1412
    %v1414 = vpop.f32.mrb[0].mxu0
    %1415 = vdwg.mxu0
    %v1418 = vunpack.c.l.b16 %v1112
    %v1419 = vunpack.c.l.b16 %v1113
    %v1420 = vpack.c.b16 %v1419, %v1418
    %v1423 = vsel %vm626, %v1098, 0
    %1425 = vmatprep.subr.bf16.mxu0 0
    %1426 = vmatpush1.bf16.msra.mxu0 %v1420
    %1427 = vmatprep.subr.bf16.mxu0 0
    %1428 = vmatpush1.bf16.msra.mxu0 0
    %1429 = vmatprep.subr.bf16.mxu0 0
    %1430 = vmatpush1.bf16.msra.mxu0 0
    %1431 = vmatprep.subr.bf16.mxu0 0
    %1432 = vmatpush1.bf16.msra.mxu0 0
    %1433 = vmatprep.subr.bf16.mxu0 0
    %1434 = vmatpush1.bf16.msra.mxu0 0
    %1435 = vmatprep.subr.bf16.mxu0 0
    %1436 = vmatpush1.bf16.msra.mxu0 0
    %1437 = vmatprep.subr.bf16.mxu0 0
    %1438 = vmatpush1.bf16.msra.mxu0 0
    %1439 = vmatprep.subr.bf16.mxu0 0
    %1440 = vmatpush1.bf16.msra.mxu0 0
    %1441 = vmatprep.subr.bf16.mxu0 0
    %1442 = vmatpush1.bf16.msra.mxu0 0
    %1443 = vmatprep.subr.bf16.mxu0 0
    %1444 = vmatpush1.bf16.msra.mxu0 0
    %1445 = vmatprep.subr.bf16.mxu0 0
    %1446 = vmatpush1.bf16.msra.mxu0 0
    %1447 = vmatprep.subr.bf16.mxu0 0
    %1448 = vmatpush1.bf16.msra.mxu0 0
    %1449 = vmatprep.subr.bf16.mxu0 0
    %1450 = vmatpush1.bf16.msra.mxu0 0
    %1451 = vmatprep.subr.bf16.mxu0 0
    %1452 = vmatpush1.bf16.msra.mxu0 0
    %1453 = vmatprep.subr.bf16.mxu0 0
    %1454 = vmatpush1.bf16.msra.mxu0 0
    %1455 = vmatprep.subr.bf16.mxu0 0
    %1456 = vmatpush1.bf16.msra.mxu0 0
    %1457 = vmatprep.mubr.bf16.mxu0 0
    %1458 = vmatmul.mubr.bf16.gmra.mrb[0].mxu0 %v1423
    %v1459 = vpop.f32.mrb[0].mxu0
    %v1460 = vadd.f32 0.0, %v1459
    %v1461 = vpop.f32.mrb[0].mxu0
    %v1462 = vpop.f32.mrb[0].mxu0
    %v1463 = vadd.f32 0.0, %v1462
    %v1464 = vpop.f32.mrb[0].mxu0
    %1465 = vdwg.mxu0
    %v1468 = vunpack.c.l.b16 %v1114
    %v1469 = vunpack.c.l.b16 %v1115
    %v1470 = vpack.c.b16 %v1469, %v1468
    %v1473 = vsel %vm626, %v1099, 0
    %1475 = vmatprep.subr.bf16.mxu0 0
    %1476 = vmatpush1.bf16.msra.mxu0 %v1470
    %1477 = vmatprep.subr.bf16.mxu0 0
    %1478 = vmatpush1.bf16.msra.mxu0 0
    %1479 = vmatprep.subr.bf16.mxu0 0
    %1480 = vmatpush1.bf16.msra.mxu0 0
    %1481 = vmatprep.subr.bf16.mxu0 0
    %1482 = vmatpush1.bf16.msra.mxu0 0
    %1483 = vmatprep.subr.bf16.mxu0 0
    %1484 = vmatpush1.bf16.msra.mxu0 0
    %1485 = vmatprep.subr.bf16.mxu0 0
    %1486 = vmatpush1.bf16.msra.mxu0 0
    %1487 = vmatprep.subr.bf16.mxu0 0
    %1488 = vmatpush1.bf16.msra.mxu0 0
    %1489 = vmatprep.subr.bf16.mxu0 0
    %1490 = vmatpush1.bf16.msra.mxu0 0
    %1491 = vmatprep.subr.bf16.mxu0 0
    %1492 = vmatpush1.bf16.msra.mxu0 0
    %1493 = vmatprep.subr.bf16.mxu0 0
    %1494 = vmatpush1.bf16.msra.mxu0 0
    %1495 = vmatprep.subr.bf16.mxu0 0
    %1496 = vmatpush1.bf16.msra.mxu0 0
    %1497 = vmatprep.subr.bf16.mxu0 0
    %1498 = vmatpush1.bf16.msra.mxu0 0
    %1499 = vmatprep.subr.bf16.mxu0 0
    %1500 = vmatpush1.bf16.msra.mxu0 0
    %1501 = vmatprep.subr.bf16.mxu0 0
    %1502 = vmatpush1.bf16.msra.mxu0 0
    %1503 = vmatprep.subr.bf16.mxu0 0
    %1504 = vmatpush1.bf16.msra.mxu0 0
    %1505 = vmatprep.subr.bf16.mxu0 0
    %1506 = vmatpush1.bf16.msra.mxu0 0
    %1507 = vmatprep.mubr.bf16.mxu0 0
    %1508 = vmatmul.mubr.bf16.gmra.mrb[0].mxu0 %v1473
    %v1509 = vpop.f32.mrb[0].mxu0
    %v1510 = vadd.f32 0.0, %v1509
    %v1511 = vpop.f32.mrb[0].mxu0
    %v1512 = vpop.f32.mrb[0].mxu0
    %v1513 = vadd.f32 0.0, %v1512
    %v1514 = vpop.f32.mrb[0].mxu0
    %1515 = vdwg.mxu0
    %v1516 = vadd.f32 %v1076, %v1160
    %v1517 = vadd.f32 %v1077, %v1163
    %v1518 = vadd.f32 %v1078, %v1210
    %v1519 = vadd.f32 %v1079, %v1213
    %v1520 = vadd.f32 %v1080, %v1260
    %v1521 = vadd.f32 %v1081, %v1263
    %v1522 = vadd.f32 %v1082, %v1310
    %v1523 = vadd.f32 %v1083, %v1313
    %v1524 = vadd.f32 %v1084, %v1360
    %v1525 = vadd.f32 %v1085, %v1363
    %v1526 = vadd.f32 %v1086, %v1410
    %v1527 = vadd.f32 %v1087, %v1413
    %v1528 = vadd.f32 %v1088, %v1460
    %v1529 = vadd.f32 %v1089, %v1463
    %v1530 = vadd.f32 %v1090, %v1510
    %v1531 = vadd.f32 %v1091, %v1513
    %1532 = vst.msk [vmem:[#allocation4] sm:$0xff] %vm198, %v1516
    %1533 = vst.msk [vmem:[#allocation4 + $0x8] sm:$0xff] %vm198, %v1517
    %1534 = vst.msk [vmem:[#allocation4 + $0x10] sm:$0xff] %vm198, %v1518
    %1535 = vst.msk [vmem:[#allocation4 + $0x18] sm:$0xff] %vm198, %v1519
    %1536 = vst.msk [vmem:[#allocation4 + $0x20] sm:$0xff] %vm198, %v1520
    %1537 = vst.msk [vmem:[#allocation4 + $0x28] sm:$0xff] %vm198, %v1521
    %1538 = vst.msk [vmem:[#allocation4 + $0x30] sm:$0xff] %vm198, %v1522
    %1539 = vst.msk [vmem:[#allocation4 + $0x38] sm:$0xff] %vm198, %v1523
    %1540 = vst.msk [vmem:[#allocation4 + $0x40] sm:$0xff] %vm198, %v1524
    %1541 = vst.msk [vmem:[#allocation4 + $0x48] sm:$0xff] %vm198, %v1525
    %1542 = vst.msk [vmem:[#allocation4 + $0x50] sm:$0xff] %vm198, %v1526
    %1543 = vst.msk [vmem:[#allocation4 + $0x58] sm:$0xff] %vm198, %v1527
    %1544 = vst.msk [vmem:[#allocation4 + $0x60] sm:$0xff] %vm198, %v1528
    %1545 = vst.msk [vmem:[#allocation4 + $0x68] sm:$0xff] %vm198, %v1529
    %1546 = vst.msk [vmem:[#allocation4 + $0x70] sm:$0xff] %vm198, %v1530
    %1547 = vst.msk [vmem:[#allocation4 + $0x78] sm:$0xff] %vm198, %v1531
    %1548 = vst.msk [vmem:[#allocation2] sm:$0xff] %vm963, %v675
    %1549 = vst.msk [vmem:[#allocation2 + $0x8] sm:$0xff] %vm963, %v676
    %1550 = vst.msk [vmem:[#allocation2 + $0x10] sm:$0xff] %vm963, %v677
    %1551 = vst.msk [vmem:[#allocation2 + $0x18] sm:$0xff] %vm963, %v678
    %1552 = vst.msk [vmem:[#allocation2 + $0x20] sm:$0xff] %vm963, %v679
    %1553 = vst.msk [vmem:[#allocation2 + $0x28] sm:$0xff] %vm963, %v680
    %1554 = vst.msk [vmem:[#allocation2 + $0x30] sm:$0xff] %vm963, %v681
    %1555 = vst.msk [vmem:[#allocation2 + $0x38] sm:$0xff] %vm963, %v682
    %1556 = vst.msk [vmem:[#allocation2 + $0x40] sm:$0xff] %vm963, %v683
    %1557 = vst.msk [vmem:[#allocation2 + $0x48] sm:$0xff] %vm963, %v684
    %1558 = vst.msk [vmem:[#allocation2 + $0x50] sm:$0xff] %vm963, %v685
    %1559 = vst.msk [vmem:[#allocation2 + $0x58] sm:$0xff] %vm963, %v686
    %1560 = vst.msk [vmem:[#allocation2 + $0x60] sm:$0xff] %vm963, %v687
    %1561 = vst.msk [vmem:[#allocation2 + $0x68] sm:$0xff] %vm963, %v688
    %1562 = vst.msk [vmem:[#allocation2 + $0x70] sm:$0xff] %vm963, %v689
    %1563 = vst.msk [vmem:[#allocation2 + $0x78] sm:$0xff] %vm963, %v690
    // Predicated region
    $region34: #{whisper_temperature_forward.47} parent=1 // pred_check
      %p1564 = pneg %p61
    $region35: #{whisper_temperature_forward.47} parent=1 // pred_check_branch
      %1566 = sbr.rel (%p1564) target = $region37
    $region36: #{whisper_temperature_forward.47} parent=1 // pred_region
      %v1567 = vld [vmem:[#allocation4] sm:$0xff]
      %v1568 = vld [vmem:[#allocation4 + $0x8] sm:$0xff]
      %v1569 = vld [vmem:[#allocation4 + $0x10] sm:$0xff]
      %v1570 = vld [vmem:[#allocation4 + $0x18] sm:$0xff]
      %v1571 = vld [vmem:[#allocation4 + $0x20] sm:$0xff]
      %v1572 = vld [vmem:[#allocation4 + $0x28] sm:$0xff]
      %v1573 = vld [vmem:[#allocation4 + $0x30] sm:$0xff]
      %v1574 = vld [vmem:[#allocation4 + $0x38] sm:$0xff]
      %v1575 = vld [vmem:[#allocation4 + $0x40] sm:$0xff]
      %v1576 = vld [vmem:[#allocation4 + $0x48] sm:$0xff]
      %v1577 = vld [vmem:[#allocation4 + $0x50] sm:$0xff]
      %v1578 = vld [vmem:[#allocation4 + $0x58] sm:$0xff]
      %v1579 = vld [vmem:[#allocation4 + $0x60] sm:$0xff]
      %v1580 = vld [vmem:[#allocation4 + $0x68] sm:$0xff]
      %v1581 = vld [vmem:[#allocation4 + $0x70] sm:$0xff]
      %v1582 = vld [vmem:[#allocation4 + $0x78] sm:$0xff]
      %v1583 = vld [vmem:[#allocation3] sm:$0xff]
      %v1584 = vld [vmem:[#allocation3 + $0x8] sm:$0xff]
      %v1585 = vld [vmem:[#allocation3 + $0x10] sm:$0xff]
      %v1586 = vld [vmem:[#allocation3 + $0x18] sm:$0xff]
      %v1587 = vld [vmem:[#allocation3 + $0x20] sm:$0xff]
      %v1588 = vld [vmem:[#allocation3 + $0x28] sm:$0xff]
      %v1589 = vld [vmem:[#allocation3 + $0x30] sm:$0xff]
      %v1590 = vld [vmem:[#allocation3 + $0x38] sm:$0xff]
      %v1591 = vld [vmem:[#allocation3 + $0x40] sm:$0xff]
      %v1592 = vld [vmem:[#allocation3 + $0x48] sm:$0xff]
      %v1593 = vld [vmem:[#allocation3 + $0x50] sm:$0xff]
      %v1594 = vld [vmem:[#allocation3 + $0x58] sm:$0xff]
      %v1595 = vld [vmem:[#allocation3 + $0x60] sm:$0xff]
      %v1596 = vld [vmem:[#allocation3 + $0x68] sm:$0xff]
      %v1597 = vld [vmem:[#allocation3 + $0x70] sm:$0xff]
      %v1598 = vld [vmem:[#allocation3 + $0x78] sm:$0xff]
      %v1599 = vrcp.pop %v1583
      %v1600 = vrcp.pop %v1584
      %v1601 = vrcp.pop %v1585
      %v1602 = vrcp.pop %v1586
      %v1603 = vrcp.pop %v1587
      %v1604 = vrcp.pop %v1588
      %v1605 = vrcp.pop %v1589
      %v1606 = vrcp.pop %v1590
      %v1607 = vrcp.pop %v1591
      %v1608 = vrcp.pop %v1592
      %v1609 = vrcp.pop %v1593
      %v1610 = vrcp.pop %v1594
      %v1611 = vrcp.pop %v1595
      %v1612 = vrcp.pop %v1596
      %v1613 = vrcp.pop %v1597
      %v1614 = vrcp.pop %v1598
      %1616 = vset.pattern.permute.xlu0 0
      %1617 = vperm.xlu0 %1616, %v1599
      %v1618 = vpop.permute.xlu0 %1617
      %1621 = vset.pattern.permute.xlu0 0
      %1622 = vperm.xlu0 %1621, %v1600
      %v1623 = vpop.permute.xlu0 %1622
      %1626 = vset.pattern.permute.xlu0 0
      %1627 = vperm.xlu0 %1626, %v1601
      %v1628 = vpop.permute.xlu0 %1627
      %1631 = vset.pattern.permute.xlu0 0
      %1632 = vperm.xlu0 %1631, %v1602
      %v1633 = vpop.permute.xlu0 %1632
      %1636 = vset.pattern.permute.xlu0 0
      %1637 = vperm.xlu0 %1636, %v1603
      %v1638 = vpop.permute.xlu0 %1637
      %1641 = vset.pattern.permute.xlu0 0
      %1642 = vperm.xlu0 %1641, %v1604
      %v1643 = vpop.permute.xlu0 %1642
      %1646 = vset.pattern.permute.xlu0 0
      %1647 = vperm.xlu0 %1646, %v1605
      %v1648 = vpop.permute.xlu0 %1647
      %1651 = vset.pattern.permute.xlu0 0
      %1652 = vperm.xlu0 %1651, %v1606
      %v1653 = vpop.permute.xlu0 %1652
      %1656 = vset.pattern.permute.xlu0 0
      %1657 = vperm.xlu0 %1656, %v1607
      %v1658 = vpop.permute.xlu0 %1657
      %1661 = vset.pattern.permute.xlu0 0
      %1662 = vperm.xlu0 %1661, %v1608
      %v1663 = vpop.permute.xlu0 %1662
      %1666 = vset.pattern.permute.xlu0 0
      %1667 = vperm.xlu0 %1666, %v1609
      %v1668 = vpop.permute.xlu0 %1667
      %1671 = vset.pattern.permute.xlu0 0
      %1672 = vperm.xlu0 %1671, %v1610
      %v1673 = vpop.permute.xlu0 %1672
      %1676 = vset.pattern.permute.xlu0 0
      %1677 = vperm.xlu0 %1676, %v1611
      %v1678 = vpop.permute.xlu0 %1677
      %1681 = vset.pattern.permute.xlu0 0
      %1682 = vperm.xlu0 %1681, %v1612
      %v1683 = vpop.permute.xlu0 %1682
      %1686 = vset.pattern.permute.xlu0 0
      %1687 = vperm.xlu0 %1686, %v1613
      %v1688 = vpop.permute.xlu0 %1687
      %1691 = vset.pattern.permute.xlu0 0
      %1692 = vperm.xlu0 %1691, %v1614
      %v1693 = vpop.permute.xlu0 %1692
      %v1695 = vmul.f32 %v1567, %v1618
      %v1696 = vmul.f32 %v1568, %v1623
      %v1697 = vmul.f32 %v1569, %v1628
      %v1698 = vmul.f32 %v1570, %v1633
      %v1699 = vmul.f32 %v1571, %v1638
      %v1700 = vmul.f32 %v1572, %v1643
      %v1701 = vmul.f32 %v1573, %v1648
      %v1702 = vmul.f32 %v1574, %v1653
      %v1703 = vmul.f32 %v1575, %v1658
      %v1704 = vmul.f32 %v1576, %v1663
      %v1705 = vmul.f32 %v1577, %v1668
      %v1706 = vmul.f32 %v1578, %v1673
      %v1707 = vmul.f32 %v1579, %v1678
      %v1708 = vmul.f32 %v1580, %v1683
      %v1709 = vmul.f32 %v1581, %v1688
      %v1710 = vmul.f32 %v1582, %v1693
      %v1711 = vpack.c.bf16 %v1696, %v1695
      %v1712 = vpack.c.bf16 %v1698, %v1697
      %v1713 = vpack.c.bf16 %v1700, %v1699
      %v1714 = vpack.c.bf16 %v1702, %v1701
      %v1715 = vpack.c.bf16 %v1704, %v1703
      %v1716 = vpack.c.bf16 %v1706, %v1705
      %v1717 = vpack.c.bf16 %v1708, %v1707
      %v1718 = vpack.c.bf16 %v1710, %v1709
      %v1727 = vunpack.c.l.b16 %v1711
      %v1728 = vunpack.c.h.b16 %v1711
      %v1729 = vunpack.c.l.b16 %v1712
      %v1730 = vunpack.c.h.b16 %v1712
      %v1731 = vunpack.c.l.b16 %v1713
      %v1732 = vunpack.c.h.b16 %v1713
      %v1733 = vunpack.c.l.b16 %v1714
      %v1734 = vunpack.c.h.b16 %v1714
      %v1735 = vunpack.c.l.b16 %v1715
      %v1736 = vunpack.c.h.b16 %v1715
      %v1737 = vunpack.c.l.b16 %v1716
      %v1738 = vunpack.c.h.b16 %v1716
      %v1739 = vunpack.c.l.b16 %v1717
      %v1740 = vunpack.c.h.b16 %v1717
      %v1741 = vunpack.c.l.b16 %v1718
      %v1742 = vunpack.c.h.b16 %v1718
      %v1743 = vpack.c.b16 %v1727, %v1727
      %v1744 = vpack.c.b16 %v1728, %v1728
      %v1745 = vpack.c.b16 %v1729, %v1729
      %v1746 = vpack.c.b16 %v1730, %v1730
      %v1747 = vpack.c.b16 %v1731, %v1731
      %v1748 = vpack.c.b16 %v1732, %v1732
      %v1749 = vpack.c.b16 %v1733, %v1733
      %v1750 = vpack.c.b16 %v1734, %v1734
      %v1751 = vpack.c.b16 %v1735, %v1735
      %v1752 = vpack.c.b16 %v1736, %v1736
      %v1753 = vpack.c.b16 %v1737, %v1737
      %v1754 = vpack.c.b16 %v1738, %v1738
      %v1755 = vpack.c.b16 %v1739, %v1739
      %v1756 = vpack.c.b16 %v1740, %v1740
      %v1757 = vpack.c.b16 %v1741, %v1741
      %v1758 = vpack.c.b16 %v1742, %v1742
      %vm1775 = vcmask 60416
      %1776 = vst.msk [vmem:[#allocation12] sm:$0xf] %vm1775, %v1743
      %1777 = vst.msk [vmem:[#allocation12 + $0x4] sm:$0xf] %vm1775, %v1744
      %1778 = vst.msk [vmem:[#allocation12 + $0x8] sm:$0xf] %vm1775, %v1745
      %1779 = vst.msk [vmem:[#allocation12 + $0xc] sm:$0xf] %vm1775, %v1746
      %1780 = vst.msk [vmem:[#allocation12 + $0x10] sm:$0xf] %vm1775, %v1747
      %1781 = vst.msk [vmem:[#allocation12 + $0x14] sm:$0xf] %vm1775, %v1748
      %1782 = vst.msk [vmem:[#allocation12 + $0x18] sm:$0xf] %vm1775, %v1749
      %1783 = vst.msk [vmem:[#allocation12 + $0x1c] sm:$0xf] %vm1775, %v1750
      %1784 = vst.msk [vmem:[#allocation12 + $0x20] sm:$0xf] %vm1775, %v1751
      %1785 = vst.msk [vmem:[#allocation12 + $0x24] sm:$0xf] %vm1775, %v1752
      %1786 = vst.msk [vmem:[#allocation12 + $0x28] sm:$0xf] %vm1775, %v1753
      %1787 = vst.msk [vmem:[#allocation12 + $0x2c] sm:$0xf] %vm1775, %v1754
      %1788 = vst.msk [vmem:[#allocation12 + $0x30] sm:$0xf] %vm1775, %v1755
      %1789 = vst.msk [vmem:[#allocation12 + $0x34] sm:$0xf] %vm1775, %v1756
      %1790 = vst.msk [vmem:[#allocation12 + $0x38] sm:$0xf] %vm1775, %v1757
      %1791 = vst.msk [vmem:[#allocation12 + $0x3c] sm:$0xf] %vm1775, %v1758
    $region37: #{whisper_temperature_forward.47} parent=1 // pred_fallthru
      _
    // Predicated region
    $region38: #{whisper_temperature_forward.47} parent=1 // pred_check
      _
    $region39: #{whisper_temperature_forward.47} parent=1 // pred_check_branch
      %1793 = sbr.rel (0) target = $region41
    $region40: #{whisper_temperature_forward.47} parent=1 // pred_region
      %s1795 = ssub.s32 1024, 1024
      %1796 = vsyncadd [#allocation8], %s1795
      %s1797 = sshll.u32 [#allocation12], 4
      %s1798 = int_to_ptr.vmem [resolvable:$true] %s1797
      %1803 = dma.vmem_to_hbm [thread:$0]  %s1798, 1024, %s4, [#allocation8], 64, 64, 4
    $region41: #{whisper_temperature_forward.47} parent=1 // pred_fallthru
      _
    // Predicated region
    $region42: #{whisper_temperature_forward.47} parent=1 // pred_check
      _
    $region43: #{whisper_temperature_forward.47} parent=1 // pred_check_branch
      %1805 = sbr.rel (0) target = $region45
    $region44: #{whisper_temperature_forward.47} parent=1 // pred_region
      %1806 = dma.done [#allocation8], 1024
    $region45: #{whisper_temperature_forward.47} parent=1 // pred_fallthru
      _
    %1807 = vsyncpa [#allocation7], 1
    %1808 = vsyncpa [#allocation10], 1
    %1809 = vsyncpa [#allocation8], 1

// kernel: whisper_temperature_forward.61
$region0: #{whisper_temperature_forward.61}
  #allocation0 [shape = 'u32[]', space=smem, size = 0x4, offset = 0x4, fixed_abs, tag = 'smem constant byte address 0x4 - core index']
  #allocation1 [shape = 'u32[144,128]{1,0:T(1,128)}', space=vmem, size = 0x12000, scoped, tag = 'internal scratch']
  %s0 = inlined_call_operand.hbm [shape: bf16[16,32], index: 0, kind: input, shape index: {}]
  %s1 = inlined_call_operand.hbm [shape: bf16[32,96], index: 1, kind: input, shape index: {}]
  %s2 = inlined_call_operand.hbm [shape: f32[1,96], index: 2, kind: input, shape index: {}]
  %s3 = inlined_call_operand.hbm [shape: bf16[16,96], index: 3, kind: output, shape index: {}]
  %s4 = sld [smem:[#allocation0]]
  $region34: #{whisper_temperature_forward.61} parent=0
    _
  %s6 = ssub.s32 1, %s4
  %s7 = scalar_select 0, %s6, %s4
  $region1: #{whisper_temperature_forward.61} parent=0
    #allocation2 [shape = 'u8[4096]{0}', space=vmem, size = 0x1000, scoped, tag = 'input window, operand 0, single buffered']
    #allocation3 [shape = 's32[1]{0}', space=sflag, size = 0x4, scoped, tag = 'scoped memory for whisper_temperature_forward.61']
    #allocation4 [shape = 's32[1]{0}', space=sflag, size = 0x4, scoped, tag = 'scoped memory for whisper_temperature_forward.61']
    #allocation5 [shape = 'u8[8192]{0}', space=vmem, size = 0x2000, scoped, tag = 'input window, operand 1, single buffered']
    #allocation6 [shape = 's32[1]{0}', space=sflag, size = 0x4, scoped, tag = 'scoped memory for whisper_temperature_forward.61']
    #allocation7 [shape = 'u8[512]{0}', space=vmem, size = 0x400, scoped, tag = 'input window, operand 2, single buffered']
    #allocation8 [shape = 'u8[4096]{0}', space=vmem, size = 0x1000, scoped, tag = 'output window, operand 0, single buffered']
    %8 = vsyncpa [#allocation3], 0
    %9 = vsyncpa [#allocation6], 0
    %10 = vsyncpa [#allocation4], 0
    // Predicated region
    $region2: #{whisper_temperature_forward.61} parent=1 // pred_check
      _
    $region3: #{whisper_temperature_forward.61} parent=1 // pred_check_branch
      %12 = sbr.rel (0) target = $region5
    $region4: #{whisper_temperature_forward.61} parent=1 // pred_region
      %s14 = ssub.s32 128, 128
      %15 = vsyncadd [#allocation3], %s14
      %s16 = sshll.u32 [#allocation2], 4
      %s17 = int_to_ptr.vmem [resolvable:$true] %s16
      %22 = dma.hbm_to_vmem [thread:$0]  %s0, 128, %s17, [#allocation3], 64, 64, 4
    $region5: #{whisper_temperature_forward.61} parent=1 // pred_fallthru
      _
    // Predicated region
    $region6: #{whisper_temperature_forward.61} parent=1 // pred_check
      _
    $region7: #{whisper_temperature_forward.61} parent=1 // pred_check_branch
      %24 = sbr.rel (0) target = $region9
    $region8: #{whisper_temperature_forward.61} parent=1 // pred_region
      %s26 = ssub.s32 256, 256
      %27 = vsyncadd [#allocation6], %s26
      %s28 = sshll.u32 [#allocation5], 4
      %s29 = int_to_ptr.vmem [resolvable:$true] %s28
      %34 = dma.hbm_to_vmem [thread:$0]  %s1, 256, %s29, [#allocation6], 64, 64, 4
    $region9: #{whisper_temperature_forward.61} parent=1 // pred_fallthru
      _
    // Predicated region
    $region10: #{whisper_temperature_forward.61} parent=1 // pred_check
      _
    $region11: #{whisper_temperature_forward.61} parent=1 // pred_check_branch
      %36 = sbr.rel (0) target = $region13
    $region12: #{whisper_temperature_forward.61} parent=1 // pred_region
      %s38 = ssub.s32 16, 16
      %39 = vsyncadd [#allocation6], %s38
      %s41 = sshll.u32 [#allocation7], 4
      %s42 = int_to_ptr.vmem [resolvable:$true] %s41
      %44 = dma.hbm_to_vmem [thread:$0]  %s2, 16, %s42, [#allocation6]
    $region13: #{whisper_temperature_forward.61} parent=1 // pred_fallthru
      _
    // Predicated region
    $region14: #{whisper_temperature_forward.61} parent=1 // pred_check
      _
    $region15: #{whisper_temperature_forward.61} parent=1 // pred_check_branch
      %46 = sbr.rel (0) target = $region17
    $region16: #{whisper_temperature_forward.61} parent=1 // pred_region
      %47 = dma.done [#allocation3], 128
    $region17: #{whisper_temperature_forward.61} parent=1 // pred_fallthru
      _
    // Predicated region
    $region18: #{whisper_temperature_forward.61} parent=1 // pred_check
      _
    $region19: #{whisper_temperature_forward.61} parent=1 // pred_check_branch
      %49 = sbr.rel (0) target = $region21
    $region20: #{whisper_temperature_forward.61} parent=1 // pred_region
      %50 = dma.done [#allocation6], 256
    $region21: #{whisper_temperature_forward.61} parent=1 // pred_fallthru
      _
    // Predicated region
    $region22: #{whisper_temperature_forward.61} parent=1 // pred_check
      _
    $region23: #{whisper_temperature_forward.61} parent=1 // pred_check_branch
      %52 = sbr.rel (0) target = $region25
    $region24: #{whisper_temperature_forward.61} parent=1 // pred_region
      %53 = dma.done [#allocation6], 16
    $region25: #{whisper_temperature_forward.61} parent=1 // pred_fallthru
      _
    %v55 = vld [vmem:[#allocation2] sm:$0xf]
    %v56 = vld [vmem:[#allocation2 + $0x4] sm:$0xf]
    %v57 = vld [vmem:[#allocation5] sm:$0xf]
    %v58 = vld [vmem:[#allocation5 + $0x4] sm:$0xf]
    %v59 = vld [vmem:[#allocation5 + $0x8] sm:$0xf]
    %v60 = vld [vmem:[#allocation5 + $0xc] sm:$0xf]
    %v61 = vld [vmem:[#allocation7] sm:$0x1]
    %v63 = vlaneseq
    %v64 = vshrl.u32 %v63, 7
    %v65 = vsub.s32 0, %v64
    %v66 = vrot.slane %v61, %v65
    %v70 = vunpack.c.l.b16 %v55
    %v71 = vunpack.c.l.b16 %v56
    %v72 = vpack.c.b16 %v71, %v70
    %v77 = vunpack.c.l.b16 %v57
    %v78 = vunpack.c.l.b16 %v58
    %v79 = vunpack.c.l.b16 %v59
    %v80 = vunpack.c.l.b16 %v60
    %v81 = vpack.c.b16 %v78, %v77
    %v82 = vpack.c.b16 %v80, %v79
    %vm85 = vcmask 261120
    %v87 = vsel %vm85, %v72, 0
    %89 = vmatprep.subr.bf16.mxu0 0
    %90 = vmatpush1.bf16.msra.mxu0 %v81
    %91 = vmatprep.subr.bf16.mxu0 0
    %92 = vmatpush1.bf16.msra.mxu0 %v82
    %93 = vmatprep.subr.bf16.mxu0 0
    %94 = vmatpush1.bf16.msra.mxu0 0
    %95 = vmatprep.subr.bf16.mxu0 0
    %96 = vmatpush1.bf16.msra.mxu0 0
    %97 = vmatprep.subr.bf16.mxu0 0
    %98 = vmatpush1.bf16.msra.mxu0 0
    %99 = vmatprep.subr.bf16.mxu0 0
    %100 = vmatpush1.bf16.msra.mxu0 0
    %101 = vmatprep.subr.bf16.mxu0 0
    %102 = vmatpush1.bf16.msra.mxu0 0
    %103 = vmatprep.subr.bf16.mxu0 0
    %104 = vmatpush1.bf16.msra.mxu0 0
    %105 = vmatprep.subr.bf16.mxu0 0
    %106 = vmatpush1.bf16.msra.mxu0 0
    %107 = vmatprep.subr.bf16.mxu0 0
    %108 = vmatpush1.bf16.msra.mxu0 0
    %109 = vmatprep.subr.bf16.mxu0 0
    %110 = vmatpush1.bf16.msra.mxu0 0
    %111 = vmatprep.subr.bf16.mxu0 0
    %112 = vmatpush1.bf16.msra.mxu0 0
    %113 = vmatprep.subr.bf16.mxu0 0
    %114 = vmatpush1.bf16.msra.mxu0 0
    %115 = vmatprep.subr.bf16.mxu0 0
    %116 = vmatpush1.bf16.msra.mxu0 0
    %117 = vmatprep.subr.bf16.mxu0 0
    %118 = vmatpush1.bf16.msra.mxu0 0
    %119 = vmatprep.subr.bf16.mxu0 0
    %120 = vmatpush1.bf16.msra.mxu0 0
    %121 = vmatprep.mubr.bf16.mxu0 0
    %122 = vmatmul.mubr.bf16.gmra.mrb[0].mxu0 %v87
    %v123 = vpop.f32.mrb[0].mxu0
    %v124 = vadd.f32 %v66, %v123
    %v125 = vpop.f32.mrb[0].mxu0
    %v126 = vpop.f32.mrb[0].mxu0
    %v127 = vadd.f32 %v66, %v126
    %v128 = vpop.f32.mrb[0].mxu0
    %129 = vdwg.mxu0
    %v130 = vpack.c.bf16 %v127, %v124
    %v132 = vunpack.c.l.b16 %v130
    %v133 = vunpack.c.h.b16 %v130
    %v134 = vpack.c.b16 %v132, %v132
    %v135 = vpack.c.b16 %v133, %v133
    %vm138 = vcmask 781312
    %139 = vst.msk [vmem:[#allocation8] sm:$0xf] %vm138, %v134
    %140 = vst.msk [vmem:[#allocation8 + $0x4] sm:$0xf] %vm138, %v135
    // Predicated region
    $region26: #{whisper_temperature_forward.61} parent=1 // pred_check
      _
    $region27: #{whisper_temperature_forward.61} parent=1 // pred_check_branch
      %142 = sbr.rel (0) target = $region29
    $region28: #{whisper_temperature_forward.61} parent=1 // pred_region
      %s144 = ssub.s32 128, 128
      %145 = vsyncadd [#allocation4], %s144
      %s146 = sshll.u32 [#allocation8], 4
      %s147 = int_to_ptr.vmem [resolvable:$true] %s146
      %152 = dma.vmem_to_hbm [thread:$0]  %s147, 128, %s3, [#allocation4], 64, 64, 4
    $region29: #{whisper_temperature_forward.61} parent=1 // pred_fallthru
      _
    // Predicated region
    $region30: #{whisper_temperature_forward.61} parent=1 // pred_check
      _
    $region31: #{whisper_temperature_forward.61} parent=1 // pred_check_branch
      %154 = sbr.rel (0) target = $region33
    $region32: #{whisper_temperature_forward.61} parent=1 // pred_region
      %155 = dma.done [#allocation4], 128
    $region33: #{whisper_temperature_forward.61} parent=1 // pred_fallthru
      _
    %156 = vsyncpa [#allocation3], 1
    %157 = vsyncpa [#allocation6], 1
    %158 = vsyncpa [#allocation4], 1

// kernel: whisper_temperature_forward.60
$region0: #{whisper_temperature_forward.60}
  #allocation0 [shape = 'u32[]', space=smem, size = 0x4, offset = 0x4, fixed_abs, tag = 'smem constant byte address 0x4 - core index']
  #allocation1 [shape = 'u32[144,128]{1,0:T(1,128)}', space=vmem, size = 0x12000, scoped, tag = 'internal scratch']
  %s0 = inlined_call_operand.hbm [shape: f32[16,32], index: 0, kind: input, shape index: {}]
  %s1 = inlined_call_operand.hbm [shape: f32[1,32], index: 1, kind: input, shape index: {}]
  %s2 = inlined_call_operand.hbm [shape: f32[1,32], index: 2, kind: input, shape index: {}]
  %s3 = inlined_call_operand.hbm [shape: bf16[16,32], index: 3, kind: output, shape index: {}]
  %s4 = sld [smem:[#allocation0]]
  $region34: #{whisper_temperature_forward.60} parent=0
    _
  %s6 = ssub.s32 1, %s4
  %s7 = scalar_select 0, %s6, %s4
  $region1: #{whisper_temperature_forward.60} parent=0
    #allocation2 [shape = 'u8[8192]{0}', space=vmem, size = 0x2000, scoped, tag = 'input window, operand 0, single buffered']
    #allocation3 [shape = 's32[1]{0}', space=sflag, size = 0x4, scoped, tag = 'scoped memory for whisper_temperature_forward.60']
    #allocation4 [shape = 's32[1]{0}', space=sflag, size = 0x4, scoped, tag = 'scoped memory for whisper_temperature_forward.60']
    #allocation5 [shape = 'u8[512]{0}', space=vmem, size = 0x400, scoped, tag = 'input window, operand 1, single buffered']
    #allocation6 [shape = 's32[1]{0}', space=sflag, size = 0x4, scoped, tag = 'scoped memory for whisper_temperature_forward.60']
    #allocation7 [shape = 'u8[512]{0}', space=vmem, size = 0x400, scoped, tag = 'input window, operand 2, single buffered']
    #allocation8 [shape = 'u8[4096]{0}', space=vmem, size = 0x1000, scoped, tag = 'output window, operand 0, single buffered']
    %8 = vsyncpa [#allocation3], 0
    %9 = vsyncpa [#allocation6], 0
    %10 = vsyncpa [#allocation4], 0
    // Predicated region
    $region2: #{whisper_temperature_forward.60} parent=1 // pred_check
      _
    $region3: #{whisper_temperature_forward.60} parent=1 // pred_check_branch
      %12 = sbr.rel (0) target = $region5
    $region4: #{whisper_temperature_forward.60} parent=1 // pred_region
      %s14 = ssub.s32 256, 256
      %15 = vsyncadd [#allocation3], %s14
      %s16 = sshll.u32 [#allocation2], 4
      %s17 = int_to_ptr.vmem [resolvable:$true] %s16
      %22 = dma.hbm_to_vmem [thread:$0]  %s0, 256, %s17, [#allocation3], 128, 128, 8
    $region5: #{whisper_temperature_forward.60} parent=1 // pred_fallthru
      _
    // Predicated region
    $region6: #{whisper_temperature_forward.60} parent=1 // pred_check
      _
    $region7: #{whisper_temperature_forward.60} parent=1 // pred_check_branch
      %24 = sbr.rel (0) target = $region9
    $region8: #{whisper_temperature_forward.60} parent=1 // pred_region
      %s26 = ssub.s32 16, 16
      %27 = vsyncadd [#allocation6], %s26
      %s29 = sshll.u32 [#allocation5], 4
      %s30 = int_to_ptr.vmem [resolvable:$true] %s29
      %32 = dma.hbm_to_vmem [thread:$0]  %s1, 16, %s30, [#allocation6]
    $region9: #{whisper_temperature_forward.60} parent=1 // pred_fallthru
      _
    // Predicated region
    $region10: #{whisper_temperature_forward.60} parent=1 // pred_check
      _
    $region11: #{whisper_temperature_forward.60} parent=1 // pred_check_branch
      %34 = sbr.rel (0) target = $region13
    $region12: #{whisper_temperature_forward.60} parent=1 // pred_region
      %s36 = ssub.s32 16, 16
      %37 = vsyncadd [#allocation6], %s36
      %s39 = sshll.u32 [#allocation7], 4
      %s40 = int_to_ptr.vmem [resolvable:$true] %s39
      %42 = dma.hbm_to_vmem [thread:$0]  %s2, 16, %s40, [#allocation6]
    $region13: #{whisper_temperature_forward.60} parent=1 // pred_fallthru
      _
    // Predicated region
    $region14: #{whisper_temperature_forward.60} parent=1 // pred_check
      _
    $region15: #{whisper_temperature_forward.60} parent=1 // pred_check_branch
      %44 = sbr.rel (0) target = $region17
    $region16: #{whisper_temperature_forward.60} parent=1 // pred_region
      %45 = dma.done [#allocation3], 256
    $region17: #{whisper_temperature_forward.60} parent=1 // pred_fallthru
      _
    // Predicated region
    $region18: #{whisper_temperature_forward.60} parent=1 // pred_check
      _
    $region19: #{whisper_temperature_forward.60} parent=1 // pred_check_branch
      %47 = sbr.rel (0) target = $region21
    $region20: #{whisper_temperature_forward.60} parent=1 // pred_region
      %48 = dma.done [#allocation6], 16
    $region21: #{whisper_temperature_forward.60} parent=1 // pred_fallthru
      _
    // Predicated region
    $region22: #{whisper_temperature_forward.60} parent=1 // pred_check
      _
    $region23: #{whisper_temperature_forward.60} parent=1 // pred_check_branch
      %50 = sbr.rel (0) target = $region25
    $region24: #{whisper_temperature_forward.60} parent=1 // pred_region
      %51 = dma.done [#allocation6], 16
    $region25: #{whisper_temperature_forward.60} parent=1 // pred_fallthru
      _
    %v52 = vld [vmem:[#allocation2] sm:$0xff]
    %v53 = vld [vmem:[#allocation2 + $0x8] sm:$0xff]
    %vm54 = vcmask 261120
    %v55 = vsel %vm54, %v52, 0.0
    %56 = vadd.xlane.f32.xlu0 %v55
    %v57 = vpop.xlane.xlu0 %56
    %v58 = vsel %vm54, %v53, 0.0
    %59 = vadd.xlane.f32.xlu0 %v58
    %v60 = vpop.xlane.xlu0 %59
    %v61 = vrcp.pop 32.0
    %v62 = vmul.f32 %v57, %v61
    %v63 = vmul.f32 %v60, %v61
    %v64 = vsub.f32 %v52, %v62
    %v65 = vsub.f32 %v53, %v63
    %v66 = vmul.f32 %v64, %v64
    %v67 = vmul.f32 %v65, %v65
    %v68 = vsel %vm54, %v66, 0.0
    %69 = vadd.xlane.f32.xlu0 %v68
    %v70 = vpop.xlane.xlu0 %69
    %v71 = vsel %vm54, %v67, 0.0
    %72 = vadd.xlane.f32.xlu0 %v71
    %v73 = vpop.xlane.xlu0 %72
    %v74 = vmul.f32 %v70, %v61
    %v75 = vmul.f32 %v73, %v61
    %v76 = vadd.f32 %v74, 1e-05
    %v77 = vadd.f32 %v75, 1e-05
    %v78 = vrsqrt.pop %v76
    %v79 = vrsqrt.pop %v77
    %v80 = vmul.f32 %v64, %v78
    %v81 = vmul.f32 %v65, %v79
    %v82 = vld [vmem:[#allocation5] sm:$0x1]
    %v84 = vlaneseq
    %v85 = vshrl.u32 %v84, 7
    %v86 = vsub.s32 0, %v85
    %v87 = vrot.slane %v82, %v86
    %v89 = vmul.f32 %v80, %v87
    %v90 = vmul.f32 %v81, %v87
    %v91 = vld [vmem:[#allocation7] sm:$0x1]
    %v93 = vlaneseq
    %v94 = vshrl.u32 %v93, 7
    %v95 = vsub.s32 0, %v94
    %v96 = vrot.slane %v91, %v95
    %v98 = vadd.f32 %v89, %v96
    %v99 = vadd.f32 %v90, %v96
    %v100 = vpack.c.bf16 %v99, %v98
    %v102 = vunpack.c.l.b16 %v100
    %v103 = vunpack.c.h.b16 %v100
    %v104 = vpack.c.b16 %v102, %v102
    %v105 = vpack.c.b16 %v103, %v103
    %vm108 = vcmask 257024
    %109 = vst.msk [vmem:[#allocation8] sm:$0xf] %vm108, %v104
    %110 = vst.msk [vmem:[#allocation8 + $0x4] sm:$0xf] %vm108, %v105
    // Predicated region
    $region26: #{whisper_temperature_forward.60} parent=1 // pred_check
      _
    $region27: #{whisper_temperature_forward.60} parent=1 // pred_check_branch
      %112 = sbr.rel (0) target = $region29
    $region28: #{whisper_temperature_forward.60} parent=1 // pred_region
      %s114 = ssub.s32 128, 128
      %115 = vsyncadd [#allocation4], %s114
      %s116 = sshll.u32 [#allocation8], 4
      %s117 = int_to_ptr.vmem [resolvable:$true] %s116
      %122 = dma.vmem_to_hbm [thread:$0]  %s117, 128, %s3, [#allocation4], 64, 64, 4
    $region29: #{whisper_temperature_forward.60} parent=1 // pred_fallthru
      _
    // Predicated region
    $region30: #{whisper_temperature_forward.60} parent=1 // pred_check
      _
    $region31: #{whisper_temperature_forward.60} parent=1 // pred_check_branch
      %124 = sbr.rel (0) target = $region33
    $region32: #{whisper_temperature_forward.60} parent=1 // pred_region
      %125 = dma.done [#allocation4], 128
    $region33: #{whisper_temperature_forward.60} parent=1 // pred_fallthru
      _
    %126 = vsyncpa [#allocation3], 1
    %127 = vsyncpa [#allocation6], 1
    %128 = vsyncpa [#allocation4], 1

// kernel: whisper_temperature_forward.65
$region0: #{whisper_temperature_forward.65}
  #allocation0 [shape = 'u32[]', space=smem, size = 0x4, offset = 0x4, fixed_abs, tag = 'smem constant byte address 0x4 - core index']
  #allocation1 [shape = 'u32[144,128]{1,0:T(1,128)}', space=vmem, size = 0x12000, scoped, tag = 'internal scratch']
  %s0 = inlined_call_operand.hbm [shape: bf16[16,32], index: 0, kind: input, shape index: {}]
  %s1 = inlined_call_operand.hbm [shape: bf16[32,32], index: 1, kind: input, shape index: {}]
  %s2 = inlined_call_operand.hbm [shape: f32[1,32], index: 2, kind: input, shape index: {}]
  %s3 = inlined_call_operand.hbm [shape: bf16[16,32], index: 3, kind: output, shape index: {}]
  %s4 = sld [smem:[#allocation0]]
  $region34: #{whisper_temperature_forward.65} parent=0
    _
  %s6 = ssub.s32 1, %s4
  %s7 = scalar_select 0, %s6, %s4
  $region1: #{whisper_temperature_forward.65} parent=0
    #allocation2 [shape = 'u8[4096]{0}', space=vmem, size = 0x1000, scoped, tag = 'input window, operand 0, single buffered']
    #allocation3 [shape = 's32[1]{0}', space=sflag, size = 0x4, scoped, tag = 'scoped memory for whisper_temperature_forward.65']
    #allocation4 [shape = 's32[1]{0}', space=sflag, size = 0x4, scoped, tag = 'scoped memory for whisper_temperature_forward.65']
    #allocation5 [shape = 'u8[8192]{0}', space=vmem, size = 0x2000, scoped, tag = 'input window, operand 1, single buffered']
    #allocation6 [shape = 's32[1]{0}', space=sflag, size = 0x4, scoped, tag = 'scoped memory for whisper_temperature_forward.65']
    #allocation7 [shape = 'u8[512]{0}', space=vmem, size = 0x400, scoped, tag = 'input window, operand 2, single buffered']
    #allocation8 [shape = 'u8[4096]{0}', space=vmem, size = 0x1000, scoped, tag = 'output window, operand 0, single buffered']
    %8 = vsyncpa [#allocation3], 0
    %9 = vsyncpa [#allocation6], 0
    %10 = vsyncpa [#allocation4], 0
    // Predicated region
    $region2: #{whisper_temperature_forward.65} parent=1 // pred_check
      _
    $region3: #{whisper_temperature_forward.65} parent=1 // pred_check_branch
      %12 = sbr.rel (0) target = $region5
    $region4: #{whisper_temperature_forward.65} parent=1 // pred_region
      %s14 = ssub.s32 128, 128
      %15 = vsyncadd [#allocation3], %s14
      %s16 = sshll.u32 [#allocation2], 4
      %s17 = int_to_ptr.vmem [resolvable:$true] %s16
      %22 = dma.hbm_to_vmem [thread:$0]  %s0, 128, %s17, [#allocation3], 64, 64, 4
    $region5: #{whisper_temperature_forward.65} parent=1 // pred_fallthru
      _
    // Predicated region
    $region6: #{whisper_temperature_forward.65} parent=1 // pred_check
      _
    $region7: #{whisper_temperature_forward.65} parent=1 // pred_check_branch
      %24 = sbr.rel (0) target = $region9
    $region8: #{whisper_temperature_forward.65} parent=1 // pred_region
      %s26 = ssub.s32 256, 256
      %27 = vsyncadd [#allocation6], %s26
      %s28 = sshll.u32 [#allocation5], 4
      %s29 = int_to_ptr.vmem [resolvable:$true] %s28
      %34 = dma.hbm_to_vmem [thread:$0]  %s1, 256, %s29, [#allocation6], 64, 64, 4
    $region9: #{whisper_temperature_forward.65} parent=1 // pred_fallthru
      _
    // Predicated region
    $region10: #{whisper_temperature_forward.65} parent=1 // pred_check
      _
    $region11: #{whisper_temperature_forward.65} parent=1 // pred_check_branch
      %36 = sbr.rel (0) target = $region13
    $region12: #{whisper_temperature_forward.65} parent=1 // pred_region
      %s38 = ssub.s32 16, 16
      %39 = vsyncadd [#allocation6], %s38
      %s41 = sshll.u32 [#allocation7], 4
      %s42 = int_to_ptr.vmem [resolvable:$true] %s41
      %44 = dma.hbm_to_vmem [thread:$0]  %s2, 16, %s42, [#allocation6]
    $region13: #{whisper_temperature_forward.65} parent=1 // pred_fallthru
      _
    // Predicated region
    $region14: #{whisper_temperature_forward.65} parent=1 // pred_check
      _
    $region15: #{whisper_temperature_forward.65} parent=1 // pred_check_branch
      %46 = sbr.rel (0) target = $region17
    $region16: #{whisper_temperature_forward.65} parent=1 // pred_region
      %47 = dma.done [#allocation3], 128
    $region17: #{whisper_temperature_forward.65} parent=1 // pred_fallthru
      _
    // Predicated region
    $region18: #{whisper_temperature_forward.65} parent=1 // pred_check
      _
    $region19: #{whisper_temperature_forward.65} parent=1 // pred_check_branch
      %49 = sbr.rel (0) target = $region21
    $region20: #{whisper_temperature_forward.65} parent=1 // pred_region
      %50 = dma.done [#allocation6], 256
    $region21: #{whisper_temperature_forward.65} parent=1 // pred_fallthru
      _
    // Predicated region
    $region22: #{whisper_temperature_forward.65} parent=1 // pred_check
      _
    $region23: #{whisper_temperature_forward.65} parent=1 // pred_check_branch
      %52 = sbr.rel (0) target = $region25
    $region24: #{whisper_temperature_forward.65} parent=1 // pred_region
      %53 = dma.done [#allocation6], 16
    $region25: #{whisper_temperature_forward.65} parent=1 // pred_fallthru
      _
    %v55 = vld [vmem:[#allocation2] sm:$0xf]
    %v56 = vld [vmem:[#allocation2 + $0x4] sm:$0xf]
    %v57 = vld [vmem:[#allocation5] sm:$0xf]
    %v58 = vld [vmem:[#allocation5 + $0x4] sm:$0xf]
    %v59 = vld [vmem:[#allocation5 + $0x8] sm:$0xf]
    %v60 = vld [vmem:[#allocation5 + $0xc] sm:$0xf]
    %v61 = vld [vmem:[#allocation7] sm:$0x1]
    %v63 = vlaneseq
    %v64 = vshrl.u32 %v63, 7
    %v65 = vsub.s32 0, %v64
    %v66 = vrot.slane %v61, %v65
    %v70 = vunpack.c.l.b16 %v55
    %v71 = vunpack.c.l.b16 %v56
    %v72 = vpack.c.b16 %v71, %v70
    %v77 = vunpack.c.l.b16 %v57
    %v78 = vunpack.c.l.b16 %v58
    %v79 = vunpack.c.l.b16 %v59
    %v80 = vunpack.c.l.b16 %v60
    %v81 = vpack.c.b16 %v78, %v77
    %v82 = vpack.c.b16 %v80, %v79
    %vm85 = vcmask 261120
    %v87 = vsel %vm85, %v72, 0
    %89 = vmatprep.subr.bf16.mxu0 0
    %90 = vmatpush1.bf16.msra.mxu0 %v81
    %91 = vmatprep.subr.bf16.mxu0 0
    %92 = vmatpush1.bf16.msra.mxu0 %v82
    %93 = vmatprep.subr.bf16.mxu0 0
    %94 = vmatpush1.bf16.msra.mxu0 0
    %95 = vmatprep.subr.bf16.mxu0 0
    %96 = vmatpush1.bf16.msra.mxu0 0
    %97 = vmatprep.subr.bf16.mxu0 0
    %98 = vmatpush1.bf16.msra.mxu0 0
    %99 = vmatprep.subr.bf16.mxu0 0
    %100 = vmatpush1.bf16.msra.mxu0 0
    %101 = vmatprep.subr.bf16.mxu0 0
    %102 = vmatpush1.bf16.msra.mxu0 0
    %103 = vmatprep.subr.bf16.mxu0 0
    %104 = vmatpush1.bf16.msra.mxu0 0
    %105 = vmatprep.subr.bf16.mxu0 0
    %106 = vmatpush1.bf16.msra.mxu0 0
    %107 = vmatprep.subr.bf16.mxu0 0
    %108 = vmatpush1.bf16.msra.mxu0 0
    %109 = vmatprep.subr.bf16.mxu0 0
    %110 = vmatpush1.bf16.msra.mxu0 0
    %111 = vmatprep.subr.bf16.mxu0 0
    %112 = vmatpush1.bf16.msra.mxu0 0
    %113 = vmatprep.subr.bf16.mxu0 0
    %114 = vmatpush1.bf16.msra.mxu0 0
    %115 = vmatprep.subr.bf16.mxu0 0
    %116 = vmatpush1.bf16.msra.mxu0 0
    %117 = vmatprep.subr.bf16.mxu0 0
    %118 = vmatpush1.bf16.msra.mxu0 0
    %119 = vmatprep.subr.bf16.mxu0 0
    %120 = vmatpush1.bf16.msra.mxu0 0
    %121 = vmatprep.mubr.bf16.mxu0 0
    %122 = vmatmul.mubr.bf16.gmra.mrb[0].mxu0 %v87
    %v123 = vpop.f32.mrb[0].mxu0
    %v124 = vadd.f32 %v66, %v123
    %v125 = vpop.f32.mrb[0].mxu0
    %v126 = vpop.f32.mrb[0].mxu0
    %v127 = vadd.f32 %v66, %v126
    %v128 = vpop.f32.mrb[0].mxu0
    %129 = vdwg.mxu0
    %v130 = vpack.c.bf16 %v127, %v124
    %v132 = vunpack.c.l.b16 %v130
    %v133 = vunpack.c.h.b16 %v130
    %v134 = vpack.c.b16 %v132, %v132
    %v135 = vpack.c.b16 %v133, %v133
    %vm138 = vcmask 257024
    %139 = vst.msk [vmem:[#allocation8] sm:$0xf] %vm138, %v134
    %140 = vst.msk [vmem:[#allocation8 + $0x4] sm:$0xf] %vm138, %v135
    // Predicated region
    $region26: #{whisper_temperature_forward.65} parent=1 // pred_check
      _
    $region27: #{whisper_temperature_forward.65} parent=1 // pred_check_branch
      %142 = sbr.rel (0) target = $region29
    $region28: #{whisper_temperature_forward.65} parent=1 // pred_region
      %s144 = ssub.s32 128, 128
      %145 = vsyncadd [#allocation4], %s144
      %s146 = sshll.u32 [#allocation8], 4
      %s147 = int_to_ptr.vmem [resolvable:$true] %s146
      %152 = dma.vmem_to_hbm [thread:$0]  %s147, 128, %s3, [#allocation4], 64, 64, 4
    $region29: #{whisper_temperature_forward.65} parent=1 // pred_fallthru
      _
    // Predicated region
    $region30: #{whisper_temperature_forward.65} parent=1 // pred_check
      _
    $region31: #{whisper_temperature_forward.65} parent=1 // pred_check_branch
      %154 = sbr.rel (0) target = $region33
    $region32: #{whisper_temperature_forward.65} parent=1 // pred_region
      %155 = dma.done [#allocation4], 128
    $region33: #{whisper_temperature_forward.65} parent=1 // pred_fallthru
      _
    %156 = vsyncpa [#allocation3], 1
    %157 = vsyncpa [#allocation6], 1
    %158 = vsyncpa [#allocation4], 1

// kernel: whisper_temperature_forward.63
$region0: #{whisper_temperature_forward.63}
  #allocation0 [shape = 'u32[]', space=smem, size = 0x4, offset = 0x4, fixed_abs, tag = 'smem constant byte address 0x4 - core index']
  #allocation1 [shape = 'u32[144,128]{1,0:T(1,128)}', space=vmem, size = 0x12000, scoped, tag = 'internal scratch']
  %s0 = inlined_call_operand.hbm [shape: bf16[16,32], index: 0, kind: input, shape index: {}]
  %s1 = inlined_call_operand.hbm [shape: bf16[32,32], index: 1, kind: input, shape index: {}]
  %s2 = inlined_call_operand.hbm [shape: f32[1,32], index: 2, kind: input, shape index: {}]
  %s3 = inlined_call_operand.hbm [shape: f32[16,32], index: 3, kind: input, shape index: {}]
  %s4 = inlined_call_operand.hbm [shape: f32[16,32], index: 4, kind: output, shape index: {}]
  %s5 = sld [smem:[#allocation0]]
  $region42: #{whisper_temperature_forward.63} parent=0
    _
  %s7 = ssub.s32 1, %s5
  %s8 = scalar_select 0, %s7, %s5
  $region1: #{whisper_temperature_forward.63} parent=0
    #allocation2 [shape = 'u8[4096]{0}', space=vmem, size = 0x1000, scoped, tag = 'input window, operand 0, single buffered']
    #allocation3 [shape = 's32[1]{0}', space=sflag, size = 0x4, scoped, tag = 'scoped memory for whisper_temperature_forward.63']
    #allocation4 [shape = 's32[1]{0}', space=sflag, size = 0x4, scoped, tag = 'scoped memory for whisper_temperature_forward.63']
    #allocation5 [shape = 'u8[8192]{0}', space=vmem, size = 0x2000, scoped, tag = 'input window, operand 1, single buffered']
    #allocation6 [shape = 's32[1]{0}', space=sflag, size = 0x4, scoped, tag = 'scoped memory for whisper_temperature_forward.63']
    #allocation7 [shape = 'u8[512]{0}', space=vmem, size = 0x400, scoped, tag = 'input window, operand 2, single buffered']
    #allocation8 [shape = 'u8[8192]{0}', space=vmem, size = 0x2000, scoped, tag = 'input window, operand 3, single buffered']
    #allocation9 [shape = 's32[1]{0}', space=sflag, size = 0x4, scoped, tag = 'scoped memory for whisper_temperature_forward.63']
    #allocation10 [shape = 'u8[8192]{0}', space=vmem, size = 0x2000, scoped, tag = 'output window, operand 0, single buffered']
    %9 = vsyncpa [#allocation3], 0
    %10 = vsyncpa [#allocation6], 0
    %11 = vsyncpa [#allocation9], 0
    %12 = vsyncpa [#allocation4], 0
    // Predicated region
    $region2: #{whisper_temperature_forward.63} parent=1 // pred_check
      _
    $region3: #{whisper_temperature_forward.63} parent=1 // pred_check_branch
      %14 = sbr.rel (0) target = $region5
    $region4: #{whisper_temperature_forward.63} parent=1 // pred_region
      %s16 = ssub.s32 128, 128
      %17 = vsyncadd [#allocation3], %s16
      %s18 = sshll.u32 [#allocation2], 4
      %s19 = int_to_ptr.vmem [resolvable:$true] %s18
      %24 = dma.hbm_to_vmem [thread:$0]  %s0, 128, %s19, [#allocation3], 64, 64, 4
    $region5: #{whisper_temperature_forward.63} parent=1 // pred_fallthru
      _
    // Predicated region
    $region6: #{whisper_temperature_forward.63} parent=1 // pred_check
      _
    $region7: #{whisper_temperature_forward.63} parent=1 // pred_check_branch
      %26 = sbr.rel (0) target = $region9
    $region8: #{whisper_temperature_forward.63} parent=1 // pred_region
      %s28 = ssub.s32 256, 256
      %29 = vsyncadd [#allocation6], %s28
      %s30 = sshll.u32 [#allocation5], 4
      %s31 = int_to_ptr.vmem [resolvable:$true] %s30
      %36 = dma.hbm_to_vmem [thread:$0]  %s1, 256, %s31, [#allocation6], 64, 64, 4
    $region9: #{whisper_temperature_forward.63} parent=1 // pred_fallthru
      _
    // Predicated region
    $region10: #{whisper_temperature_forward.63} parent=1 // pred_check
      _
    $region11: #{whisper_temperature_forward.63} parent=1 // pred_check_branch
      %38 = sbr.rel (0) target = $region13
    $region12: #{whisper_temperature_forward.63} parent=1 // pred_region
      %s40 = ssub.s32 16, 16
      %41 = vsyncadd [#allocation6], %s40
      %s43 = sshll.u32 [#allocation7], 4
      %s44 = int_to_ptr.vmem [resolvable:$true] %s43
      %46 = dma.hbm_to_vmem [thread:$0]  %s2, 16, %s44, [#allocation6]
    $region13: #{whisper_temperature_forward.63} parent=1 // pred_fallthru
      _
    // Predicated region
    $region14: #{whisper_temperature_forward.63} parent=1 // pred_check
      _
    $region15: #{whisper_temperature_forward.63} parent=1 // pred_check_branch
      %48 = sbr.rel (0) target = $region17
    $region16: #{whisper_temperature_forward.63} parent=1 // pred_region
      %s50 = ssub.s32 256, 256
      %51 = vsyncadd [#allocation9], %s50
      %s52 = sshll.u32 [#allocation8], 4
      %s53 = int_to_ptr.vmem [resolvable:$true] %s52
      %58 = dma.hbm_to_vmem [thread:$0]  %s3, 256, %s53, [#allocation9], 128, 128, 8
    $region17: #{whisper_temperature_forward.63} parent=1 // pred_fallthru
      _
    // Predicated region
    $region18: #{whisper_temperature_forward.63} parent=1 // pred_check
      _
    $region19: #{whisper_temperature_forward.63} parent=1 // pred_check_branch
      %60 = sbr.rel (0) target = $region21
    $region20: #{whisper_temperature_forward.63} parent=1 // pred_region
      %61 = dma.done [#allocation3], 128
    $region21: #{whisper_temperature_forward.63} parent=1 // pred_fallthru
      _
    // Predicated region
    $region22: #{whisper_temperature_forward.63} parent=1 // pred_check
      _
    $region23: #{whisper_temperature_forward.63} parent=1 // pred_check_branch
      %63 = sbr.rel (0) target = $region25
    $region24: #{whisper_temperature_forward.63} parent=1 // pred_region
      %64 = dma.done [#allocation6], 256
    $region25: #{whisper_temperature_forward.63} parent=1 // pred_fallthru
      _
    // Predicated region
    $region26: #{whisper_temperature_forward.63} parent=1 // pred_check
      _
    $region27: #{whisper_temperature_forward.63} parent=1 // pred_check_branch
      %66 = sbr.rel (0) target = $region29
    $region28: #{whisper_temperature_forward.63} parent=1 // pred_region
      %67 = dma.done [#allocation6], 16
    $region29: #{whisper_temperature_forward.63} parent=1 // pred_fallthru
      _
    // Predicated region
    $region30: #{whisper_temperature_forward.63} parent=1 // pred_check
      _
    $region31: #{whisper_temperature_forward.63} parent=1 // pred_check_branch
      %69 = sbr.rel (0) target = $region33
    $region32: #{whisper_temperature_forward.63} parent=1 // pred_region
      %70 = dma.done [#allocation9], 256
    $region33: #{whisper_temperature_forward.63} parent=1 // pred_fallthru
      _
    %v72 = vld [vmem:[#allocation2] sm:$0xf]
    %v73 = vld [vmem:[#allocation2 + $0x4] sm:$0xf]
    %v74 = vld [vmem:[#allocation5] sm:$0xf]
    %v75 = vld [vmem:[#allocation5 + $0x4] sm:$0xf]
    %v76 = vld [vmem:[#allocation5 + $0x8] sm:$0xf]
    %v77 = vld [vmem:[#allocation5 + $0xc] sm:$0xf]
    %v78 = vld [vmem:[#allocation7] sm:$0x1]
    %v80 = vlaneseq
    %v81 = vshrl.u32 %v80, 7
    %v82 = vsub.s32 0, %v81
    %v83 = vrot.slane %v78, %v82
    %v87 = vunpack.c.l.b16 %v72
    %v88 = vunpack.c.l.b16 %v73
    %v89 = vpack.c.b16 %v88, %v87
    %v94 = vunpack.c.l.b16 %v74
    %v95 = vunpack.c.l.b16 %v75
    %v96 = vunpack.c.l.b16 %v76
    %v97 = vunpack.c.l.b16 %v77
    %v98 = vpack.c.b16 %v95, %v94
    %v99 = vpack.c.b16 %v97, %v96
    %vm102 = vcmask 261120
    %v104 = vsel %vm102, %v89, 0
    %106 = vmatprep.subr.bf16.mxu0 0
    %107 = vmatpush1.bf16.msra.mxu0 %v98
    %108 = vmatprep.subr.bf16.mxu0 0
    %109 = vmatpush1.bf16.msra.mxu0 %v99
    %110 = vmatprep.subr.bf16.mxu0 0
    %111 = vmatpush1.bf16.msra.mxu0 0
    %112 = vmatprep.subr.bf16.mxu0 0
    %113 = vmatpush1.bf16.msra.mxu0 0
    %114 = vmatprep.subr.bf16.mxu0 0
    %115 = vmatpush1.bf16.msra.mxu0 0
    %116 = vmatprep.subr.bf16.mxu0 0
    %117 = vmatpush1.bf16.msra.mxu0 0
    %118 = vmatprep.subr.bf16.mxu0 0
    %119 = vmatpush1.bf16.msra.mxu0 0
    %120 = vmatprep.subr.bf16.mxu0 0
    %121 = vmatpush1.bf16.msra.mxu0 0
    %122 = vmatprep.subr.bf16.mxu0 0
    %123 = vmatpush1.bf16.msra.mxu0 0
    %124 = vmatprep.subr.bf16.mxu0 0
    %125 = vmatpush1.bf16.msra.mxu0 0
    %126 = vmatprep.subr.bf16.mxu0 0
    %127 = vmatpush1.bf16.msra.mxu0 0
    %128 = vmatprep.subr.bf16.mxu0 0
    %129 = vmatpush1.bf16.msra.mxu0 0
    %130 = vmatprep.subr.bf16.mxu0 0
    %131 = vmatpush1.bf16.msra.mxu0 0
    %132 = vmatprep.subr.bf16.mxu0 0
    %133 = vmatpush1.bf16.msra.mxu0 0
    %134 = vmatprep.subr.bf16.mxu0 0
    %135 = vmatpush1.bf16.msra.mxu0 0
    %136 = vmatprep.subr.bf16.mxu0 0
    %137 = vmatpush1.bf16.msra.mxu0 0
    %138 = vmatprep.mubr.bf16.mxu0 0
    %139 = vmatmul.mubr.bf16.gmra.mrb[0].mxu0 %v104
    %v140 = vpop.f32.mrb[0].mxu0
    %v141 = vadd.f32 %v83, %v140
    %v142 = vpop.f32.mrb[0].mxu0
    %v143 = vpop.f32.mrb[0].mxu0
    %v144 = vadd.f32 %v83, %v143
    %v145 = vpop.f32.mrb[0].mxu0
    %146 = vdwg.mxu0
    %v147 = vld [vmem:[#allocation8] sm:$0xff]
    %v148 = vld [vmem:[#allocation8 + $0x8] sm:$0xff]
    %v149 = vadd.f32 %v141, %v147
    %v150 = vadd.f32 %v144, %v148
    %151 = vst.msk [vmem:[#allocation10] sm:$0xff] %vm102, %v149
    %152 = vst.msk [vmem:[#allocation10 + $0x8] sm:$0xff] %vm102, %v150
    // Predicated region
    $region34: #{whisper_temperature_forward.63} parent=1 // pred_check
      _
    $region35: #{whisper_temperature_forward.63} parent=1 // pred_check_branch
      %154 = sbr.rel (0) target = $region37
    $region36: #{whisper_temperature_forward.63} parent=1 // pred_region
      %s156 = ssub.s32 256, 256
      %157 = vsyncadd [#allocation4], %s156
      %s158 = sshll.u32 [#allocation10], 4
      %s159 = int_to_ptr.vmem [resolvable:$true] %s158
      %164 = dma.vmem_to_hbm [thread:$0]  %s159, 256, %s4, [#allocation4], 128, 128, 8
    $region37: #{whisper_temperature_forward.63} parent=1 // pred_fallthru
      _
    // Predicated region
    $region38: #{whisper_temperature_forward.63} parent=1 // pred_check
      _
    $region39: #{whisper_temperature_forward.63} parent=1 // pred_check_branch
      %166 = sbr.rel (0) target = $region41
    $region40: #{whisper_temperature_forward.63} parent=1 // pred_region
      %167 = dma.done [#allocation4], 256
    $region41: #{whisper_temperature_forward.63} parent=1 // pred_fallthru
      _
    %168 = vsyncpa [#allocation3], 1
    %169 = vsyncpa [#allocation6], 1
    %170 = vsyncpa [#allocation9], 1
    %171 = vsyncpa [#allocation4], 1

// kernel: whisper_temperature_forward.62
$region0: #{whisper_temperature_forward.62}
  #allocation0 [shape = 'u32[]', space=smem, size = 0x4, offset = 0x4, fixed_abs, tag = 'smem constant byte address 0x4 - core index']
  #allocation1 [shape = 'u32[144,128]{1,0:T(1,128)}', space=vmem, size = 0x12000, scoped, tag = 'internal scratch']
  #allocation2 [shape = 'f32[8,8,1]{2,1,0:T(8,128)}', space=vmem, size = 0x8000, scoped, tag = 'scratch operand']
  #allocation3 [shape = 'f32[8,8,1]{2,1,0:T(8,128)}', space=vmem, size = 0x8000, scoped, tag = 'scratch operand']
  #allocation4 [shape = 'f32[8,8,8]{2,1,0:T(8,128)}', space=vmem, size = 0x8000, scoped, tag = 'scratch operand']
  #allocation5 [shape = 'f32[1]{0:T(128)S(6)}', space=smem, size = 0x200, scoped, tag = 'scoped memory for whisper_temperature_forward.62']
  %s0 = inlined_call_operand.hbm [shape: bf16[8,8,8], index: 0, kind: input, shape index: {}]
  %s1 = inlined_call_operand.hbm [shape: bf16[8,8,8], index: 1, kind: input, shape index: {}]
  %s2 = inlined_call_operand.hbm [shape: bf16[8,8,8], index: 2, kind: input, shape index: {}]
  %s3 = inlined_call_operand.<no memory space> [shape: f32[1], index: 3, kind: input, shape index: {}]
  %s4 = inlined_call_operand.hbm [shape: bf16[8,8,8], index: 4, kind: output, shape index: {}]
  %s5 = sld [smem:[#allocation0]]
  $region46: #{whisper_temperature_forward.62} parent=0
    _
  %s7 = ssub.s32 1, %s5
  %s8 = scalar_select 0, %s7, %s5
  %9 = sst [smem:[#allocation5]] %s3
  $region1: #{whisper_temperature_forward.62} parent=0
    #allocation6 [shape = 'u8[16384]{0}', space=vmem, size = 0x4000, scoped, tag = 'input window, operand 0, single buffered']
    #allocation7 [shape = 's32[1]{0}', space=sflag, size = 0x4, scoped, tag = 'scoped memory for whisper_temperature_forward.62']
    #allocation8 [shape = 's32[1]{0}', space=sflag, size = 0x4, scoped, tag = 'scoped memory for whisper_temperature_forward.62']
    #allocation9 [shape = 'u8[16384]{0}', space=vmem, size = 0x4000, scoped, tag = 'input window, operand 1, single buffered']
    #allocation10 [shape = 's32[1]{0}', space=sflag, size = 0x4, scoped, tag = 'scoped memory for whisper_temperature_forward.62']
    #allocation11 [shape = 'u8[16384]{0}', space=vmem, size = 0x4000, scoped, tag = 'input window, operand 2, single buffered']
    #allocation12 [shape = 'u8[16384]{0}', space=vmem, size = 0x4000, scoped, tag = 'output window, operand 0, single buffered']
    %10 = vsyncpa [#allocation7], 0
    %11 = vsyncpa [#allocation10], 0
    %12 = vsyncpa [#allocation8], 0
    // Predicated region
    $region2: #{whisper_temperature_forward.62} parent=1 // pred_check
      _
    $region3: #{whisper_temperature_forward.62} parent=1 // pred_check_branch
      %14 = sbr.rel (0) target = $region5
    $region4: #{whisper_temperature_forward.62} parent=1 // pred_region
      %s16 = ssub.s32 512, 512
      %17 = vsyncadd [#allocation7], %s16
      %s18 = sshll.u32 [#allocation6], 4
      %s19 = int_to_ptr.vmem [resolvable:$true] %s18
      %24 = dma.hbm_to_vmem [thread:$0]  %s0, 512, %s19, [#allocation7], 64, 64, 4
    $region5: #{whisper_temperature_forward.62} parent=1 // pred_fallthru
      _
    // Predicated region
    $region6: #{whisper_temperature_forward.62} parent=1 // pred_check
      _
    $region7: #{whisper_temperature_forward.62} parent=1 // pred_check_branch
      %26 = sbr.rel (0) target = $region9
    $region8: #{whisper_temperature_forward.62} parent=1 // pred_region
      %s28 = ssub.s32 512, 512
      %29 = vsyncadd [#allocation10], %s28
      %s30 = sshll.u32 [#allocation9], 4
      %s31 = int_to_ptr.vmem [resolvable:$true] %s30
      %36 = dma.hbm_to_vmem [thread:$0]  %s1, 512, %s31, [#allocation10], 64, 64, 4
    $region9: #{whisper_temperature_forward.62} parent=1 // pred_fallthru
      _
    // Predicated region
    $region10: #{whisper_temperature_forward.62} parent=1 // pred_check
      _
    $region11: #{whisper_temperature_forward.62} parent=1 // pred_check_branch
      %38 = sbr.rel (0) target = $region13
    $region12: #{whisper_temperature_forward.62} parent=1 // pred_region
      %s40 = ssub.s32 512, 512
      %41 = vsyncadd [#allocation10], %s40
      %s42 = sshll.u32 [#allocation11], 4
      %s43 = int_to_ptr.vmem [resolvable:$true] %s42
      %48 = dma.hbm_to_vmem [thread:$0]  %s2, 512, %s43, [#allocation10], 64, 64, 4
    $region13: #{whisper_temperature_forward.62} parent=1 // pred_fallthru
      _
    // Predicated region
    $region14: #{whisper_temperature_forward.62} parent=1 // pred_check
      _
    $region15: #{whisper_temperature_forward.62} parent=1 // pred_check_branch
      %50 = sbr.rel (0) target = $region17
    $region16: #{whisper_temperature_forward.62} parent=1 // pred_region
      _
    $region17: #{whisper_temperature_forward.62} parent=1 // pred_fallthru
      _
    // Predicated region
    $region18: #{whisper_temperature_forward.62} parent=1 // pred_check
      _
    $region19: #{whisper_temperature_forward.62} parent=1 // pred_check_branch
      %52 = sbr.rel (0) target = $region21
    $region20: #{whisper_temperature_forward.62} parent=1 // pred_region
      %53 = dma.done [#allocation7], 512
    $region21: #{whisper_temperature_forward.62} parent=1 // pred_fallthru
      _
    // Predicated region
    $region22: #{whisper_temperature_forward.62} parent=1 // pred_check
      _
    $region23: #{whisper_temperature_forward.62} parent=1 // pred_check_branch
      %55 = sbr.rel (0) target = $region25
    $region24: #{whisper_temperature_forward.62} parent=1 // pred_region
      %56 = dma.done [#allocation10], 512
    $region25: #{whisper_temperature_forward.62} parent=1 // pred_fallthru
      _
    // Predicated region
    $region26: #{whisper_temperature_forward.62} parent=1 // pred_check
      _
    $region27: #{whisper_temperature_forward.62} parent=1 // pred_check_branch
      %58 = sbr.rel (0) target = $region29
    $region28: #{whisper_temperature_forward.62} parent=1 // pred_region
      %59 = dma.done [#allocation10], 512
    $region29: #{whisper_temperature_forward.62} parent=1 // pred_fallthru
      _
    %p61 = scmp.eq.s32.totalorder 0, 0
    // Predicated region
    $region30: #{whisper_temperature_forward.62} parent=1 // pred_check
      %p62 = pneg %p61
    $region31: #{whisper_temperature_forward.62} parent=1 // pred_check_branch
      %64 = sbr.rel (%p62) target = $region33
    $region32: #{whisper_temperature_forward.62} parent=1 // pred_region
      %vm65 = vcmask 7168
      %66 = vst.msk [vmem:[#allocation2] sm:$0xff] %vm65, -1e+30
      %67 = vst.msk [vmem:[#allocation2 + $0x8] sm:$0xff] %vm65, -1e+30
      %68 = vst.msk [vmem:[#allocation2 + $0x10] sm:$0xff] %vm65, -1e+30
      %69 = vst.msk [vmem:[#allocation2 + $0x18] sm:$0xff] %vm65, -1e+30
      %70 = vst.msk [vmem:[#allocation2 + $0x20] sm:$0xff] %vm65, -1e+30
      %71 = vst.msk [vmem:[#allocation2 + $0x28] sm:$0xff] %vm65, -1e+30
      %72 = vst.msk [vmem:[#allocation2 + $0x30] sm:$0xff] %vm65, -1e+30
      %73 = vst.msk [vmem:[#allocation2 + $0x38] sm:$0xff] %vm65, -1e+30
      %74 = vst.msk [vmem:[#allocation3] sm:$0xff] %vm65, 0.0
      %75 = vst.msk [vmem:[#allocation3 + $0x8] sm:$0xff] %vm65, 0.0
      %76 = vst.msk [vmem:[#allocation3 + $0x10] sm:$0xff] %vm65, 0.0
      %77 = vst.msk [vmem:[#allocation3 + $0x18] sm:$0xff] %vm65, 0.0
      %78 = vst.msk [vmem:[#allocation3 + $0x20] sm:$0xff] %vm65, 0.0
      %79 = vst.msk [vmem:[#allocation3 + $0x28] sm:$0xff] %vm65, 0.0
      %80 = vst.msk [vmem:[#allocation3 + $0x30] sm:$0xff] %vm65, 0.0
      %81 = vst.msk [vmem:[#allocation3 + $0x38] sm:$0xff] %vm65, 0.0
      %vm82 = vcmask 64512
      %83 = vst.msk [vmem:[#allocation4] sm:$0xff] %vm82, 0.0
      %84 = vst.msk [vmem:[#allocation4 + $0x8] sm:$0xff] %vm82, 0.0
      %85 = vst.msk [vmem:[#allocation4 + $0x10] sm:$0xff] %vm82, 0.0
      %86 = vst.msk [vmem:[#allocation4 + $0x18] sm:$0xff] %vm82, 0.0
      %87 = vst.msk [vmem:[#allocation4 + $0x20] sm:$0xff] %vm82, 0.0
      %88 = vst.msk [vmem:[#allocation4 + $0x28] sm:$0xff] %vm82, 0.0
      %89 = vst.msk [vmem:[#allocation4 + $0x30] sm:$0xff] %vm82, 0.0
      %90 = vst.msk [vmem:[#allocation4 + $0x38] sm:$0xff] %vm82, 0.0
    $region33: #{whisper_temperature_forward.62} parent=1 // pred_fallthru
      _
    %s91 = sld [smem:[#allocation5]]
    %v92 = vstv %s91
    %v93 = vrcp.pop %v92
    %s94 = vtos %v93
    %s95 = smul.f32 0.35355338, %s94
    %v96 = vld [vmem:[#allocation6] sm:$0xf]
    %v97 = vld [vmem:[#allocation6 + $0x4] sm:$0xf]
    %v98 = vld [vmem:[#allocation6 + $0x8] sm:$0xf]
    %v99 = vld [vmem:[#allocation6 + $0xc] sm:$0xf]
    %v100 = vld [vmem:[#allocation6 + $0x10] sm:$0xf]
    %v101 = vld [vmem:[#allocation6 + $0x14] sm:$0xf]
    %v102 = vld [vmem:[#allocation6 + $0x18] sm:$0xf]
    %v103 = vld [vmem:[#allocation6 + $0x1c] sm:$0xf]
    %v104 = vunpack.c.l.bf16 %v96
    %v105 = vunpack.c.l.bf16 %v97
    %v106 = vunpack.c.l.bf16 %v98
    %v107 = vunpack.c.l.bf16 %v99
    %v108 = vunpack.c.l.bf16 %v100
    %v109 = vunpack.c.l.bf16 %v101
    %v110 = vunpack.c.l.bf16 %v102
    %v111 = vunpack.c.l.bf16 %v103
    %v112 = vstv %s95
    %v113 = vmul.f32 %v104, %v112
    %v114 = vmul.f32 %v105, %v112
    %v115 = vmul.f32 %v106, %v112
    %v116 = vmul.f32 %v107, %v112
    %v117 = vmul.f32 %v108, %v112
    %v118 = vmul.f32 %v109, %v112
    %v119 = vmul.f32 %v110, %v112
    %v120 = vmul.f32 %v111, %v112
    %v121 = vpack.c.bf16 %v113, %v113
    %v122 = vpack.c.bf16 %v114, %v114
    %v123 = vpack.c.bf16 %v115, %v115
    %v124 = vpack.c.bf16 %v116, %v116
    %v125 = vpack.c.bf16 %v117, %v117
    %v126 = vpack.c.bf16 %v118, %v118
    %v127 = vpack.c.bf16 %v119, %v119
    %v128 = vpack.c.bf16 %v120, %v120
    %v129 = vld [vmem:[#allocation9] sm:$0xf]
    %v130 = vld [vmem:[#allocation9 + $0x4] sm:$0xf]
    %v131 = vld [vmem:[#allocation9 + $0x8] sm:$0xf]
    %v132 = vld [vmem:[#allocation9 + $0xc] sm:$0xf]
    %v133 = vld [vmem:[#allocation9 + $0x10] sm:$0xf]
    %v134 = vld [vmem:[#allocation9 + $0x14] sm:$0xf]
    %v135 = vld [vmem:[#allocation9 + $0x18] sm:$0xf]
    %v136 = vld [vmem:[#allocation9 + $0x1c] sm:$0xf]
    %s137 = smul.u32 0, 8
    %v138 = vlaneseq
    %v139 = vshrl.u32 %v138, 7
    %v140 = vstv %s137
    %v141 = vadd.s32 %v140, %v139
    %s142 = smul.u32 0, 8
    %v143 = vlaneseq
    %v144 = vand.u32 %v143, 127
    %v145 = vstv %s142
    %v146 = vadd.s32 %v145, %v144
    %vm147 = vcmp.le.s32.totalorder %v146, %v141
    %v148 = vsel %vm147, 0.0, -1e+30
    %vm149 = vcmask 64512
    %v151 = vsel %vm149, %v121, 0
    %v154 = vsel %vm149, %v129, 0
    %156 = vmatprep.subr.bf16.mxu0 0
    %157 = vmatpush1.bf16.xpose.msra.mxu0 %v154
    %158 = vmatprep.subr.bf16.mxu0 0
    %159 = vmatpush1.bf16.xpose.msra.mxu0 0
    %160 = vmatprep.subr.bf16.mxu0 0
    %161 = vmatpush1.bf16.xpose.msra.mxu0 0
    %162 = vmatprep.subr.bf16.mxu0 0
    %163 = vmatpush1.bf16.xpose.msra.mxu0 0
    %164 = vmatprep.subr.bf16.mxu0 0
    %165 = vmatpush1.bf16.xpose.msra.mxu0 0
    %166 = vmatprep.subr.bf16.mxu0 0
    %167 = vmatpush1.bf16.xpose.msra.mxu0 0
    %168 = vmatprep.subr.bf16.mxu0 0
    %169 = vmatpush1.bf16.xpose.msra.mxu0 0
    %170 = vmatprep.subr.bf16.mxu0 0
    %171 = vmatpush1.bf16.xpose.msra.mxu0 0
    %172 = vmatprep.subr.bf16.mxu0 0
    %173 = vmatpush1.bf16.xpose.msra.mxu0 0
    %174 = vmatprep.subr.bf16.mxu0 0
    %175 = vmatpush1.bf16.xpose.msra.mxu0 0
    %176 = vmatprep.subr.bf16.mxu0 0
    %177 = vmatpush1.bf16.xpose.msra.mxu0 0
    %178 = vmatprep.subr.bf16.mxu0 0
    %179 = vmatpush1.bf16.xpose.msra.mxu0 0
    %180 = vmatprep.subr.bf16.mxu0 0
    %181 = vmatpush1.bf16.xpose.msra.mxu0 0
    %182 = vmatprep.subr.bf16.mxu0 0
    %183 = vmatpush1.bf16.xpose.msra.mxu0 0
    %184 = vmatprep.subr.bf16.mxu0 0
    %185 = vmatpush1.bf16.xpose.msra.mxu0 0
    %186 = vmatprep.subr.bf16.mxu0 0
    %187 = vmatpush1.bf16.xpose.msra.mxu0 0
    %188 = vmatprep.mubr.bf16.mxu0 0
    %189 = vmatmul.mubr.bf16.gmra.mrb[0].mxu0 %v151
    %v190 = vpop.f32.mrb[0].mxu0
    %v191 = vadd.f32 %v148, %v190
    %v192 = vpop.f32.mrb[0].mxu0
    %v193 = vpop.f32.mrb[0].mxu0
    %v194 = vpop.f32.mrb[0].mxu0
    %195 = vdwg.mxu0
    %v197 = vsel %vm149, %v122, 0
    %v200 = vsel %vm149, %v130, 0
    %202 = vmatprep.subr.bf16.mxu0 0
    %203 = vmatpush1.bf16.xpose.msra.mxu0 %v200
    %204 = vmatprep.subr.bf16.mxu0 0
    %205 = vmatpush1.bf16.xpose.msra.mxu0 0
    %206 = vmatprep.subr.bf16.mxu0 0
    %207 = vmatpush1.bf16.xpose.msra.mxu0 0
    %208 = vmatprep.subr.bf16.mxu0 0
    %209 = vmatpush1.bf16.xpose.msra.mxu0 0
    %210 = vmatprep.subr.bf16.mxu0 0
    %211 = vmatpush1.bf16.xpose.msra.mxu0 0
    %212 = vmatprep.subr.bf16.mxu0 0
    %213 = vmatpush1.bf16.xpose.msra.mxu0 0
    %214 = vmatprep.subr.bf16.mxu0 0
    %215 = vmatpush1.bf16.xpose.msra.mxu0 0
    %216 = vmatprep.subr.bf16.mxu0 0
    %217 = vmatpush1.bf16.xpose.msra.mxu0 0
    %218 = vmatprep.subr.bf16.mxu0 0
    %219 = vmatpush1.bf16.xpose.msra.mxu0 0
    %220 = vmatprep.subr.bf16.mxu0 0
    %221 = vmatpush1.bf16.xpose.msra.mxu0 0
    %222 = vmatprep.subr.bf16.mxu0 0
    %223 = vmatpush1.bf16.xpose.msra.mxu0 0
    %224 = vmatprep.subr.bf16.mxu0 0
    %225 = vmatpush1.bf16.xpose.msra.mxu0 0
    %226 = vmatprep.subr.bf16.mxu0 0
    %227 = vmatpush1.bf16.xpose.msra.mxu0 0
    %228 = vmatprep.subr.bf16.mxu0 0
    %229 = vmatpush1.bf16.xpose.msra.mxu0 0
    %230 = vmatprep.subr.bf16.mxu0 0
    %231 = vmatpush1.bf16.xpose.msra.mxu0 0
    %232 = vmatprep.subr.bf16.mxu0 0
    %233 = vmatpush1.bf16.xpose.msra.mxu0 0
    %234 = vmatprep.mubr.bf16.mxu0 0
    %235 = vmatmul.mubr.bf16.gmra.mrb[0].mxu0 %v197
    %v236 = vpop.f32.mrb[0].mxu0
    %v237 = vadd.f32 %v148, %v236
    %v238 = vpop.f32.mrb[0].mxu0
    %v239 = vpop.f32.mrb[0].mxu0
    %v240 = vpop.f32.mrb[0].mxu0
    %241 = vdwg.mxu0
    %v243 = vsel %vm149, %v123, 0
    %v246 = vsel %vm149, %v131, 0
    %248 = vmatprep.subr.bf16.mxu0 0
    %249 = vmatpush1.bf16.xpose.msra.mxu0 %v246
    %250 = vmatprep.subr.bf16.mxu0 0
    %251 = vmatpush1.bf16.xpose.msra.mxu0 0
    %252 = vmatprep.subr.bf16.mxu0 0
    %253 = vmatpush1.bf16.xpose.msra.mxu0 0
    %254 = vmatprep.subr.bf16.mxu0 0
    %255 = vmatpush1.bf16.xpose.msra.mxu0 0
    %256 = vmatprep.subr.bf16.mxu0 0
    %257 = vmatpush1.bf16.xpose.msra.mxu0 0
    %258 = vmatprep.subr.bf16.mxu0 0
    %259 = vmatpush1.bf16.xpose.msra.mxu0 0
    %260 = vmatprep.subr.bf16.mxu0 0
    %261 = vmatpush1.bf16.xpose.msra.mxu0 0
    %262 = vmatprep.subr.bf16.mxu0 0
    %263 = vmatpush1.bf16.xpose.msra.mxu0 0
    %264 = vmatprep.subr.bf16.mxu0 0
    %265 = vmatpush1.bf16.xpose.msra.mxu0 0
    %266 = vmatprep.subr.bf16.mxu0 0
    %267 = vmatpush1.bf16.xpose.msra.mxu0 0
    %268 = vmatprep.subr.bf16.mxu0 0
    %269 = vmatpush1.bf16.xpose.msra.mxu0 0
    %270 = vmatprep.subr.bf16.mxu0 0
    %271 = vmatpush1.bf16.xpose.msra.mxu0 0
    %272 = vmatprep.subr.bf16.mxu0 0
    %273 = vmatpush1.bf16.xpose.msra.mxu0 0
    %274 = vmatprep.subr.bf16.mxu0 0
    %275 = vmatpush1.bf16.xpose.msra.mxu0 0
    %276 = vmatprep.subr.bf16.mxu0 0
    %277 = vmatpush1.bf16.xpose.msra.mxu0 0
    %278 = vmatprep.subr.bf16.mxu0 0
    %279 = vmatpush1.bf16.xpose.msra.mxu0 0
    %280 = vmatprep.mubr.bf16.mxu0 0
    %281 = vmatmul.mubr.bf16.gmra.mrb[0].mxu0 %v243
    %v282 = vpop.f32.mrb[0].mxu0
    %v283 = vadd.f32 %v148, %v282
    %v284 = vpop.f32.mrb[0].mxu0
    %v285 = vpop.f32.mrb[0].mxu0
    %v286 = vpop.f32.mrb[0].mxu0
    %287 = vdwg.mxu0
    %v289 = vsel %vm149, %v124, 0
    %v292 = vsel %vm149, %v132, 0
    %294 = vmatprep.subr.bf16.mxu0 0
    %295 = vmatpush1.bf16.xpose.msra.mxu0 %v292
    %296 = vmatprep.subr.bf16.mxu0 0
    %297 = vmatpush1.bf16.xpose.msra.mxu0 0
    %298 = vmatprep.subr.bf16.mxu0 0
    %299 = vmatpush1.bf16.xpose.msra.mxu0 0
    %300 = vmatprep.subr.bf16.mxu0 0
    %301 = vmatpush1.bf16.xpose.msra.mxu0 0
    %302 = vmatprep.subr.bf16.mxu0 0
    %303 = vmatpush1.bf16.xpose.msra.mxu0 0
    %304 = vmatprep.subr.bf16.mxu0 0
    %305 = vmatpush1.bf16.xpose.msra.mxu0 0
    %306 = vmatprep.subr.bf16.mxu0 0
    %307 = vmatpush1.bf16.xpose.msra.mxu0 0
    %308 = vmatprep.subr.bf16.mxu0 0
    %309 = vmatpush1.bf16.xpose.msra.mxu0 0
    %310 = vmatprep.subr.bf16.mxu0 0
    %311 = vmatpush1.bf16.xpose.msra.mxu0 0
    %312 = vmatprep.subr.bf16.mxu0 0
    %313 = vmatpush1.bf16.xpose.msra.mxu0 0
    %314 = vmatprep.subr.bf16.mxu0 0
    %315 = vmatpush1.bf16.xpose.msra.mxu0 0
    %316 = vmatprep.subr.bf16.mxu0 0
    %317 = vmatpush1.bf16.xpose.msra.mxu0 0
    %318 = vmatprep.subr.bf16.mxu0 0
    %319 = vmatpush1.bf16.xpose.msra.mxu0 0
    %320 = vmatprep.subr.bf16.mxu0 0
    %321 = vmatpush1.bf16.xpose.msra.mxu0 0
    %322 = vmatprep.subr.bf16.mxu0 0
    %323 = vmatpush1.bf16.xpose.msra.mxu0 0
    %324 = vmatprep.subr.bf16.mxu0 0
    %325 = vmatpush1.bf16.xpose.msra.mxu0 0
    %326 = vmatprep.mubr.bf16.mxu0 0
    %327 = vmatmul.mubr.bf16.gmra.mrb[0].mxu0 %v289
    %v328 = vpop.f32.mrb[0].mxu0
    %v329 = vadd.f32 %v148, %v328
    %v330 = vpop.f32.mrb[0].mxu0
    %v331 = vpop.f32.mrb[0].mxu0
    %v332 = vpop.f32.mrb[0].mxu0
    %333 = vdwg.mxu0
    %v335 = vsel %vm149, %v125, 0
    %v338 = vsel %vm149, %v133, 0
    %340 = vmatprep.subr.bf16.mxu0 0
    %341 = vmatpush1.bf16.xpose.msra.mxu0 %v338
    %342 = vmatprep.subr.bf16.mxu0 0
    %343 = vmatpush1.bf16.xpose.msra.mxu0 0
    %344 = vmatprep.subr.bf16.mxu0 0
    %345 = vmatpush1.bf16.xpose.msra.mxu0 0
    %346 = vmatprep.subr.bf16.mxu0 0
    %347 = vmatpush1.bf16.xpose.msra.mxu0 0
    %348 = vmatprep.subr.bf16.mxu0 0
    %349 = vmatpush1.bf16.xpose.msra.mxu0 0
    %350 = vmatprep.subr.bf16.mxu0 0
    %351 = vmatpush1.bf16.xpose.msra.mxu0 0
    %352 = vmatprep.subr.bf16.mxu0 0
    %353 = vmatpush1.bf16.xpose.msra.mxu0 0
    %354 = vmatprep.subr.bf16.mxu0 0
    %355 = vmatpush1.bf16.xpose.msra.mxu0 0
    %356 = vmatprep.subr.bf16.mxu0 0
    %357 = vmatpush1.bf16.xpose.msra.mxu0 0
    %358 = vmatprep.subr.bf16.mxu0 0
    %359 = vmatpush1.bf16.xpose.msra.mxu0 0
    %360 = vmatprep.subr.bf16.mxu0 0
    %361 = vmatpush1.bf16.xpose.msra.mxu0 0
    %362 = vmatprep.subr.bf16.mxu0 0
    %363 = vmatpush1.bf16.xpose.msra.mxu0 0
    %364 = vmatprep.subr.bf16.mxu0 0
    %365 = vmatpush1.bf16.xpose.msra.mxu0 0
    %366 = vmatprep.subr.bf16.mxu0 0
    %367 = vmatpush1.bf16.xpose.msra.mxu0 0
    %368 = vmatprep.subr.bf16.mxu0 0
    %369 = vmatpush1.bf16.xpose.msra.mxu0 0
    %370 = vmatprep.subr.bf16.mxu0 0
    %371 = vmatpush1.bf16.xpose.msra.mxu0 0
    %372 = vmatprep.mubr.bf16.mxu0 0
    %373 = vmatmul.mubr.bf16.gmra.mrb[0].mxu0 %v335
    %v374 = vpop.f32.mrb[0].mxu0
    %v375 = vadd.f32 %v148, %v374
    %v376 = vpop.f32.mrb[0].mxu0
    %v377 = vpop.f32.mrb[0].mxu0
    %v378 = vpop.f32.mrb[0].mxu0
    %379 = vdwg.mxu0
    %v381 = vsel %vm149, %v126, 0
    %v384 = vsel %vm149, %v134, 0
    %386 = vmatprep.subr.bf16.mxu0 0
    %387 = vmatpush1.bf16.xpose.msra.mxu0 %v384
    %388 = vmatprep.subr.bf16.mxu0 0
    %389 = vmatpush1.bf16.xpose.msra.mxu0 0
    %390 = vmatprep.subr.bf16.mxu0 0
    %391 = vmatpush1.bf16.xpose.msra.mxu0 0
    %392 = vmatprep.subr.bf16.mxu0 0
    %393 = vmatpush1.bf16.xpose.msra.mxu0 0
    %394 = vmatprep.subr.bf16.mxu0 0
    %395 = vmatpush1.bf16.xpose.msra.mxu0 0
    %396 = vmatprep.subr.bf16.mxu0 0
    %397 = vmatpush1.bf16.xpose.msra.mxu0 0
    %398 = vmatprep.subr.bf16.mxu0 0
    %399 = vmatpush1.bf16.xpose.msra.mxu0 0
    %400 = vmatprep.subr.bf16.mxu0 0
    %401 = vmatpush1.bf16.xpose.msra.mxu0 0
    %402 = vmatprep.subr.bf16.mxu0 0
    %403 = vmatpush1.bf16.xpose.msra.mxu0 0
    %404 = vmatprep.subr.bf16.mxu0 0
    %405 = vmatpush1.bf16.xpose.msra.mxu0 0
    %406 = vmatprep.subr.bf16.mxu0 0
    %407 = vmatpush1.bf16.xpose.msra.mxu0 0
    %408 = vmatprep.subr.bf16.mxu0 0
    %409 = vmatpush1.bf16.xpose.msra.mxu0 0
    %410 = vmatprep.subr.bf16.mxu0 0
    %411 = vmatpush1.bf16.xpose.msra.mxu0 0
    %412 = vmatprep.subr.bf16.mxu0 0
    %413 = vmatpush1.bf16.xpose.msra.mxu0 0
    %414 = vmatprep.subr.bf16.mxu0 0
    %415 = vmatpush1.bf16.xpose.msra.mxu0 0
    %416 = vmatprep.subr.bf16.mxu0 0
    %417 = vmatpush1.bf16.xpose.msra.mxu0 0
    %418 = vmatprep.mubr.bf16.mxu0 0
    %419 = vmatmul.mubr.bf16.gmra.mrb[0].mxu0 %v381
    %v420 = vpop.f32.mrb[0].mxu0
    %v421 = vadd.f32 %v148, %v420
    %v422 = vpop.f32.mrb[0].mxu0
    %v423 = vpop.f32.mrb[0].mxu0
    %v424 = vpop.f32.mrb[0].mxu0
    %425 = vdwg.mxu0
    %v427 = vsel %vm149, %v127, 0
    %v430 = vsel %vm149, %v135, 0
    %432 = vmatprep.subr.bf16.mxu0 0
    %433 = vmatpush1.bf16.xpose.msra.mxu0 %v430
    %434 = vmatprep.subr.bf16.mxu0 0
    %435 = vmatpush1.bf16.xpose.msra.mxu0 0
    %436 = vmatprep.subr.bf16.mxu0 0
    %437 = vmatpush1.bf16.xpose.msra.mxu0 0
    %438 = vmatprep.subr.bf16.mxu0 0
    %439 = vmatpush1.bf16.xpose.msra.mxu0 0
    %440 = vmatprep.subr.bf16.mxu0 0
    %441 = vmatpush1.bf16.xpose.msra.mxu0 0
    %442 = vmatprep.subr.bf16.mxu0 0
    %443 = vmatpush1.bf16.xpose.msra.mxu0 0
    %444 = vmatprep.subr.bf16.mxu0 0
    %445 = vmatpush1.bf16.xpose.msra.mxu0 0
    %446 = vmatprep.subr.bf16.mxu0 0
    %447 = vmatpush1.bf16.xpose.msra.mxu0 0
    %448 = vmatprep.subr.bf16.mxu0 0
    %449 = vmatpush1.bf16.xpose.msra.mxu0 0
    %450 = vmatprep.subr.bf16.mxu0 0
    %451 = vmatpush1.bf16.xpose.msra.mxu0 0
    %452 = vmatprep.subr.bf16.mxu0 0
    %453 = vmatpush1.bf16.xpose.msra.mxu0 0
    %454 = vmatprep.subr.bf16.mxu0 0
    %455 = vmatpush1.bf16.xpose.msra.mxu0 0
    %456 = vmatprep.subr.bf16.mxu0 0
    %457 = vmatpush1.bf16.xpose.msra.mxu0 0
    %458 = vmatprep.subr.bf16.mxu0 0
    %459 = vmatpush1.bf16.xpose.msra.mxu0 0
    %460 = vmatprep.subr.bf16.mxu0 0
    %461 = vmatpush1.bf16.xpose.msra.mxu0 0
    %462 = vmatprep.subr.bf16.mxu0 0
    %463 = vmatpush1.bf16.xpose.msra.mxu0 0
    %464 = vmatprep.mubr.bf16.mxu0 0
    %465 = vmatmul.mubr.bf16.gmra.mrb[0].mxu0 %v427
    %v466 = vpop.f32.mrb[0].mxu0
    %v467 = vadd.f32 %v148, %v466
    %v468 = vpop.f32.mrb[0].mxu0
    %v469 = vpop.f32.mrb[0].mxu0
    %v470 = vpop.f32.mrb[0].mxu0
    %471 = vdwg.mxu0
    %v473 = vsel %vm149, %v128, 0
    %v476 = vsel %vm149, %v136, 0
    %478 = vmatprep.subr.bf16.mxu0 0
    %479 = vmatpush1.bf16.xpose.msra.mxu0 %v476
    %480 = vmatprep.subr.bf16.mxu0 0
    %481 = vmatpush1.bf16.xpose.msra.mxu0 0
    %482 = vmatprep.subr.bf16.mxu0 0
    %483 = vmatpush1.bf16.xpose.msra.mxu0 0
    %484 = vmatprep.subr.bf16.mxu0 0
    %485 = vmatpush1.bf16.xpose.msra.mxu0 0
    %486 = vmatprep.subr.bf16.mxu0 0
    %487 = vmatpush1.bf16.xpose.msra.mxu0 0
    %488 = vmatprep.subr.bf16.mxu0 0
    %489 = vmatpush1.bf16.xpose.msra.mxu0 0
    %490 = vmatprep.subr.bf16.mxu0 0
    %491 = vmatpush1.bf16.xpose.msra.mxu0 0
    %492 = vmatprep.subr.bf16.mxu0 0
    %493 = vmatpush1.bf16.xpose.msra.mxu0 0
    %494 = vmatprep.subr.bf16.mxu0 0
    %495 = vmatpush1.bf16.xpose.msra.mxu0 0
    %496 = vmatprep.subr.bf16.mxu0 0
    %497 = vmatpush1.bf16.xpose.msra.mxu0 0
    %498 = vmatprep.subr.bf16.mxu0 0
    %499 = vmatpush1.bf16.xpose.msra.mxu0 0
    %500 = vmatprep.subr.bf16.mxu0 0
    %501 = vmatpush1.bf16.xpose.msra.mxu0 0
    %502 = vmatprep.subr.bf16.mxu0 0
    %503 = vmatpush1.bf16.xpose.msra.mxu0 0
    %504 = vmatprep.subr.bf16.mxu0 0
    %505 = vmatpush1.bf16.xpose.msra.mxu0 0
    %506 = vmatprep.subr.bf16.mxu0 0
    %507 = vmatpush1.bf16.xpose.msra.mxu0 0
    %508 = vmatprep.subr.bf16.mxu0 0
    %509 = vmatpush1.bf16.xpose.msra.mxu0 0
    %510 = vmatprep.mubr.bf16.mxu0 0
    %511 = vmatmul.mubr.bf16.gmra.mrb[0].mxu0 %v473
    %v512 = vpop.f32.mrb[0].mxu0
    %v513 = vadd.f32 %v148, %v512
    %v514 = vpop.f32.mrb[0].mxu0
    %v515 = vpop.f32.mrb[0].mxu0
    %v516 = vpop.f32.mrb[0].mxu0
    %517 = vdwg.mxu0
    %v518 = vld [vmem:[#allocation2] sm:$0xff]
    %v519 = vld [vmem:[#allocation2 + $0x8] sm:$0xff]
    %v520 = vld [vmem:[#allocation2 + $0x10] sm:$0xff]
    %v521 = vld [vmem:[#allocation2 + $0x18] sm:$0xff]
    %v522 = vld [vmem:[#allocation2 + $0x20] sm:$0xff]
    %v523 = vld [vmem:[#allocation2 + $0x28] sm:$0xff]
    %v524 = vld [vmem:[#allocation2 + $0x30] sm:$0xff]
    %v525 = vld [vmem:[#allocation2 + $0x38] sm:$0xff]
    %v526 = vsel %vm149, %v191, -inf
    %527 = vmax.xlane.f32.xlu0 %v526
    %v528 = vpop.xlane.xlu0 %527
    %v529 = vsel %vm149, %v237, -inf
    %530 = vmax.xlane.f32.xlu0 %v529
    %v531 = vpop.xlane.xlu0 %530
    %v532 = vsel %vm149, %v283, -inf
    %533 = vmax.xlane.f32.xlu0 %v532
    %v534 = vpop.xlane.xlu0 %533
    %v535 = vsel %vm149, %v329, -inf
    %536 = vmax.xlane.f32.xlu0 %v535
    %v537 = vpop.xlane.xlu0 %536
    %v538 = vsel %vm149, %v375, -inf
    %539 = vmax.xlane.f32.xlu0 %v538
    %v540 = vpop.xlane.xlu0 %539
    %v541 = vsel %vm149, %v421, -inf
    %542 = vmax.xlane.f32.xlu0 %v541
    %v543 = vpop.xlane.xlu0 %542
    %v544 = vsel %vm149, %v467, -inf
    %545 = vmax.xlane.f32.xlu0 %v544
    %v546 = vpop.xlane.xlu0 %545
    %v547 = vsel %vm149, %v513, -inf
    %548 = vmax.xlane.f32.xlu0 %v547
    %v549 = vpop.xlane.xlu0 %548
    %v550 = vmax.f32 %v518, %v528
    %v551 = vmax.f32 %v519, %v531
    %v552 = vmax.f32 %v520, %v534
    %v553 = vmax.f32 %v521, %v537
    %v554 = vmax.f32 %v522, %v540
    %v555 = vmax.f32 %v523, %v543
    %v556 = vmax.f32 %v524, %v546
    %v557 = vmax.f32 %v525, %v549
    %v558 = vsub.f32 %v518, %v550
    %v559 = vsub.f32 %v519, %v551
    %v560 = vsub.f32 %v520, %v552
    %v561 = vsub.f32 %v521, %v553
    %v562 = vsub.f32 %v522, %v554
    %v563 = vsub.f32 %v523, %v555
    %v564 = vsub.f32 %v524, %v556
    %v565 = vsub.f32 %v525, %v557
    %v566 = vmul.f32 %v558, 1.442695
    %v567 = vpow.pop %v566
    %v568 = vmul.f32 %v559, 1.442695
    %v569 = vpow.pop %v568
    %v570 = vmul.f32 %v560, 1.442695
    %v571 = vpow.pop %v570
    %v572 = vmul.f32 %v561, 1.442695
    %v573 = vpow.pop %v572
    %v574 = vmul.f32 %v562, 1.442695
    %v575 = vpow.pop %v574
    %v576 = vmul.f32 %v563, 1.442695
    %v577 = vpow.pop %v576
    %v578 = vmul.f32 %v564, 1.442695
    %v579 = vpow.pop %v578
    %v580 = vmul.f32 %v565, 1.442695
    %v581 = vpow.pop %v580
    %583 = vset.pattern.permute.xlu0 0
    %584 = vperm.xlu0 %583, %v550
    %v585 = vpop.permute.xlu0 %584
    %588 = vset.pattern.permute.xlu0 0
    %589 = vperm.xlu0 %588, %v551
    %v590 = vpop.permute.xlu0 %589
    %593 = vset.pattern.permute.xlu0 0
    %594 = vperm.xlu0 %593, %v552
    %v595 = vpop.permute.xlu0 %594
    %598 = vset.pattern.permute.xlu0 0
    %599 = vperm.xlu0 %598, %v553
    %v600 = vpop.permute.xlu0 %599
    %603 = vset.pattern.permute.xlu0 0
    %604 = vperm.xlu0 %603, %v554
    %v605 = vpop.permute.xlu0 %604
    %608 = vset.pattern.permute.xlu0 0
    %609 = vperm.xlu0 %608, %v555
    %v610 = vpop.permute.xlu0 %609
    %613 = vset.pattern.permute.xlu0 0
    %614 = vperm.xlu0 %613, %v556
    %v615 = vpop.permute.xlu0 %614
    %618 = vset.pattern.permute.xlu0 0
    %619 = vperm.xlu0 %618, %v557
    %v620 = vpop.permute.xlu0 %619
    %v622 = vsub.f32 %v191, %v585
    %v623 = vsub.f32 %v237, %v590
    %v624 = vsub.f32 %v283, %v595
    %v625 = vsub.f32 %v329, %v600
    %v626 = vsub.f32 %v375, %v605
    %v627 = vsub.f32 %v421, %v610
    %v628 = vsub.f32 %v467, %v615
    %v629 = vsub.f32 %v513, %v620
    %v630 = vmul.f32 %v622, 1.442695
    %v631 = vpow.pop %v630
    %v632 = vmul.f32 %v623, 1.442695
    %v633 = vpow.pop %v632
    %v634 = vmul.f32 %v624, 1.442695
    %v635 = vpow.pop %v634
    %v636 = vmul.f32 %v625, 1.442695
    %v637 = vpow.pop %v636
    %v638 = vmul.f32 %v626, 1.442695
    %v639 = vpow.pop %v638
    %v640 = vmul.f32 %v627, 1.442695
    %v641 = vpow.pop %v640
    %v642 = vmul.f32 %v628, 1.442695
    %v643 = vpow.pop %v642
    %v644 = vmul.f32 %v629, 1.442695
    %v645 = vpow.pop %v644
    %v646 = vld [vmem:[#allocation3] sm:$0xff]
    %v647 = vld [vmem:[#allocation3 + $0x8] sm:$0xff]
    %v648 = vld [vmem:[#allocation3 + $0x10] sm:$0xff]
    %v649 = vld [vmem:[#allocation3 + $0x18] sm:$0xff]
    %v650 = vld [vmem:[#allocation3 + $0x20] sm:$0xff]
    %v651 = vld [vmem:[#allocation3 + $0x28] sm:$0xff]
    %v652 = vld [vmem:[#allocation3 + $0x30] sm:$0xff]
    %v653 = vld [vmem:[#allocation3 + $0x38] sm:$0xff]
    %v654 = vmul.f32 %v567, %v646
    %v655 = vmul.f32 %v569, %v647
    %v656 = vmul.f32 %v571, %v648
    %v657 = vmul.f32 %v573, %v649
    %v658 = vmul.f32 %v575, %v650
    %v659 = vmul.f32 %v577, %v651
    %v660 = vmul.f32 %v579, %v652
    %v661 = vmul.f32 %v581, %v653
    %v662 = vsel %vm149, %v631, 0.0
    %663 = vadd.xlane.f32.xlu0 %v662
    %v664 = vpop.xlane.xlu0 %663
    %v665 = vsel %vm149, %v633, 0.0
    %666 = vadd.xlane.f32.xlu0 %v665
    %v667 = vpop.xlane.xlu0 %666
    %v668 = vsel %vm149, %v635, 0.0
    %669 = vadd.xlane.f32.xlu0 %v668
    %v670 = vpop.xlane.xlu0 %669
    %v671 = vsel %vm149, %v637, 0.0
    %672 = vadd.xlane.f32.xlu0 %v671
    %v673 = vpop.xlane.xlu0 %672
    %v674 = vsel %vm149, %v639, 0.0
    %675 = vadd.xlane.f32.xlu0 %v674
    %v676 = vpop.xlane.xlu0 %675
    %v677 = vsel %vm149, %v641, 0.0
    %678 = vadd.xlane.f32.xlu0 %v677
    %v679 = vpop.xlane.xlu0 %678
    %v680 = vsel %vm149, %v643, 0.0
    %681 = vadd.xlane.f32.xlu0 %v680
    %v682 = vpop.xlane.xlu0 %681
    %v683 = vsel %vm149, %v645, 0.0
    %684 = vadd.xlane.f32.xlu0 %v683
    %v685 = vpop.xlane.xlu0 %684
    %v686 = vadd.f32 %v654, %v664
    %v687 = vadd.f32 %v655, %v667
    %v688 = vadd.f32 %v656, %v670
    %v689 = vadd.f32 %v657, %v673
    %v690 = vadd.f32 %v658, %v676
    %v691 = vadd.f32 %v659, %v679
    %v692 = vadd.f32 %v660, %v682
    %v693 = vadd.f32 %v661, %v685
    %vm694 = vcmask 7168
    %695 = vst.msk [vmem:[#allocation3] sm:$0xff] %vm694, %v686
    %696 = vst.msk [vmem:[#allocation3 + $0x8] sm:$0xff] %vm694, %v687
    %697 = vst.msk [vmem:[#allocation3 + $0x10] sm:$0xff] %vm694, %v688
    %698 = vst.msk [vmem:[#allocation3 + $0x18] sm:$0xff] %vm694, %v689
    %699 = vst.msk [vmem:[#allocation3 + $0x20] sm:$0xff] %vm694, %v690
    %700 = vst.msk [vmem:[#allocation3 + $0x28] sm:$0xff] %vm694, %v691
    %701 = vst.msk [vmem:[#allocation3 + $0x30] sm:$0xff] %vm694, %v692
    %702 = vst.msk [vmem:[#allocation3 + $0x38] sm:$0xff] %vm694, %v693
    %v703 = vld [vmem:[#allocation4] sm:$0xff]
    %v704 = vld [vmem:[#allocation4 + $0x8] sm:$0xff]
    %v705 = vld [vmem:[#allocation4 + $0x10] sm:$0xff]
    %v706 = vld [vmem:[#allocation4 + $0x18] sm:$0xff]
    %v707 = vld [vmem:[#allocation4 + $0x20] sm:$0xff]
    %v708 = vld [vmem:[#allocation4 + $0x28] sm:$0xff]
    %v709 = vld [vmem:[#allocation4 + $0x30] sm:$0xff]
    %v710 = vld [vmem:[#allocation4 + $0x38] sm:$0xff]
    %712 = vset.pattern.permute.xlu0 0
    %713 = vperm.xlu0 %712, %v567
    %v714 = vpop.permute.xlu0 %713
    %717 = vset.pattern.permute.xlu0 0
    %718 = vperm.xlu0 %717, %v569
    %v719 = vpop.permute.xlu0 %718
    %722 = vset.pattern.permute.xlu0 0
    %723 = vperm.xlu0 %722, %v571
    %v724 = vpop.permute.xlu0 %723
    %727 = vset.pattern.permute.xlu0 0
    %728 = vperm.xlu0 %727, %v573
    %v729 = vpop.permute.xlu0 %728
    %732 = vset.pattern.permute.xlu0 0
    %733 = vperm.xlu0 %732, %v575
    %v734 = vpop.permute.xlu0 %733
    %737 = vset.pattern.permute.xlu0 0
    %738 = vperm.xlu0 %737, %v577
    %v739 = vpop.permute.xlu0 %738
    %742 = vset.pattern.permute.xlu0 0
    %743 = vperm.xlu0 %742, %v579
    %v744 = vpop.permute.xlu0 %743
    %747 = vset.pattern.permute.xlu0 0
    %748 = vperm.xlu0 %747, %v581
    %v749 = vpop.permute.xlu0 %748
    %v751 = vmul.f32 %v714, %v703
    %v752 = vmul.f32 %v719, %v704
    %v753 = vmul.f32 %v724, %v705
    %v754 = vmul.f32 %v729, %v706
    %v755 = vmul.f32 %v734, %v707
    %v756 = vmul.f32 %v739, %v708
    %v757 = vmul.f32 %v744, %v709
    %v758 = vmul.f32 %v749, %v710
    %v759 = vpack.c.bf16 %v631, %v631
    %v760 = vpack.c.bf16 %v633, %v633
    %v761 = vpack.c.bf16 %v635, %v635
    %v762 = vpack.c.bf16 %v637, %v637
    %v763 = vpack.c.bf16 %v639, %v639
    %v764 = vpack.c.bf16 %v641, %v641
    %v765 = vpack.c.bf16 %v643, %v643
    %v766 = vpack.c.bf16 %v645, %v645
    %v767 = vld [vmem:[#allocation11] sm:$0xf]
    %v768 = vld [vmem:[#allocation11 + $0x4] sm:$0xf]
    %v769 = vld [vmem:[#allocation11 + $0x8] sm:$0xf]
    %v770 = vld [vmem:[#allocation11 + $0xc] sm:$0xf]
    %v771 = vld [vmem:[#allocation11 + $0x10] sm:$0xf]
    %v772 = vld [vmem:[#allocation11 + $0x14] sm:$0xf]
    %v773 = vld [vmem:[#allocation11 + $0x18] sm:$0xf]
    %v774 = vld [vmem:[#allocation11 + $0x1c] sm:$0xf]
    %v776 = vsel %vm149, %v759, 0
    %vm778 = vcmask 1043456
    %v780 = vsel %vm778, %v767, 0
    %782 = vmatprep.subr.bf16.mxu0 0
    %783 = vmatpush1.bf16.msra.mxu0 %v780
    %784 = vmatprep.subr.bf16.mxu0 0
    %785 = vmatpush1.bf16.msra.mxu0 0
    %786 = vmatprep.subr.bf16.mxu0 0
    %787 = vmatpush1.bf16.msra.mxu0 0
    %788 = vmatprep.subr.bf16.mxu0 0
    %789 = vmatpush1.bf16.msra.mxu0 0
    %790 = vmatprep.subr.bf16.mxu0 0
    %791 = vmatpush1.bf16.msra.mxu0 0
    %792 = vmatprep.subr.bf16.mxu0 0
    %793 = vmatpush1.bf16.msra.mxu0 0
    %794 = vmatprep.subr.bf16.mxu0 0
    %795 = vmatpush1.bf16.msra.mxu0 0
    %796 = vmatprep.subr.bf16.mxu0 0
    %797 = vmatpush1.bf16.msra.mxu0 0
    %798 = vmatprep.subr.bf16.mxu0 0
    %799 = vmatpush1.bf16.msra.mxu0 0
    %800 = vmatprep.subr.bf16.mxu0 0
    %801 = vmatpush1.bf16.msra.mxu0 0
    %802 = vmatprep.subr.bf16.mxu0 0
    %803 = vmatpush1.bf16.msra.mxu0 0
    %804 = vmatprep.subr.bf16.mxu0 0
    %805 = vmatpush1.bf16.msra.mxu0 0
    %806 = vmatprep.subr.bf16.mxu0 0
    %807 = vmatpush1.bf16.msra.mxu0 0
    %808 = vmatprep.subr.bf16.mxu0 0
    %809 = vmatpush1.bf16.msra.mxu0 0
    %810 = vmatprep.subr.bf16.mxu0 0
    %811 = vmatpush1.bf16.msra.mxu0 0
    %812 = vmatprep.subr.bf16.mxu0 0
    %813 = vmatpush1.bf16.msra.mxu0 0
    %814 = vmatprep.mubr.bf16.mxu0 0
    %815 = vmatmul.mubr.bf16.gmra.mrb[0].mxu0 %v776
    %v816 = vpop.f32.mrb[0].mxu0
    %v817 = vadd.f32 0.0, %v816
    %v818 = vpop.f32.mrb[0].mxu0
    %v819 = vpop.f32.mrb[0].mxu0
    %v820 = vpop.f32.mrb[0].mxu0
    %821 = vdwg.mxu0
    %v823 = vsel %vm149, %v760, 0
    %v826 = vsel %vm778, %v768, 0
    %828 = vmatprep.subr.bf16.mxu0 0
    %829 = vmatpush1.bf16.msra.mxu0 %v826
    %830 = vmatprep.subr.bf16.mxu0 0
    %831 = vmatpush1.bf16.msra.mxu0 0
    %832 = vmatprep.subr.bf16.mxu0 0
    %833 = vmatpush1.bf16.msra.mxu0 0
    %834 = vmatprep.subr.bf16.mxu0 0
    %835 = vmatpush1.bf16.msra.mxu0 0
    %836 = vmatprep.subr.bf16.mxu0 0
    %837 = vmatpush1.bf16.msra.mxu0 0
    %838 = vmatprep.subr.bf16.mxu0 0
    %839 = vmatpush1.bf16.msra.mxu0 0
    %840 = vmatprep.subr.bf16.mxu0 0
    %841 = vmatpush1.bf16.msra.mxu0 0
    %842 = vmatprep.subr.bf16.mxu0 0
    %843 = vmatpush1.bf16.msra.mxu0 0
    %844 = vmatprep.subr.bf16.mxu0 0
    %845 = vmatpush1.bf16.msra.mxu0 0
    %846 = vmatprep.subr.bf16.mxu0 0
    %847 = vmatpush1.bf16.msra.mxu0 0
    %848 = vmatprep.subr.bf16.mxu0 0
    %849 = vmatpush1.bf16.msra.mxu0 0
    %850 = vmatprep.subr.bf16.mxu0 0
    %851 = vmatpush1.bf16.msra.mxu0 0
    %852 = vmatprep.subr.bf16.mxu0 0
    %853 = vmatpush1.bf16.msra.mxu0 0
    %854 = vmatprep.subr.bf16.mxu0 0
    %855 = vmatpush1.bf16.msra.mxu0 0
    %856 = vmatprep.subr.bf16.mxu0 0
    %857 = vmatpush1.bf16.msra.mxu0 0
    %858 = vmatprep.subr.bf16.mxu0 0
    %859 = vmatpush1.bf16.msra.mxu0 0
    %860 = vmatprep.mubr.bf16.mxu0 0
    %861 = vmatmul.mubr.bf16.gmra.mrb[0].mxu0 %v823
    %v862 = vpop.f32.mrb[0].mxu0
    %v863 = vadd.f32 0.0, %v862
    %v864 = vpop.f32.mrb[0].mxu0
    %v865 = vpop.f32.mrb[0].mxu0
    %v866 = vpop.f32.mrb[0].mxu0
    %867 = vdwg.mxu0
    %v869 = vsel %vm149, %v761, 0
    %v872 = vsel %vm778, %v769, 0
    %874 = vmatprep.subr.bf16.mxu0 0
    %875 = vmatpush1.bf16.msra.mxu0 %v872
    %876 = vmatprep.subr.bf16.mxu0 0
    %877 = vmatpush1.bf16.msra.mxu0 0
    %878 = vmatprep.subr.bf16.mxu0 0
    %879 = vmatpush1.bf16.msra.mxu0 0
    %880 = vmatprep.subr.bf16.mxu0 0
    %881 = vmatpush1.bf16.msra.mxu0 0
    %882 = vmatprep.subr.bf16.mxu0 0
    %883 = vmatpush1.bf16.msra.mxu0 0
    %884 = vmatprep.subr.bf16.mxu0 0
    %885 = vmatpush1.bf16.msra.mxu0 0
    %886 = vmatprep.subr.bf16.mxu0 0
    %887 = vmatpush1.bf16.msra.mxu0 0
    %888 = vmatprep.subr.bf16.mxu0 0
    %889 = vmatpush1.bf16.msra.mxu0 0
    %890 = vmatprep.subr.bf16.mxu0 0
    %891 = vmatpush1.bf16.msra.mxu0 0
    %892 = vmatprep.subr.bf16.mxu0 0
    %893 = vmatpush1.bf16.msra.mxu0 0
    %894 = vmatprep.subr.bf16.mxu0 0
    %895 = vmatpush1.bf16.msra.mxu0 0
    %896 = vmatprep.subr.bf16.mxu0 0
    %897 = vmatpush1.bf16.msra.mxu0 0
    %898 = vmatprep.subr.bf16.mxu0 0
    %899 = vmatpush1.bf16.msra.mxu0 0
    %900 = vmatprep.subr.bf16.mxu0 0
    %901 = vmatpush1.bf16.msra.mxu0 0
    %902 = vmatprep.subr.bf16.mxu0 0
    %903 = vmatpush1.bf16.msra.mxu0 0
    %904 = vmatprep.subr.bf16.mxu0 0
    %905 = vmatpush1.bf16.msra.mxu0 0
    %906 = vmatprep.mubr.bf16.mxu0 0
    %907 = vmatmul.mubr.bf16.gmra.mrb[0].mxu0 %v869
    %v908 = vpop.f32.mrb[0].mxu0
    %v909 = vadd.f32 0.0, %v908
    %v910 = vpop.f32.mrb[0].mxu0
    %v911 = vpop.f32.mrb[0].mxu0
    %v912 = vpop.f32.mrb[0].mxu0
    %913 = vdwg.mxu0
    %v915 = vsel %vm149, %v762, 0
    %v918 = vsel %vm778, %v770, 0
    %920 = vmatprep.subr.bf16.mxu0 0
    %921 = vmatpush1.bf16.msra.mxu0 %v918
    %922 = vmatprep.subr.bf16.mxu0 0
    %923 = vmatpush1.bf16.msra.mxu0 0
    %924 = vmatprep.subr.bf16.mxu0 0
    %925 = vmatpush1.bf16.msra.mxu0 0
    %926 = vmatprep.subr.bf16.mxu0 0
    %927 = vmatpush1.bf16.msra.mxu0 0
    %928 = vmatprep.subr.bf16.mxu0 0
    %929 = vmatpush1.bf16.msra.mxu0 0
    %930 = vmatprep.subr.bf16.mxu0 0
    %931 = vmatpush1.bf16.msra.mxu0 0
    %932 = vmatprep.subr.bf16.mxu0 0
    %933 = vmatpush1.bf16.msra.mxu0 0
    %934 = vmatprep.subr.bf16.mxu0 0
    %935 = vmatpush1.bf16.msra.mxu0 0
    %936 = vmatprep.subr.bf16.mxu0 0
    %937 = vmatpush1.bf16.msra.mxu0 0
    %938 = vmatprep.subr.bf16.mxu0 0
    %939 = vmatpush1.bf16.msra.mxu0 0
    %940 = vmatprep.subr.bf16.mxu0 0
    %941 = vmatpush1.bf16.msra.mxu0 0
    %942 = vmatprep.subr.bf16.mxu0 0
    %943 = vmatpush1.bf16.msra.mxu0 0
    %944 = vmatprep.subr.bf16.mxu0 0
    %945 = vmatpush1.bf16.msra.mxu0 0
    %946 = vmatprep.subr.bf16.mxu0 0
    %947 = vmatpush1.bf16.msra.mxu0 0
    %948 = vmatprep.subr.bf16.mxu0 0
    %949 = vmatpush1.bf16.msra.mxu0 0
    %950 = vmatprep.subr.bf16.mxu0 0
    %951 = vmatpush1.bf16.msra.mxu0 0
    %952 = vmatprep.mubr.bf16.mxu0 0
    %953 = vmatmul.mubr.bf16.gmra.mrb[0].mxu0 %v915
    %v954 = vpop.f32.mrb[0].mxu0
    %v955 = vadd.f32 0.0, %v954
    %v956 = vpop.f32.mrb[0].mxu0
    %v957 = vpop.f32.mrb[0].mxu0
    %v958 = vpop.f32.mrb[0].mxu0
    %959 = vdwg.mxu0
    %v961 = vsel %vm149, %v763, 0
    %v964 = vsel %vm778, %v771, 0
    %966 = vmatprep.subr.bf16.mxu0 0
    %967 = vmatpush1.bf16.msra.mxu0 %v964
    %968 = vmatprep.subr.bf16.mxu0 0
    %969 = vmatpush1.bf16.msra.mxu0 0
    %970 = vmatprep.subr.bf16.mxu0 0
    %971 = vmatpush1.bf16.msra.mxu0 0
    %972 = vmatprep.subr.bf16.mxu0 0
    %973 = vmatpush1.bf16.msra.mxu0 0
    %974 = vmatprep.subr.bf16.mxu0 0
    %975 = vmatpush1.bf16.msra.mxu0 0
    %976 = vmatprep.subr.bf16.mxu0 0
    %977 = vmatpush1.bf16.msra.mxu0 0
    %978 = vmatprep.subr.bf16.mxu0 0
    %979 = vmatpush1.bf16.msra.mxu0 0
    %980 = vmatprep.subr.bf16.mxu0 0
    %981 = vmatpush1.bf16.msra.mxu0 0
    %982 = vmatprep.subr.bf16.mxu0 0
    %983 = vmatpush1.bf16.msra.mxu0 0
    %984 = vmatprep.subr.bf16.mxu0 0
    %985 = vmatpush1.bf16.msra.mxu0 0
    %986 = vmatprep.subr.bf16.mxu0 0
    %987 = vmatpush1.bf16.msra.mxu0 0
    %988 = vmatprep.subr.bf16.mxu0 0
    %989 = vmatpush1.bf16.msra.mxu0 0
    %990 = vmatprep.subr.bf16.mxu0 0
    %991 = vmatpush1.bf16.msra.mxu0 0
    %992 = vmatprep.subr.bf16.mxu0 0
    %993 = vmatpush1.bf16.msra.mxu0 0
    %994 = vmatprep.subr.bf16.mxu0 0
    %995 = vmatpush1.bf16.msra.mxu0 0
    %996 = vmatprep.subr.bf16.mxu0 0
    %997 = vmatpush1.bf16.msra.mxu0 0
    %998 = vmatprep.mubr.bf16.mxu0 0
    %999 = vmatmul.mubr.bf16.gmra.mrb[0].mxu0 %v961
    %v1000 = vpop.f32.mrb[0].mxu0
    %v1001 = vadd.f32 0.0, %v1000
    %v1002 = vpop.f32.mrb[0].mxu0
    %v1003 = vpop.f32.mrb[0].mxu0
    %v1004 = vpop.f32.mrb[0].mxu0
    %1005 = vdwg.mxu0
    %v1007 = vsel %vm149, %v764, 0
    %v1010 = vsel %vm778, %v772, 0
    %1012 = vmatprep.subr.bf16.mxu0 0
    %1013 = vmatpush1.bf16.msra.mxu0 %v1010
    %1014 = vmatprep.subr.bf16.mxu0 0
    %1015 = vmatpush1.bf16.msra.mxu0 0
    %1016 = vmatprep.subr.bf16.mxu0 0
    %1017 = vmatpush1.bf16.msra.mxu0 0
    %1018 = vmatprep.subr.bf16.mxu0 0
    %1019 = vmatpush1.bf16.msra.mxu0 0
    %1020 = vmatprep.subr.bf16.mxu0 0
    %1021 = vmatpush1.bf16.msra.mxu0 0
    %1022 = vmatprep.subr.bf16.mxu0 0
    %1023 = vmatpush1.bf16.msra.mxu0 0
    %1024 = vmatprep.subr.bf16.mxu0 0
    %1025 = vmatpush1.bf16.msra.mxu0 0
    %1026 = vmatprep.subr.bf16.mxu0 0
    %1027 = vmatpush1.bf16.msra.mxu0 0
    %1028 = vmatprep.subr.bf16.mxu0 0
    %1029 = vmatpush1.bf16.msra.mxu0 0
    %1030 = vmatprep.subr.bf16.mxu0 0
    %1031 = vmatpush1.bf16.msra.mxu0 0
    %1032 = vmatprep.subr.bf16.mxu0 0
    %1033 = vmatpush1.bf16.msra.mxu0 0
    %1034 = vmatprep.subr.bf16.mxu0 0
    %1035 = vmatpush1.bf16.msra.mxu0 0
    %1036 = vmatprep.subr.bf16.mxu0 0
    %1037 = vmatpush1.bf16.msra.mxu0 0
    %1038 = vmatprep.subr.bf16.mxu0 0
    %1039 = vmatpush1.bf16.msra.mxu0 0
    %1040 = vmatprep.subr.bf16.mxu0 0
    %1041 = vmatpush1.bf16.msra.mxu0 0
    %1042 = vmatprep.subr.bf16.mxu0 0
    %1043 = vmatpush1.bf16.msra.mxu0 0
    %1044 = vmatprep.mubr.bf16.mxu0 0
    %1045 = vmatmul.mubr.bf16.gmra.mrb[0].mxu0 %v1007
    %v1046 = vpop.f32.mrb[0].mxu0
    %v1047 = vadd.f32 0.0, %v1046
    %v1048 = vpop.f32.mrb[0].mxu0
    %v1049 = vpop.f32.mrb[0].mxu0
    %v1050 = vpop.f32.mrb[0].mxu0
    %1051 = vdwg.mxu0
    %v1053 = vsel %vm149, %v765, 0
    %v1056 = vsel %vm778, %v773, 0
    %1058 = vmatprep.subr.bf16.mxu0 0
    %1059 = vmatpush1.bf16.msra.mxu0 %v1056
    %1060 = vmatprep.subr.bf16.mxu0 0
    %1061 = vmatpush1.bf16.msra.mxu0 0
    %1062 = vmatprep.subr.bf16.mxu0 0
    %1063 = vmatpush1.bf16.msra.mxu0 0
    %1064 = vmatprep.subr.bf16.mxu0 0
    %1065 = vmatpush1.bf16.msra.mxu0 0
    %1066 = vmatprep.subr.bf16.mxu0 0
    %1067 = vmatpush1.bf16.msra.mxu0 0
    %1068 = vmatprep.subr.bf16.mxu0 0
    %1069 = vmatpush1.bf16.msra.mxu0 0
    %1070 = vmatprep.subr.bf16.mxu0 0
    %1071 = vmatpush1.bf16.msra.mxu0 0
    %1072 = vmatprep.subr.bf16.mxu0 0
    %1073 = vmatpush1.bf16.msra.mxu0 0
    %1074 = vmatprep.subr.bf16.mxu0 0
    %1075 = vmatpush1.bf16.msra.mxu0 0
    %1076 = vmatprep.subr.bf16.mxu0 0
    %1077 = vmatpush1.bf16.msra.mxu0 0
    %1078 = vmatprep.subr.bf16.mxu0 0
    %1079 = vmatpush1.bf16.msra.mxu0 0
    %1080 = vmatprep.subr.bf16.mxu0 0
    %1081 = vmatpush1.bf16.msra.mxu0 0
    %1082 = vmatprep.subr.bf16.mxu0 0
    %1083 = vmatpush1.bf16.msra.mxu0 0
    %1084 = vmatprep.subr.bf16.mxu0 0
    %1085 = vmatpush1.bf16.msra.mxu0 0
    %1086 = vmatprep.subr.bf16.mxu0 0
    %1087 = vmatpush1.bf16.msra.mxu0 0
    %1088 = vmatprep.subr.bf16.mxu0 0
    %1089 = vmatpush1.bf16.msra.mxu0 0
    %1090 = vmatprep.mubr.bf16.mxu0 0
    %1091 = vmatmul.mubr.bf16.gmra.mrb[0].mxu0 %v1053
    %v1092 = vpop.f32.mrb[0].mxu0
    %v1093 = vadd.f32 0.0, %v1092
    %v1094 = vpop.f32.mrb[0].mxu0
    %v1095 = vpop.f32.mrb[0].mxu0
    %v1096 = vpop.f32.mrb[0].mxu0
    %1097 = vdwg.mxu0
    %v1099 = vsel %vm149, %v766, 0
    %v1102 = vsel %vm778, %v774, 0
    %1104 = vmatprep.subr.bf16.mxu0 0
    %1105 = vmatpush1.bf16.msra.mxu0 %v1102
    %1106 = vmatprep.subr.bf16.mxu0 0
    %1107 = vmatpush1.bf16.msra.mxu0 0
    %1108 = vmatprep.subr.bf16.mxu0 0
    %1109 = vmatpush1.bf16.msra.mxu0 0
    %1110 = vmatprep.subr.bf16.mxu0 0
    %1111 = vmatpush1.bf16.msra.mxu0 0
    %1112 = vmatprep.subr.bf16.mxu0 0
    %1113 = vmatpush1.bf16.msra.mxu0 0
    %1114 = vmatprep.subr.bf16.mxu0 0
    %1115 = vmatpush1.bf16.msra.mxu0 0
    %1116 = vmatprep.subr.bf16.mxu0 0
    %1117 = vmatpush1.bf16.msra.mxu0 0
    %1118 = vmatprep.subr.bf16.mxu0 0
    %1119 = vmatpush1.bf16.msra.mxu0 0
    %1120 = vmatprep.subr.bf16.mxu0 0
    %1121 = vmatpush1.bf16.msra.mxu0 0
    %1122 = vmatprep.subr.bf16.mxu0 0
    %1123 = vmatpush1.bf16.msra.mxu0 0
    %1124 = vmatprep.subr.bf16.mxu0 0
    %1125 = vmatpush1.bf16.msra.mxu0 0
    %1126 = vmatprep.subr.bf16.mxu0 0
    %1127 = vmatpush1.bf16.msra.mxu0 0
    %1128 = vmatprep.subr.bf16.mxu0 0
    %1129 = vmatpush1.bf16.msra.mxu0 0
    %1130 = vmatprep.subr.bf16.mxu0 0
    %1131 = vmatpush1.bf16.msra.mxu0 0
    %1132 = vmatprep.subr.bf16.mxu0 0
    %1133 = vmatpush1.bf16.msra.mxu0 0
    %1134 = vmatprep.subr.bf16.mxu0 0
    %1135 = vmatpush1.bf16.msra.mxu0 0
    %1136 = vmatprep.mubr.bf16.mxu0 0
    %1137 = vmatmul.mubr.bf16.gmra.mrb[0].mxu0 %v1099
    %v1138 = vpop.f32.mrb[0].mxu0
    %v1139 = vadd.f32 0.0, %v1138
    %v1140 = vpop.f32.mrb[0].mxu0
    %v1141 = vpop.f32.mrb[0].mxu0
    %v1142 = vpop.f32.mrb[0].mxu0
    %1143 = vdwg.mxu0
    %v1144 = vadd.f32 %v751, %v817
    %v1145 = vadd.f32 %v752, %v863
    %v1146 = vadd.f32 %v753, %v909
    %v1147 = vadd.f32 %v754, %v955
    %v1148 = vadd.f32 %v755, %v1001
    %v1149 = vadd.f32 %v756, %v1047
    %v1150 = vadd.f32 %v757, %v1093
    %v1151 = vadd.f32 %v758, %v1139
    %1152 = vst.msk [vmem:[#allocation4] sm:$0xff] %vm149, %v1144
    %1153 = vst.msk [vmem:[#allocation4 + $0x8] sm:$0xff] %vm149, %v1145
    %1154 = vst.msk [vmem:[#allocation4 + $0x10] sm:$0xff] %vm149, %v1146
    %1155 = vst.msk [vmem:[#allocation4 + $0x18] sm:$0xff] %vm149, %v1147
    %1156 = vst.msk [vmem:[#allocation4 + $0x20] sm:$0xff] %vm149, %v1148
    %1157 = vst.msk [vmem:[#allocation4 + $0x28] sm:$0xff] %vm149, %v1149
    %1158 = vst.msk [vmem:[#allocation4 + $0x30] sm:$0xff] %vm149, %v1150
    %1159 = vst.msk [vmem:[#allocation4 + $0x38] sm:$0xff] %vm149, %v1151
    %1160 = vst.msk [vmem:[#allocation2] sm:$0xff] %vm694, %v550
    %1161 = vst.msk [vmem:[#allocation2 + $0x8] sm:$0xff] %vm694, %v551
    %1162 = vst.msk [vmem:[#allocation2 + $0x10] sm:$0xff] %vm694, %v552
    %1163 = vst.msk [vmem:[#allocation2 + $0x18] sm:$0xff] %vm694, %v553
    %1164 = vst.msk [vmem:[#allocation2 + $0x20] sm:$0xff] %vm694, %v554
    %1165 = vst.msk [vmem:[#allocation2 + $0x28] sm:$0xff] %vm694, %v555
    %1166 = vst.msk [vmem:[#allocation2 + $0x30] sm:$0xff] %vm694, %v556
    %1167 = vst.msk [vmem:[#allocation2 + $0x38] sm:$0xff] %vm694, %v557
    // Predicated region
    $region34: #{whisper_temperature_forward.62} parent=1 // pred_check
      %p1168 = pneg %p61
    $region35: #{whisper_temperature_forward.62} parent=1 // pred_check_branch
      %1170 = sbr.rel (%p1168) target = $region37
    $region36: #{whisper_temperature_forward.62} parent=1 // pred_region
      %v1171 = vld [vmem:[#allocation4] sm:$0xff]
      %v1172 = vld [vmem:[#allocation4 + $0x8] sm:$0xff]
      %v1173 = vld [vmem:[#allocation4 + $0x10] sm:$0xff]
      %v1174 = vld [vmem:[#allocation4 + $0x18] sm:$0xff]
      %v1175 = vld [vmem:[#allocation4 + $0x20] sm:$0xff]
      %v1176 = vld [vmem:[#allocation4 + $0x28] sm:$0xff]
      %v1177 = vld [vmem:[#allocation4 + $0x30] sm:$0xff]
      %v1178 = vld [vmem:[#allocation4 + $0x38] sm:$0xff]
      %v1179 = vld [vmem:[#allocation3] sm:$0xff]
      %v1180 = vld [vmem:[#allocation3 + $0x8] sm:$0xff]
      %v1181 = vld [vmem:[#allocation3 + $0x10] sm:$0xff]
      %v1182 = vld [vmem:[#allocation3 + $0x18] sm:$0xff]
      %v1183 = vld [vmem:[#allocation3 + $0x20] sm:$0xff]
      %v1184 = vld [vmem:[#allocation3 + $0x28] sm:$0xff]
      %v1185 = vld [vmem:[#allocation3 + $0x30] sm:$0xff]
      %v1186 = vld [vmem:[#allocation3 + $0x38] sm:$0xff]
      %v1187 = vrcp.pop %v1179
      %v1188 = vrcp.pop %v1180
      %v1189 = vrcp.pop %v1181
      %v1190 = vrcp.pop %v1182
      %v1191 = vrcp.pop %v1183
      %v1192 = vrcp.pop %v1184
      %v1193 = vrcp.pop %v1185
      %v1194 = vrcp.pop %v1186
      %1196 = vset.pattern.permute.xlu0 0
      %1197 = vperm.xlu0 %1196, %v1187
      %v1198 = vpop.permute.xlu0 %1197
      %1201 = vset.pattern.permute.xlu0 0
      %1202 = vperm.xlu0 %1201, %v1188
      %v1203 = vpop.permute.xlu0 %1202
      %1206 = vset.pattern.permute.xlu0 0
      %1207 = vperm.xlu0 %1206, %v1189
      %v1208 = vpop.permute.xlu0 %1207
      %1211 = vset.pattern.permute.xlu0 0
      %1212 = vperm.xlu0 %1211, %v1190
      %v1213 = vpop.permute.xlu0 %1212
      %1216 = vset.pattern.permute.xlu0 0
      %1217 = vperm.xlu0 %1216, %v1191
      %v1218 = vpop.permute.xlu0 %1217
      %1221 = vset.pattern.permute.xlu0 0
      %1222 = vperm.xlu0 %1221, %v1192
      %v1223 = vpop.permute.xlu0 %1222
      %1226 = vset.pattern.permute.xlu0 0
      %1227 = vperm.xlu0 %1226, %v1193
      %v1228 = vpop.permute.xlu0 %1227
      %1231 = vset.pattern.permute.xlu0 0
      %1232 = vperm.xlu0 %1231, %v1194
      %v1233 = vpop.permute.xlu0 %1232
      %v1235 = vmul.f32 %v1171, %v1198
      %v1236 = vmul.f32 %v1172, %v1203
      %v1237 = vmul.f32 %v1173, %v1208
      %v1238 = vmul.f32 %v1174, %v1213
      %v1239 = vmul.f32 %v1175, %v1218
      %v1240 = vmul.f32 %v1176, %v1223
      %v1241 = vmul.f32 %v1177, %v1228
      %v1242 = vmul.f32 %v1178, %v1233
      %v1243 = vpack.c.bf16 %v1235, %v1235
      %v1244 = vpack.c.bf16 %v1236, %v1236
      %v1245 = vpack.c.bf16 %v1237, %v1237
      %v1246 = vpack.c.bf16 %v1238, %v1238
      %v1247 = vpack.c.bf16 %v1239, %v1239
      %v1248 = vpack.c.bf16 %v1240, %v1240
      %v1249 = vpack.c.bf16 %v1241, %v1241
      %v1250 = vpack.c.bf16 %v1242, %v1242
      %vm1251 = vcmask 60416
      %1252 = vst.msk [vmem:[#allocation12] sm:$0xf] %vm1251, %v1243
      %1253 = vst.msk [vmem:[#allocation12 + $0x4] sm:$0xf] %vm1251, %v1244
      %1254 = vst.msk [vmem:[#allocation12 + $0x8] sm:$0xf] %vm1251, %v1245
      %1255 = vst.msk [vmem:[#allocation12 + $0xc] sm:$0xf] %vm1251, %v1246
      %1256 = vst.msk [vmem:[#allocation12 + $0x10] sm:$0xf] %vm1251, %v1247
      %1257 = vst.msk [vmem:[#allocation12 + $0x14] sm:$0xf] %vm1251, %v1248
      %1258 = vst.msk [vmem:[#allocation12 + $0x18] sm:$0xf] %vm1251, %v1249
      %1259 = vst.msk [vmem:[#allocation12 + $0x1c] sm:$0xf] %vm1251, %v1250
    $region37: #{whisper_temperature_forward.62} parent=1 // pred_fallthru
      _
    // Predicated region
    $region38: #{whisper_temperature_forward.62} parent=1 // pred_check
      _
    $region39: #{whisper_temperature_forward.62} parent=1 // pred_check_branch
      %1261 = sbr.rel (0) target = $region41
    $region40: #{whisper_temperature_forward.62} parent=1 // pred_region
      %s1263 = ssub.s32 512, 512
      %1264 = vsyncadd [#allocation8], %s1263
      %s1265 = sshll.u32 [#allocation12], 4
      %s1266 = int_to_ptr.vmem [resolvable:$true] %s1265
      %1271 = dma.vmem_to_hbm [thread:$0]  %s1266, 512, %s4, [#allocation8], 64, 64, 4
    $region41: #{whisper_temperature_forward.62} parent=1 // pred_fallthru
      _
    // Predicated region
    $region42: #{whisper_temperature_forward.62} parent=1 // pred_check
      _
    $region43: #{whisper_temperature_forward.62} parent=1 // pred_check_branch
      %1273 = sbr.rel (0) target = $region45
    $region44: #{whisper_temperature_forward.62} parent=1 // pred_region
      %1274 = dma.done [#allocation8], 512
    $region45: #{whisper_temperature_forward.62} parent=1 // pred_fallthru
      _
    %1275 = vsyncpa [#allocation7], 1
    %1276 = vsyncpa [#allocation10], 1
    %1277 = vsyncpa [#allocation8], 1

// kernel: whisper_temperature_forward.70
$region0: #{whisper_temperature_forward.70}
  #allocation0 [shape = 'u32[]', space=smem, size = 0x4, offset = 0x4, fixed_abs, tag = 'smem constant byte address 0x4 - core index']
  #allocation1 [shape = 'u32[144,128]{1,0:T(1,128)}', space=vmem, size = 0x12000, scoped, tag = 'internal scratch']
  %s0 = inlined_call_operand.hbm [shape: bf16[16,32], index: 0, kind: input, shape index: {}]
  %s1 = inlined_call_operand.hbm [shape: bf16[32,128], index: 1, kind: input, shape index: {}]
  %s2 = inlined_call_operand.hbm [shape: f32[1,128], index: 2, kind: input, shape index: {}]
  %s3 = inlined_call_operand.hbm [shape: bf16[16,128], index: 3, kind: output, shape index: {}]
  %s4 = sld [smem:[#allocation0]]
  $region34: #{whisper_temperature_forward.70} parent=0
    _
  %s6 = ssub.s32 1, %s4
  %s7 = scalar_select 0, %s6, %s4
  $region1: #{whisper_temperature_forward.70} parent=0
    #allocation2 [shape = 'u8[4096]{0}', space=vmem, size = 0x1000, scoped, tag = 'input window, operand 0, single buffered']
    #allocation3 [shape = 's32[1]{0}', space=sflag, size = 0x4, scoped, tag = 'scoped memory for whisper_temperature_forward.70']
    #allocation4 [shape = 's32[1]{0}', space=sflag, size = 0x4, scoped, tag = 'scoped memory for whisper_temperature_forward.70']
    #allocation5 [shape = 'u8[8192]{0}', space=vmem, size = 0x2000, scoped, tag = 'input window, operand 1, single buffered']
    #allocation6 [shape = 's32[1]{0}', space=sflag, size = 0x4, scoped, tag = 'scoped memory for whisper_temperature_forward.70']
    #allocation7 [shape = 'u8[512]{0}', space=vmem, size = 0x400, scoped, tag = 'input window, operand 2, single buffered']
    #allocation8 [shape = 'u8[4096]{0}', space=vmem, size = 0x1000, scoped, tag = 'output window, operand 0, single buffered']
    %8 = vsyncpa [#allocation3], 0
    %9 = vsyncpa [#allocation6], 0
    %10 = vsyncpa [#allocation4], 0
    // Predicated region
    $region2: #{whisper_temperature_forward.70} parent=1 // pred_check
      _
    $region3: #{whisper_temperature_forward.70} parent=1 // pred_check_branch
      %12 = sbr.rel (0) target = $region5
    $region4: #{whisper_temperature_forward.70} parent=1 // pred_region
      %s14 = ssub.s32 128, 128
      %15 = vsyncadd [#allocation3], %s14
      %s16 = sshll.u32 [#allocation2], 4
      %s17 = int_to_ptr.vmem [resolvable:$true] %s16
      %22 = dma.hbm_to_vmem [thread:$0]  %s0, 128, %s17, [#allocation3], 64, 64, 4
    $region5: #{whisper_temperature_forward.70} parent=1 // pred_fallthru
      _
    // Predicated region
    $region6: #{whisper_temperature_forward.70} parent=1 // pred_check
      _
    $region7: #{whisper_temperature_forward.70} parent=1 // pred_check_branch
      %24 = sbr.rel (0) target = $region9
    $region8: #{whisper_temperature_forward.70} parent=1 // pred_region
      %s26 = ssub.s32 256, 256
      %27 = vsyncadd [#allocation6], %s26
      %s28 = sshll.u32 [#allocation5], 4
      %s29 = int_to_ptr.vmem [resolvable:$true] %s28
      %34 = dma.hbm_to_vmem [thread:$0]  %s1, 256, %s29, [#allocation6], 64, 64, 4
    $region9: #{whisper_temperature_forward.70} parent=1 // pred_fallthru
      _
    // Predicated region
    $region10: #{whisper_temperature_forward.70} parent=1 // pred_check
      _
    $region11: #{whisper_temperature_forward.70} parent=1 // pred_check_branch
      %36 = sbr.rel (0) target = $region13
    $region12: #{whisper_temperature_forward.70} parent=1 // pred_region
      %s38 = ssub.s32 16, 16
      %39 = vsyncadd [#allocation6], %s38
      %s41 = sshll.u32 [#allocation7], 4
      %s42 = int_to_ptr.vmem [resolvable:$true] %s41
      %44 = dma.hbm_to_vmem [thread:$0]  %s2, 16, %s42, [#allocation6]
    $region13: #{whisper_temperature_forward.70} parent=1 // pred_fallthru
      _
    // Predicated region
    $region14: #{whisper_temperature_forward.70} parent=1 // pred_check
      _
    $region15: #{whisper_temperature_forward.70} parent=1 // pred_check_branch
      %46 = sbr.rel (0) target = $region17
    $region16: #{whisper_temperature_forward.70} parent=1 // pred_region
      %47 = dma.done [#allocation3], 128
    $region17: #{whisper_temperature_forward.70} parent=1 // pred_fallthru
      _
    // Predicated region
    $region18: #{whisper_temperature_forward.70} parent=1 // pred_check
      _
    $region19: #{whisper_temperature_forward.70} parent=1 // pred_check_branch
      %49 = sbr.rel (0) target = $region21
    $region20: #{whisper_temperature_forward.70} parent=1 // pred_region
      %50 = dma.done [#allocation6], 256
    $region21: #{whisper_temperature_forward.70} parent=1 // pred_fallthru
      _
    // Predicated region
    $region22: #{whisper_temperature_forward.70} parent=1 // pred_check
      _
    $region23: #{whisper_temperature_forward.70} parent=1 // pred_check_branch
      %52 = sbr.rel (0) target = $region25
    $region24: #{whisper_temperature_forward.70} parent=1 // pred_region
      %53 = dma.done [#allocation6], 16
    $region25: #{whisper_temperature_forward.70} parent=1 // pred_fallthru
      _
    %v55 = vld [vmem:[#allocation2] sm:$0xf]
    %v56 = vld [vmem:[#allocation2 + $0x4] sm:$0xf]
    %v57 = vld [vmem:[#allocation5] sm:$0xf]
    %v58 = vld [vmem:[#allocation5 + $0x4] sm:$0xf]
    %v59 = vld [vmem:[#allocation5 + $0x8] sm:$0xf]
    %v60 = vld [vmem:[#allocation5 + $0xc] sm:$0xf]
    %v61 = vld [vmem:[#allocation7] sm:$0x1]
    %v63 = vlaneseq
    %v64 = vshrl.u32 %v63, 7
    %v65 = vsub.s32 0, %v64
    %v66 = vrot.slane %v61, %v65
    %v70 = vunpack.c.l.b16 %v55
    %v71 = vunpack.c.l.b16 %v56
    %v72 = vpack.c.b16 %v71, %v70
    %v77 = vunpack.c.l.b16 %v57
    %v78 = vunpack.c.l.b16 %v58
    %v79 = vunpack.c.l.b16 %v59
    %v80 = vunpack.c.l.b16 %v60
    %v81 = vpack.c.b16 %v78, %v77
    %v82 = vpack.c.b16 %v80, %v79
    %vm85 = vcmask 261120
    %v87 = vsel %vm85, %v72, 0
    %89 = vmatprep.subr.bf16.mxu0 0
    %90 = vmatpush1.bf16.msra.mxu0 %v81
    %91 = vmatprep.subr.bf16.mxu0 0
    %92 = vmatpush1.bf16.msra.mxu0 %v82
    %93 = vmatprep.subr.bf16.mxu0 0
    %94 = vmatpush1.bf16.msra.mxu0 0
    %95 = vmatprep.subr.bf16.mxu0 0
    %96 = vmatpush1.bf16.msra.mxu0 0
    %97 = vmatprep.subr.bf16.mxu0 0
    %98 = vmatpush1.bf16.msra.mxu0 0
    %99 = vmatprep.subr.bf16.mxu0 0
    %100 = vmatpush1.bf16.msra.mxu0 0
    %101 = vmatprep.subr.bf16.mxu0 0
    %102 = vmatpush1.bf16.msra.mxu0 0
    %103 = vmatprep.subr.bf16.mxu0 0
    %104 = vmatpush1.bf16.msra.mxu0 0
    %105 = vmatprep.subr.bf16.mxu0 0
    %106 = vmatpush1.bf16.msra.mxu0 0
    %107 = vmatprep.subr.bf16.mxu0 0
    %108 = vmatpush1.bf16.msra.mxu0 0
    %109 = vmatprep.subr.bf16.mxu0 0
    %110 = vmatpush1.bf16.msra.mxu0 0
    %111 = vmatprep.subr.bf16.mxu0 0
    %112 = vmatpush1.bf16.msra.mxu0 0
    %113 = vmatprep.subr.bf16.mxu0 0
    %114 = vmatpush1.bf16.msra.mxu0 0
    %115 = vmatprep.subr.bf16.mxu0 0
    %116 = vmatpush1.bf16.msra.mxu0 0
    %117 = vmatprep.subr.bf16.mxu0 0
    %118 = vmatpush1.bf16.msra.mxu0 0
    %119 = vmatprep.subr.bf16.mxu0 0
    %120 = vmatpush1.bf16.msra.mxu0 0
    %121 = vmatprep.mubr.bf16.mxu0 0
    %122 = vmatmul.mubr.bf16.gmra.mrb[0].mxu0 %v87
    %v123 = vpop.f32.mrb[0].mxu0
    %v124 = vadd.f32 %v66, %v123
    %v125 = vpop.f32.mrb[0].mxu0
    %v126 = vpop.f32.mrb[0].mxu0
    %v127 = vadd.f32 %v66, %v126
    %v128 = vpop.f32.mrb[0].mxu0
    %129 = vdwg.mxu0
    %v130 = vmul.f32 %v124, %v124
    %v131 = vmul.f32 %v127, %v127
    %v132 = vmul.f32 %v124, %v130
    %v133 = vmul.f32 %v127, %v131
    %v134 = vmul.f32 %v132, 0.044715
    %v135 = vmul.f32 %v133, 0.044715
    %v136 = vadd.f32 %v124, %v134
    %v137 = vadd.f32 %v127, %v135
    %v138 = vmul.f32 %v136, 0.7978846
    %v139 = vmul.f32 %v137, 0.7978846
    %v140 = vtanh.pop %v138
    %v141 = vtanh.pop %v139
    %v142 = vadd.f32 %v140, 1.0
    %v143 = vadd.f32 %v141, 1.0
    %v144 = vmul.f32 %v142, 0.5
    %v145 = vmul.f32 %v143, 0.5
    %v146 = vmul.f32 %v124, %v144
    %v147 = vmul.f32 %v127, %v145
    %v148 = vpack.c.bf16 %v147, %v146
    %v150 = vunpack.c.l.b16 %v148
    %v151 = vunpack.c.h.b16 %v148
    %v152 = vpack.c.b16 %v150, %v150
    %v153 = vpack.c.b16 %v151, %v151
    %156 = vst [vmem:[#allocation8] sm:$0xf] %v152
    %157 = vst [vmem:[#allocation8 + $0x4] sm:$0xf] %v153
    // Predicated region
    $region26: #{whisper_temperature_forward.70} parent=1 // pred_check
      _
    $region27: #{whisper_temperature_forward.70} parent=1 // pred_check_branch
      %159 = sbr.rel (0) target = $region29
    $region28: #{whisper_temperature_forward.70} parent=1 // pred_region
      %s161 = ssub.s32 128, 128
      %162 = vsyncadd [#allocation4], %s161
      %s163 = sshll.u32 [#allocation8], 4
      %s164 = int_to_ptr.vmem [resolvable:$true] %s163
      %169 = dma.vmem_to_hbm [thread:$0]  %s164, 128, %s3, [#allocation4], 64, 64, 4
    $region29: #{whisper_temperature_forward.70} parent=1 // pred_fallthru
      _
    // Predicated region
    $region30: #{whisper_temperature_forward.70} parent=1 // pred_check
      _
    $region31: #{whisper_temperature_forward.70} parent=1 // pred_check_branch
      %171 = sbr.rel (0) target = $region33
    $region32: #{whisper_temperature_forward.70} parent=1 // pred_region
      %172 = dma.done [#allocation4], 128
    $region33: #{whisper_temperature_forward.70} parent=1 // pred_fallthru
      _
    %173 = vsyncpa [#allocation3], 1
    %174 = vsyncpa [#allocation6], 1
    %175 = vsyncpa [#allocation4], 1

// kernel: whisper_temperature_forward.71
$region0: #{whisper_temperature_forward.71}
  #allocation0 [shape = 'u32[]', space=smem, size = 0x4, offset = 0x4, fixed_abs, tag = 'smem constant byte address 0x4 - core index']
  #allocation1 [shape = 'u32[144,128]{1,0:T(1,128)}', space=vmem, size = 0x12000, scoped, tag = 'internal scratch']
  %s0 = inlined_call_operand.hbm [shape: bf16[16,128], index: 0, kind: input, shape index: {}]
  %s1 = inlined_call_operand.hbm [shape: bf16[128,32], index: 1, kind: input, shape index: {}]
  %s2 = inlined_call_operand.hbm [shape: f32[1,32], index: 2, kind: input, shape index: {}]
  %s3 = inlined_call_operand.hbm [shape: f32[16,32], index: 3, kind: input, shape index: {}]
  %s4 = inlined_call_operand.hbm [shape: f32[16,32], index: 4, kind: output, shape index: {}]
  %s5 = sld [smem:[#allocation0]]
  $region42: #{whisper_temperature_forward.71} parent=0
    _
  %s7 = ssub.s32 1, %s5
  %s8 = scalar_select 0, %s7, %s5
  $region1: #{whisper_temperature_forward.71} parent=0
    #allocation2 [shape = 'u8[4096]{0}', space=vmem, size = 0x1000, scoped, tag = 'input window, operand 0, single buffered']
    #allocation3 [shape = 's32[1]{0}', space=sflag, size = 0x4, scoped, tag = 'scoped memory for whisper_temperature_forward.71']
    #allocation4 [shape = 's32[1]{0}', space=sflag, size = 0x4, scoped, tag = 'scoped memory for whisper_temperature_forward.71']
    #allocation5 [shape = 'u8[32768]{0}', space=vmem, size = 0x8000, scoped, tag = 'input window, operand 1, single buffered']
    #allocation6 [shape = 's32[1]{0}', space=sflag, size = 0x4, scoped, tag = 'scoped memory for whisper_temperature_forward.71']
    #allocation7 [shape = 'u8[512]{0}', space=vmem, size = 0x400, scoped, tag = 'input window, operand 2, single buffered']
    #allocation8 [shape = 'u8[8192]{0}', space=vmem, size = 0x2000, scoped, tag = 'input window, operand 3, single buffered']
    #allocation9 [shape = 's32[1]{0}', space=sflag, size = 0x4, scoped, tag = 'scoped memory for whisper_temperature_forward.71']
    #allocation10 [shape = 'u8[8192]{0}', space=vmem, size = 0x2000, scoped, tag = 'output window, operand 0, single buffered']
    %9 = vsyncpa [#allocation3], 0
    %10 = vsyncpa [#allocation6], 0
    %11 = vsyncpa [#allocation9], 0
    %12 = vsyncpa [#allocation4], 0
    // Predicated region
    $region2: #{whisper_temperature_forward.71} parent=1 // pred_check
      _
    $region3: #{whisper_temperature_forward.71} parent=1 // pred_check_branch
      %14 = sbr.rel (0) target = $region5
    $region4: #{whisper_temperature_forward.71} parent=1 // pred_region
      %s16 = ssub.s32 128, 128
      %17 = vsyncadd [#allocation3], %s16
      %s18 = sshll.u32 [#allocation2], 4
      %s19 = int_to_ptr.vmem [resolvable:$true] %s18
      %24 = dma.hbm_to_vmem [thread:$0]  %s0, 128, %s19, [#allocation3], 64, 64, 4
    $region5: #{whisper_temperature_forward.71} parent=1 // pred_fallthru
      _
    // Predicated region
    $region6: #{whisper_temperature_forward.71} parent=1 // pred_check
      _
    $region7: #{whisper_temperature_forward.71} parent=1 // pred_check_branch
      %26 = sbr.rel (0) target = $region9
    $region8: #{whisper_temperature_forward.71} parent=1 // pred_region
      %s28 = ssub.s32 1024, 1024
      %29 = vsyncadd [#allocation6], %s28
      %s30 = sshll.u32 [#allocation5], 4
      %s31 = int_to_ptr.vmem [resolvable:$true] %s30
      %36 = dma.hbm_to_vmem [thread:$0]  %s1, 1024, %s31, [#allocation6], 64, 64, 4
    $region9: #{whisper_temperature_forward.71} parent=1 // pred_fallthru
      _
    // Predicated region
    $region10: #{whisper_temperature_forward.71} parent=1 // pred_check
      _
    $region11: #{whisper_temperature_forward.71} parent=1 // pred_check_branch
      %38 = sbr.rel (0) target = $region13
    $region12: #{whisper_temperature_forward.71} parent=1 // pred_region
      %s40 = ssub.s32 16, 16
      %41 = vsyncadd [#allocation6], %s40
      %s43 = sshll.u32 [#allocation7], 4
      %s44 = int_to_ptr.vmem [resolvable:$true] %s43
      %46 = dma.hbm_to_vmem [thread:$0]  %s2, 16, %s44, [#allocation6]
    $region13: #{whisper_temperature_forward.71} parent=1 // pred_fallthru
      _
    // Predicated region
    $region14: #{whisper_temperature_forward.71} parent=1 // pred_check
      _
    $region15: #{whisper_temperature_forward.71} parent=1 // pred_check_branch
      %48 = sbr.rel (0) target = $region17
    $region16: #{whisper_temperature_forward.71} parent=1 // pred_region
      %s50 = ssub.s32 256, 256
      %51 = vsyncadd [#allocation9], %s50
      %s52 = sshll.u32 [#allocation8], 4
      %s53 = int_to_ptr.vmem [resolvable:$true] %s52
      %58 = dma.hbm_to_vmem [thread:$0]  %s3, 256, %s53, [#allocation9], 128, 128, 8
    $region17: #{whisper_temperature_forward.71} parent=1 // pred_fallthru
      _
    // Predicated region
    $region18: #{whisper_temperature_forward.71} parent=1 // pred_check
      _
    $region19: #{whisper_temperature_forward.71} parent=1 // pred_check_branch
      %60 = sbr.rel (0) target = $region21
    $region20: #{whisper_temperature_forward.71} parent=1 // pred_region
      %61 = dma.done [#allocation3], 128
    $region21: #{whisper_temperature_forward.71} parent=1 // pred_fallthru
      _
    // Predicated region
    $region22: #{whisper_temperature_forward.71} parent=1 // pred_check
      _
    $region23: #{whisper_temperature_forward.71} parent=1 // pred_check_branch
      %63 = sbr.rel (0) target = $region25
    $region24: #{whisper_temperature_forward.71} parent=1 // pred_region
      %64 = dma.done [#allocation6], 1024
    $region25: #{whisper_temperature_forward.71} parent=1 // pred_fallthru
      _
    // Predicated region
    $region26: #{whisper_temperature_forward.71} parent=1 // pred_check
      _
    $region27: #{whisper_temperature_forward.71} parent=1 // pred_check_branch
      %66 = sbr.rel (0) target = $region29
    $region28: #{whisper_temperature_forward.71} parent=1 // pred_region
      %67 = dma.done [#allocation6], 16
    $region29: #{whisper_temperature_forward.71} parent=1 // pred_fallthru
      _
    // Predicated region
    $region30: #{whisper_temperature_forward.71} parent=1 // pred_check
      _
    $region31: #{whisper_temperature_forward.71} parent=1 // pred_check_branch
      %69 = sbr.rel (0) target = $region33
    $region32: #{whisper_temperature_forward.71} parent=1 // pred_region
      %70 = dma.done [#allocation9], 256
    $region33: #{whisper_temperature_forward.71} parent=1 // pred_fallthru
      _
    %v72 = vld [vmem:[#allocation2] sm:$0xf]
    %v73 = vld [vmem:[#allocation2 + $0x4] sm:$0xf]
    %v74 = vld [vmem:[#allocation5] sm:$0xf]
    %v75 = vld [vmem:[#allocation5 + $0x4] sm:$0xf]
    %v76 = vld [vmem:[#allocation5 + $0x8] sm:$0xf]
    %v77 = vld [vmem:[#allocation5 + $0xc] sm:$0xf]
    %v78 = vld [vmem:[#allocation5 + $0x10] sm:$0xf]
    %v79 = vld [vmem:[#allocation5 + $0x14] sm:$0xf]
    %v80 = vld [vmem:[#allocation5 + $0x18] sm:$0xf]
    %v81 = vld [vmem:[#allocation5 + $0x1c] sm:$0xf]
    %v82 = vld [vmem:[#allocation5 + $0x20] sm:$0xf]
    %v83 = vld [vmem:[#allocation5 + $0x24] sm:$0xf]
    %v84 = vld [vmem:[#allocation5 + $0x28] sm:$0xf]
    %v85 = vld [vmem:[#allocation5 + $0x2c] sm:$0xf]
    %v86 = vld [vmem:[#allocation5 + $0x30] sm:$0xf]
    %v87 = vld [vmem:[#allocation5 + $0x34] sm:$0xf]
    %v88 = vld [vmem:[#allocation5 + $0x38] sm:$0xf]
    %v89 = vld [vmem:[#allocation5 + $0x3c] sm:$0xf]
    %v90 = vld [vmem:[#allocation7] sm:$0x1]
    %v92 = vlaneseq
    %v93 = vshrl.u32 %v92, 7
    %v94 = vsub.s32 0, %v93
    %v95 = vrot.slane %v90, %v94
    %v99 = vunpack.c.l.b16 %v72
    %v100 = vunpack.c.l.b16 %v73
    %v101 = vpack.c.b16 %v100, %v99
    %v119 = vunpack.c.l.b16 %v74
    %v120 = vunpack.c.l.b16 %v75
    %v121 = vunpack.c.l.b16 %v76
    %v122 = vunpack.c.l.b16 %v77
    %v123 = vunpack.c.l.b16 %v78
    %v124 = vunpack.c.l.b16 %v79
    %v125 = vunpack.c.l.b16 %v80
    %v126 = vunpack.c.l.b16 %v81
    %v127 = vunpack.c.l.b16 %v82
    %v128 = vunpack.c.l.b16 %v83
    %v129 = vunpack.c.l.b16 %v84
    %v130 = vunpack.c.l.b16 %v85
    %v131 = vunpack.c.l.b16 %v86
    %v132 = vunpack.c.l.b16 %v87
    %v133 = vunpack.c.l.b16 %v88
    %v134 = vunpack.c.l.b16 %v89
    %v135 = vpack.c.b16 %v120, %v119
    %v136 = vpack.c.b16 %v122, %v121
    %v137 = vpack.c.b16 %v124, %v123
    %v138 = vpack.c.b16 %v126, %v125
    %v139 = vpack.c.b16 %v128, %v127
    %v140 = vpack.c.b16 %v130, %v129
    %v141 = vpack.c.b16 %v132, %v131
    %v142 = vpack.c.b16 %v134, %v133
    %151 = vmatprep.subr.bf16.mxu0 0
    %152 = vmatpush1.bf16.msra.mxu0 %v135
    %153 = vmatprep.subr.bf16.mxu0 0
    %154 = vmatpush1.bf16.msra.mxu0 %v136
    %155 = vmatprep.subr.bf16.mxu0 0
    %156 = vmatpush1.bf16.msra.mxu0 %v137
    %157 = vmatprep.subr.bf16.mxu0 0
    %158 = vmatpush1.bf16.msra.mxu0 %v138
    %159 = vmatprep.subr.bf16.mxu0 0
    %160 = vmatpush1.bf16.msra.mxu0 %v139
    %161 = vmatprep.subr.bf16.mxu0 0
    %162 = vmatpush1.bf16.msra.mxu0 %v140
    %163 = vmatprep.subr.bf16.mxu0 0
    %164 = vmatpush1.bf16.msra.mxu0 %v141
    %165 = vmatprep.subr.bf16.mxu0 0
    %166 = vmatpush1.bf16.msra.mxu0 %v142
    %167 = vmatprep.subr.bf16.mxu0 0
    %168 = vmatpush1.bf16.msra.mxu0 0
    %169 = vmatprep.subr.bf16.mxu0 0
    %170 = vmatpush1.bf16.msra.mxu0 0
    %171 = vmatprep.subr.bf16.mxu0 0
    %172 = vmatpush1.bf16.msra.mxu0 0
    %173 = vmatprep.subr.bf16.mxu0 0
    %174 = vmatpush1.bf16.msra.mxu0 0
    %175 = vmatprep.subr.bf16.mxu0 0
    %176 = vmatpush1.bf16.msra.mxu0 0
    %177 = vmatprep.subr.bf16.mxu0 0
    %178 = vmatpush1.bf16.msra.mxu0 0
    %179 = vmatprep.subr.bf16.mxu0 0
    %180 = vmatpush1.bf16.msra.mxu0 0
    %181 = vmatprep.subr.bf16.mxu0 0
    %182 = vmatpush1.bf16.msra.mxu0 0
    %183 = vmatprep.mubr.bf16.mxu0 0
    %184 = vmatmul.mubr.bf16.gmra.mrb[0].mxu0 %v101
    %v185 = vpop.f32.mrb[0].mxu0
    %v186 = vadd.f32 %v95, %v185
    %v187 = vpop.f32.mrb[0].mxu0
    %v188 = vpop.f32.mrb[0].mxu0
    %v189 = vadd.f32 %v95, %v188
    %v190 = vpop.f32.mrb[0].mxu0
    %191 = vdwg.mxu0
    %v192 = vld [vmem:[#allocation8] sm:$0xff]
    %v193 = vld [vmem:[#allocation8 + $0x8] sm:$0xff]
    %v194 = vadd.f32 %v186, %v192
    %v195 = vadd.f32 %v189, %v193
    %vm196 = vcmask 261120
    %197 = vst.msk [vmem:[#allocation10] sm:$0xff] %vm196, %v194
    %198 = vst.msk [vmem:[#allocation10 + $0x8] sm:$0xff] %vm196, %v195
    // Predicated region
    $region34: #{whisper_temperature_forward.71} parent=1 // pred_check
      _
    $region35: #{whisper_temperature_forward.71} parent=1 // pred_check_branch
      %200 = sbr.rel (0) target = $region37
    $region36: #{whisper_temperature_forward.71} parent=1 // pred_region
      %s202 = ssub.s32 256, 256
      %203 = vsyncadd [#allocation4], %s202
      %s204 = sshll.u32 [#allocation10], 4
      %s205 = int_to_ptr.vmem [resolvable:$true] %s204
      %210 = dma.vmem_to_hbm [thread:$0]  %s205, 256, %s4, [#allocation4], 128, 128, 8
    $region37: #{whisper_temperature_forward.71} parent=1 // pred_fallthru
      _
    // Predicated region
    $region38: #{whisper_temperature_forward.71} parent=1 // pred_check
      _
    $region39: #{whisper_temperature_forward.71} parent=1 // pred_check_branch
      %212 = sbr.rel (0) target = $region41
    $region40: #{whisper_temperature_forward.71} parent=1 // pred_region
      %213 = dma.done [#allocation4], 256
    $region41: #{whisper_temperature_forward.71} parent=1 // pred_fallthru
      _
    %214 = vsyncpa [#allocation3], 1
    %215 = vsyncpa [#allocation6], 1
    %216 = vsyncpa [#allocation9], 1
    %217 = vsyncpa [#allocation4], 1

// kernel: whisper_temperature_forward.67
$region0: #{whisper_temperature_forward.67}
  #allocation0 [shape = 'u32[]', space=smem, size = 0x4, offset = 0x4, fixed_abs, tag = 'smem constant byte address 0x4 - core index']
  #allocation1 [shape = 'u32[144,128]{1,0:T(1,128)}', space=vmem, size = 0x12000, scoped, tag = 'internal scratch']
  #allocation2 [shape = 'f32[8,8,1]{2,1,0:T(8,128)}', space=vmem, size = 0x8000, scoped, tag = 'scratch operand']
  #allocation3 [shape = 'f32[8,8,1]{2,1,0:T(8,128)}', space=vmem, size = 0x8000, scoped, tag = 'scratch operand']
  #allocation4 [shape = 'f32[8,8,8]{2,1,0:T(8,128)}', space=vmem, size = 0x8000, scoped, tag = 'scratch operand']
  #allocation5 [shape = 'f32[1]{0:T(128)S(6)}', space=smem, size = 0x200, scoped, tag = 'scoped memory for whisper_temperature_forward.67']
  %s0 = inlined_call_operand.hbm [shape: bf16[8,8,8], index: 0, kind: input, shape index: {}]
  %s1 = inlined_call_operand.hbm [shape: bf16[8,16,8], index: 1, kind: input, shape index: {}]
  %s2 = inlined_call_operand.hbm [shape: bf16[8,16,8], index: 2, kind: input, shape index: {}]
  %s3 = inlined_call_operand.<no memory space> [shape: f32[1], index: 3, kind: input, shape index: {}]
  %s4 = inlined_call_operand.hbm [shape: bf16[8,8,8], index: 4, kind: output, shape index: {}]
  %s5 = sld [smem:[#allocation0]]
  $region46: #{whisper_temperature_forward.67} parent=0
    _
  %s7 = ssub.s32 1, %s5
  %s8 = scalar_select 0, %s7, %s5
  %9 = sst [smem:[#allocation5]] %s3
  $region1: #{whisper_temperature_forward.67} parent=0
    #allocation6 [shape = 'u8[16384]{0}', space=vmem, size = 0x4000, scoped, tag = 'input window, operand 0, single buffered']
    #allocation7 [shape = 's32[1]{0}', space=sflag, size = 0x4, scoped, tag = 'scoped memory for whisper_temperature_forward.67']
    #allocation8 [shape = 's32[1]{0}', space=sflag, size = 0x4, scoped, tag = 'scoped memory for whisper_temperature_forward.67']
    #allocation9 [shape = 'u8[32768]{0}', space=vmem, size = 0x8000, scoped, tag = 'input window, operand 1, single buffered']
    #allocation10 [shape = 's32[1]{0}', space=sflag, size = 0x4, scoped, tag = 'scoped memory for whisper_temperature_forward.67']
    #allocation11 [shape = 'u8[32768]{0}', space=vmem, size = 0x8000, scoped, tag = 'input window, operand 2, single buffered']
    #allocation12 [shape = 'u8[16384]{0}', space=vmem, size = 0x4000, scoped, tag = 'output window, operand 0, single buffered']
    %10 = vsyncpa [#allocation7], 0
    %11 = vsyncpa [#allocation10], 0
    %12 = vsyncpa [#allocation8], 0
    // Predicated region
    $region2: #{whisper_temperature_forward.67} parent=1 // pred_check
      _
    $region3: #{whisper_temperature_forward.67} parent=1 // pred_check_branch
      %14 = sbr.rel (0) target = $region5
    $region4: #{whisper_temperature_forward.67} parent=1 // pred_region
      %s16 = ssub.s32 512, 512
      %17 = vsyncadd [#allocation7], %s16
      %s18 = sshll.u32 [#allocation6], 4
      %s19 = int_to_ptr.vmem [resolvable:$true] %s18
      %24 = dma.hbm_to_vmem [thread:$0]  %s0, 512, %s19, [#allocation7], 64, 64, 4
    $region5: #{whisper_temperature_forward.67} parent=1 // pred_fallthru
      _
    // Predicated region
    $region6: #{whisper_temperature_forward.67} parent=1 // pred_check
      _
    $region7: #{whisper_temperature_forward.67} parent=1 // pred_check_branch
      %26 = sbr.rel (0) target = $region9
    $region8: #{whisper_temperature_forward.67} parent=1 // pred_region
      %s28 = ssub.s32 1024, 1024
      %29 = vsyncadd [#allocation10], %s28
      %s30 = sshll.u32 [#allocation9], 4
      %s31 = int_to_ptr.vmem [resolvable:$true] %s30
      %36 = dma.hbm_to_vmem [thread:$0]  %s1, 1024, %s31, [#allocation10], 64, 64, 4
    $region9: #{whisper_temperature_forward.67} parent=1 // pred_fallthru
      _
    // Predicated region
    $region10: #{whisper_temperature_forward.67} parent=1 // pred_check
      _
    $region11: #{whisper_temperature_forward.67} parent=1 // pred_check_branch
      %38 = sbr.rel (0) target = $region13
    $region12: #{whisper_temperature_forward.67} parent=1 // pred_region
      %s40 = ssub.s32 1024, 1024
      %41 = vsyncadd [#allocation10], %s40
      %s42 = sshll.u32 [#allocation11], 4
      %s43 = int_to_ptr.vmem [resolvable:$true] %s42
      %48 = dma.hbm_to_vmem [thread:$0]  %s2, 1024, %s43, [#allocation10], 64, 64, 4
    $region13: #{whisper_temperature_forward.67} parent=1 // pred_fallthru
      _
    // Predicated region
    $region14: #{whisper_temperature_forward.67} parent=1 // pred_check
      _
    $region15: #{whisper_temperature_forward.67} parent=1 // pred_check_branch
      %50 = sbr.rel (0) target = $region17
    $region16: #{whisper_temperature_forward.67} parent=1 // pred_region
      _
    $region17: #{whisper_temperature_forward.67} parent=1 // pred_fallthru
      _
    // Predicated region
    $region18: #{whisper_temperature_forward.67} parent=1 // pred_check
      _
    $region19: #{whisper_temperature_forward.67} parent=1 // pred_check_branch
      %52 = sbr.rel (0) target = $region21
    $region20: #{whisper_temperature_forward.67} parent=1 // pred_region
      %53 = dma.done [#allocation7], 512
    $region21: #{whisper_temperature_forward.67} parent=1 // pred_fallthru
      _
    // Predicated region
    $region22: #{whisper_temperature_forward.67} parent=1 // pred_check
      _
    $region23: #{whisper_temperature_forward.67} parent=1 // pred_check_branch
      %55 = sbr.rel (0) target = $region25
    $region24: #{whisper_temperature_forward.67} parent=1 // pred_region
      %56 = dma.done [#allocation10], 1024
    $region25: #{whisper_temperature_forward.67} parent=1 // pred_fallthru
      _
    // Predicated region
    $region26: #{whisper_temperature_forward.67} parent=1 // pred_check
      _
    $region27: #{whisper_temperature_forward.67} parent=1 // pred_check_branch
      %58 = sbr.rel (0) target = $region29
    $region28: #{whisper_temperature_forward.67} parent=1 // pred_region
      %59 = dma.done [#allocation10], 1024
    $region29: #{whisper_temperature_forward.67} parent=1 // pred_fallthru
      _
    %p61 = scmp.eq.s32.totalorder 0, 0
    // Predicated region
    $region30: #{whisper_temperature_forward.67} parent=1 // pred_check
      %p62 = pneg %p61
    $region31: #{whisper_temperature_forward.67} parent=1 // pred_check_branch
      %64 = sbr.rel (%p62) target = $region33
    $region32: #{whisper_temperature_forward.67} parent=1 // pred_region
      %vm65 = vcmask 7168
      %66 = vst.msk [vmem:[#allocation2] sm:$0xff] %vm65, -1e+30
      %67 = vst.msk [vmem:[#allocation2 + $0x8] sm:$0xff] %vm65, -1e+30
      %68 = vst.msk [vmem:[#allocation2 + $0x10] sm:$0xff] %vm65, -1e+30
      %69 = vst.msk [vmem:[#allocation2 + $0x18] sm:$0xff] %vm65, -1e+30
      %70 = vst.msk [vmem:[#allocation2 + $0x20] sm:$0xff] %vm65, -1e+30
      %71 = vst.msk [vmem:[#allocation2 + $0x28] sm:$0xff] %vm65, -1e+30
      %72 = vst.msk [vmem:[#allocation2 + $0x30] sm:$0xff] %vm65, -1e+30
      %73 = vst.msk [vmem:[#allocation2 + $0x38] sm:$0xff] %vm65, -1e+30
      %74 = vst.msk [vmem:[#allocation3] sm:$0xff] %vm65, 0.0
      %75 = vst.msk [vmem:[#allocation3 + $0x8] sm:$0xff] %vm65, 0.0
      %76 = vst.msk [vmem:[#allocation3 + $0x10] sm:$0xff] %vm65, 0.0
      %77 = vst.msk [vmem:[#allocation3 + $0x18] sm:$0xff] %vm65, 0.0
      %78 = vst.msk [vmem:[#allocation3 + $0x20] sm:$0xff] %vm65, 0.0
      %79 = vst.msk [vmem:[#allocation3 + $0x28] sm:$0xff] %vm65, 0.0
      %80 = vst.msk [vmem:[#allocation3 + $0x30] sm:$0xff] %vm65, 0.0
      %81 = vst.msk [vmem:[#allocation3 + $0x38] sm:$0xff] %vm65, 0.0
      %vm82 = vcmask 64512
      %83 = vst.msk [vmem:[#allocation4] sm:$0xff] %vm82, 0.0
      %84 = vst.msk [vmem:[#allocation4 + $0x8] sm:$0xff] %vm82, 0.0
      %85 = vst.msk [vmem:[#allocation4 + $0x10] sm:$0xff] %vm82, 0.0
      %86 = vst.msk [vmem:[#allocation4 + $0x18] sm:$0xff] %vm82, 0.0
      %87 = vst.msk [vmem:[#allocation4 + $0x20] sm:$0xff] %vm82, 0.0
      %88 = vst.msk [vmem:[#allocation4 + $0x28] sm:$0xff] %vm82, 0.0
      %89 = vst.msk [vmem:[#allocation4 + $0x30] sm:$0xff] %vm82, 0.0
      %90 = vst.msk [vmem:[#allocation4 + $0x38] sm:$0xff] %vm82, 0.0
    $region33: #{whisper_temperature_forward.67} parent=1 // pred_fallthru
      _
    %s91 = sld [smem:[#allocation5]]
    %v92 = vstv %s91
    %v93 = vrcp.pop %v92
    %s94 = vtos %v93
    %s95 = smul.f32 0.35355338, %s94
    %v96 = vld [vmem:[#allocation6] sm:$0xf]
    %v97 = vld [vmem:[#allocation6 + $0x4] sm:$0xf]
    %v98 = vld [vmem:[#allocation6 + $0x8] sm:$0xf]
    %v99 = vld [vmem:[#allocation6 + $0xc] sm:$0xf]
    %v100 = vld [vmem:[#allocation6 + $0x10] sm:$0xf]
    %v101 = vld [vmem:[#allocation6 + $0x14] sm:$0xf]
    %v102 = vld [vmem:[#allocation6 + $0x18] sm:$0xf]
    %v103 = vld [vmem:[#allocation6 + $0x1c] sm:$0xf]
    %v104 = vunpack.c.l.bf16 %v96
    %v105 = vunpack.c.l.bf16 %v97
    %v106 = vunpack.c.l.bf16 %v98
    %v107 = vunpack.c.l.bf16 %v99
    %v108 = vunpack.c.l.bf16 %v100
    %v109 = vunpack.c.l.bf16 %v101
    %v110 = vunpack.c.l.bf16 %v102
    %v111 = vunpack.c.l.bf16 %v103
    %v112 = vstv %s95
    %v113 = vmul.f32 %v104, %v112
    %v114 = vmul.f32 %v105, %v112
    %v115 = vmul.f32 %v106, %v112
    %v116 = vmul.f32 %v107, %v112
    %v117 = vmul.f32 %v108, %v112
    %v118 = vmul.f32 %v109, %v112
    %v119 = vmul.f32 %v110, %v112
    %v120 = vmul.f32 %v111, %v112
    %v121 = vpack.c.bf16 %v113, %v113
    %v122 = vpack.c.bf16 %v114, %v114
    %v123 = vpack.c.bf16 %v115, %v115
    %v124 = vpack.c.bf16 %v116, %v116
    %v125 = vpack.c.bf16 %v117, %v117
    %v126 = vpack.c.bf16 %v118, %v118
    %v127 = vpack.c.bf16 %v119, %v119
    %v128 = vpack.c.bf16 %v120, %v120
    %v129 = vld [vmem:[#allocation9] sm:$0xf]
    %v130 = vld [vmem:[#allocation9 + $0x4] sm:$0xf]
    %v131 = vld [vmem:[#allocation9 + $0x8] sm:$0xf]
    %v132 = vld [vmem:[#allocation9 + $0xc] sm:$0xf]
    %v133 = vld [vmem:[#allocation9 + $0x10] sm:$0xf]
    %v134 = vld [vmem:[#allocation9 + $0x14] sm:$0xf]
    %v135 = vld [vmem:[#allocation9 + $0x18] sm:$0xf]
    %v136 = vld [vmem:[#allocation9 + $0x1c] sm:$0xf]
    %v137 = vld [vmem:[#allocation9 + $0x20] sm:$0xf]
    %v138 = vld [vmem:[#allocation9 + $0x24] sm:$0xf]
    %v139 = vld [vmem:[#allocation9 + $0x28] sm:$0xf]
    %v140 = vld [vmem:[#allocation9 + $0x2c] sm:$0xf]
    %v141 = vld [vmem:[#allocation9 + $0x30] sm:$0xf]
    %v142 = vld [vmem:[#allocation9 + $0x34] sm:$0xf]
    %v143 = vld [vmem:[#allocation9 + $0x38] sm:$0xf]
    %v144 = vld [vmem:[#allocation9 + $0x3c] sm:$0xf]
    %v147 = vunpack.c.l.b16 %v129
    %v148 = vunpack.c.l.b16 %v130
    %v149 = vpack.c.b16 %v148, %v147
    %vm150 = vcmask 64512
    %v152 = vsel %vm150, %v121, 0
    %v155 = vsel %vm150, %v149, 0
    %157 = vmatprep.subr.bf16.mxu0 0
    %158 = vmatpush1.bf16.xpose.msra.mxu0 %v155
    %159 = vmatprep.subr.bf16.mxu0 0
    %160 = vmatpush1.bf16.xpose.msra.mxu0 0
    %161 = vmatprep.subr.bf16.mxu0 0
    %162 = vmatpush1.bf16.xpose.msra.mxu0 0
    %163 = vmatprep.subr.bf16.mxu0 0
    %164 = vmatpush1.bf16.xpose.msra.mxu0 0
    %165 = vmatprep.subr.bf16.mxu0 0
    %166 = vmatpush1.bf16.xpose.msra.mxu0 0
    %167 = vmatprep.subr.bf16.mxu0 0
    %168 = vmatpush1.bf16.xpose.msra.mxu0 0
    %169 = vmatprep.subr.bf16.mxu0 0
    %170 = vmatpush1.bf16.xpose.msra.mxu0 0
    %171 = vmatprep.subr.bf16.mxu0 0
    %172 = vmatpush1.bf16.xpose.msra.mxu0 0
    %173 = vmatprep.subr.bf16.mxu0 0
    %174 = vmatpush1.bf16.xpose.msra.mxu0 0
    %175 = vmatprep.subr.bf16.mxu0 0
    %176 = vmatpush1.bf16.xpose.msra.mxu0 0
    %177 = vmatprep.subr.bf16.mxu0 0
    %178 = vmatpush1.bf16.xpose.msra.mxu0 0
    %179 = vmatprep.subr.bf16.mxu0 0
    %180 = vmatpush1.bf16.xpose.msra.mxu0 0
    %181 = vmatprep.subr.bf16.mxu0 0
    %182 = vmatpush1.bf16.xpose.msra.mxu0 0
    %183 = vmatprep.subr.bf16.mxu0 0
    %184 = vmatpush1.bf16.xpose.msra.mxu0 0
    %185 = vmatprep.subr.bf16.mxu0 0
    %186 = vmatpush1.bf16.xpose.msra.mxu0 0
    %187 = vmatprep.subr.bf16.mxu0 0
    %188 = vmatpush1.bf16.xpose.msra.mxu0 0
    %189 = vmatprep.mubr.bf16.mxu0 0
    %190 = vmatmul.mubr.bf16.gmra.mrb[0].mxu0 %v152
    %v191 = vpop.f32.mrb[0].mxu0
    %v192 = vadd.f32 0.0, %v191
    %v193 = vpop.f32.mrb[0].mxu0
    %v194 = vpop.f32.mrb[0].mxu0
    %v195 = vpop.f32.mrb[0].mxu0
    %196 = vdwg.mxu0
    %v199 = vunpack.c.l.b16 %v131
    %v200 = vunpack.c.l.b16 %v132
    %v201 = vpack.c.b16 %v200, %v199
    %v203 = vsel %vm150, %v122, 0
    %v206 = vsel %vm150, %v201, 0
    %208 = vmatprep.subr.bf16.mxu0 0
    %209 = vmatpush1.bf16.xpose.msra.mxu0 %v206
    %210 = vmatprep.subr.bf16.mxu0 0
    %211 = vmatpush1.bf16.xpose.msra.mxu0 0
    %212 = vmatprep.subr.bf16.mxu0 0
    %213 = vmatpush1.bf16.xpose.msra.mxu0 0
    %214 = vmatprep.subr.bf16.mxu0 0
    %215 = vmatpush1.bf16.xpose.msra.mxu0 0
    %216 = vmatprep.subr.bf16.mxu0 0
    %217 = vmatpush1.bf16.xpose.msra.mxu0 0
    %218 = vmatprep.subr.bf16.mxu0 0
    %219 = vmatpush1.bf16.xpose.msra.mxu0 0
    %220 = vmatprep.subr.bf16.mxu0 0
    %221 = vmatpush1.bf16.xpose.msra.mxu0 0
    %222 = vmatprep.subr.bf16.mxu0 0
    %223 = vmatpush1.bf16.xpose.msra.mxu0 0
    %224 = vmatprep.subr.bf16.mxu0 0
    %225 = vmatpush1.bf16.xpose.msra.mxu0 0
    %226 = vmatprep.subr.bf16.mxu0 0
    %227 = vmatpush1.bf16.xpose.msra.mxu0 0
    %228 = vmatprep.subr.bf16.mxu0 0
    %229 = vmatpush1.bf16.xpose.msra.mxu0 0
    %230 = vmatprep.subr.bf16.mxu0 0
    %231 = vmatpush1.bf16.xpose.msra.mxu0 0
    %232 = vmatprep.subr.bf16.mxu0 0
    %233 = vmatpush1.bf16.xpose.msra.mxu0 0
    %234 = vmatprep.subr.bf16.mxu0 0
    %235 = vmatpush1.bf16.xpose.msra.mxu0 0
    %236 = vmatprep.subr.bf16.mxu0 0
    %237 = vmatpush1.bf16.xpose.msra.mxu0 0
    %238 = vmatprep.subr.bf16.mxu0 0
    %239 = vmatpush1.bf16.xpose.msra.mxu0 0
    %240 = vmatprep.mubr.bf16.mxu0 0
    %241 = vmatmul.mubr.bf16.gmra.mrb[0].mxu0 %v203
    %v242 = vpop.f32.mrb[0].mxu0
    %v243 = vadd.f32 0.0, %v242
    %v244 = vpop.f32.mrb[0].mxu0
    %v245 = vpop.f32.mrb[0].mxu0
    %v246 = vpop.f32.mrb[0].mxu0
    %247 = vdwg.mxu0
    %v250 = vunpack.c.l.b16 %v133
    %v251 = vunpack.c.l.b16 %v134
    %v252 = vpack.c.b16 %v251, %v250
    %v254 = vsel %vm150, %v123, 0
    %v257 = vsel %vm150, %v252, 0
    %259 = vmatprep.subr.bf16.mxu0 0
    %260 = vmatpush1.bf16.xpose.msra.mxu0 %v257
    %261 = vmatprep.subr.bf16.mxu0 0
    %262 = vmatpush1.bf16.xpose.msra.mxu0 0
    %263 = vmatprep.subr.bf16.mxu0 0
    %264 = vmatpush1.bf16.xpose.msra.mxu0 0
    %265 = vmatprep.subr.bf16.mxu0 0
    %266 = vmatpush1.bf16.xpose.msra.mxu0 0
    %267 = vmatprep.subr.bf16.mxu0 0
    %268 = vmatpush1.bf16.xpose.msra.mxu0 0
    %269 = vmatprep.subr.bf16.mxu0 0
    %270 = vmatpush1.bf16.xpose.msra.mxu0 0
    %271 = vmatprep.subr.bf16.mxu0 0
    %272 = vmatpush1.bf16.xpose.msra.mxu0 0
    %273 = vmatprep.subr.bf16.mxu0 0
    %274 = vmatpush1.bf16.xpose.msra.mxu0 0
    %275 = vmatprep.subr.bf16.mxu0 0
    %276 = vmatpush1.bf16.xpose.msra.mxu0 0
    %277 = vmatprep.subr.bf16.mxu0 0
    %278 = vmatpush1.bf16.xpose.msra.mxu0 0
    %279 = vmatprep.subr.bf16.mxu0 0
    %280 = vmatpush1.bf16.xpose.msra.mxu0 0
    %281 = vmatprep.subr.bf16.mxu0 0
    %282 = vmatpush1.bf16.xpose.msra.mxu0 0
    %283 = vmatprep.subr.bf16.mxu0 0
    %284 = vmatpush1.bf16.xpose.msra.mxu0 0
    %285 = vmatprep.subr.bf16.mxu0 0
    %286 = vmatpush1.bf16.xpose.msra.mxu0 0
    %287 = vmatprep.subr.bf16.mxu0 0
    %288 = vmatpush1.bf16.xpose.msra.mxu0 0
    %289 = vmatprep.subr.bf16.mxu0 0
    %290 = vmatpush1.bf16.xpose.msra.mxu0 0
    %291 = vmatprep.mubr.bf16.mxu0 0
    %292 = vmatmul.mubr.bf16.gmra.mrb[0].mxu0 %v254
    %v293 = vpop.f32.mrb[0].mxu0
    %v294 = vadd.f32 0.0, %v293
    %v295 = vpop.f32.mrb[0].mxu0
    %v296 = vpop.f32.mrb[0].mxu0
    %v297 = vpop.f32.mrb[0].mxu0
    %298 = vdwg.mxu0
    %v301 = vunpack.c.l.b16 %v135
    %v302 = vunpack.c.l.b16 %v136
    %v303 = vpack.c.b16 %v302, %v301
    %v305 = vsel %vm150, %v124, 0
    %v308 = vsel %vm150, %v303, 0
    %310 = vmatprep.subr.bf16.mxu0 0
    %311 = vmatpush1.bf16.xpose.msra.mxu0 %v308
    %312 = vmatprep.subr.bf16.mxu0 0
    %313 = vmatpush1.bf16.xpose.msra.mxu0 0
    %314 = vmatprep.subr.bf16.mxu0 0
    %315 = vmatpush1.bf16.xpose.msra.mxu0 0
    %316 = vmatprep.subr.bf16.mxu0 0
    %317 = vmatpush1.bf16.xpose.msra.mxu0 0
    %318 = vmatprep.subr.bf16.mxu0 0
    %319 = vmatpush1.bf16.xpose.msra.mxu0 0
    %320 = vmatprep.subr.bf16.mxu0 0
    %321 = vmatpush1.bf16.xpose.msra.mxu0 0
    %322 = vmatprep.subr.bf16.mxu0 0
    %323 = vmatpush1.bf16.xpose.msra.mxu0 0
    %324 = vmatprep.subr.bf16.mxu0 0
    %325 = vmatpush1.bf16.xpose.msra.mxu0 0
    %326 = vmatprep.subr.bf16.mxu0 0
    %327 = vmatpush1.bf16.xpose.msra.mxu0 0
    %328 = vmatprep.subr.bf16.mxu0 0
    %329 = vmatpush1.bf16.xpose.msra.mxu0 0
    %330 = vmatprep.subr.bf16.mxu0 0
    %331 = vmatpush1.bf16.xpose.msra.mxu0 0
    %332 = vmatprep.subr.bf16.mxu0 0
    %333 = vmatpush1.bf16.xpose.msra.mxu0 0
    %334 = vmatprep.subr.bf16.mxu0 0
    %335 = vmatpush1.bf16.xpose.msra.mxu0 0
    %336 = vmatprep.subr.bf16.mxu0 0
    %337 = vmatpush1.bf16.xpose.msra.mxu0 0
    %338 = vmatprep.subr.bf16.mxu0 0
    %339 = vmatpush1.bf16.xpose.msra.mxu0 0
    %340 = vmatprep.subr.bf16.mxu0 0
    %341 = vmatpush1.bf16.xpose.msra.mxu0 0
    %342 = vmatprep.mubr.bf16.mxu0 0
    %343 = vmatmul.mubr.bf16.gmra.mrb[0].mxu0 %v305
    %v344 = vpop.f32.mrb[0].mxu0
    %v345 = vadd.f32 0.0, %v344
    %v346 = vpop.f32.mrb[0].mxu0
    %v347 = vpop.f32.mrb[0].mxu0
    %v348 = vpop.f32.mrb[0].mxu0
    %349 = vdwg.mxu0
    %v352 = vunpack.c.l.b16 %v137
    %v353 = vunpack.c.l.b16 %v138
    %v354 = vpack.c.b16 %v353, %v352
    %v356 = vsel %vm150, %v125, 0
    %v359 = vsel %vm150, %v354, 0
    %361 = vmatprep.subr.bf16.mxu0 0
    %362 = vmatpush1.bf16.xpose.msra.mxu0 %v359
    %363 = vmatprep.subr.bf16.mxu0 0
    %364 = vmatpush1.bf16.xpose.msra.mxu0 0
    %365 = vmatprep.subr.bf16.mxu0 0
    %366 = vmatpush1.bf16.xpose.msra.mxu0 0
    %367 = vmatprep.subr.bf16.mxu0 0
    %368 = vmatpush1.bf16.xpose.msra.mxu0 0
    %369 = vmatprep.subr.bf16.mxu0 0
    %370 = vmatpush1.bf16.xpose.msra.mxu0 0
    %371 = vmatprep.subr.bf16.mxu0 0
    %372 = vmatpush1.bf16.xpose.msra.mxu0 0
    %373 = vmatprep.subr.bf16.mxu0 0
    %374 = vmatpush1.bf16.xpose.msra.mxu0 0
    %375 = vmatprep.subr.bf16.mxu0 0
    %376 = vmatpush1.bf16.xpose.msra.mxu0 0
    %377 = vmatprep.subr.bf16.mxu0 0
    %378 = vmatpush1.bf16.xpose.msra.mxu0 0
    %379 = vmatprep.subr.bf16.mxu0 0
    %380 = vmatpush1.bf16.xpose.msra.mxu0 0
    %381 = vmatprep.subr.bf16.mxu0 0
    %382 = vmatpush1.bf16.xpose.msra.mxu0 0
    %383 = vmatprep.subr.bf16.mxu0 0
    %384 = vmatpush1.bf16.xpose.msra.mxu0 0
    %385 = vmatprep.subr.bf16.mxu0 0
    %386 = vmatpush1.bf16.xpose.msra.mxu0 0
    %387 = vmatprep.subr.bf16.mxu0 0
    %388 = vmatpush1.bf16.xpose.msra.mxu0 0
    %389 = vmatprep.subr.bf16.mxu0 0
    %390 = vmatpush1.bf16.xpose.msra.mxu0 0
    %391 = vmatprep.subr.bf16.mxu0 0
    %392 = vmatpush1.bf16.xpose.msra.mxu0 0
    %393 = vmatprep.mubr.bf16.mxu0 0
    %394 = vmatmul.mubr.bf16.gmra.mrb[0].mxu0 %v356
    %v395 = vpop.f32.mrb[0].mxu0
    %v396 = vadd.f32 0.0, %v395
    %v397 = vpop.f32.mrb[0].mxu0
    %v398 = vpop.f32.mrb[0].mxu0
    %v399 = vpop.f32.mrb[0].mxu0
    %400 = vdwg.mxu0
    %v403 = vunpack.c.l.b16 %v139
    %v404 = vunpack.c.l.b16 %v140
    %v405 = vpack.c.b16 %v404, %v403
    %v407 = vsel %vm150, %v126, 0
    %v410 = vsel %vm150, %v405, 0
    %412 = vmatprep.subr.bf16.mxu0 0
    %413 = vmatpush1.bf16.xpose.msra.mxu0 %v410
    %414 = vmatprep.subr.bf16.mxu0 0
    %415 = vmatpush1.bf16.xpose.msra.mxu0 0
    %416 = vmatprep.subr.bf16.mxu0 0
    %417 = vmatpush1.bf16.xpose.msra.mxu0 0
    %418 = vmatprep.subr.bf16.mxu0 0
    %419 = vmatpush1.bf16.xpose.msra.mxu0 0
    %420 = vmatprep.subr.bf16.mxu0 0
    %421 = vmatpush1.bf16.xpose.msra.mxu0 0
    %422 = vmatprep.subr.bf16.mxu0 0
    %423 = vmatpush1.bf16.xpose.msra.mxu0 0
    %424 = vmatprep.subr.bf16.mxu0 0
    %425 = vmatpush1.bf16.xpose.msra.mxu0 0
    %426 = vmatprep.subr.bf16.mxu0 0
    %427 = vmatpush1.bf16.xpose.msra.mxu0 0
    %428 = vmatprep.subr.bf16.mxu0 0
    %429 = vmatpush1.bf16.xpose.msra.mxu0 0
    %430 = vmatprep.subr.bf16.mxu0 0
    %431 = vmatpush1.bf16.xpose.msra.mxu0 0
    %432 = vmatprep.subr.bf16.mxu0 0
    %433 = vmatpush1.bf16.xpose.msra.mxu0 0
    %434 = vmatprep.subr.bf16.mxu0 0
    %435 = vmatpush1.bf16.xpose.msra.mxu0 0
    %436 = vmatprep.subr.bf16.mxu0 0
    %437 = vmatpush1.bf16.xpose.msra.mxu0 0
    %438 = vmatprep.subr.bf16.mxu0 0
    %439 = vmatpush1.bf16.xpose.msra.mxu0 0
    %440 = vmatprep.subr.bf16.mxu0 0
    %441 = vmatpush1.bf16.xpose.msra.mxu0 0
    %442 = vmatprep.subr.bf16.mxu0 0
    %443 = vmatpush1.bf16.xpose.msra.mxu0 0
    %444 = vmatprep.mubr.bf16.mxu0 0
    %445 = vmatmul.mubr.bf16.gmra.mrb[0].mxu0 %v407
    %v446 = vpop.f32.mrb[0].mxu0
    %v447 = vadd.f32 0.0, %v446
    %v448 = vpop.f32.mrb[0].mxu0
    %v449 = vpop.f32.mrb[0].mxu0
    %v450 = vpop.f32.mrb[0].mxu0
    %451 = vdwg.mxu0
    %v454 = vunpack.c.l.b16 %v141
    %v455 = vunpack.c.l.b16 %v142
    %v456 = vpack.c.b16 %v455, %v454
    %v458 = vsel %vm150, %v127, 0
    %v461 = vsel %vm150, %v456, 0
    %463 = vmatprep.subr.bf16.mxu0 0
    %464 = vmatpush1.bf16.xpose.msra.mxu0 %v461
    %465 = vmatprep.subr.bf16.mxu0 0
    %466 = vmatpush1.bf16.xpose.msra.mxu0 0
    %467 = vmatprep.subr.bf16.mxu0 0
    %468 = vmatpush1.bf16.xpose.msra.mxu0 0
    %469 = vmatprep.subr.bf16.mxu0 0
    %470 = vmatpush1.bf16.xpose.msra.mxu0 0
    %471 = vmatprep.subr.bf16.mxu0 0
    %472 = vmatpush1.bf16.xpose.msra.mxu0 0
    %473 = vmatprep.subr.bf16.mxu0 0
    %474 = vmatpush1.bf16.xpose.msra.mxu0 0
    %475 = vmatprep.subr.bf16.mxu0 0
    %476 = vmatpush1.bf16.xpose.msra.mxu0 0
    %477 = vmatprep.subr.bf16.mxu0 0
    %478 = vmatpush1.bf16.xpose.msra.mxu0 0
    %479 = vmatprep.subr.bf16.mxu0 0
    %480 = vmatpush1.bf16.xpose.msra.mxu0 0
    %481 = vmatprep.subr.bf16.mxu0 0
    %482 = vmatpush1.bf16.xpose.msra.mxu0 0
    %483 = vmatprep.subr.bf16.mxu0 0
    %484 = vmatpush1.bf16.xpose.msra.mxu0 0
    %485 = vmatprep.subr.bf16.mxu0 0
    %486 = vmatpush1.bf16.xpose.msra.mxu0 0
    %487 = vmatprep.subr.bf16.mxu0 0
    %488 = vmatpush1.bf16.xpose.msra.mxu0 0
    %489 = vmatprep.subr.bf16.mxu0 0
    %490 = vmatpush1.bf16.xpose.msra.mxu0 0
    %491 = vmatprep.subr.bf16.mxu0 0
    %492 = vmatpush1.bf16.xpose.msra.mxu0 0
    %493 = vmatprep.subr.bf16.mxu0 0
    %494 = vmatpush1.bf16.xpose.msra.mxu0 0
    %495 = vmatprep.mubr.bf16.mxu0 0
    %496 = vmatmul.mubr.bf16.gmra.mrb[0].mxu0 %v458
    %v497 = vpop.f32.mrb[0].mxu0
    %v498 = vadd.f32 0.0, %v497
    %v499 = vpop.f32.mrb[0].mxu0
    %v500 = vpop.f32.mrb[0].mxu0
    %v501 = vpop.f32.mrb[0].mxu0
    %502 = vdwg.mxu0
    %v505 = vunpack.c.l.b16 %v143
    %v506 = vunpack.c.l.b16 %v144
    %v507 = vpack.c.b16 %v506, %v505
    %v509 = vsel %vm150, %v128, 0
    %v512 = vsel %vm150, %v507, 0
    %514 = vmatprep.subr.bf16.mxu0 0
    %515 = vmatpush1.bf16.xpose.msra.mxu0 %v512
    %516 = vmatprep.subr.bf16.mxu0 0
    %517 = vmatpush1.bf16.xpose.msra.mxu0 0
    %518 = vmatprep.subr.bf16.mxu0 0
    %519 = vmatpush1.bf16.xpose.msra.mxu0 0
    %520 = vmatprep.subr.bf16.mxu0 0
    %521 = vmatpush1.bf16.xpose.msra.mxu0 0
    %522 = vmatprep.subr.bf16.mxu0 0
    %523 = vmatpush1.bf16.xpose.msra.mxu0 0
    %524 = vmatprep.subr.bf16.mxu0 0
    %525 = vmatpush1.bf16.xpose.msra.mxu0 0
    %526 = vmatprep.subr.bf16.mxu0 0
    %527 = vmatpush1.bf16.xpose.msra.mxu0 0
    %528 = vmatprep.subr.bf16.mxu0 0
    %529 = vmatpush1.bf16.xpose.msra.mxu0 0
    %530 = vmatprep.subr.bf16.mxu0 0
    %531 = vmatpush1.bf16.xpose.msra.mxu0 0
    %532 = vmatprep.subr.bf16.mxu0 0
    %533 = vmatpush1.bf16.xpose.msra.mxu0 0
    %534 = vmatprep.subr.bf16.mxu0 0
    %535 = vmatpush1.bf16.xpose.msra.mxu0 0
    %536 = vmatprep.subr.bf16.mxu0 0
    %537 = vmatpush1.bf16.xpose.msra.mxu0 0
    %538 = vmatprep.subr.bf16.mxu0 0
    %539 = vmatpush1.bf16.xpose.msra.mxu0 0
    %540 = vmatprep.subr.bf16.mxu0 0
    %541 = vmatpush1.bf16.xpose.msra.mxu0 0
    %542 = vmatprep.subr.bf16.mxu0 0
    %543 = vmatpush1.bf16.xpose.msra.mxu0 0
    %544 = vmatprep.subr.bf16.mxu0 0
    %545 = vmatpush1.bf16.xpose.msra.mxu0 0
    %546 = vmatprep.mubr.bf16.mxu0 0
    %547 = vmatmul.mubr.bf16.gmra.mrb[0].mxu0 %v509
    %v548 = vpop.f32.mrb[0].mxu0
    %v549 = vadd.f32 0.0, %v548
    %v550 = vpop.f32.mrb[0].mxu0
    %v551 = vpop.f32.mrb[0].mxu0
    %v552 = vpop.f32.mrb[0].mxu0
    %553 = vdwg.mxu0
    %v554 = vld [vmem:[#allocation2] sm:$0xff]
    %v555 = vld [vmem:[#allocation2 + $0x8] sm:$0xff]
    %v556 = vld [vmem:[#allocation2 + $0x10] sm:$0xff]
    %v557 = vld [vmem:[#allocation2 + $0x18] sm:$0xff]
    %v558 = vld [vmem:[#allocation2 + $0x20] sm:$0xff]
    %v559 = vld [vmem:[#allocation2 + $0x28] sm:$0xff]
    %v560 = vld [vmem:[#allocation2 + $0x30] sm:$0xff]
    %v561 = vld [vmem:[#allocation2 + $0x38] sm:$0xff]
    %vm562 = vcmask 130048
    %v563 = vsel %vm562, %v192, -inf
    %564 = vmax.xlane.f32.xlu0 %v563
    %v565 = vpop.xlane.xlu0 %564
    %v566 = vsel %vm562, %v243, -inf
    %567 = vmax.xlane.f32.xlu0 %v566
    %v568 = vpop.xlane.xlu0 %567
    %v569 = vsel %vm562, %v294, -inf
    %570 = vmax.xlane.f32.xlu0 %v569
    %v571 = vpop.xlane.xlu0 %570
    %v572 = vsel %vm562, %v345, -inf
    %573 = vmax.xlane.f32.xlu0 %v572
    %v574 = vpop.xlane.xlu0 %573
    %v575 = vsel %vm562, %v396, -inf
    %576 = vmax.xlane.f32.xlu0 %v575
    %v577 = vpop.xlane.xlu0 %576
    %v578 = vsel %vm562, %v447, -inf
    %579 = vmax.xlane.f32.xlu0 %v578
    %v580 = vpop.xlane.xlu0 %579
    %v581 = vsel %vm562, %v498, -inf
    %582 = vmax.xlane.f32.xlu0 %v581
    %v583 = vpop.xlane.xlu0 %582
    %v584 = vsel %vm562, %v549, -inf
    %585 = vmax.xlane.f32.xlu0 %v584
    %v586 = vpop.xlane.xlu0 %585
    %v587 = vmax.f32 %v554, %v565
    %v588 = vmax.f32 %v555, %v568
    %v589 = vmax.f32 %v556, %v571
    %v590 = vmax.f32 %v557, %v574
    %v591 = vmax.f32 %v558, %v577
    %v592 = vmax.f32 %v559, %v580
    %v593 = vmax.f32 %v560, %v583
    %v594 = vmax.f32 %v561, %v586
    %v595 = vsub.f32 %v554, %v587
    %v596 = vsub.f32 %v555, %v588
    %v597 = vsub.f32 %v556, %v589
    %v598 = vsub.f32 %v557, %v590
    %v599 = vsub.f32 %v558, %v591
    %v600 = vsub.f32 %v559, %v592
    %v601 = vsub.f32 %v560, %v593
    %v602 = vsub.f32 %v561, %v594
    %v603 = vmul.f32 %v595, 1.442695
    %v604 = vpow.pop %v603
    %v605 = vmul.f32 %v596, 1.442695
    %v606 = vpow.pop %v605
    %v607 = vmul.f32 %v597, 1.442695
    %v608 = vpow.pop %v607
    %v609 = vmul.f32 %v598, 1.442695
    %v610 = vpow.pop %v609
    %v611 = vmul.f32 %v599, 1.442695
    %v612 = vpow.pop %v611
    %v613 = vmul.f32 %v600, 1.442695
    %v614 = vpow.pop %v613
    %v615 = vmul.f32 %v601, 1.442695
    %v616 = vpow.pop %v615
    %v617 = vmul.f32 %v602, 1.442695
    %v618 = vpow.pop %v617
    %620 = vset.pattern.permute.xlu0 0
    %621 = vperm.xlu0 %620, %v587
    %v622 = vpop.permute.xlu0 %621
    %625 = vset.pattern.permute.xlu0 0
    %626 = vperm.xlu0 %625, %v588
    %v627 = vpop.permute.xlu0 %626
    %630 = vset.pattern.permute.xlu0 0
    %631 = vperm.xlu0 %630, %v589
    %v632 = vpop.permute.xlu0 %631
    %635 = vset.pattern.permute.xlu0 0
    %636 = vperm.xlu0 %635, %v590
    %v637 = vpop.permute.xlu0 %636
    %640 = vset.pattern.permute.xlu0 0
    %641 = vperm.xlu0 %640, %v591
    %v642 = vpop.permute.xlu0 %641
    %645 = vset.pattern.permute.xlu0 0
    %646 = vperm.xlu0 %645, %v592
    %v647 = vpop.permute.xlu0 %646
    %650 = vset.pattern.permute.xlu0 0
    %651 = vperm.xlu0 %650, %v593
    %v652 = vpop.permute.xlu0 %651
    %655 = vset.pattern.permute.xlu0 0
    %656 = vperm.xlu0 %655, %v594
    %v657 = vpop.permute.xlu0 %656
    %v659 = vsub.f32 %v192, %v622
    %v660 = vsub.f32 %v243, %v627
    %v661 = vsub.f32 %v294, %v632
    %v662 = vsub.f32 %v345, %v637
    %v663 = vsub.f32 %v396, %v642
    %v664 = vsub.f32 %v447, %v647
    %v665 = vsub.f32 %v498, %v652
    %v666 = vsub.f32 %v549, %v657
    %v667 = vmul.f32 %v659, 1.442695
    %v668 = vpow.pop %v667
    %v669 = vmul.f32 %v660, 1.442695
    %v670 = vpow.pop %v669
    %v671 = vmul.f32 %v661, 1.442695
    %v672 = vpow.pop %v671
    %v673 = vmul.f32 %v662, 1.442695
    %v674 = vpow.pop %v673
    %v675 = vmul.f32 %v663, 1.442695
    %v676 = vpow.pop %v675
    %v677 = vmul.f32 %v664, 1.442695
    %v678 = vpow.pop %v677
    %v679 = vmul.f32 %v665, 1.442695
    %v680 = vpow.pop %v679
    %v681 = vmul.f32 %v666, 1.442695
    %v682 = vpow.pop %v681
    %v683 = vld [vmem:[#allocation3] sm:$0xff]
    %v684 = vld [vmem:[#allocation3 + $0x8] sm:$0xff]
    %v685 = vld [vmem:[#allocation3 + $0x10] sm:$0xff]
    %v686 = vld [vmem:[#allocation3 + $0x18] sm:$0xff]
    %v687 = vld [vmem:[#allocation3 + $0x20] sm:$0xff]
    %v688 = vld [vmem:[#allocation3 + $0x28] sm:$0xff]
    %v689 = vld [vmem:[#allocation3 + $0x30] sm:$0xff]
    %v690 = vld [vmem:[#allocation3 + $0x38] sm:$0xff]
    %v691 = vmul.f32 %v604, %v683
    %v692 = vmul.f32 %v606, %v684
    %v693 = vmul.f32 %v608, %v685
    %v694 = vmul.f32 %v610, %v686
    %v695 = vmul.f32 %v612, %v687
    %v696 = vmul.f32 %v614, %v688
    %v697 = vmul.f32 %v616, %v689
    %v698 = vmul.f32 %v618, %v690
    %v699 = vsel %vm562, %v668, 0.0
    %700 = vadd.xlane.f32.xlu0 %v699
    %v701 = vpop.xlane.xlu0 %700
    %v702 = vsel %vm562, %v670, 0.0
    %703 = vadd.xlane.f32.xlu0 %v702
    %v704 = vpop.xlane.xlu0 %703
    %v705 = vsel %vm562, %v672, 0.0
    %706 = vadd.xlane.f32.xlu0 %v705
    %v707 = vpop.xlane.xlu0 %706
    %v708 = vsel %vm562, %v674, 0.0
    %709 = vadd.xlane.f32.xlu0 %v708
    %v710 = vpop.xlane.xlu0 %709
    %v711 = vsel %vm562, %v676, 0.0
    %712 = vadd.xlane.f32.xlu0 %v711
    %v713 = vpop.xlane.xlu0 %712
    %v714 = vsel %vm562, %v678, 0.0
    %715 = vadd.xlane.f32.xlu0 %v714
    %v716 = vpop.xlane.xlu0 %715
    %v717 = vsel %vm562, %v680, 0.0
    %718 = vadd.xlane.f32.xlu0 %v717
    %v719 = vpop.xlane.xlu0 %718
    %v720 = vsel %vm562, %v682, 0.0
    %721 = vadd.xlane.f32.xlu0 %v720
    %v722 = vpop.xlane.xlu0 %721
    %v723 = vadd.f32 %v691, %v701
    %v724 = vadd.f32 %v692, %v704
    %v725 = vadd.f32 %v693, %v707
    %v726 = vadd.f32 %v694, %v710
    %v727 = vadd.f32 %v695, %v713
    %v728 = vadd.f32 %v696, %v716
    %v729 = vadd.f32 %v697, %v719
    %v730 = vadd.f32 %v698, %v722
    %vm731 = vcmask 7168
    %732 = vst.msk [vmem:[#allocation3] sm:$0xff] %vm731, %v723
    %733 = vst.msk [vmem:[#allocation3 + $0x8] sm:$0xff] %vm731, %v724
    %734 = vst.msk [vmem:[#allocation3 + $0x10] sm:$0xff] %vm731, %v725
    %735 = vst.msk [vmem:[#allocation3 + $0x18] sm:$0xff] %vm731, %v726
    %736 = vst.msk [vmem:[#allocation3 + $0x20] sm:$0xff] %vm731, %v727
    %737 = vst.msk [vmem:[#allocation3 + $0x28] sm:$0xff] %vm731, %v728
    %738 = vst.msk [vmem:[#allocation3 + $0x30] sm:$0xff] %vm731, %v729
    %739 = vst.msk [vmem:[#allocation3 + $0x38] sm:$0xff] %vm731, %v730
    %v740 = vld [vmem:[#allocation4] sm:$0xff]
    %v741 = vld [vmem:[#allocation4 + $0x8] sm:$0xff]
    %v742 = vld [vmem:[#allocation4 + $0x10] sm:$0xff]
    %v743 = vld [vmem:[#allocation4 + $0x18] sm:$0xff]
    %v744 = vld [vmem:[#allocation4 + $0x20] sm:$0xff]
    %v745 = vld [vmem:[#allocation4 + $0x28] sm:$0xff]
    %v746 = vld [vmem:[#allocation4 + $0x30] sm:$0xff]
    %v747 = vld [vmem:[#allocation4 + $0x38] sm:$0xff]
    %749 = vset.pattern.permute.xlu0 0
    %750 = vperm.xlu0 %749, %v604
    %v751 = vpop.permute.xlu0 %750
    %754 = vset.pattern.permute.xlu0 0
    %755 = vperm.xlu0 %754, %v606
    %v756 = vpop.permute.xlu0 %755
    %759 = vset.pattern.permute.xlu0 0
    %760 = vperm.xlu0 %759, %v608
    %v761 = vpop.permute.xlu0 %760
    %764 = vset.pattern.permute.xlu0 0
    %765 = vperm.xlu0 %764, %v610
    %v766 = vpop.permute.xlu0 %765
    %769 = vset.pattern.permute.xlu0 0
    %770 = vperm.xlu0 %769, %v612
    %v771 = vpop.permute.xlu0 %770
    %774 = vset.pattern.permute.xlu0 0
    %775 = vperm.xlu0 %774, %v614
    %v776 = vpop.permute.xlu0 %775
    %779 = vset.pattern.permute.xlu0 0
    %780 = vperm.xlu0 %779, %v616
    %v781 = vpop.permute.xlu0 %780
    %784 = vset.pattern.permute.xlu0 0
    %785 = vperm.xlu0 %784, %v618
    %v786 = vpop.permute.xlu0 %785
    %v788 = vmul.f32 %v751, %v740
    %v789 = vmul.f32 %v756, %v741
    %v790 = vmul.f32 %v761, %v742
    %v791 = vmul.f32 %v766, %v743
    %v792 = vmul.f32 %v771, %v744
    %v793 = vmul.f32 %v776, %v745
    %v794 = vmul.f32 %v781, %v746
    %v795 = vmul.f32 %v786, %v747
    %v796 = vpack.c.bf16 %v668, %v668
    %v797 = vpack.c.bf16 %v670, %v670
    %v798 = vpack.c.bf16 %v672, %v672
    %v799 = vpack.c.bf16 %v674, %v674
    %v800 = vpack.c.bf16 %v676, %v676
    %v801 = vpack.c.bf16 %v678, %v678
    %v802 = vpack.c.bf16 %v680, %v680
    %v803 = vpack.c.bf16 %v682, %v682
    %v804 = vld [vmem:[#allocation11] sm:$0xf]
    %v805 = vld [vmem:[#allocation11 + $0x4] sm:$0xf]
    %v806 = vld [vmem:[#allocation11 + $0x8] sm:$0xf]
    %v807 = vld [vmem:[#allocation11 + $0xc] sm:$0xf]
    %v808 = vld [vmem:[#allocation11 + $0x10] sm:$0xf]
    %v809 = vld [vmem:[#allocation11 + $0x14] sm:$0xf]
    %v810 = vld [vmem:[#allocation11 + $0x18] sm:$0xf]
    %v811 = vld [vmem:[#allocation11 + $0x1c] sm:$0xf]
    %v812 = vld [vmem:[#allocation11 + $0x20] sm:$0xf]
    %v813 = vld [vmem:[#allocation11 + $0x24] sm:$0xf]
    %v814 = vld [vmem:[#allocation11 + $0x28] sm:$0xf]
    %v815 = vld [vmem:[#allocation11 + $0x2c] sm:$0xf]
    %v816 = vld [vmem:[#allocation11 + $0x30] sm:$0xf]
    %v817 = vld [vmem:[#allocation11 + $0x34] sm:$0xf]
    %v818 = vld [vmem:[#allocation11 + $0x38] sm:$0xf]
    %v819 = vld [vmem:[#allocation11 + $0x3c] sm:$0xf]
    %v822 = vunpack.c.l.b16 %v804
    %v823 = vunpack.c.l.b16 %v805
    %v824 = vpack.c.b16 %v823, %v822
    %v827 = vsel %vm562, %v796, 0
    %829 = vmatprep.subr.bf16.mxu0 0
    %830 = vmatpush1.bf16.msra.mxu0 %v824
    %831 = vmatprep.subr.bf16.mxu0 0
    %832 = vmatpush1.bf16.msra.mxu0 0
    %833 = vmatprep.subr.bf16.mxu0 0
    %834 = vmatpush1.bf16.msra.mxu0 0
    %835 = vmatprep.subr.bf16.mxu0 0
    %836 = vmatpush1.bf16.msra.mxu0 0
    %837 = vmatprep.subr.bf16.mxu0 0
    %838 = vmatpush1.bf16.msra.mxu0 0
    %839 = vmatprep.subr.bf16.mxu0 0
    %840 = vmatpush1.bf16.msra.mxu0 0
    %841 = vmatprep.subr.bf16.mxu0 0
    %842 = vmatpush1.bf16.msra.mxu0 0
    %843 = vmatprep.subr.bf16.mxu0 0
    %844 = vmatpush1.bf16.msra.mxu0 0
    %845 = vmatprep.subr.bf16.mxu0 0
    %846 = vmatpush1.bf16.msra.mxu0 0
    %847 = vmatprep.subr.bf16.mxu0 0
    %848 = vmatpush1.bf16.msra.mxu0 0
    %849 = vmatprep.subr.bf16.mxu0 0
    %850 = vmatpush1.bf16.msra.mxu0 0
    %851 = vmatprep.subr.bf16.mxu0 0
    %852 = vmatpush1.bf16.msra.mxu0 0
    %853 = vmatprep.subr.bf16.mxu0 0
    %854 = vmatpush1.bf16.msra.mxu0 0
    %855 = vmatprep.subr.bf16.mxu0 0
    %856 = vmatpush1.bf16.msra.mxu0 0
    %857 = vmatprep.subr.bf16.mxu0 0
    %858 = vmatpush1.bf16.msra.mxu0 0
    %859 = vmatprep.subr.bf16.mxu0 0
    %860 = vmatpush1.bf16.msra.mxu0 0
    %861 = vmatprep.mubr.bf16.mxu0 0
    %862 = vmatmul.mubr.bf16.gmra.mrb[0].mxu0 %v827
    %v863 = vpop.f32.mrb[0].mxu0
    %v864 = vadd.f32 0.0, %v863
    %v865 = vpop.f32.mrb[0].mxu0
    %v866 = vpop.f32.mrb[0].mxu0
    %v867 = vpop.f32.mrb[0].mxu0
    %868 = vdwg.mxu0
    %v871 = vunpack.c.l.b16 %v806
    %v872 = vunpack.c.l.b16 %v807
    %v873 = vpack.c.b16 %v872, %v871
    %v876 = vsel %vm562, %v797, 0
    %878 = vmatprep.subr.bf16.mxu0 0
    %879 = vmatpush1.bf16.msra.mxu0 %v873
    %880 = vmatprep.subr.bf16.mxu0 0
    %881 = vmatpush1.bf16.msra.mxu0 0
    %882 = vmatprep.subr.bf16.mxu0 0
    %883 = vmatpush1.bf16.msra.mxu0 0
    %884 = vmatprep.subr.bf16.mxu0 0
    %885 = vmatpush1.bf16.msra.mxu0 0
    %886 = vmatprep.subr.bf16.mxu0 0
    %887 = vmatpush1.bf16.msra.mxu0 0
    %888 = vmatprep.subr.bf16.mxu0 0
    %889 = vmatpush1.bf16.msra.mxu0 0
    %890 = vmatprep.subr.bf16.mxu0 0
    %891 = vmatpush1.bf16.msra.mxu0 0
    %892 = vmatprep.subr.bf16.mxu0 0
    %893 = vmatpush1.bf16.msra.mxu0 0
    %894 = vmatprep.subr.bf16.mxu0 0
    %895 = vmatpush1.bf16.msra.mxu0 0
    %896 = vmatprep.subr.bf16.mxu0 0
    %897 = vmatpush1.bf16.msra.mxu0 0
    %898 = vmatprep.subr.bf16.mxu0 0
    %899 = vmatpush1.bf16.msra.mxu0 0
    %900 = vmatprep.subr.bf16.mxu0 0
    %901 = vmatpush1.bf16.msra.mxu0 0
    %902 = vmatprep.subr.bf16.mxu0 0
    %903 = vmatpush1.bf16.msra.mxu0 0
    %904 = vmatprep.subr.bf16.mxu0 0
    %905 = vmatpush1.bf16.msra.mxu0 0
    %906 = vmatprep.subr.bf16.mxu0 0
    %907 = vmatpush1.bf16.msra.mxu0 0
    %908 = vmatprep.subr.bf16.mxu0 0
    %909 = vmatpush1.bf16.msra.mxu0 0
    %910 = vmatprep.mubr.bf16.mxu0 0
    %911 = vmatmul.mubr.bf16.gmra.mrb[0].mxu0 %v876
    %v912 = vpop.f32.mrb[0].mxu0
    %v913 = vadd.f32 0.0, %v912
    %v914 = vpop.f32.mrb[0].mxu0
    %v915 = vpop.f32.mrb[0].mxu0
    %v916 = vpop.f32.mrb[0].mxu0
    %917 = vdwg.mxu0
    %v920 = vunpack.c.l.b16 %v808
    %v921 = vunpack.c.l.b16 %v809
    %v922 = vpack.c.b16 %v921, %v920
    %v925 = vsel %vm562, %v798, 0
    %927 = vmatprep.subr.bf16.mxu0 0
    %928 = vmatpush1.bf16.msra.mxu0 %v922
    %929 = vmatprep.subr.bf16.mxu0 0
    %930 = vmatpush1.bf16.msra.mxu0 0
    %931 = vmatprep.subr.bf16.mxu0 0
    %932 = vmatpush1.bf16.msra.mxu0 0
    %933 = vmatprep.subr.bf16.mxu0 0
    %934 = vmatpush1.bf16.msra.mxu0 0
    %935 = vmatprep.subr.bf16.mxu0 0
    %936 = vmatpush1.bf16.msra.mxu0 0
    %937 = vmatprep.subr.bf16.mxu0 0
    %938 = vmatpush1.bf16.msra.mxu0 0
    %939 = vmatprep.subr.bf16.mxu0 0
    %940 = vmatpush1.bf16.msra.mxu0 0
    %941 = vmatprep.subr.bf16.mxu0 0
    %942 = vmatpush1.bf16.msra.mxu0 0
    %943 = vmatprep.subr.bf16.mxu0 0
    %944 = vmatpush1.bf16.msra.mxu0 0
    %945 = vmatprep.subr.bf16.mxu0 0
    %946 = vmatpush1.bf16.msra.mxu0 0
    %947 = vmatprep.subr.bf16.mxu0 0
    %948 = vmatpush1.bf16.msra.mxu0 0
    %949 = vmatprep.subr.bf16.mxu0 0
    %950 = vmatpush1.bf16.msra.mxu0 0
    %951 = vmatprep.subr.bf16.mxu0 0
    %952 = vmatpush1.bf16.msra.mxu0 0
    %953 = vmatprep.subr.bf16.mxu0 0
    %954 = vmatpush1.bf16.msra.mxu0 0
    %955 = vmatprep.subr.bf16.mxu0 0
    %956 = vmatpush1.bf16.msra.mxu0 0
    %957 = vmatprep.subr.bf16.mxu0 0
    %958 = vmatpush1.bf16.msra.mxu0 0
    %959 = vmatprep.mubr.bf16.mxu0 0
    %960 = vmatmul.mubr.bf16.gmra.mrb[0].mxu0 %v925
    %v961 = vpop.f32.mrb[0].mxu0
    %v962 = vadd.f32 0.0, %v961
    %v963 = vpop.f32.mrb[0].mxu0
    %v964 = vpop.f32.mrb[0].mxu0
    %v965 = vpop.f32.mrb[0].mxu0
    %966 = vdwg.mxu0
    %v969 = vunpack.c.l.b16 %v810
    %v970 = vunpack.c.l.b16 %v811
    %v971 = vpack.c.b16 %v970, %v969
    %v974 = vsel %vm562, %v799, 0
    %976 = vmatprep.subr.bf16.mxu0 0
    %977 = vmatpush1.bf16.msra.mxu0 %v971
    %978 = vmatprep.subr.bf16.mxu0 0
    %979 = vmatpush1.bf16.msra.mxu0 0
    %980 = vmatprep.subr.bf16.mxu0 0
    %981 = vmatpush1.bf16.msra.mxu0 0
    %982 = vmatprep.subr.bf16.mxu0 0
    %983 = vmatpush1.bf16.msra.mxu0 0
    %984 = vmatprep.subr.bf16.mxu0 0
    %985 = vmatpush1.bf16.msra.mxu0 0
    %986 = vmatprep.subr.bf16.mxu0 0
    %987 = vmatpush1.bf16.msra.mxu0 0
    %988 = vmatprep.subr.bf16.mxu0 0
    %989 = vmatpush1.bf16.msra.mxu0 0
    %990 = vmatprep.subr.bf16.mxu0 0
    %991 = vmatpush1.bf16.msra.mxu0 0
    %992 = vmatprep.subr.bf16.mxu0 0
    %993 = vmatpush1.bf16.msra.mxu0 0
    %994 = vmatprep.subr.bf16.mxu0 0
    %995 = vmatpush1.bf16.msra.mxu0 0
    %996 = vmatprep.subr.bf16.mxu0 0
    %997 = vmatpush1.bf16.msra.mxu0 0
    %998 = vmatprep.subr.bf16.mxu0 0
    %999 = vmatpush1.bf16.msra.mxu0 0
    %1000 = vmatprep.subr.bf16.mxu0 0
    %1001 = vmatpush1.bf16.msra.mxu0 0
    %1002 = vmatprep.subr.bf16.mxu0 0
    %1003 = vmatpush1.bf16.msra.mxu0 0
    %1004 = vmatprep.subr.bf16.mxu0 0
    %1005 = vmatpush1.bf16.msra.mxu0 0
    %1006 = vmatprep.subr.bf16.mxu0 0
    %1007 = vmatpush1.bf16.msra.mxu0 0
    %1008 = vmatprep.mubr.bf16.mxu0 0
    %1009 = vmatmul.mubr.bf16.gmra.mrb[0].mxu0 %v974
    %v1010 = vpop.f32.mrb[0].mxu0
    %v1011 = vadd.f32 0.0, %v1010
    %v1012 = vpop.f32.mrb[0].mxu0
    %v1013 = vpop.f32.mrb[0].mxu0
    %v1014 = vpop.f32.mrb[0].mxu0
    %1015 = vdwg.mxu0
    %v1018 = vunpack.c.l.b16 %v812
    %v1019 = vunpack.c.l.b16 %v813
    %v1020 = vpack.c.b16 %v1019, %v1018
    %v1023 = vsel %vm562, %v800, 0
    %1025 = vmatprep.subr.bf16.mxu0 0
    %1026 = vmatpush1.bf16.msra.mxu0 %v1020
    %1027 = vmatprep.subr.bf16.mxu0 0
    %1028 = vmatpush1.bf16.msra.mxu0 0
    %1029 = vmatprep.subr.bf16.mxu0 0
    %1030 = vmatpush1.bf16.msra.mxu0 0
    %1031 = vmatprep.subr.bf16.mxu0 0
    %1032 = vmatpush1.bf16.msra.mxu0 0
    %1033 = vmatprep.subr.bf16.mxu0 0
    %1034 = vmatpush1.bf16.msra.mxu0 0
    %1035 = vmatprep.subr.bf16.mxu0 0
    %1036 = vmatpush1.bf16.msra.mxu0 0
    %1037 = vmatprep.subr.bf16.mxu0 0
    %1038 = vmatpush1.bf16.msra.mxu0 0
    %1039 = vmatprep.subr.bf16.mxu0 0
    %1040 = vmatpush1.bf16.msra.mxu0 0
    %1041 = vmatprep.subr.bf16.mxu0 0
    %1042 = vmatpush1.bf16.msra.mxu0 0
    %1043 = vmatprep.subr.bf16.mxu0 0
    %1044 = vmatpush1.bf16.msra.mxu0 0
    %1045 = vmatprep.subr.bf16.mxu0 0
    %1046 = vmatpush1.bf16.msra.mxu0 0
    %1047 = vmatprep.subr.bf16.mxu0 0
    %1048 = vmatpush1.bf16.msra.mxu0 0
    %1049 = vmatprep.subr.bf16.mxu0 0
    %1050 = vmatpush1.bf16.msra.mxu0 0
    %1051 = vmatprep.subr.bf16.mxu0 0
    %1052 = vmatpush1.bf16.msra.mxu0 0
    %1053 = vmatprep.subr.bf16.mxu0 0
    %1054 = vmatpush1.bf16.msra.mxu0 0
    %1055 = vmatprep.subr.bf16.mxu0 0
    %1056 = vmatpush1.bf16.msra.mxu0 0
    %1057 = vmatprep.mubr.bf16.mxu0 0
    %1058 = vmatmul.mubr.bf16.gmra.mrb[0].mxu0 %v1023
    %v1059 = vpop.f32.mrb[0].mxu0
    %v1060 = vadd.f32 0.0, %v1059
    %v1061 = vpop.f32.mrb[0].mxu0
    %v1062 = vpop.f32.mrb[0].mxu0
    %v1063 = vpop.f32.mrb[0].mxu0
    %1064 = vdwg.mxu0
    %v1067 = vunpack.c.l.b16 %v814
    %v1068 = vunpack.c.l.b16 %v815
    %v1069 = vpack.c.b16 %v1068, %v1067
    %v1072 = vsel %vm562, %v801, 0
    %1074 = vmatprep.subr.bf16.mxu0 0
    %1075 = vmatpush1.bf16.msra.mxu0 %v1069
    %1076 = vmatprep.subr.bf16.mxu0 0
    %1077 = vmatpush1.bf16.msra.mxu0 0
    %1078 = vmatprep.subr.bf16.mxu0 0
    %1079 = vmatpush1.bf16.msra.mxu0 0
    %1080 = vmatprep.subr.bf16.mxu0 0
    %1081 = vmatpush1.bf16.msra.mxu0 0
    %1082 = vmatprep.subr.bf16.mxu0 0
    %1083 = vmatpush1.bf16.msra.mxu0 0
    %1084 = vmatprep.subr.bf16.mxu0 0
    %1085 = vmatpush1.bf16.msra.mxu0 0
    %1086 = vmatprep.subr.bf16.mxu0 0
    %1087 = vmatpush1.bf16.msra.mxu0 0
    %1088 = vmatprep.subr.bf16.mxu0 0
    %1089 = vmatpush1.bf16.msra.mxu0 0
    %1090 = vmatprep.subr.bf16.mxu0 0
    %1091 = vmatpush1.bf16.msra.mxu0 0
    %1092 = vmatprep.subr.bf16.mxu0 0
    %1093 = vmatpush1.bf16.msra.mxu0 0
    %1094 = vmatprep.subr.bf16.mxu0 0
    %1095 = vmatpush1.bf16.msra.mxu0 0
    %1096 = vmatprep.subr.bf16.mxu0 0
    %1097 = vmatpush1.bf16.msra.mxu0 0
    %1098 = vmatprep.subr.bf16.mxu0 0
    %1099 = vmatpush1.bf16.msra.mxu0 0
    %1100 = vmatprep.subr.bf16.mxu0 0
    %1101 = vmatpush1.bf16.msra.mxu0 0
    %1102 = vmatprep.subr.bf16.mxu0 0
    %1103 = vmatpush1.bf16.msra.mxu0 0
    %1104 = vmatprep.subr.bf16.mxu0 0
    %1105 = vmatpush1.bf16.msra.mxu0 0
    %1106 = vmatprep.mubr.bf16.mxu0 0
    %1107 = vmatmul.mubr.bf16.gmra.mrb[0].mxu0 %v1072
    %v1108 = vpop.f32.mrb[0].mxu0
    %v1109 = vadd.f32 0.0, %v1108
    %v1110 = vpop.f32.mrb[0].mxu0
    %v1111 = vpop.f32.mrb[0].mxu0
    %v1112 = vpop.f32.mrb[0].mxu0
    %1113 = vdwg.mxu0
    %v1116 = vunpack.c.l.b16 %v816
    %v1117 = vunpack.c.l.b16 %v817
    %v1118 = vpack.c.b16 %v1117, %v1116
    %v1121 = vsel %vm562, %v802, 0
    %1123 = vmatprep.subr.bf16.mxu0 0
    %1124 = vmatpush1.bf16.msra.mxu0 %v1118
    %1125 = vmatprep.subr.bf16.mxu0 0
    %1126 = vmatpush1.bf16.msra.mxu0 0
    %1127 = vmatprep.subr.bf16.mxu0 0
    %1128 = vmatpush1.bf16.msra.mxu0 0
    %1129 = vmatprep.subr.bf16.mxu0 0
    %1130 = vmatpush1.bf16.msra.mxu0 0
    %1131 = vmatprep.subr.bf16.mxu0 0
    %1132 = vmatpush1.bf16.msra.mxu0 0
    %1133 = vmatprep.subr.bf16.mxu0 0
    %1134 = vmatpush1.bf16.msra.mxu0 0
    %1135 = vmatprep.subr.bf16.mxu0 0
    %1136 = vmatpush1.bf16.msra.mxu0 0
    %1137 = vmatprep.subr.bf16.mxu0 0
    %1138 = vmatpush1.bf16.msra.mxu0 0
    %1139 = vmatprep.subr.bf16.mxu0 0
    %1140 = vmatpush1.bf16.msra.mxu0 0
    %1141 = vmatprep.subr.bf16.mxu0 0
    %1142 = vmatpush1.bf16.msra.mxu0 0
    %1143 = vmatprep.subr.bf16.mxu0 0
    %1144 = vmatpush1.bf16.msra.mxu0 0
    %1145 = vmatprep.subr.bf16.mxu0 0
    %1146 = vmatpush1.bf16.msra.mxu0 0
    %1147 = vmatprep.subr.bf16.mxu0 0
    %1148 = vmatpush1.bf16.msra.mxu0 0
    %1149 = vmatprep.subr.bf16.mxu0 0
    %1150 = vmatpush1.bf16.msra.mxu0 0
    %1151 = vmatprep.subr.bf16.mxu0 0
    %1152 = vmatpush1.bf16.msra.mxu0 0
    %1153 = vmatprep.subr.bf16.mxu0 0
    %1154 = vmatpush1.bf16.msra.mxu0 0
    %1155 = vmatprep.mubr.bf16.mxu0 0
    %1156 = vmatmul.mubr.bf16.gmra.mrb[0].mxu0 %v1121
    %v1157 = vpop.f32.mrb[0].mxu0
    %v1158 = vadd.f32 0.0, %v1157
    %v1159 = vpop.f32.mrb[0].mxu0
    %v1160 = vpop.f32.mrb[0].mxu0
    %v1161 = vpop.f32.mrb[0].mxu0
    %1162 = vdwg.mxu0
    %v1165 = vunpack.c.l.b16 %v818
    %v1166 = vunpack.c.l.b16 %v819
    %v1167 = vpack.c.b16 %v1166, %v1165
    %v1170 = vsel %vm562, %v803, 0
    %1172 = vmatprep.subr.bf16.mxu0 0
    %1173 = vmatpush1.bf16.msra.mxu0 %v1167
    %1174 = vmatprep.subr.bf16.mxu0 0
    %1175 = vmatpush1.bf16.msra.mxu0 0
    %1176 = vmatprep.subr.bf16.mxu0 0
    %1177 = vmatpush1.bf16.msra.mxu0 0
    %1178 = vmatprep.subr.bf16.mxu0 0
    %1179 = vmatpush1.bf16.msra.mxu0 0
    %1180 = vmatprep.subr.bf16.mxu0 0
    %1181 = vmatpush1.bf16.msra.mxu0 0
    %1182 = vmatprep.subr.bf16.mxu0 0
    %1183 = vmatpush1.bf16.msra.mxu0 0
    %1184 = vmatprep.subr.bf16.mxu0 0
    %1185 = vmatpush1.bf16.msra.mxu0 0
    %1186 = vmatprep.subr.bf16.mxu0 0
    %1187 = vmatpush1.bf16.msra.mxu0 0
    %1188 = vmatprep.subr.bf16.mxu0 0
    %1189 = vmatpush1.bf16.msra.mxu0 0
    %1190 = vmatprep.subr.bf16.mxu0 0
    %1191 = vmatpush1.bf16.msra.mxu0 0
    %1192 = vmatprep.subr.bf16.mxu0 0
    %1193 = vmatpush1.bf16.msra.mxu0 0
    %1194 = vmatprep.subr.bf16.mxu0 0
    %1195 = vmatpush1.bf16.msra.mxu0 0
    %1196 = vmatprep.subr.bf16.mxu0 0
    %1197 = vmatpush1.bf16.msra.mxu0 0
    %1198 = vmatprep.subr.bf16.mxu0 0
    %1199 = vmatpush1.bf16.msra.mxu0 0
    %1200 = vmatprep.subr.bf16.mxu0 0
    %1201 = vmatpush1.bf16.msra.mxu0 0
    %1202 = vmatprep.subr.bf16.mxu0 0
    %1203 = vmatpush1.bf16.msra.mxu0 0
    %1204 = vmatprep.mubr.bf16.mxu0 0
    %1205 = vmatmul.mubr.bf16.gmra.mrb[0].mxu0 %v1170
    %v1206 = vpop.f32.mrb[0].mxu0
    %v1207 = vadd.f32 0.0, %v1206
    %v1208 = vpop.f32.mrb[0].mxu0
    %v1209 = vpop.f32.mrb[0].mxu0
    %v1210 = vpop.f32.mrb[0].mxu0
    %1211 = vdwg.mxu0
    %v1212 = vadd.f32 %v788, %v864
    %v1213 = vadd.f32 %v789, %v913
    %v1214 = vadd.f32 %v790, %v962
    %v1215 = vadd.f32 %v791, %v1011
    %v1216 = vadd.f32 %v792, %v1060
    %v1217 = vadd.f32 %v793, %v1109
    %v1218 = vadd.f32 %v794, %v1158
    %v1219 = vadd.f32 %v795, %v1207
    %1220 = vst.msk [vmem:[#allocation4] sm:$0xff] %vm150, %v1212
    %1221 = vst.msk [vmem:[#allocation4 + $0x8] sm:$0xff] %vm150, %v1213
    %1222 = vst.msk [vmem:[#allocation4 + $0x10] sm:$0xff] %vm150, %v1214
    %1223 = vst.msk [vmem:[#allocation4 + $0x18] sm:$0xff] %vm150, %v1215
    %1224 = vst.msk [vmem:[#allocation4 + $0x20] sm:$0xff] %vm150, %v1216
    %1225 = vst.msk [vmem:[#allocation4 + $0x28] sm:$0xff] %vm150, %v1217
    %1226 = vst.msk [vmem:[#allocation4 + $0x30] sm:$0xff] %vm150, %v1218
    %1227 = vst.msk [vmem:[#allocation4 + $0x38] sm:$0xff] %vm150, %v1219
    %1228 = vst.msk [vmem:[#allocation2] sm:$0xff] %vm731, %v587
    %1229 = vst.msk [vmem:[#allocation2 + $0x8] sm:$0xff] %vm731, %v588
    %1230 = vst.msk [vmem:[#allocation2 + $0x10] sm:$0xff] %vm731, %v589
    %1231 = vst.msk [vmem:[#allocation2 + $0x18] sm:$0xff] %vm731, %v590
    %1232 = vst.msk [vmem:[#allocation2 + $0x20] sm:$0xff] %vm731, %v591
    %1233 = vst.msk [vmem:[#allocation2 + $0x28] sm:$0xff] %vm731, %v592
    %1234 = vst.msk [vmem:[#allocation2 + $0x30] sm:$0xff] %vm731, %v593
    %1235 = vst.msk [vmem:[#allocation2 + $0x38] sm:$0xff] %vm731, %v594
    // Predicated region
    $region34: #{whisper_temperature_forward.67} parent=1 // pred_check
      %p1236 = pneg %p61
    $region35: #{whisper_temperature_forward.67} parent=1 // pred_check_branch
      %1238 = sbr.rel (%p1236) target = $region37
    $region36: #{whisper_temperature_forward.67} parent=1 // pred_region
      %v1239 = vld [vmem:[#allocation4] sm:$0xff]
      %v1240 = vld [vmem:[#allocation4 + $0x8] sm:$0xff]
      %v1241 = vld [vmem:[#allocation4 + $0x10] sm:$0xff]
      %v1242 = vld [vmem:[#allocation4 + $0x18] sm:$0xff]
      %v1243 = vld [vmem:[#allocation4 + $0x20] sm:$0xff]
      %v1244 = vld [vmem:[#allocation4 + $0x28] sm:$0xff]
      %v1245 = vld [vmem:[#allocation4 + $0x30] sm:$0xff]
      %v1246 = vld [vmem:[#allocation4 + $0x38] sm:$0xff]
      %v1247 = vld [vmem:[#allocation3] sm:$0xff]
      %v1248 = vld [vmem:[#allocation3 + $0x8] sm:$0xff]
      %v1249 = vld [vmem:[#allocation3 + $0x10] sm:$0xff]
      %v1250 = vld [vmem:[#allocation3 + $0x18] sm:$0xff]
      %v1251 = vld [vmem:[#allocation3 + $0x20] sm:$0xff]
      %v1252 = vld [vmem:[#allocation3 + $0x28] sm:$0xff]
      %v1253 = vld [vmem:[#allocation3 + $0x30] sm:$0xff]
      %v1254 = vld [vmem:[#allocation3 + $0x38] sm:$0xff]
      %v1255 = vrcp.pop %v1247
      %v1256 = vrcp.pop %v1248
      %v1257 = vrcp.pop %v1249
      %v1258 = vrcp.pop %v1250
      %v1259 = vrcp.pop %v1251
      %v1260 = vrcp.pop %v1252
      %v1261 = vrcp.pop %v1253
      %v1262 = vrcp.pop %v1254
      %1264 = vset.pattern.permute.xlu0 0
      %1265 = vperm.xlu0 %1264, %v1255
      %v1266 = vpop.permute.xlu0 %1265
      %1269 = vset.pattern.permute.xlu0 0
      %1270 = vperm.xlu0 %1269, %v1256
      %v1271 = vpop.permute.xlu0 %1270
      %1274 = vset.pattern.permute.xlu0 0
      %1275 = vperm.xlu0 %1274, %v1257
      %v1276 = vpop.permute.xlu0 %1275
      %1279 = vset.pattern.permute.xlu0 0
      %1280 = vperm.xlu0 %1279, %v1258
      %v1281 = vpop.permute.xlu0 %1280
      %1284 = vset.pattern.permute.xlu0 0
      %1285 = vperm.xlu0 %1284, %v1259
      %v1286 = vpop.permute.xlu0 %1285
      %1289 = vset.pattern.permute.xlu0 0
      %1290 = vperm.xlu0 %1289, %v1260
      %v1291 = vpop.permute.xlu0 %1290
      %1294 = vset.pattern.permute.xlu0 0
      %1295 = vperm.xlu0 %1294, %v1261
      %v1296 = vpop.permute.xlu0 %1295
      %1299 = vset.pattern.permute.xlu0 0
      %1300 = vperm.xlu0 %1299, %v1262
      %v1301 = vpop.permute.xlu0 %1300
      %v1303 = vmul.f32 %v1239, %v1266
      %v1304 = vmul.f32 %v1240, %v1271
      %v1305 = vmul.f32 %v1241, %v1276
      %v1306 = vmul.f32 %v1242, %v1281
      %v1307 = vmul.f32 %v1243, %v1286
      %v1308 = vmul.f32 %v1244, %v1291
      %v1309 = vmul.f32 %v1245, %v1296
      %v1310 = vmul.f32 %v1246, %v1301
      %v1311 = vpack.c.bf16 %v1303, %v1303
      %v1312 = vpack.c.bf16 %v1304, %v1304
      %v1313 = vpack.c.bf16 %v1305, %v1305
      %v1314 = vpack.c.bf16 %v1306, %v1306
      %v1315 = vpack.c.bf16 %v1307, %v1307
      %v1316 = vpack.c.bf16 %v1308, %v1308
      %v1317 = vpack.c.bf16 %v1309, %v1309
      %v1318 = vpack.c.bf16 %v1310, %v1310
      %vm1319 = vcmask 60416
      %1320 = vst.msk [vmem:[#allocation12] sm:$0xf] %vm1319, %v1311
      %1321 = vst.msk [vmem:[#allocation12 + $0x4] sm:$0xf] %vm1319, %v1312
      %1322 = vst.msk [vmem:[#allocation12 + $0x8] sm:$0xf] %vm1319, %v1313
      %1323 = vst.msk [vmem:[#allocation12 + $0xc] sm:$0xf] %vm1319, %v1314
      %1324 = vst.msk [vmem:[#allocation12 + $0x10] sm:$0xf] %vm1319, %v1315
      %1325 = vst.msk [vmem:[#allocation12 + $0x14] sm:$0xf] %vm1319, %v1316
      %1326 = vst.msk [vmem:[#allocation12 + $0x18] sm:$0xf] %vm1319, %v1317
      %1327 = vst.msk [vmem:[#allocation12 + $0x1c] sm:$0xf] %vm1319, %v1318
    $region37: #{whisper_temperature_forward.67} parent=1 // pred_fallthru
      _
    // Predicated region
    $region38: #{whisper_temperature_forward.67} parent=1 // pred_check
      _
    $region39: #{whisper_temperature_forward.67} parent=1 // pred_check_branch
      %1329 = sbr.rel (0) target = $region41
    $region40: #{whisper_temperature_forward.67} parent=1 // pred_region
      %s1331 = ssub.s32 512, 512
      %1332 = vsyncadd [#allocation8], %s1331
      %s1333 = sshll.u32 [#allocation12], 4
      %s1334 = int_to_ptr.vmem [resolvable:$true] %s1333
      %1339 = dma.vmem_to_hbm [thread:$0]  %s1334, 512, %s4, [#allocation8], 64, 64, 4
    $region41: #{whisper_temperature_forward.67} parent=1 // pred_fallthru
      _
    // Predicated region
    $region42: #{whisper_temperature_forward.67} parent=1 // pred_check
      _
    $region43: #{whisper_temperature_forward.67} parent=1 // pred_check_branch
      %1341 = sbr.rel (0) target = $region45
    $region44: #{whisper_temperature_forward.67} parent=1 // pred_region
      %1342 = dma.done [#allocation8], 512
    $region45: #{whisper_temperature_forward.67} parent=1 // pred_fallthru
      _
    %1343 = vsyncpa [#allocation7], 1
    %1344 = vsyncpa [#allocation10], 1
    %1345 = vsyncpa [#allocation8], 1

// kernel: whisper_temperature_forward.85
$region0: #{whisper_temperature_forward.85}
  #allocation0 [shape = 'u32[]', space=smem, size = 0x4, offset = 0x4, fixed_abs, tag = 'smem constant byte address 0x4 - core index']
  #allocation1 [shape = 'u32[144,128]{1,0:T(1,128)}', space=vmem, size = 0x12000, scoped, tag = 'internal scratch']
  #allocation2 [shape = 'f32[1]{0:T(128)S(6)}', space=smem, size = 0x200, scoped, tag = 'scoped memory for whisper_temperature_forward.85']
  %s0 = inlined_call_operand.hbm [shape: bf16[16,32], index: 0, kind: input, shape index: {}]
  %s1 = inlined_call_operand.hbm [shape: bf16[32,128], index: 1, kind: input, shape index: {}]
  %s2 = inlined_call_operand.hbm [shape: f32[1,128], index: 2, kind: input, shape index: {}]
  %s3 = inlined_call_operand.<no memory space> [shape: f32[1], index: 3, kind: input, shape index: {}]
  %s4 = inlined_call_operand.hbm [shape: f32[16,128], index: 4, kind: output, shape index: {}]
  %s5 = sld [smem:[#allocation0]]
  $region38: #{whisper_temperature_forward.85} parent=0
    _
  %s7 = ssub.s32 1, %s5
  %s8 = scalar_select 0, %s7, %s5
  %9 = sst [smem:[#allocation2]] %s3
  $region1: #{whisper_temperature_forward.85} parent=0
    #allocation3 [shape = 'u8[4096]{0}', space=vmem, size = 0x1000, scoped, tag = 'input window, operand 0, single buffered']
    #allocation4 [shape = 's32[1]{0}', space=sflag, size = 0x4, scoped, tag = 'scoped memory for whisper_temperature_forward.85']
    #allocation5 [shape = 's32[1]{0}', space=sflag, size = 0x4, scoped, tag = 'scoped memory for whisper_temperature_forward.85']
    #allocation6 [shape = 'u8[8192]{0}', space=vmem, size = 0x2000, scoped, tag = 'input window, operand 1, single buffered']
    #allocation7 [shape = 's32[1]{0}', space=sflag, size = 0x4, scoped, tag = 'scoped memory for whisper_temperature_forward.85']
    #allocation8 [shape = 'u8[512]{0}', space=vmem, size = 0x400, scoped, tag = 'input window, operand 2, single buffered']
    #allocation9 [shape = 'u8[8192]{0}', space=vmem, size = 0x2000, scoped, tag = 'output window, operand 0, single buffered']
    %10 = vsyncpa [#allocation4], 0
    %11 = vsyncpa [#allocation7], 0
    %12 = vsyncpa [#allocation5], 0
    // Predicated region
    $region2: #{whisper_temperature_forward.85} parent=1 // pred_check
      _
    $region3: #{whisper_temperature_forward.85} parent=1 // pred_check_branch
      %14 = sbr.rel (0) target = $region5
    $region4: #{whisper_temperature_forward.85} parent=1 // pred_region
      %s16 = ssub.s32 128, 128
      %17 = vsyncadd [#allocation4], %s16
      %s18 = sshll.u32 [#allocation3], 4
      %s19 = int_to_ptr.vmem [resolvable:$true] %s18
      %24 = dma.hbm_to_vmem [thread:$0]  %s0, 128, %s19, [#allocation4], 64, 64, 4
    $region5: #{whisper_temperature_forward.85} parent=1 // pred_fallthru
      _
    // Predicated region
    $region6: #{whisper_temperature_forward.85} parent=1 // pred_check
      _
    $region7: #{whisper_temperature_forward.85} parent=1 // pred_check_branch
      %26 = sbr.rel (0) target = $region9
    $region8: #{whisper_temperature_forward.85} parent=1 // pred_region
      %s28 = ssub.s32 256, 256
      %29 = vsyncadd [#allocation7], %s28
      %s30 = sshll.u32 [#allocation6], 4
      %s31 = int_to_ptr.vmem [resolvable:$true] %s30
      %36 = dma.hbm_to_vmem [thread:$0]  %s1, 256, %s31, [#allocation7], 64, 64, 4
    $region9: #{whisper_temperature_forward.85} parent=1 // pred_fallthru
      _
    // Predicated region
    $region10: #{whisper_temperature_forward.85} parent=1 // pred_check
      _
    $region11: #{whisper_temperature_forward.85} parent=1 // pred_check_branch
      %38 = sbr.rel (0) target = $region13
    $region12: #{whisper_temperature_forward.85} parent=1 // pred_region
      %s40 = ssub.s32 16, 16
      %41 = vsyncadd [#allocation7], %s40
      %s43 = sshll.u32 [#allocation8], 4
      %s44 = int_to_ptr.vmem [resolvable:$true] %s43
      %46 = dma.hbm_to_vmem [thread:$0]  %s2, 16, %s44, [#allocation7]
    $region13: #{whisper_temperature_forward.85} parent=1 // pred_fallthru
      _
    // Predicated region
    $region14: #{whisper_temperature_forward.85} parent=1 // pred_check
      _
    $region15: #{whisper_temperature_forward.85} parent=1 // pred_check_branch
      %48 = sbr.rel (0) target = $region17
    $region16: #{whisper_temperature_forward.85} parent=1 // pred_region
      _
    $region17: #{whisper_temperature_forward.85} parent=1 // pred_fallthru
      _
    // Predicated region
    $region18: #{whisper_temperature_forward.85} parent=1 // pred_check
      _
    $region19: #{whisper_temperature_forward.85} parent=1 // pred_check_branch
      %50 = sbr.rel (0) target = $region21
    $region20: #{whisper_temperature_forward.85} parent=1 // pred_region
      %51 = dma.done [#allocation4], 128
    $region21: #{whisper_temperature_forward.85} parent=1 // pred_fallthru
      _
    // Predicated region
    $region22: #{whisper_temperature_forward.85} parent=1 // pred_check
      _
    $region23: #{whisper_temperature_forward.85} parent=1 // pred_check_branch
      %53 = sbr.rel (0) target = $region25
    $region24: #{whisper_temperature_forward.85} parent=1 // pred_region
      %54 = dma.done [#allocation7], 256
    $region25: #{whisper_temperature_forward.85} parent=1 // pred_fallthru
      _
    // Predicated region
    $region26: #{whisper_temperature_forward.85} parent=1 // pred_check
      _
    $region27: #{whisper_temperature_forward.85} parent=1 // pred_check_branch
      %56 = sbr.rel (0) target = $region29
    $region28: #{whisper_temperature_forward.85} parent=1 // pred_region
      %57 = dma.done [#allocation7], 16
    $region29: #{whisper_temperature_forward.85} parent=1 // pred_fallthru
      _
    %v59 = vld [vmem:[#allocation3] sm:$0xf]
    %v60 = vld [vmem:[#allocation3 + $0x4] sm:$0xf]
    %v61 = vld [vmem:[#allocation6] sm:$0xf]
    %v62 = vld [vmem:[#allocation6 + $0x4] sm:$0xf]
    %v63 = vld [vmem:[#allocation6 + $0x8] sm:$0xf]
    %v64 = vld [vmem:[#allocation6 + $0xc] sm:$0xf]
    %v65 = vld [vmem:[#allocation8] sm:$0x1]
    %v67 = vlaneseq
    %v68 = vshrl.u32 %v67, 7
    %v69 = vsub.s32 0, %v68
    %v70 = vrot.slane %v65, %v69
    %v74 = vunpack.c.l.b16 %v59
    %v75 = vunpack.c.l.b16 %v60
    %v76 = vpack.c.b16 %v75, %v74
    %v81 = vunpack.c.l.b16 %v61
    %v82 = vunpack.c.l.b16 %v62
    %v83 = vunpack.c.l.b16 %v63
    %v84 = vunpack.c.l.b16 %v64
    %v85 = vpack.c.b16 %v82, %v81
    %v86 = vpack.c.b16 %v84, %v83
    %vm89 = vcmask 261120
    %v91 = vsel %vm89, %v76, 0
    %93 = vmatprep.subr.bf16.mxu0 0
    %94 = vmatpush1.bf16.msra.mxu0 %v85
    %95 = vmatprep.subr.bf16.mxu0 0
    %96 = vmatpush1.bf16.msra.mxu0 %v86
    %97 = vmatprep.subr.bf16.mxu0 0
    %98 = vmatpush1.bf16.msra.mxu0 0
    %99 = vmatprep.subr.bf16.mxu0 0
    %100 = vmatpush1.bf16.msra.mxu0 0
    %101 = vmatprep.subr.bf16.mxu0 0
    %102 = vmatpush1.bf16.msra.mxu0 0
    %103 = vmatprep.subr.bf16.mxu0 0
    %104 = vmatpush1.bf16.msra.mxu0 0
    %105 = vmatprep.subr.bf16.mxu0 0
    %106 = vmatpush1.bf16.msra.mxu0 0
    %107 = vmatprep.subr.bf16.mxu0 0
    %108 = vmatpush1.bf16.msra.mxu0 0
    %109 = vmatprep.subr.bf16.mxu0 0
    %110 = vmatpush1.bf16.msra.mxu0 0
    %111 = vmatprep.subr.bf16.mxu0 0
    %112 = vmatpush1.bf16.msra.mxu0 0
    %113 = vmatprep.subr.bf16.mxu0 0
    %114 = vmatpush1.bf16.msra.mxu0 0
    %115 = vmatprep.subr.bf16.mxu0 0
    %116 = vmatpush1.bf16.msra.mxu0 0
    %117 = vmatprep.subr.bf16.mxu0 0
    %118 = vmatpush1.bf16.msra.mxu0 0
    %119 = vmatprep.subr.bf16.mxu0 0
    %120 = vmatpush1.bf16.msra.mxu0 0
    %121 = vmatprep.subr.bf16.mxu0 0
    %122 = vmatpush1.bf16.msra.mxu0 0
    %123 = vmatprep.subr.bf16.mxu0 0
    %124 = vmatpush1.bf16.msra.mxu0 0
    %125 = vmatprep.mubr.bf16.mxu0 0
    %126 = vmatmul.mubr.bf16.gmra.mrb[0].mxu0 %v91
    %v127 = vpop.f32.mrb[0].mxu0
    %v128 = vadd.f32 %v70, %v127
    %v129 = vpop.f32.mrb[0].mxu0
    %v130 = vpop.f32.mrb[0].mxu0
    %v131 = vadd.f32 %v70, %v130
    %v132 = vpop.f32.mrb[0].mxu0
    %133 = vdwg.mxu0
    %s134 = sld [smem:[#allocation2]]
    %s135 = sand.u32 2147483647, %s134
    %s136 = sadd.f32 %s135, 1e-06
    %v137 = vstv %s136
    %v138 = vrcp.pop %v137
    %s139 = vtos %v138
    %v140 = vstv %s139
    %v141 = vmul.f32 %v128, %v140
    %v142 = vmul.f32 %v131, %v140
    %143 = vst [vmem:[#allocation9] sm:$0xff] %v141
    %144 = vst [vmem:[#allocation9 + $0x8] sm:$0xff] %v142
    // Predicated region
    $region30: #{whisper_temperature_forward.85} parent=1 // pred_check
      _
    $region31: #{whisper_temperature_forward.85} parent=1 // pred_check_branch
      %146 = sbr.rel (0) target = $region33
    $region32: #{whisper_temperature_forward.85} parent=1 // pred_region
      %s148 = ssub.s32 256, 256
      %149 = vsyncadd [#allocation5], %s148
      %s150 = sshll.u32 [#allocation9], 4
      %s151 = int_to_ptr.vmem [resolvable:$true] %s150
      %156 = dma.vmem_to_hbm [thread:$0]  %s151, 256, %s4, [#allocation5], 128, 128, 8
    $region33: #{whisper_temperature_forward.85} parent=1 // pred_fallthru
      _
    // Predicated region
    $region34: #{whisper_temperature_forward.85} parent=1 // pred_check
      _
    $region35: #{whisper_temperature_forward.85} parent=1 // pred_check_branch
      %158 = sbr.rel (0) target = $region37
    $region36: #{whisper_temperature_forward.85} parent=1 // pred_region
      %159 = dma.done [#allocation5], 256
    $region37: #{whisper_temperature_forward.85} parent=1 // pred_fallthru
      _
    %160 = vsyncpa [#allocation4], 1
    %161 = vsyncpa [#allocation7], 1
    %162 = vsyncpa [#allocation5], 1

</llo_original>
